<compile_context>
chip_gen: v5e
topology: v5e:2x2
jax: 0.10.0
libtpu: 0.0.40
codegen_flags: <defaults>
</compile_context>

<pallas_src>
import functools

import numpy as np
import jax
import jax.numpy as jnp
from jax import lax
from jax.experimental import pallas as pl
from jax.experimental.pallas import tpu as pltpu


# ----------------------------- fused kernel --------------------------------

def _disc_kernel(p1_ref, w1_ref, w2_ref, w3_ref, w4_ref,
                 m2_ref, m3_ref, g2_ref, b2_ref, g3_ref, b3_ref,
                 o_ref, a1_ref, p2_ref, a2_ref, a3_ref, *, batch):
    f32 = jnp.float32
    bf16 = jnp.bfloat16
    slope = 0.2
    eps = 1e-5
    B = batch

    def lrelu(v):
        return jnp.where(v >= 0, v, slope * v)

    # ---------------- layer 1: fused layer_x + layer_y ----------------
    # p1 rows are the zero-padded 16x16 layer-2 input grid in mod-4
    # space-to-depth order; each row's columns hold the layer-1 im2col patch
    # of padded position q AND of q+(0,2), so the (block-diagonal) w1 produces
    # 128 real lanes per row: [ch(q) | ch(q+(0,2))].
    z1 = jnp.dot(p1_ref[...], w1_ref[...], preferred_element_type=f32)
    a1_ref[...] = lrelu(z1).astype(bf16)                 # [512B, 128] bf16

    # ------------- layer 2: conv 64->128, k4 s2 p1, + BN + LReLU -------------
    # One merged matmul: four parity-class slabs stacked along M, K = 1024
    # (16 kernel offsets x 64 real channels, delivered as 8 pair-packed
    # 128-lane groups).  Rows that fall outside the valid 7x7 output grid are
    # carried as masked garbage rows so every slice stays unit-stride.
    rows2 = 24 * B
    for ci in range(4):
        alpha, beta = ci // 2, ci % 2                    # output row/col parity
        grp = 0
        for dr in range(4):
            for j in range(2):                           # pair group: dc = j and j+2
                qr = 2 * alpha + dr
                qc = 2 * beta + j
                blk = (qr % 4) * 4 + (qc % 4)            # mod-4 class block of a1
                off = (qr // 4) * 4 + (qc // 4)          # offset inside the block
                s = (blk * 32 + off) * B
                p2_ref[ci * rows2:(ci + 1) * rows2, grp * 128:(grp + 1) * 128] = \
                    a1_ref[s:s + rows2, :]
                grp += 1
    z2 = jnp.dot(p2_ref[...], w2_ref[...], preferred_element_type=f32)  # [96B,128]

    n2 = float(B * 49)                                   # true BN positions (B*7*7)
    zm2 = z2 * m2_ref[...]                               # masked (valid rows only)
    mean2 = jnp.sum(zm2, axis=0, keepdims=True) / n2
    var2 = jnp.sum(zm2 * z2, axis=0, keepdims=True) / n2 - mean2 * mean2
    inv2 = lax.rsqrt(jnp.maximum(var2, 0.0) + eps) * g2_ref[...]
    a2_ref[...] = lrelu((z2 - mean2) * inv2 + b2_ref[...]).astype(bf16)  # [96B,128]

    # ------------- layer 3: conv 128->256, k3 s2 p0, + BN + LReLU -------------
    rows3 = 12 * B
    pieces = []
    for d in range(3):
        for e in range(3):
            cls = 2 * (d % 2) + (e % 2)
            s = cls * rows2 + ((d // 2) * 4 + (e // 2)) * B
            pieces.append(a2_ref[s:s + rows3, :])
    p3 = jnp.concatenate(pieces, axis=-1)                        # [12B, 1152] bf16
    z3 = jnp.dot(p3, w3_ref[...], preferred_element_type=f32)    # [12B, 256]

    n3 = float(B * 9)                                    # true BN positions (B*3*3)
    zm3 = z3 * m3_ref[...]
    mean3 = jnp.sum(zm3, axis=0, keepdims=True) / n3
    var3 = jnp.sum(zm3 * z3, axis=0, keepdims=True) / n3 - mean3 * mean3
    inv3 = lax.rsqrt(jnp.maximum(var3, 0.0) + eps) * g3_ref[...]
    a3_ref[...] = lrelu((z3 - mean3) * inv3 + b3_ref[...])       # [12B, 256] f32

    # --------- layer 4: conv 256->1 (full 3x3 window) + sigmoid ---------
    # a3 rows are position-major, batch-minor; w4 carries one (garbage-column
    # zeroed) weight row per position, so a 12-step MAC yields [B,1] directly.
    acc = jnp.zeros((B, 256), f32)
    for d in range(12):
        acc = acc + a3_ref[d * B:(d + 1) * B, :] * w4_ref[d:d + 1, :]
    logit = jnp.sum(acc, axis=1, keepdims=True)                  # [B, 1]
    o_ref[...] = jax.nn.sigmoid(logit)


# ----------------------------- host-side glue -------------------------------

def _p1_gather_indices(batch, n_classes):
    """Flat indices into the padded NCHW input that build the layer-1 im2col
    patch matrix directly in the kernel's pair-packed space-to-depth row
    layout.  Invalid positions get a huge out-of-bounds index so the fill-mode
    gather returns an exact zero (conv padding / garbage rows)."""
    ct = 1 + n_classes
    m = np.arange(512 * batch)
    b = m % batch
    t = m // batch
    w = t % 32                                  # slot inside a 32-row class block
    g = t // 32                                 # mod-4 class block (gr*4+gc)
    gr, gc = g // 4, g % 4
    rr, cc = w // 4, w % 4
    pi, pj = 4 * rr + gr, 4 * cc + gc           # position in padded 16x16 grid
    l = np.arange(16 * ct)
    off, c = l // ct, l % ct
    di, dj = off // 4, off % 4

    def half(pj_h):
        valid = (w < 16) & (pi >= 1) & (pi <= 14) & (pj_h >= 1) & (pj_h <= 14)
        oi = np.clip(pi - 1, 0, 13)             # layer-1 output position
        oj = np.clip(pj_h - 1, 0, 13)
        si = 2 * oi[:, None] + di[None, :]      # position in 30x30 padded input
        sj = 2 * oj[:, None] + dj[None, :]
        idx = ((b[:, None] * ct + c[None, :]) * 30 + si) * 30 + sj
        return np.where(valid[:, None], idx, 2 ** 30)   # OOB -> fill value 0.0

    idx = np.concatenate([half(pj), half(pj + 2)], axis=1)      # [512B, 32ct]
    return jnp.asarray(idx, dtype=jnp.int32)


def _bn_masks(batch):
    """Static validity masks for the garbage-row carrying activation layouts."""
    m2 = np.zeros((4, 24, batch), np.float32)
    for alpha in range(2):
        for beta in range(2):
            c = 2 * alpha + beta
            for u in range(24):
                if (u // 4) < 4 - alpha and (u % 4) < 4 - beta:
                    m2[c, u, :] = 1.0
    m3 = np.zeros((12, batch), np.float32)
    for u in range(12):
        if u % 4 < 3:
            m3[u, :] = 1.0
    return (jnp.asarray(m2.reshape(96 * batch, 1)),
            jnp.asarray(m3.reshape(12 * batch, 1)))


@jax.jit
def discriminator_forward(x_nchw, y_nchw, params):
    B = x_nchw.shape[0]
    n_classes = y_nchw.shape[1]
    ct = 1 + n_classes

    # Layer-1 patch matrix via a single gather over the padded, channel-
    # concatenated NCHW input (all layout shuffling folded into the indices).
    xy = jnp.concatenate([x_nchw.astype(jnp.float32),
                          y_nchw.astype(jnp.float32)], axis=1)
    xy = jnp.pad(xy, ((0, 0), (0, 0), (1, 1), (1, 1)))           # [B, ct, 30, 30]
    p1 = jnp.take(xy.reshape(-1), _p1_gather_indices(B, n_classes),
                  axis=0, mode="fill", fill_value=0.0).astype(jnp.bfloat16)

    m2, m3 = _bn_masks(B)

    flops = 2 * (512 * B * (32 * ct) * 128
                 + 96 * B * 1024 * 128
                 + 12 * B * 1152 * 256)
    bytes_accessed = (p1.size * 2 + params["w1"].size * 2 + params["w2"].size * 2
                      + params["w3"].size * 2 + params["w4"].size * 4
                      + m2.size * 4 + m3.size * 4 + 2 * (128 + 256) * 4 + B * 4)

    kernel = functools.partial(_disc_kernel, batch=B)
    out = pl.pallas_call(
        kernel,
        out_shape=jax.ShapeDtypeStruct((B, 1), jnp.float32),
        in_specs=[pl.BlockSpec(memory_space=pltpu.MemorySpace.VMEM)] * 11,
        out_specs=pl.BlockSpec(memory_space=pltpu.MemorySpace.VMEM),
        scratch_shapes=[pltpu.VMEM((512 * B, 128), jnp.bfloat16),   # a1
                        pltpu.VMEM((96 * B, 1024), jnp.bfloat16),   # p2 patch slab
                        pltpu.VMEM((96 * B, 128), jnp.bfloat16),    # a2
                        pltpu.VMEM((12 * B, 256), jnp.float32)],    # a3
        compiler_params=pltpu.CompilerParams(vmem_limit_bytes=32 * 1024 * 1024),
        cost_estimate=pl.CostEstimate(flops=flops, transcendentals=1024,
                                      bytes_accessed=bytes_accessed),
    )(p1, params["w1"], params["w2"], params["w3"], params["w4"],
      m2, m3, params["g2"], params["b2"], params["g3"], params["b3"])
    return out


# ------------------------------- parameters --------------------------------

def init_raw_params(n_classes, key):
    ks = jax.random.split(key, 5)

    def conv_w(k, shape):
        return 0.05 * jax.random.normal(k, shape, dtype=jnp.float32)

    return {
        "wx": conv_w(ks[0], (32, 1, 4, 4)),            # layer_x conv
        "wy": conv_w(ks[1], (32, n_classes, 4, 4)),    # layer_y conv
        "w1": conv_w(ks[2], (128, 64, 4, 4)),          # layer_xy conv1
        "w2": conv_w(ks[3], (256, 128, 3, 3)),         # layer_xy conv2
        "w3": conv_w(ks[4], (1, 256, 3, 3)),           # layer_xy conv3
    }


def pack_params(raw):
    n_classes = raw["wy"].shape[1]
    ct = 1 + n_classes

    # layer_x + layer_y fused into one matmul weight, duplicated block-
    # diagonally so each layer-1 activation row carries TWO positions
    # (q, q+(0,2)) across its 128 lanes -> no zero-channel padding downstream.
    wxy = jnp.zeros((64, ct, 4, 4), jnp.float32)
    wxy = wxy.at[:32, :1].set(raw["wx"])
    wxy = wxy.at[32:, 1:].set(raw["wy"])
    w1s = jnp.transpose(wxy, (2, 3, 1, 0)).reshape(16 * ct, 64)
    w1 = jnp.zeros((32 * ct, 128), jnp.float32)
    w1 = w1.at[:16 * ct, :64].set(w1s)
    w1 = w1.at[16 * ct:, 64:].set(w1s)

    # conv 64->128: rows ordered (dr, dc in pair order [0,2,1,3], cin) so each
    # 128-row group matches one pair-packed 128-lane patch group. K = 1024.
    w2 = jnp.transpose(raw["w1"], (2, 3, 1, 0))                  # [4,4,64,128]
    w2 = w2[:, jnp.array([0, 2, 1, 3]), :, :].reshape(1024, 128)

    # conv 128->256: rows ordered (kh, kw, cin).
    w3 = jnp.transpose(raw["w2"], (2, 3, 1, 0)).reshape(9 * 128, 256)

    # conv 256->1 as a per-position weight map over the 3x4 (garbage-column
    # padded) layer-3 row layout; the padded column gets zero weight.
    w4 = jnp.transpose(raw["w3"][0], (1, 2, 0))                  # [3,3,256]
    w4 = jnp.pad(w4, ((0, 0), (0, 1), (0, 0))).reshape(12, 256)

    return {
        "w1": w1.astype(jnp.bfloat16),
        "w2": w2.astype(jnp.bfloat16),
        "w3": w3.astype(jnp.bfloat16),
        "w4": w4,                                                # stays f32 (VPU)
        "g2": jnp.ones((1, 128), jnp.float32),                   # BatchNorm2d(128)
        "b2": jnp.zeros((1, 128), jnp.float32),
        "g3": jnp.ones((1, 256), jnp.float32),                   # BatchNorm2d(256)
        "b3": jnp.zeros((1, 256), jnp.float32),
    }


# ------------------------- pure-JAX reference (f32) -------------------------

def reference_forward(x, y, raw):
    def conv(h, w, stride, pad):
        return lax.conv_general_dilated(
            h, w, (stride, stride), [(pad, pad), (pad, pad)],
            dimension_numbers=("NCHW", "OIHW", "NCHW"))

    def lrelu(h):
        return jnp.where(h >= 0, h, 0.2 * h)

    def bn(h):  # training-mode BatchNorm2d, gamma=1, beta=0, eps=1e-5
        m = jnp.mean(h, axis=(0, 2, 3), keepdims=True)
        v = jnp.mean((h - m) ** 2, axis=(0, 2, 3), keepdims=True)
        return (h - m) * lax.rsqrt(v + 1e-5)

    hx = lrelu(conv(x, raw["wx"], 2, 1))
    hy = lrelu(conv(y, raw["wy"], 2, 1))
    h = jnp.concatenate([hx, hy], axis=1)
    h = lrelu(bn(conv(h, raw["w1"], 2, 1)))
    h = lrelu(bn(conv(h, raw["w2"], 2, 0)))
    h = jax.nn.sigmoid(conv(h, raw["w3"], 1, 0))
    return h.reshape(h.shape[0], -1)


# ----------------------------------- main -----------------------------------

if __name__ == "__main__":
    n_classes, H, W = 4, 28, 28   # 28 -> 14 -> 7 -> 3 -> 1 through the stack
    key = jax.random.PRNGKey(0)
    kx, ky, kp = jax.random.split(key, 3)

    raw = init_raw_params(n_classes, kp)
    params = pack_params(raw)

    # Validate the B-dependent layout / mask / index math at two batch sizes.
    for B in (2, 4):
        kxb = jax.random.fold_in(kx, B)
        kyb = jax.random.fold_in(ky, B)
        x = jax.random.normal(kxb, (B, 1, H, W), dtype=jnp.float32)
        y = jax.random.normal(kyb, (B, n_classes, H, W), dtype=jnp.float32)

        out = discriminator_forward(x, y, params)
        jax.block_until_ready(out)
        assert out.shape == (B, 1), out.shape

        # Correctness guard against the f32 XLA reference (bf16 MXU tolerance).
        ref = jax.jit(reference_forward)(x, y, raw)
        err = float(jnp.max(jnp.abs(out - ref)))
        assert err < 0.08, f"B={B}: mismatch vs reference, max abs err {err}"

    print("KERNEL_OK")
</pallas_src>

<mosaic_0001>
module attributes {stable_mosaic.version = 11 : i64} {
  func.func @_disc_kernel(%arg0: memref<1024x160xbf16, #tpu.memory_space<vmem>>, %arg1: memref<160x128xbf16, #tpu.memory_space<vmem>>, %arg2: memref<1024x128xbf16, #tpu.memory_space<vmem>>, %arg3: memref<1152x256xbf16, #tpu.memory_space<vmem>>, %arg4: memref<12x256xf32, #tpu.memory_space<vmem>>, %arg5: memref<192x1xf32, #tpu.memory_space<vmem>>, %arg6: memref<24x1xf32, #tpu.memory_space<vmem>>, %arg7: memref<1x128xf32, #tpu.memory_space<vmem>>, %arg8: memref<1x128xf32, #tpu.memory_space<vmem>>, %arg9: memref<1x256xf32, #tpu.memory_space<vmem>>, %arg10: memref<1x256xf32, #tpu.memory_space<vmem>>, %arg11: memref<2x1xf32, #tpu.memory_space<vmem>>, %arg12: memref<1024x128xbf16, #tpu.memory_space<vmem>>, %arg13: memref<192x1024xbf16, #tpu.memory_space<vmem>>, %arg14: memref<192x128xbf16, #tpu.memory_space<vmem>>, %arg15: memref<24x256xf32, #tpu.memory_space<vmem>>) attributes {dimension_semantics = [], scalar_prefetch = 0 : i64, scratch_operands = 4 : i64, tpu.core_type = #tpu.core_type<tc>} {
    %c0 = arith.constant 0 : index
    %c0_0 = arith.constant 0 : index
    %0 = vector.load %arg0[%c0, %c0_0] : memref<1024x160xbf16, #tpu.memory_space<vmem>>, vector<1024x160xbf16>
    %c0_1 = arith.constant 0 : index
    %c0_2 = arith.constant 0 : index
    %1 = vector.load %arg1[%c0_1, %c0_2] : memref<160x128xbf16, #tpu.memory_space<vmem>>, vector<160x128xbf16>
    %cst = arith.constant dense<0.000000e+00> : vector<1024x128xf32>
    %2 = tpu.matmul %0, %1, %cst {dimension_numbers = #tpu.dot_dimension_numbers<[1], [0], [0], [1], [0, 0, 1, 1], [], []>} : vector<1024x160xbf16>, vector<160x128xbf16>, vector<1024x128xf32> -> vector<1024x128xf32>
    %cst_3 = arith.constant 0.000000e+00 : f32
    %3 = vector.broadcast %cst_3 : f32 to vector<1024x128xf32>
    %4 = arith.cmpf oge, %2, %3 : vector<1024x128xf32>
    %cst_4 = arith.constant 2.000000e-01 : f32
    %5 = vector.broadcast %cst_4 : f32 to vector<1024x128xf32>
    %6 = arith.mulf %5, %2 : vector<1024x128xf32>
    %7 = arith.select %4, %2, %6 : vector<1024x128xi1>, vector<1024x128xf32>
    %8 = arith.truncf %7 : vector<1024x128xf32> to vector<1024x128xbf16>
    %c0_5 = arith.constant 0 : index
    %c0_6 = arith.constant 0 : index
    %9 = vector.load %arg12[%c0_5, %c0_6] : memref<1024x128xbf16, #tpu.memory_space<vmem>>, vector<1024x128xbf16>
    tpu.vector_store %arg12[%c0_5, %c0_6], %8 {strides = array<i32>} : memref<1024x128xbf16, #tpu.memory_space<vmem>>, vector<1024x128xbf16>,
    %c0_7 = arith.constant 0 : index
    %c0_8 = arith.constant 0 : index
    %10 = vector.load %arg12[%c0_7, %c0_8] : memref<1024x128xbf16, #tpu.memory_space<vmem>>, vector<48x128xbf16>
    %c0_9 = arith.constant 0 : index
    %c0_10 = arith.constant 0 : index
    %11 = vector.load %arg13[%c0_9, %c0_10] : memref<192x1024xbf16, #tpu.memory_space<vmem>>, vector<48x128xbf16>
    tpu.vector_store %arg13[%c0_9, %c0_10], %10 {strides = array<i32>} : memref<192x1024xbf16, #tpu.memory_space<vmem>>, vector<48x128xbf16>,
    %c64 = arith.constant 64 : index
    %c0_11 = arith.constant 0 : index
    %12 = vector.load %arg12[%c64, %c0_11] : memref<1024x128xbf16, #tpu.memory_space<vmem>>, vector<48x128xbf16>
    %c0_12 = arith.constant 0 : index
    %c128 = arith.constant 128 : index
    %13 = vector.load %arg13[%c0_12, %c128] : memref<192x1024xbf16, #tpu.memory_space<vmem>>, vector<48x128xbf16>
    tpu.vector_store %arg13[%c0_12, %c128], %12 {strides = array<i32>} : memref<192x1024xbf16, #tpu.memory_space<vmem>>, vector<48x128xbf16>,
    %c256 = arith.constant 256 : index
    %c0_13 = arith.constant 0 : index
    %14 = vector.load %arg12[%c256, %c0_13] : memref<1024x128xbf16, #tpu.memory_space<vmem>>, vector<48x128xbf16>
    %c0_14 = arith.constant 0 : index
    %c256_15 = arith.constant 256 : index
    %15 = vector.load %arg13[%c0_14, %c256_15] : memref<192x1024xbf16, #tpu.memory_space<vmem>>, vector<48x128xbf16>
    tpu.vector_store %arg13[%c0_14, %c256_15], %14 {strides = array<i32>} : memref<192x1024xbf16, #tpu.memory_space<vmem>>, vector<48x128xbf16>,
    %c320 = arith.constant 320 : index
    %c0_16 = arith.constant 0 : index
    %16 = vector.load %arg12[%c320, %c0_16] : memref<1024x128xbf16, #tpu.memory_space<vmem>>, vector<48x128xbf16>
    %c0_17 = arith.constant 0 : index
    %c384 = arith.constant 384 : index
    %17 = vector.load %arg13[%c0_17, %c384] : memref<192x1024xbf16, #tpu.memory_space<vmem>>, vector<48x128xbf16>
    tpu.vector_store %arg13[%c0_17, %c384], %16 {strides = array<i32>} : memref<192x1024xbf16, #tpu.memory_space<vmem>>, vector<48x128xbf16>,
    %c512 = arith.constant 512 : index
    %c0_18 = arith.constant 0 : index
    %18 = vector.load %arg12[%c512, %c0_18] : memref<1024x128xbf16, #tpu.memory_space<vmem>>, vector<48x128xbf16>
    %c0_19 = arith.constant 0 : index
    %c512_20 = arith.constant 512 : index
    %19 = vector.load %arg13[%c0_19, %c512_20] : memref<192x1024xbf16, #tpu.memory_space<vmem>>, vector<48x128xbf16>
    tpu.vector_store %arg13[%c0_19, %c512_20], %18 {strides = array<i32>} : memref<192x1024xbf16, #tpu.memory_space<vmem>>, vector<48x128xbf16>,
    %c576 = arith.constant 576 : index
    %c0_21 = arith.constant 0 : index
    %20 = vector.load %arg12[%c576, %c0_21] : memref<1024x128xbf16, #tpu.memory_space<vmem>>, vector<48x128xbf16>
    %c0_22 = arith.constant 0 : index
    %c640 = arith.constant 640 : index
    %21 = vector.load %arg13[%c0_22, %c640] : memref<192x1024xbf16, #tpu.memory_space<vmem>>, vector<48x128xbf16>
    tpu.vector_store %arg13[%c0_22, %c640], %20 {strides = array<i32>} : memref<192x1024xbf16, #tpu.memory_space<vmem>>, vector<48x128xbf16>,
    %c768 = arith.constant 768 : index
    %c0_23 = arith.constant 0 : index
    %22 = vector.load %arg12[%c768, %c0_23] : memref<1024x128xbf16, #tpu.memory_space<vmem>>, vector<48x128xbf16>
    %c0_24 = arith.constant 0 : index
    %c768_25 = arith.constant 768 : index
    %23 = vector.load %arg13[%c0_24, %c768_25] : memref<192x1024xbf16, #tpu.memory_space<vmem>>, vector<48x128xbf16>
    tpu.vector_store %arg13[%c0_24, %c768_25], %22 {strides = array<i32>} : memref<192x1024xbf16, #tpu.memory_space<vmem>>, vector<48x128xbf16>,
    %c832 = arith.constant 832 : index
    %c0_26 = arith.constant 0 : index
    %24 = vector.load %arg12[%c832, %c0_26] : memref<1024x128xbf16, #tpu.memory_space<vmem>>, vector<48x128xbf16>
    %c0_27 = arith.constant 0 : index
    %c896 = arith.constant 896 : index
    %25 = vector.load %arg13[%c0_27, %c896] : memref<192x1024xbf16, #tpu.memory_space<vmem>>, vector<48x128xbf16>
    tpu.vector_store %arg13[%c0_27, %c896], %24 {strides = array<i32>} : memref<192x1024xbf16, #tpu.memory_space<vmem>>, vector<48x128xbf16>,
    %c128_28 = arith.constant 128 : index
    %c0_29 = arith.constant 0 : index
    %26 = vector.load %arg12[%c128_28, %c0_29] : memref<1024x128xbf16, #tpu.memory_space<vmem>>, vector<48x128xbf16>
    %c48 = arith.constant 48 : index
    %c0_30 = arith.constant 0 : index
    %27 = vector.load %arg13[%c48, %c0_30] : memref<192x1024xbf16, #tpu.memory_space<vmem>>, vector<48x128xbf16>
    tpu.vector_store %arg13[%c48, %c0_30], %26 {strides = array<i32>} : memref<192x1024xbf16, #tpu.memory_space<vmem>>, vector<48x128xbf16>,
    %c192 = arith.constant 192 : index
    %c0_31 = arith.constant 0 : index
    %28 = vector.load %arg12[%c192, %c0_31] : memref<1024x128xbf16, #tpu.memory_space<vmem>>, vector<48x128xbf16>
    %c48_32 = arith.constant 48 : index
    %c128_33 = arith.constant 128 : index
    %29 = vector.load %arg13[%c48_32, %c128_33] : memref<192x1024xbf16, #tpu.memory_space<vmem>>, vector<48x128xbf16>
    tpu.vector_store %arg13[%c48_32, %c128_33], %28 {strides = array<i32>} : memref<192x1024xbf16, #tpu.memory_space<vmem>>, vector<48x128xbf16>,
    %c384_34 = arith.constant 384 : index
    %c0_35 = arith.constant 0 : index
    %30 = vector.load %arg12[%c384_34, %c0_35] : memref<1024x128xbf16, #tpu.memory_space<vmem>>, vector<48x128xbf16>
    %c48_36 = arith.constant 48 : index
    %c256_37 = arith.constant 256 : index
    %31 = vector.load %arg13[%c48_36, %c256_37] : memref<192x1024xbf16, #tpu.memory_space<vmem>>, vector<48x128xbf16>
    tpu.vector_store %arg13[%c48_36, %c256_37], %30 {strides = array<i32>} : memref<192x1024xbf16, #tpu.memory_space<vmem>>, vector<48x128xbf16>,
    %c448 = arith.constant 448 : index
    %c0_38 = arith.constant 0 : index
    %32 = vector.load %arg12[%c448, %c0_38] : memref<1024x128xbf16, #tpu.memory_space<vmem>>, vector<48x128xbf16>
    %c48_39 = arith.constant 48 : index
    %c384_40 = arith.constant 384 : index
    %33 = vector.load %arg13[%c48_39, %c384_40] : memref<192x1024xbf16, #tpu.memory_space<vmem>>, vector<48x128xbf16>
    tpu.vector_store %arg13[%c48_39, %c384_40], %32 {strides = array<i32>} : memref<192x1024xbf16, #tpu.memory_space<vmem>>, vector<48x128xbf16>,
    %c640_41 = arith.constant 640 : index
    %c0_42 = arith.constant 0 : index
    %34 = vector.load %arg12[%c640_41, %c0_42] : memref<1024x128xbf16, #tpu.memory_space<vmem>>, vector<48x128xbf16>
    %c48_43 = arith.constant 48 : index
    %c512_44 = arith.constant 512 : index
    %35 = vector.load %arg13[%c48_43, %c512_44] : memref<192x1024xbf16, #tpu.memory_space<vmem>>, vector<48x128xbf16>
    tpu.vector_store %arg13[%c48_43, %c512_44], %34 {strides = array<i32>} : memref<192x1024xbf16, #tpu.memory_space<vmem>>, vector<48x128xbf16>,
    %c704 = arith.constant 704 : index
    %c0_45 = arith.constant 0 : index
    %36 = vector.load %arg12[%c704, %c0_45] : memref<1024x128xbf16, #tpu.memory_space<vmem>>, vector<48x128xbf16>
    %c48_46 = arith.constant 48 : index
    %c640_47 = arith.constant 640 : index
    %37 = vector.load %arg13[%c48_46, %c640_47] : memref<192x1024xbf16, #tpu.memory_space<vmem>>, vector<48x128xbf16>
    tpu.vector_store %arg13[%c48_46, %c640_47], %36 {strides = array<i32>} : memref<192x1024xbf16, #tpu.memory_space<vmem>>, vector<48x128xbf16>,
    %c896_48 = arith.constant 896 : index
    %c0_49 = arith.constant 0 : index
    %38 = vector.load %arg12[%c896_48, %c0_49] : memref<1024x128xbf16, #tpu.memory_space<vmem>>, vector<48x128xbf16>
    %c48_50 = arith.constant 48 : index
    %c768_51 = arith.constant 768 : index
    %39 = vector.load %arg13[%c48_50, %c768_51] : memref<192x1024xbf16, #tpu.memory_space<vmem>>, vector<48x128xbf16>
    tpu.vector_store %arg13[%c48_50, %c768_51], %38 {strides = array<i32>} : memref<192x1024xbf16, #tpu.memory_space<vmem>>, vector<48x128xbf16>,
    %c960 = arith.constant 960 : index
    %c0_52 = arith.constant 0 : index
    %40 = vector.load %arg12[%c960, %c0_52] : memref<1024x128xbf16, #tpu.memory_space<vmem>>, vector<48x128xbf16>
    %c48_53 = arith.constant 48 : index
    %c896_54 = arith.constant 896 : index
    %41 = vector.load %arg13[%c48_53, %c896_54] : memref<192x1024xbf16, #tpu.memory_space<vmem>>, vector<48x128xbf16>
    tpu.vector_store %arg13[%c48_53, %c896_54], %40 {strides = array<i32>} : memref<192x1024xbf16, #tpu.memory_space<vmem>>, vector<48x128xbf16>,
    %c512_55 = arith.constant 512 : index
    %c0_56 = arith.constant 0 : index
    %42 = vector.load %arg12[%c512_55, %c0_56] : memref<1024x128xbf16, #tpu.memory_space<vmem>>, vector<48x128xbf16>
    %c96 = arith.constant 96 : index
    %c0_57 = arith.constant 0 : index
    %43 = vector.load %arg13[%c96, %c0_57] : memref<192x1024xbf16, #tpu.memory_space<vmem>>, vector<48x128xbf16>
    tpu.vector_store %arg13[%c96, %c0_57], %42 {strides = array<i32>} : memref<192x1024xbf16, #tpu.memory_space<vmem>>, vector<48x128xbf16>,
    %c576_58 = arith.constant 576 : index
    %c0_59 = arith.constant 0 : index
    %44 = vector.load %arg12[%c576_58, %c0_59] : memref<1024x128xbf16, #tpu.memory_space<vmem>>, vector<48x128xbf16>
    %c96_60 = arith.constant 96 : index
    %c128_61 = arith.constant 128 : index
    %45 = vector.load %arg13[%c96_60, %c128_61] : memref<192x1024xbf16, #tpu.memory_space<vmem>>, vector<48x128xbf16>
    tpu.vector_store %arg13[%c96_60, %c128_61], %44 {strides = array<i32>} : memref<192x1024xbf16, #tpu.memory_space<vmem>>, vector<48x128xbf16>,
    %c768_62 = arith.constant 768 : index
    %c0_63 = arith.constant 0 : index
    %46 = vector.load %arg12[%c768_62, %c0_63] : memref<1024x128xbf16, #tpu.memory_space<vmem>>, vector<48x128xbf16>
    %c96_64 = arith.constant 96 : index
    %c256_65 = arith.constant 256 : index
    %47 = vector.load %arg13[%c96_64, %c256_65] : memref<192x1024xbf16, #tpu.memory_space<vmem>>, vector<48x128xbf16>
    tpu.vector_store %arg13[%c96_64, %c256_65], %46 {strides = array<i32>} : memref<192x1024xbf16, #tpu.memory_space<vmem>>, vector<48x128xbf16>,
    %c832_66 = arith.constant 832 : index
    %c0_67 = arith.constant 0 : index
    %48 = vector.load %arg12[%c832_66, %c0_67] : memref<1024x128xbf16, #tpu.memory_space<vmem>>, vector<48x128xbf16>
    %c96_68 = arith.constant 96 : index
    %c384_69 = arith.constant 384 : index
    %49 = vector.load %arg13[%c96_68, %c384_69] : memref<192x1024xbf16, #tpu.memory_space<vmem>>, vector<48x128xbf16>
    tpu.vector_store %arg13[%c96_68, %c384_69], %48 {strides = array<i32>} : memref<192x1024xbf16, #tpu.memory_space<vmem>>, vector<48x128xbf16>,
    %c8 = arith.constant 8 : index
    %c0_70 = arith.constant 0 : index
    %50 = vector.load %arg12[%c8, %c0_70] : memref<1024x128xbf16, #tpu.memory_space<vmem>>, vector<48x128xbf16>
    %c96_71 = arith.constant 96 : index
    %c512_72 = arith.constant 512 : index
    %51 = vector.load %arg13[%c96_71, %c512_72] : memref<192x1024xbf16, #tpu.memory_space<vmem>>, vector<48x128xbf16>
    tpu.vector_store %arg13[%c96_71, %c512_72], %50 {strides = array<i32>} : memref<192x1024xbf16, #tpu.memory_space<vmem>>, vector<48x128xbf16>,
    %c72 = arith.constant 72 : index
    %c0_73 = arith.constant 0 : index
    %52 = vector.load %arg12[%c72, %c0_73] : memref<1024x128xbf16, #tpu.memory_space<vmem>>, vector<48x128xbf16>
    %c96_74 = arith.constant 96 : index
    %c640_75 = arith.constant 640 : index
    %53 = vector.load %arg13[%c96_74, %c640_75] : memref<192x1024xbf16, #tpu.memory_space<vmem>>, vector<48x128xbf16>
    tpu.vector_store %arg13[%c96_74, %c640_75], %52 {strides = array<i32>} : memref<192x1024xbf16, #tpu.memory_space<vmem>>, vector<48x128xbf16>,
    %c264 = arith.constant 264 : index
    %c0_76 = arith.constant 0 : index
    %54 = vector.load %arg12[%c264, %c0_76] : memref<1024x128xbf16, #tpu.memory_space<vmem>>, vector<48x128xbf16>
    %c96_77 = arith.constant 96 : index
    %c768_78 = arith.constant 768 : index
    %55 = vector.load %arg13[%c96_77, %c768_78] : memref<192x1024xbf16, #tpu.memory_space<vmem>>, vector<48x128xbf16>
    tpu.vector_store %arg13[%c96_77, %c768_78], %54 {strides = array<i32>} : memref<192x1024xbf16, #tpu.memory_space<vmem>>, vector<48x128xbf16>,
    %c328 = arith.constant 328 : index
    %c0_79 = arith.constant 0 : index
    %56 = vector.load %arg12[%c328, %c0_79] : memref<1024x128xbf16, #tpu.memory_space<vmem>>, vector<48x128xbf16>
    %c96_80 = arith.constant 96 : index
    %c896_81 = arith.constant 896 : index
    %57 = vector.load %arg13[%c96_80, %c896_81] : memref<192x1024xbf16, #tpu.memory_space<vmem>>, vector<48x128xbf16>
    tpu.vector_store %arg13[%c96_80, %c896_81], %56 {strides = array<i32>} : memref<192x1024xbf16, #tpu.memory_space<vmem>>, vector<48x128xbf16>,
    %c640_82 = arith.constant 640 : index
    %c0_83 = arith.constant 0 : index
    %58 = vector.load %arg12[%c640_82, %c0_83] : memref<1024x128xbf16, #tpu.memory_space<vmem>>, vector<48x128xbf16>
    %c144 = arith.constant 144 : index
    %c0_84 = arith.constant 0 : index
    %59 = vector.load %arg13[%c144, %c0_84] : memref<192x1024xbf16, #tpu.memory_space<vmem>>, vector<48x128xbf16>
    tpu.vector_store %arg13[%c144, %c0_84], %58 {strides = array<i32>} : memref<192x1024xbf16, #tpu.memory_space<vmem>>, vector<48x128xbf16>,
    %c704_85 = arith.constant 704 : index
    %c0_86 = arith.constant 0 : index
    %60 = vector.load %arg12[%c704_85, %c0_86] : memref<1024x128xbf16, #tpu.memory_space<vmem>>, vector<48x128xbf16>
    %c144_87 = arith.constant 144 : index
    %c128_88 = arith.constant 128 : index
    %61 = vector.load %arg13[%c144_87, %c128_88] : memref<192x1024xbf16, #tpu.memory_space<vmem>>, vector<48x128xbf16>
    tpu.vector_store %arg13[%c144_87, %c128_88], %60 {strides = array<i32>} : memref<192x1024xbf16, #tpu.memory_space<vmem>>, vector<48x128xbf16>,
    %c896_89 = arith.constant 896 : index
    %c0_90 = arith.constant 0 : index
    %62 = vector.load %arg12[%c896_89, %c0_90] : memref<1024x128xbf16, #tpu.memory_space<vmem>>, vector<48x128xbf16>
    %c144_91 = arith.constant 144 : index
    %c256_92 = arith.constant 256 : index
    %63 = vector.load %arg13[%c144_91, %c256_92] : memref<192x1024xbf16, #tpu.memory_space<vmem>>, vector<48x128xbf16>
    tpu.vector_store %arg13[%c144_91, %c256_92], %62 {strides = array<i32>} : memref<192x1024xbf16, #tpu.memory_space<vmem>>, vector<48x128xbf16>,
    %c960_93 = arith.constant 960 : index
    %c0_94 = arith.constant 0 : index
    %64 = vector.load %arg12[%c960_93, %c0_94] : memref<1024x128xbf16, #tpu.memory_space<vmem>>, vector<48x128xbf16>
    %c144_95 = arith.constant 144 : index
    %c384_96 = arith.constant 384 : index
    %65 = vector.load %arg13[%c144_95, %c384_96] : memref<192x1024xbf16, #tpu.memory_space<vmem>>, vector<48x128xbf16>
    tpu.vector_store %arg13[%c144_95, %c384_96], %64 {strides = array<i32>} : memref<192x1024xbf16, #tpu.memory_space<vmem>>, vector<48x128xbf16>,
    %c136 = arith.constant 136 : index
    %c0_97 = arith.constant 0 : index
    %66 = vector.load %arg12[%c136, %c0_97] : memref<1024x128xbf16, #tpu.memory_space<vmem>>, vector<48x128xbf16>
    %c144_98 = arith.constant 144 : index
    %c512_99 = arith.constant 512 : index
    %67 = vector.load %arg13[%c144_98, %c512_99] : memref<192x1024xbf16, #tpu.memory_space<vmem>>, vector<48x128xbf16>
    tpu.vector_store %arg13[%c144_98, %c512_99], %66 {strides = array<i32>} : memref<192x1024xbf16, #tpu.memory_space<vmem>>, vector<48x128xbf16>,
    %c200 = arith.constant 200 : index
    %c0_100 = arith.constant 0 : index
    %68 = vector.load %arg12[%c200, %c0_100] : memref<1024x128xbf16, #tpu.memory_space<vmem>>, vector<48x128xbf16>
    %c144_101 = arith.constant 144 : index
    %c640_102 = arith.constant 640 : index
    %69 = vector.load %arg13[%c144_101, %c640_102] : memref<192x1024xbf16, #tpu.memory_space<vmem>>, vector<48x128xbf16>
    tpu.vector_store %arg13[%c144_101, %c640_102], %68 {strides = array<i32>} : memref<192x1024xbf16, #tpu.memory_space<vmem>>, vector<48x128xbf16>,
    %c392 = arith.constant 392 : index
    %c0_103 = arith.constant 0 : index
    %70 = vector.load %arg12[%c392, %c0_103] : memref<1024x128xbf16, #tpu.memory_space<vmem>>, vector<48x128xbf16>
    %c144_104 = arith.constant 144 : index
    %c768_105 = arith.constant 768 : index
    %71 = vector.load %arg13[%c144_104, %c768_105] : memref<192x1024xbf16, #tpu.memory_space<vmem>>, vector<48x128xbf16>
    tpu.vector_store %arg13[%c144_104, %c768_105], %70 {strides = array<i32>} : memref<192x1024xbf16, #tpu.memory_space<vmem>>, vector<48x128xbf16>,
    %c456 = arith.constant 456 : index
    %c0_106 = arith.constant 0 : index
    %72 = vector.load %arg12[%c456, %c0_106] : memref<1024x128xbf16, #tpu.memory_space<vmem>>, vector<48x128xbf16>
    %c144_107 = arith.constant 144 : index
    %c896_108 = arith.constant 896 : index
    %73 = vector.load %arg13[%c144_107, %c896_108] : memref<192x1024xbf16, #tpu.memory_space<vmem>>, vector<48x128xbf16>
    tpu.vector_store %arg13[%c144_107, %c896_108], %72 {strides = array<i32>} : memref<192x1024xbf16, #tpu.memory_space<vmem>>, vector<48x128xbf16>,
    %c0_109 = arith.constant 0 : index
    %c0_110 = arith.constant 0 : index
    %74 = vector.load %arg13[%c0_109, %c0_110] : memref<192x1024xbf16, #tpu.memory_space<vmem>>, vector<192x1024xbf16>
    %c0_111 = arith.constant 0 : index
    %c0_112 = arith.constant 0 : index
    %75 = vector.load %arg2[%c0_111, %c0_112] : memref<1024x128xbf16, #tpu.memory_space<vmem>>, vector<1024x128xbf16>
    %cst_113 = arith.constant dense<0.000000e+00> : vector<192x128xf32>
    %76 = tpu.matmul %74, %75, %cst_113 {dimension_numbers = #tpu.dot_dimension_numbers<[1], [0], [0], [1], [0, 0, 1, 1], [], []>} : vector<192x1024xbf16>, vector<1024x128xbf16>, vector<192x128xf32> -> vector<192x128xf32>
    %c0_114 = arith.constant 0 : index
    %c0_115 = arith.constant 0 : index
    %77 = vector.load %arg5[%c0_114, %c0_115] : memref<192x1xf32, #tpu.memory_space<vmem>>, vector<192x1xf32>
    %78 = vector.broadcast %77 : vector<192x1xf32> to vector<192x128xf32>
    %79 = arith.mulf %76, %78 : vector<192x128xf32>
    %cst_116 = arith.constant dense<0.000000e+00> : vector<128xf32>
    %80 = vector.multi_reduction <add>, %79, %cst_116 [0] : vector<192x128xf32> to vector<128xf32>
    %81 = vector.shape_cast %80 : vector<128xf32> to vector<1x128xf32>
    %cst_117 = arith.constant 9.800000e+01 : f32
    %82 = vector.broadcast %cst_117 : f32 to vector<1x128xf32>
    %83 = arith.divf %81, %82 : vector<1x128xf32>
    %84 = arith.mulf %79, %76 : vector<192x128xf32>
    %cst_118 = arith.constant dense<0.000000e+00> : vector<128xf32>
    %85 = vector.multi_reduction <add>, %84, %cst_118 [0] : vector<192x128xf32> to vector<128xf32>
    %86 = vector.shape_cast %85 : vector<128xf32> to vector<1x128xf32>
    %cst_119 = arith.constant 9.800000e+01 : f32
    %87 = vector.broadcast %cst_119 : f32 to vector<1x128xf32>
    %88 = arith.divf %86, %87 : vector<1x128xf32>
    %89 = arith.mulf %83, %83 : vector<1x128xf32>
    %90 = arith.subf %88, %89 : vector<1x128xf32>
    %cst_120 = arith.constant 0.000000e+00 : f32
    %91 = vector.broadcast %cst_120 : f32 to vector<1x128xf32>
    %92 = arith.maximumf %90, %91 : vector<1x128xf32>
    %cst_121 = arith.constant 9.99999974E-6 : f32
    %93 = vector.broadcast %cst_121 : f32 to vector<1x128xf32>
    %94 = arith.addf %92, %93 : vector<1x128xf32>
    %95 = math.rsqrt %94 : vector<1x128xf32>
    %c0_122 = arith.constant 0 : index
    %c0_123 = arith.constant 0 : index
    %96 = vector.load %arg7[%c0_122, %c0_123] : memref<1x128xf32, #tpu.memory_space<vmem>>, vector<1x128xf32>
    %97 = arith.mulf %95, %96 : vector<1x128xf32>
    %98 = vector.broadcast %83 : vector<1x128xf32> to vector<192x128xf32>
    %99 = arith.subf %76, %98 : vector<192x128xf32>
    %100 = vector.broadcast %97 : vector<1x128xf32> to vector<192x128xf32>
    %101 = arith.mulf %99, %100 : vector<192x128xf32>
    %c0_124 = arith.constant 0 : index
    %c0_125 = arith.constant 0 : index
    %102 = vector.load %arg8[%c0_124, %c0_125] : memref<1x128xf32, #tpu.memory_space<vmem>>, vector<1x128xf32>
    %103 = vector.broadcast %102 : vector<1x128xf32> to vector<192x128xf32>
    %104 = arith.addf %101, %103 : vector<192x128xf32>
    %cst_126 = arith.constant 0.000000e+00 : f32
    %105 = vector.broadcast %cst_126 : f32 to vector<192x128xf32>
    %106 = arith.cmpf oge, %104, %105 : vector<192x128xf32>
    %cst_127 = arith.constant 2.000000e-01 : f32
    %107 = vector.broadcast %cst_127 : f32 to vector<192x128xf32>
    %108 = arith.mulf %107, %104 : vector<192x128xf32>
    %109 = arith.select %106, %104, %108 : vector<192x128xi1>, vector<192x128xf32>
    %110 = arith.truncf %109 : vector<192x128xf32> to vector<192x128xbf16>
    %c0_128 = arith.constant 0 : index
    %c0_129 = arith.constant 0 : index
    %111 = vector.load %arg14[%c0_128, %c0_129] : memref<192x128xbf16, #tpu.memory_space<vmem>>, vector<192x128xbf16>
    tpu.vector_store %arg14[%c0_128, %c0_129], %110 {strides = array<i32>} : memref<192x128xbf16, #tpu.memory_space<vmem>>, vector<192x128xbf16>,
    %c0_130 = arith.constant 0 : index
    %c0_131 = arith.constant 0 : index
    %112 = vector.load %arg14[%c0_130, %c0_131] : memref<192x128xbf16, #tpu.memory_space<vmem>>, vector<24x128xbf16>
    %c48_132 = arith.constant 48 : index
    %c0_133 = arith.constant 0 : index
    %113 = vector.load %arg14[%c48_132, %c0_133] : memref<192x128xbf16, #tpu.memory_space<vmem>>, vector<24x128xbf16>
    %c2 = arith.constant 2 : index
    %c0_134 = arith.constant 0 : index
    %114 = vector.load %arg14[%c2, %c0_134] : memref<192x128xbf16, #tpu.memory_space<vmem>>, vector<24x128xbf16>
    %c96_135 = arith.constant 96 : index
    %c0_136 = arith.constant 0 : index
    %115 = vector.load %arg14[%c96_135, %c0_136] : memref<192x128xbf16, #tpu.memory_space<vmem>>, vector<24x128xbf16>
    %c144_137 = arith.constant 144 : index
    %c0_138 = arith.constant 0 : index
    %116 = vector.load %arg14[%c144_137, %c0_138] : memref<192x128xbf16, #tpu.memory_space<vmem>>, vector<24x128xbf16>
    %c98 = arith.constant 98 : index
    %c0_139 = arith.constant 0 : index
    %117 = vector.load %arg14[%c98, %c0_139] : memref<192x128xbf16, #tpu.memory_space<vmem>>, vector<24x128xbf16>
    %c8_140 = arith.constant 8 : index
    %c0_141 = arith.constant 0 : index
    %118 = vector.load %arg14[%c8_140, %c0_141] : memref<192x128xbf16, #tpu.memory_space<vmem>>, vector<24x128xbf16>
    %c56 = arith.constant 56 : index
    %c0_142 = arith.constant 0 : index
    %119 = vector.load %arg14[%c56, %c0_142] : memref<192x128xbf16, #tpu.memory_space<vmem>>, vector<24x128xbf16>
    %c10 = arith.constant 10 : index
    %c0_143 = arith.constant 0 : index
    %120 = vector.load %arg14[%c10, %c0_143] : memref<192x128xbf16, #tpu.memory_space<vmem>>, vector<24x128xbf16>
    %121 = tpu.concatenate %112, %113, %114, %115, %116, %117, %118, %119, %120 in 1 : vector<24x128xbf16>, vector<24x128xbf16>, vector<24x128xbf16>, vector<24x128xbf16>, vector<24x128xbf16>, vector<24x128xbf16>, vector<24x128xbf16>, vector<24x128xbf16>, vector<24x128xbf16> -> vector<24x1152xbf16>
    %c0_144 = arith.constant 0 : index
    %c0_145 = arith.constant 0 : index
    %122 = vector.load %arg3[%c0_144, %c0_145] : memref<1152x256xbf16, #tpu.memory_space<vmem>>, vector<1152x256xbf16>
    %cst_146 = arith.constant dense<0.000000e+00> : vector<24x256xf32>
    %123 = tpu.matmul %121, %122, %cst_146 {dimension_numbers = #tpu.dot_dimension_numbers<[1], [0], [0], [1], [0, 0, 1, 1], [], []>} : vector<24x1152xbf16>, vector<1152x256xbf16>, vector<24x256xf32> -> vector<24x256xf32>
    %c0_147 = arith.constant 0 : index
    %c0_148 = arith.constant 0 : index
    %124 = vector.load %arg6[%c0_147, %c0_148] : memref<24x1xf32, #tpu.memory_space<vmem>>, vector<24x1xf32>
    %125 = vector.broadcast %124 : vector<24x1xf32> to vector<24x256xf32>
    %126 = arith.mulf %123, %125 : vector<24x256xf32>
    %cst_149 = arith.constant dense<0.000000e+00> : vector<256xf32>
    %127 = vector.multi_reduction <add>, %126, %cst_149 [0] : vector<24x256xf32> to vector<256xf32>
    %128 = vector.shape_cast %127 : vector<256xf32> to vector<1x256xf32>
    %cst_150 = arith.constant 1.800000e+01 : f32
    %129 = vector.broadcast %cst_150 : f32 to vector<1x256xf32>
    %130 = arith.divf %128, %129 : vector<1x256xf32>
    %131 = arith.mulf %126, %123 : vector<24x256xf32>
    %cst_151 = arith.constant dense<0.000000e+00> : vector<256xf32>
    %132 = vector.multi_reduction <add>, %131, %cst_151 [0] : vector<24x256xf32> to vector<256xf32>
    %133 = vector.shape_cast %132 : vector<256xf32> to vector<1x256xf32>
    %cst_152 = arith.constant 1.800000e+01 : f32
    %134 = vector.broadcast %cst_152 : f32 to vector<1x256xf32>
    %135 = arith.divf %133, %134 : vector<1x256xf32>
    %136 = arith.mulf %130, %130 : vector<1x256xf32>
    %137 = arith.subf %135, %136 : vector<1x256xf32>
    %cst_153 = arith.constant 0.000000e+00 : f32
    %138 = vector.broadcast %cst_153 : f32 to vector<1x256xf32>
    %139 = arith.maximumf %137, %138 : vector<1x256xf32>
    %cst_154 = arith.constant 9.99999974E-6 : f32
    %140 = vector.broadcast %cst_154 : f32 to vector<1x256xf32>
    %141 = arith.addf %139, %140 : vector<1x256xf32>
    %142 = math.rsqrt %141 : vector<1x256xf32>
    %c0_155 = arith.constant 0 : index
    %c0_156 = arith.constant 0 : index
    %143 = vector.load %arg9[%c0_155, %c0_156] : memref<1x256xf32, #tpu.memory_space<vmem>>, vector<1x256xf32>
    %144 = arith.mulf %142, %143 : vector<1x256xf32>
    %145 = vector.broadcast %130 : vector<1x256xf32> to vector<24x256xf32>
    %146 = arith.subf %123, %145 : vector<24x256xf32>
    %147 = vector.broadcast %144 : vector<1x256xf32> to vector<24x256xf32>
    %148 = arith.mulf %146, %147 : vector<24x256xf32>
    %c0_157 = arith.constant 0 : index
    %c0_158 = arith.constant 0 : index
    %149 = vector.load %arg10[%c0_157, %c0_158] : memref<1x256xf32, #tpu.memory_space<vmem>>, vector<1x256xf32>
    %150 = vector.broadcast %149 : vector<1x256xf32> to vector<24x256xf32>
    %151 = arith.addf %148, %150 : vector<24x256xf32>
    %cst_159 = arith.constant 0.000000e+00 : f32
    %152 = vector.broadcast %cst_159 : f32 to vector<24x256xf32>
    %153 = arith.cmpf oge, %151, %152 : vector<24x256xf32>
    %cst_160 = arith.constant 2.000000e-01 : f32
    %154 = vector.broadcast %cst_160 : f32 to vector<24x256xf32>
    %155 = arith.mulf %154, %151 : vector<24x256xf32>
    %156 = arith.select %153, %151, %155 : vector<24x256xi1>, vector<24x256xf32>
    %c0_161 = arith.constant 0 : index
    %c0_162 = arith.constant 0 : index
    %157 = vector.load %arg15[%c0_161, %c0_162] : memref<24x256xf32, #tpu.memory_space<vmem>>, vector<24x256xf32>
    tpu.vector_store %arg15[%c0_161, %c0_162], %156 {strides = array<i32>} : memref<24x256xf32, #tpu.memory_space<vmem>>, vector<24x256xf32>,
    %cst_163 = arith.constant 0.000000e+00 : f32
    %158 = vector.broadcast %cst_163 : f32 to vector<2x256xf32>
    %c0_164 = arith.constant 0 : index
    %c0_165 = arith.constant 0 : index
    %159 = vector.load %arg15[%c0_164, %c0_165] : memref<24x256xf32, #tpu.memory_space<vmem>>, vector<2x256xf32>
    %c0_166 = arith.constant 0 : index
    %c0_167 = arith.constant 0 : index
    %160 = vector.load %arg4[%c0_166, %c0_167] : memref<12x256xf32, #tpu.memory_space<vmem>>, vector<1x256xf32>
    %161 = vector.broadcast %160 : vector<1x256xf32> to vector<2x256xf32>
    %162 = arith.mulf %159, %161 : vector<2x256xf32>
    %163 = arith.addf %158, %162 : vector<2x256xf32>
    %c2_168 = arith.constant 2 : index
    %c0_169 = arith.constant 0 : index
    %164 = vector.load %arg15[%c2_168, %c0_169] : memref<24x256xf32, #tpu.memory_space<vmem>>, vector<2x256xf32>
    %c1 = arith.constant 1 : index
    %c0_170 = arith.constant 0 : index
    %165 = vector.load %arg4[%c1, %c0_170] : memref<12x256xf32, #tpu.memory_space<vmem>>, vector<1x256xf32>
    %166 = vector.broadcast %165 : vector<1x256xf32> to vector<2x256xf32>
    %167 = arith.mulf %164, %166 : vector<2x256xf32>
    %168 = arith.addf %163, %167 : vector<2x256xf32>
    %c4 = arith.constant 4 : index
    %c0_171 = arith.constant 0 : index
    %169 = vector.load %arg15[%c4, %c0_171] : memref<24x256xf32, #tpu.memory_space<vmem>>, vector<2x256xf32>
    %c2_172 = arith.constant 2 : index
    %c0_173 = arith.constant 0 : index
    %170 = vector.load %arg4[%c2_172, %c0_173] : memref<12x256xf32, #tpu.memory_space<vmem>>, vector<1x256xf32>
    %171 = vector.broadcast %170 : vector<1x256xf32> to vector<2x256xf32>
    %172 = arith.mulf %169, %171 : vector<2x256xf32>
    %173 = arith.addf %168, %172 : vector<2x256xf32>
    %c6 = arith.constant 6 : index
    %c0_174 = arith.constant 0 : index
    %174 = vector.load %arg15[%c6, %c0_174] : memref<24x256xf32, #tpu.memory_space<vmem>>, vector<2x256xf32>
    %c3 = arith.constant 3 : index
    %c0_175 = arith.constant 0 : index
    %175 = vector.load %arg4[%c3, %c0_175] : memref<12x256xf32, #tpu.memory_space<vmem>>, vector<1x256xf32>
    %176 = vector.broadcast %175 : vector<1x256xf32> to vector<2x256xf32>
    %177 = arith.mulf %174, %176 : vector<2x256xf32>
    %178 = arith.addf %173, %177 : vector<2x256xf32>
    %c8_176 = arith.constant 8 : index
    %c0_177 = arith.constant 0 : index
    %179 = vector.load %arg15[%c8_176, %c0_177] : memref<24x256xf32, #tpu.memory_space<vmem>>, vector<2x256xf32>
    %c4_178 = arith.constant 4 : index
    %c0_179 = arith.constant 0 : index
    %180 = vector.load %arg4[%c4_178, %c0_179] : memref<12x256xf32, #tpu.memory_space<vmem>>, vector<1x256xf32>
    %181 = vector.broadcast %180 : vector<1x256xf32> to vector<2x256xf32>
    %182 = arith.mulf %179, %181 : vector<2x256xf32>
    %183 = arith.addf %178, %182 : vector<2x256xf32>
    %c10_180 = arith.constant 10 : index
    %c0_181 = arith.constant 0 : index
    %184 = vector.load %arg15[%c10_180, %c0_181] : memref<24x256xf32, #tpu.memory_space<vmem>>, vector<2x256xf32>
    %c5 = arith.constant 5 : index
    %c0_182 = arith.constant 0 : index
    %185 = vector.load %arg4[%c5, %c0_182] : memref<12x256xf32, #tpu.memory_space<vmem>>, vector<1x256xf32>
    %186 = vector.broadcast %185 : vector<1x256xf32> to vector<2x256xf32>
    %187 = arith.mulf %184, %186 : vector<2x256xf32>
    %188 = arith.addf %183, %187 : vector<2x256xf32>
    %c12 = arith.constant 12 : index
    %c0_183 = arith.constant 0 : index
    %189 = vector.load %arg15[%c12, %c0_183] : memref<24x256xf32, #tpu.memory_space<vmem>>, vector<2x256xf32>
    %c6_184 = arith.constant 6 : index
    %c0_185 = arith.constant 0 : index
    %190 = vector.load %arg4[%c6_184, %c0_185] : memref<12x256xf32, #tpu.memory_space<vmem>>, vector<1x256xf32>
    %191 = vector.broadcast %190 : vector<1x256xf32> to vector<2x256xf32>
    %192 = arith.mulf %189, %191 : vector<2x256xf32>
    %193 = arith.addf %188, %192 : vector<2x256xf32>
    %c14 = arith.constant 14 : index
    %c0_186 = arith.constant 0 : index
    %194 = vector.load %arg15[%c14, %c0_186] : memref<24x256xf32, #tpu.memory_space<vmem>>, vector<2x256xf32>
    %c7 = arith.constant 7 : index
    %c0_187 = arith.constant 0 : index
    %195 = vector.load %arg4[%c7, %c0_187] : memref<12x256xf32, #tpu.memory_space<vmem>>, vector<1x256xf32>
    %196 = vector.broadcast %195 : vector<1x256xf32> to vector<2x256xf32>
    %197 = arith.mulf %194, %196 : vector<2x256xf32>
    %198 = arith.addf %193, %197 : vector<2x256xf32>
    %c16 = arith.constant 16 : index
    %c0_188 = arith.constant 0 : index
    %199 = vector.load %arg15[%c16, %c0_188] : memref<24x256xf32, #tpu.memory_space<vmem>>, vector<2x256xf32>
    %c8_189 = arith.constant 8 : index
    %c0_190 = arith.constant 0 : index
    %200 = vector.load %arg4[%c8_189, %c0_190] : memref<12x256xf32, #tpu.memory_space<vmem>>, vector<1x256xf32>
    %201 = vector.broadcast %200 : vector<1x256xf32> to vector<2x256xf32>
    %202 = arith.mulf %199, %201 : vector<2x256xf32>
    %203 = arith.addf %198, %202 : vector<2x256xf32>
    %c18 = arith.constant 18 : index
    %c0_191 = arith.constant 0 : index
    %204 = vector.load %arg15[%c18, %c0_191] : memref<24x256xf32, #tpu.memory_space<vmem>>, vector<2x256xf32>
    %c9 = arith.constant 9 : index
    %c0_192 = arith.constant 0 : index
    %205 = vector.load %arg4[%c9, %c0_192] : memref<12x256xf32, #tpu.memory_space<vmem>>, vector<1x256xf32>
    %206 = vector.broadcast %205 : vector<1x256xf32> to vector<2x256xf32>
    %207 = arith.mulf %204, %206 : vector<2x256xf32>
    %208 = arith.addf %203, %207 : vector<2x256xf32>
    %c20 = arith.constant 20 : index
    %c0_193 = arith.constant 0 : index
    %209 = vector.load %arg15[%c20, %c0_193] : memref<24x256xf32, #tpu.memory_space<vmem>>, vector<2x256xf32>
    %c10_194 = arith.constant 10 : index
    %c0_195 = arith.constant 0 : index
    %210 = vector.load %arg4[%c10_194, %c0_195] : memref<12x256xf32, #tpu.memory_space<vmem>>, vector<1x256xf32>
    %211 = vector.broadcast %210 : vector<1x256xf32> to vector<2x256xf32>
    %212 = arith.mulf %209, %211 : vector<2x256xf32>
    %213 = arith.addf %208, %212 : vector<2x256xf32>
    %c22 = arith.constant 22 : index
    %c0_196 = arith.constant 0 : index
    %214 = vector.load %arg15[%c22, %c0_196] : memref<24x256xf32, #tpu.memory_space<vmem>>, vector<2x256xf32>
    %c11 = arith.constant 11 : index
    %c0_197 = arith.constant 0 : index
    %215 = vector.load %arg4[%c11, %c0_197] : memref<12x256xf32, #tpu.memory_space<vmem>>, vector<1x256xf32>
    %216 = vector.broadcast %215 : vector<1x256xf32> to vector<2x256xf32>
    %217 = arith.mulf %214, %216 : vector<2x256xf32>
    %218 = arith.addf %213, %217 : vector<2x256xf32>
    %cst_198 = arith.constant dense<0.000000e+00> : vector<2xf32>
    %219 = vector.multi_reduction <add>, %218, %cst_198 [1] : vector<2x256xf32> to vector<2xf32>
    %220 = vector.shape_cast %219 : vector<2xf32> to vector<2x1xf32>
    %221 = arith.negf %220 : vector<2x1xf32>
    %222 = math.exp %221 : vector<2x1xf32>
    %cst_199 = arith.constant 1.000000e+00 : f32
    %223 = vector.broadcast %cst_199 : f32 to vector<2x1xf32>
    %224 = arith.addf %223, %222 : vector<2x1xf32>
    %225 = arith.divf %223, %224 : vector<2x1xf32>
    %c0_200 = arith.constant 0 : index
    %c0_201 = arith.constant 0 : index
    %226 = vector.load %arg11[%c0_200, %c0_201] : memref<2x1xf32, #tpu.memory_space<vmem>>, vector<2x1xf32>
    tpu.vector_store %arg11[%c0_200, %c0_201], %225 {strides = array<i32>} : memref<2x1xf32, #tpu.memory_space<vmem>>, vector<2x1xf32>,
    return
  }
}

</mosaic_0001>

<llo_original>
// kernel: discriminator_forward.1
$region0: #{discriminator_forward.1}
  #allocation0 [shape = 'u32[]', space=smem, size = 0x4, offset = 0x4, fixed_abs, tag = 'smem constant byte address 0x4 - core index']
  #allocation1 [shape = 'u32[72,128]{1,0:T(1,128)}', space=vmem, size = 0x9000, scoped, tag = 'internal scratch']
  #allocation2 [shape = 'bf16[1024,128]{1,0:T(8,128)(2,1)}', space=vmem, size = 0x40000, scoped, tag = 'scratch operand']
  #allocation3 [shape = 'bf16[192,1024]{1,0:T(8,128)(2,1)}', space=vmem, size = 0x60000, scoped, tag = 'scratch operand']
  #allocation4 [shape = 'bf16[192,128]{1,0:T(8,128)(2,1)}', space=vmem, size = 0xc000, scoped, tag = 'scratch operand']
  #allocation5 [shape = 'f32[24,256]{1,0:T(8,128)}', space=vmem, size = 0x6000, scoped, tag = 'scratch operand']
  %s0 = inlined_call_operand.vmem [shape: bf16[1024,160], index: 0, kind: input, shape index: {}]
  %s1 = inlined_call_operand.vmem [shape: bf16[160,128], index: 1, kind: input, shape index: {}]
  %s2 = inlined_call_operand.vmem [shape: bf16[1024,128], index: 2, kind: input, shape index: {}]
  %s3 = inlined_call_operand.vmem [shape: bf16[1152,256], index: 3, kind: input, shape index: {}]
  %s4 = inlined_call_operand.vmem [shape: f32[12,256], index: 4, kind: input, shape index: {}]
  %s5 = inlined_call_operand.vmem [shape: f32[192,1], index: 5, kind: input, shape index: {}]
  %s6 = inlined_call_operand.vmem [shape: f32[24,1], index: 6, kind: input, shape index: {}]
  %s7 = inlined_call_operand.vmem [shape: f32[1,128], index: 7, kind: input, shape index: {}]
  %s8 = inlined_call_operand.vmem [shape: f32[1,128], index: 8, kind: input, shape index: {}]
  %s9 = inlined_call_operand.vmem [shape: f32[1,256], index: 9, kind: input, shape index: {}]
  %s10 = inlined_call_operand.vmem [shape: f32[1,256], index: 10, kind: input, shape index: {}]
  %s11 = inlined_call_operand.vmem [shape: f32[2,1], index: 11, kind: output, shape index: {}]
  %s12 = sld [smem:[#allocation0]]
  $region54: #{discriminator_forward.1} parent=0
    _
  %s14 = ssub.s32 1, %s12
  %s15 = scalar_select 0, %s14, %s12
  // Predicated region
  $region2: #{discriminator_forward.1} parent=0 // pred_check
    _
  $region3: #{discriminator_forward.1} parent=0 // pred_check_branch
    %17 = sbr.rel (0) target = $region5
  $region4: #{discriminator_forward.1} parent=0 // pred_region
    _
  $region5: #{discriminator_forward.1} parent=0 // pred_fallthru
    _
  // Predicated region
  $region6: #{discriminator_forward.1} parent=0 // pred_check
    _
  $region7: #{discriminator_forward.1} parent=0 // pred_check_branch
    %19 = sbr.rel (0) target = $region9
  $region8: #{discriminator_forward.1} parent=0 // pred_region
    _
  $region9: #{discriminator_forward.1} parent=0 // pred_fallthru
    _
  // Predicated region
  $region10: #{discriminator_forward.1} parent=0 // pred_check
    _
  $region11: #{discriminator_forward.1} parent=0 // pred_check_branch
    %21 = sbr.rel (0) target = $region13
  $region12: #{discriminator_forward.1} parent=0 // pred_region
    _
  $region13: #{discriminator_forward.1} parent=0 // pred_fallthru
    _
  // Predicated region
  $region14: #{discriminator_forward.1} parent=0 // pred_check
    _
  $region15: #{discriminator_forward.1} parent=0 // pred_check_branch
    %23 = sbr.rel (0) target = $region17
  $region16: #{discriminator_forward.1} parent=0 // pred_region
    _
  $region17: #{discriminator_forward.1} parent=0 // pred_fallthru
    _
  // Predicated region
  $region18: #{discriminator_forward.1} parent=0 // pred_check
    _
  $region19: #{discriminator_forward.1} parent=0 // pred_check_branch
    %25 = sbr.rel (0) target = $region21
  $region20: #{discriminator_forward.1} parent=0 // pred_region
    _
  $region21: #{discriminator_forward.1} parent=0 // pred_fallthru
    _
  // Predicated region
  $region22: #{discriminator_forward.1} parent=0 // pred_check
    _
  $region23: #{discriminator_forward.1} parent=0 // pred_check_branch
    %27 = sbr.rel (0) target = $region25
  $region24: #{discriminator_forward.1} parent=0 // pred_region
    _
  $region25: #{discriminator_forward.1} parent=0 // pred_fallthru
    _
  // Predicated region
  $region26: #{discriminator_forward.1} parent=0 // pred_check
    _
  $region27: #{discriminator_forward.1} parent=0 // pred_check_branch
    %29 = sbr.rel (0) target = $region29
  $region28: #{discriminator_forward.1} parent=0 // pred_region
    _
  $region29: #{discriminator_forward.1} parent=0 // pred_fallthru
    _
  // Predicated region
  $region30: #{discriminator_forward.1} parent=0 // pred_check
    _
  $region31: #{discriminator_forward.1} parent=0 // pred_check_branch
    %31 = sbr.rel (0) target = $region33
  $region32: #{discriminator_forward.1} parent=0 // pred_region
    _
  $region33: #{discriminator_forward.1} parent=0 // pred_fallthru
    _
  // Predicated region
  $region34: #{discriminator_forward.1} parent=0 // pred_check
    _
  $region35: #{discriminator_forward.1} parent=0 // pred_check_branch
    %33 = sbr.rel (0) target = $region37
  $region36: #{discriminator_forward.1} parent=0 // pred_region
    _
  $region37: #{discriminator_forward.1} parent=0 // pred_fallthru
    _
  // Predicated region
  $region38: #{discriminator_forward.1} parent=0 // pred_check
    _
  $region39: #{discriminator_forward.1} parent=0 // pred_check_branch
    %35 = sbr.rel (0) target = $region41
  $region40: #{discriminator_forward.1} parent=0 // pred_region
    _
  $region41: #{discriminator_forward.1} parent=0 // pred_fallthru
    _
  // Predicated region
  $region42: #{discriminator_forward.1} parent=0 // pred_check
    _
  $region43: #{discriminator_forward.1} parent=0 // pred_check_branch
    %37 = sbr.rel (0) target = $region45
  $region44: #{discriminator_forward.1} parent=0 // pred_region
    _
  $region45: #{discriminator_forward.1} parent=0 // pred_fallthru
    _
  %v39 = vld [vmem:[%s0] sm:$0xff]
  %v40 = vld [vmem:[%s0 + $0x8] sm:$0xff]
  %v41 = vld [vmem:[%s0 + $0x10] sm:$0xff]
  %v42 = vld [vmem:[%s0 + $0x18] sm:$0xff]
  %v43 = vld [vmem:[%s0 + $0x20] sm:$0xff]
  %v44 = vld [vmem:[%s0 + $0x28] sm:$0xff]
  %v45 = vld [vmem:[%s0 + $0x30] sm:$0xff]
  %v46 = vld [vmem:[%s0 + $0x38] sm:$0xff]
  %v47 = vld [vmem:[%s0 + $0x40] sm:$0xff]
  %v48 = vld [vmem:[%s0 + $0x48] sm:$0xff]
  %v49 = vld [vmem:[%s0 + $0x50] sm:$0xff]
  %v50 = vld [vmem:[%s0 + $0x58] sm:$0xff]
  %v51 = vld [vmem:[%s0 + $0x60] sm:$0xff]
  %v52 = vld [vmem:[%s0 + $0x68] sm:$0xff]
  %v53 = vld [vmem:[%s0 + $0x70] sm:$0xff]
  %v54 = vld [vmem:[%s0 + $0x78] sm:$0xff]
  %v55 = vld [vmem:[%s0 + $0x80] sm:$0xff]
  %v56 = vld [vmem:[%s0 + $0x88] sm:$0xff]
  %v57 = vld [vmem:[%s0 + $0x90] sm:$0xff]
  %v58 = vld [vmem:[%s0 + $0x98] sm:$0xff]
  %v59 = vld [vmem:[%s0 + $0xa0] sm:$0xff]
  %v60 = vld [vmem:[%s0 + $0xa8] sm:$0xff]
  %v61 = vld [vmem:[%s0 + $0xb0] sm:$0xff]
  %v62 = vld [vmem:[%s0 + $0xb8] sm:$0xff]
  %v63 = vld [vmem:[%s0 + $0xc0] sm:$0xff]
  %v64 = vld [vmem:[%s0 + $0xc8] sm:$0xff]
  %v65 = vld [vmem:[%s0 + $0xd0] sm:$0xff]
  %v66 = vld [vmem:[%s0 + $0xd8] sm:$0xff]
  %v67 = vld [vmem:[%s0 + $0xe0] sm:$0xff]
  %v68 = vld [vmem:[%s0 + $0xe8] sm:$0xff]
  %v69 = vld [vmem:[%s0 + $0xf0] sm:$0xff]
  %v70 = vld [vmem:[%s0 + $0xf8] sm:$0xff]
  %v71 = vld [vmem:[%s0 + $0x100] sm:$0xff]
  %v72 = vld [vmem:[%s0 + $0x108] sm:$0xff]
  %v73 = vld [vmem:[%s0 + $0x110] sm:$0xff]
  %v74 = vld [vmem:[%s0 + $0x118] sm:$0xff]
  %v75 = vld [vmem:[%s0 + $0x120] sm:$0xff]
  %v76 = vld [vmem:[%s0 + $0x128] sm:$0xff]
  %v77 = vld [vmem:[%s0 + $0x130] sm:$0xff]
  %v78 = vld [vmem:[%s0 + $0x138] sm:$0xff]
  %v79 = vld [vmem:[%s0 + $0x140] sm:$0xff]
  %v80 = vld [vmem:[%s0 + $0x148] sm:$0xff]
  %v81 = vld [vmem:[%s0 + $0x150] sm:$0xff]
  %v82 = vld [vmem:[%s0 + $0x158] sm:$0xff]
  %v83 = vld [vmem:[%s0 + $0x160] sm:$0xff]
  %v84 = vld [vmem:[%s0 + $0x168] sm:$0xff]
  %v85 = vld [vmem:[%s0 + $0x170] sm:$0xff]
  %v86 = vld [vmem:[%s0 + $0x178] sm:$0xff]
  %v87 = vld [vmem:[%s0 + $0x180] sm:$0xff]
  %v88 = vld [vmem:[%s0 + $0x188] sm:$0xff]
  %v89 = vld [vmem:[%s0 + $0x190] sm:$0xff]
  %v90 = vld [vmem:[%s0 + $0x198] sm:$0xff]
  %v91 = vld [vmem:[%s0 + $0x1a0] sm:$0xff]
  %v92 = vld [vmem:[%s0 + $0x1a8] sm:$0xff]
  %v93 = vld [vmem:[%s0 + $0x1b0] sm:$0xff]
  %v94 = vld [vmem:[%s0 + $0x1b8] sm:$0xff]
  %v95 = vld [vmem:[%s0 + $0x1c0] sm:$0xff]
  %v96 = vld [vmem:[%s0 + $0x1c8] sm:$0xff]
  %v97 = vld [vmem:[%s0 + $0x1d0] sm:$0xff]
  %v98 = vld [vmem:[%s0 + $0x1d8] sm:$0xff]
  %v99 = vld [vmem:[%s0 + $0x1e0] sm:$0xff]
  %v100 = vld [vmem:[%s0 + $0x1e8] sm:$0xff]
  %v101 = vld [vmem:[%s0 + $0x1f0] sm:$0xff]
  %v102 = vld [vmem:[%s0 + $0x1f8] sm:$0xff]
  %v103 = vld [vmem:[%s0 + $0x200] sm:$0xff]
  %v104 = vld [vmem:[%s0 + $0x208] sm:$0xff]
  %v105 = vld [vmem:[%s0 + $0x210] sm:$0xff]
  %v106 = vld [vmem:[%s0 + $0x218] sm:$0xff]
  %v107 = vld [vmem:[%s0 + $0x220] sm:$0xff]
  %v108 = vld [vmem:[%s0 + $0x228] sm:$0xff]
  %v109 = vld [vmem:[%s0 + $0x230] sm:$0xff]
  %v110 = vld [vmem:[%s0 + $0x238] sm:$0xff]
  %v111 = vld [vmem:[%s0 + $0x240] sm:$0xff]
  %v112 = vld [vmem:[%s0 + $0x248] sm:$0xff]
  %v113 = vld [vmem:[%s0 + $0x250] sm:$0xff]
  %v114 = vld [vmem:[%s0 + $0x258] sm:$0xff]
  %v115 = vld [vmem:[%s0 + $0x260] sm:$0xff]
  %v116 = vld [vmem:[%s0 + $0x268] sm:$0xff]
  %v117 = vld [vmem:[%s0 + $0x270] sm:$0xff]
  %v118 = vld [vmem:[%s0 + $0x278] sm:$0xff]
  %v119 = vld [vmem:[%s0 + $0x280] sm:$0xff]
  %v120 = vld [vmem:[%s0 + $0x288] sm:$0xff]
  %v121 = vld [vmem:[%s0 + $0x290] sm:$0xff]
  %v122 = vld [vmem:[%s0 + $0x298] sm:$0xff]
  %v123 = vld [vmem:[%s0 + $0x2a0] sm:$0xff]
  %v124 = vld [vmem:[%s0 + $0x2a8] sm:$0xff]
  %v125 = vld [vmem:[%s0 + $0x2b0] sm:$0xff]
  %v126 = vld [vmem:[%s0 + $0x2b8] sm:$0xff]
  %v127 = vld [vmem:[%s0 + $0x2c0] sm:$0xff]
  %v128 = vld [vmem:[%s0 + $0x2c8] sm:$0xff]
  %v129 = vld [vmem:[%s0 + $0x2d0] sm:$0xff]
  %v130 = vld [vmem:[%s0 + $0x2d8] sm:$0xff]
  %v131 = vld [vmem:[%s0 + $0x2e0] sm:$0xff]
  %v132 = vld [vmem:[%s0 + $0x2e8] sm:$0xff]
  %v133 = vld [vmem:[%s0 + $0x2f0] sm:$0xff]
  %v134 = vld [vmem:[%s0 + $0x2f8] sm:$0xff]
  %v135 = vld [vmem:[%s0 + $0x300] sm:$0xff]
  %v136 = vld [vmem:[%s0 + $0x308] sm:$0xff]
  %v137 = vld [vmem:[%s0 + $0x310] sm:$0xff]
  %v138 = vld [vmem:[%s0 + $0x318] sm:$0xff]
  %v139 = vld [vmem:[%s0 + $0x320] sm:$0xff]
  %v140 = vld [vmem:[%s0 + $0x328] sm:$0xff]
  %v141 = vld [vmem:[%s0 + $0x330] sm:$0xff]
  %v142 = vld [vmem:[%s0 + $0x338] sm:$0xff]
  %v143 = vld [vmem:[%s0 + $0x340] sm:$0xff]
  %v144 = vld [vmem:[%s0 + $0x348] sm:$0xff]
  %v145 = vld [vmem:[%s0 + $0x350] sm:$0xff]
  %v146 = vld [vmem:[%s0 + $0x358] sm:$0xff]
  %v147 = vld [vmem:[%s0 + $0x360] sm:$0xff]
  %v148 = vld [vmem:[%s0 + $0x368] sm:$0xff]
  %v149 = vld [vmem:[%s0 + $0x370] sm:$0xff]
  %v150 = vld [vmem:[%s0 + $0x378] sm:$0xff]
  %v151 = vld [vmem:[%s0 + $0x380] sm:$0xff]
  %v152 = vld [vmem:[%s0 + $0x388] sm:$0xff]
  %v153 = vld [vmem:[%s0 + $0x390] sm:$0xff]
  %v154 = vld [vmem:[%s0 + $0x398] sm:$0xff]
  %v155 = vld [vmem:[%s0 + $0x3a0] sm:$0xff]
  %v156 = vld [vmem:[%s0 + $0x3a8] sm:$0xff]
  %v157 = vld [vmem:[%s0 + $0x3b0] sm:$0xff]
  %v158 = vld [vmem:[%s0 + $0x3b8] sm:$0xff]
  %v159 = vld [vmem:[%s0 + $0x3c0] sm:$0xff]
  %v160 = vld [vmem:[%s0 + $0x3c8] sm:$0xff]
  %v161 = vld [vmem:[%s0 + $0x3d0] sm:$0xff]
  %v162 = vld [vmem:[%s0 + $0x3d8] sm:$0xff]
  %v163 = vld [vmem:[%s0 + $0x3e0] sm:$0xff]
  %v164 = vld [vmem:[%s0 + $0x3e8] sm:$0xff]
  %v165 = vld [vmem:[%s0 + $0x3f0] sm:$0xff]
  %v166 = vld [vmem:[%s0 + $0x3f8] sm:$0xff]
  %v167 = vld [vmem:[%s1] sm:$0xf]
  %v168 = vld [vmem:[%s1 + $0x4] sm:$0xf]
  %v169 = vld [vmem:[%s1 + $0x8] sm:$0xf]
  %v170 = vld [vmem:[%s1 + $0xc] sm:$0xf]
  %v171 = vld [vmem:[%s1 + $0x10] sm:$0xf]
  %v172 = vld [vmem:[%s1 + $0x14] sm:$0xf]
  %v173 = vld [vmem:[%s1 + $0x18] sm:$0xf]
  %v174 = vld [vmem:[%s1 + $0x1c] sm:$0xf]
  %v175 = vld [vmem:[%s1 + $0x20] sm:$0xf]
  %v176 = vld [vmem:[%s1 + $0x24] sm:$0xf]
  %v177 = vld [vmem:[%s1 + $0x28] sm:$0xf]
  %v178 = vld [vmem:[%s1 + $0x2c] sm:$0xf]
  %v179 = vld [vmem:[%s1 + $0x30] sm:$0xf]
  %v180 = vld [vmem:[%s1 + $0x34] sm:$0xf]
  %v181 = vld [vmem:[%s1 + $0x38] sm:$0xf]
  %v182 = vld [vmem:[%s1 + $0x3c] sm:$0xf]
  %v183 = vld [vmem:[%s1 + $0x40] sm:$0xf]
  %v184 = vld [vmem:[%s1 + $0x44] sm:$0xf]
  %v185 = vld [vmem:[%s1 + $0x48] sm:$0xf]
  %v186 = vld [vmem:[%s1 + $0x4c] sm:$0xf]
  %v315 = vunpack.c.l.b16 %v39
  %v316 = vunpack.c.h.b16 %v39
  %v317 = vunpack.c.l.b16 %v40
  %v318 = vunpack.c.h.b16 %v40
  %v319 = vunpack.c.l.b16 %v41
  %v320 = vunpack.c.h.b16 %v41
  %v321 = vunpack.c.l.b16 %v42
  %v322 = vunpack.c.h.b16 %v42
  %v323 = vunpack.c.l.b16 %v43
  %v324 = vunpack.c.h.b16 %v43
  %v325 = vunpack.c.l.b16 %v44
  %v326 = vunpack.c.h.b16 %v44
  %v327 = vunpack.c.l.b16 %v45
  %v328 = vunpack.c.h.b16 %v45
  %v329 = vunpack.c.l.b16 %v46
  %v330 = vunpack.c.h.b16 %v46
  %v331 = vunpack.c.l.b16 %v47
  %v332 = vunpack.c.h.b16 %v47
  %v333 = vunpack.c.l.b16 %v48
  %v334 = vunpack.c.h.b16 %v48
  %v335 = vunpack.c.l.b16 %v49
  %v336 = vunpack.c.h.b16 %v49
  %v337 = vunpack.c.l.b16 %v50
  %v338 = vunpack.c.h.b16 %v50
  %v339 = vunpack.c.l.b16 %v51
  %v340 = vunpack.c.h.b16 %v51
  %v341 = vunpack.c.l.b16 %v52
  %v342 = vunpack.c.h.b16 %v52
  %v343 = vunpack.c.l.b16 %v53
  %v344 = vunpack.c.h.b16 %v53
  %v345 = vunpack.c.l.b16 %v54
  %v346 = vunpack.c.h.b16 %v54
  %v347 = vunpack.c.l.b16 %v55
  %v348 = vunpack.c.h.b16 %v55
  %v349 = vunpack.c.l.b16 %v56
  %v350 = vunpack.c.h.b16 %v56
  %v351 = vunpack.c.l.b16 %v57
  %v352 = vunpack.c.h.b16 %v57
  %v353 = vunpack.c.l.b16 %v58
  %v354 = vunpack.c.h.b16 %v58
  %v355 = vunpack.c.l.b16 %v59
  %v356 = vunpack.c.h.b16 %v59
  %v357 = vunpack.c.l.b16 %v60
  %v358 = vunpack.c.h.b16 %v60
  %v359 = vunpack.c.l.b16 %v61
  %v360 = vunpack.c.h.b16 %v61
  %v361 = vunpack.c.l.b16 %v62
  %v362 = vunpack.c.h.b16 %v62
  %v363 = vunpack.c.l.b16 %v63
  %v364 = vunpack.c.h.b16 %v63
  %v365 = vunpack.c.l.b16 %v64
  %v366 = vunpack.c.h.b16 %v64
  %v367 = vunpack.c.l.b16 %v65
  %v368 = vunpack.c.h.b16 %v65
  %v369 = vunpack.c.l.b16 %v66
  %v370 = vunpack.c.h.b16 %v66
  %v371 = vunpack.c.l.b16 %v67
  %v372 = vunpack.c.h.b16 %v67
  %v373 = vunpack.c.l.b16 %v68
  %v374 = vunpack.c.h.b16 %v68
  %v375 = vunpack.c.l.b16 %v69
  %v376 = vunpack.c.h.b16 %v69
  %v377 = vunpack.c.l.b16 %v70
  %v378 = vunpack.c.h.b16 %v70
  %v379 = vunpack.c.l.b16 %v71
  %v380 = vunpack.c.h.b16 %v71
  %v381 = vunpack.c.l.b16 %v72
  %v382 = vunpack.c.h.b16 %v72
  %v383 = vunpack.c.l.b16 %v73
  %v384 = vunpack.c.h.b16 %v73
  %v385 = vunpack.c.l.b16 %v74
  %v386 = vunpack.c.h.b16 %v74
  %v387 = vunpack.c.l.b16 %v75
  %v388 = vunpack.c.h.b16 %v75
  %v389 = vunpack.c.l.b16 %v76
  %v390 = vunpack.c.h.b16 %v76
  %v391 = vunpack.c.l.b16 %v77
  %v392 = vunpack.c.h.b16 %v77
  %v393 = vunpack.c.l.b16 %v78
  %v394 = vunpack.c.h.b16 %v78
  %v395 = vunpack.c.l.b16 %v79
  %v396 = vunpack.c.h.b16 %v79
  %v397 = vunpack.c.l.b16 %v80
  %v398 = vunpack.c.h.b16 %v80
  %v399 = vunpack.c.l.b16 %v81
  %v400 = vunpack.c.h.b16 %v81
  %v401 = vunpack.c.l.b16 %v82
  %v402 = vunpack.c.h.b16 %v82
  %v403 = vunpack.c.l.b16 %v83
  %v404 = vunpack.c.h.b16 %v83
  %v405 = vunpack.c.l.b16 %v84
  %v406 = vunpack.c.h.b16 %v84
  %v407 = vunpack.c.l.b16 %v85
  %v408 = vunpack.c.h.b16 %v85
  %v409 = vunpack.c.l.b16 %v86
  %v410 = vunpack.c.h.b16 %v86
  %v411 = vunpack.c.l.b16 %v87
  %v412 = vunpack.c.h.b16 %v87
  %v413 = vunpack.c.l.b16 %v88
  %v414 = vunpack.c.h.b16 %v88
  %v415 = vunpack.c.l.b16 %v89
  %v416 = vunpack.c.h.b16 %v89
  %v417 = vunpack.c.l.b16 %v90
  %v418 = vunpack.c.h.b16 %v90
  %v419 = vunpack.c.l.b16 %v91
  %v420 = vunpack.c.h.b16 %v91
  %v421 = vunpack.c.l.b16 %v92
  %v422 = vunpack.c.h.b16 %v92
  %v423 = vunpack.c.l.b16 %v93
  %v424 = vunpack.c.h.b16 %v93
  %v425 = vunpack.c.l.b16 %v94
  %v426 = vunpack.c.h.b16 %v94
  %v427 = vunpack.c.l.b16 %v95
  %v428 = vunpack.c.h.b16 %v95
  %v429 = vunpack.c.l.b16 %v96
  %v430 = vunpack.c.h.b16 %v96
  %v431 = vunpack.c.l.b16 %v97
  %v432 = vunpack.c.h.b16 %v97
  %v433 = vunpack.c.l.b16 %v98
  %v434 = vunpack.c.h.b16 %v98
  %v435 = vunpack.c.l.b16 %v99
  %v436 = vunpack.c.h.b16 %v99
  %v437 = vunpack.c.l.b16 %v100
  %v438 = vunpack.c.h.b16 %v100
  %v439 = vunpack.c.l.b16 %v101
  %v440 = vunpack.c.h.b16 %v101
  %v441 = vunpack.c.l.b16 %v102
  %v442 = vunpack.c.h.b16 %v102
  %v443 = vunpack.c.l.b16 %v103
  %v444 = vunpack.c.h.b16 %v103
  %v445 = vunpack.c.l.b16 %v104
  %v446 = vunpack.c.h.b16 %v104
  %v447 = vunpack.c.l.b16 %v105
  %v448 = vunpack.c.h.b16 %v105
  %v449 = vunpack.c.l.b16 %v106
  %v450 = vunpack.c.h.b16 %v106
  %v451 = vunpack.c.l.b16 %v107
  %v452 = vunpack.c.h.b16 %v107
  %v453 = vunpack.c.l.b16 %v108
  %v454 = vunpack.c.h.b16 %v108
  %v455 = vunpack.c.l.b16 %v109
  %v456 = vunpack.c.h.b16 %v109
  %v457 = vunpack.c.l.b16 %v110
  %v458 = vunpack.c.h.b16 %v110
  %v459 = vunpack.c.l.b16 %v111
  %v460 = vunpack.c.h.b16 %v111
  %v461 = vunpack.c.l.b16 %v112
  %v462 = vunpack.c.h.b16 %v112
  %v463 = vunpack.c.l.b16 %v113
  %v464 = vunpack.c.h.b16 %v113
  %v465 = vunpack.c.l.b16 %v114
  %v466 = vunpack.c.h.b16 %v114
  %v467 = vunpack.c.l.b16 %v115
  %v468 = vunpack.c.h.b16 %v115
  %v469 = vunpack.c.l.b16 %v116
  %v470 = vunpack.c.h.b16 %v116
  %v471 = vunpack.c.l.b16 %v117
  %v472 = vunpack.c.h.b16 %v117
  %v473 = vunpack.c.l.b16 %v118
  %v474 = vunpack.c.h.b16 %v118
  %v475 = vunpack.c.l.b16 %v119
  %v476 = vunpack.c.h.b16 %v119
  %v477 = vunpack.c.l.b16 %v120
  %v478 = vunpack.c.h.b16 %v120
  %v479 = vunpack.c.l.b16 %v121
  %v480 = vunpack.c.h.b16 %v121
  %v481 = vunpack.c.l.b16 %v122
  %v482 = vunpack.c.h.b16 %v122
  %v483 = vunpack.c.l.b16 %v123
  %v484 = vunpack.c.h.b16 %v123
  %v485 = vunpack.c.l.b16 %v124
  %v486 = vunpack.c.h.b16 %v124
  %v487 = vunpack.c.l.b16 %v125
  %v488 = vunpack.c.h.b16 %v125
  %v489 = vunpack.c.l.b16 %v126
  %v490 = vunpack.c.h.b16 %v126
  %v491 = vunpack.c.l.b16 %v127
  %v492 = vunpack.c.h.b16 %v127
  %v493 = vunpack.c.l.b16 %v128
  %v494 = vunpack.c.h.b16 %v128
  %v495 = vunpack.c.l.b16 %v129
  %v496 = vunpack.c.h.b16 %v129
  %v497 = vunpack.c.l.b16 %v130
  %v498 = vunpack.c.h.b16 %v130
  %v499 = vunpack.c.l.b16 %v131
  %v500 = vunpack.c.h.b16 %v131
  %v501 = vunpack.c.l.b16 %v132
  %v502 = vunpack.c.h.b16 %v132
  %v503 = vunpack.c.l.b16 %v133
  %v504 = vunpack.c.h.b16 %v133
  %v505 = vunpack.c.l.b16 %v134
  %v506 = vunpack.c.h.b16 %v134
  %v507 = vunpack.c.l.b16 %v135
  %v508 = vunpack.c.h.b16 %v135
  %v509 = vunpack.c.l.b16 %v136
  %v510 = vunpack.c.h.b16 %v136
  %v511 = vunpack.c.l.b16 %v137
  %v512 = vunpack.c.h.b16 %v137
  %v513 = vunpack.c.l.b16 %v138
  %v514 = vunpack.c.h.b16 %v138
  %v515 = vunpack.c.l.b16 %v139
  %v516 = vunpack.c.h.b16 %v139
  %v517 = vunpack.c.l.b16 %v140
  %v518 = vunpack.c.h.b16 %v140
  %v519 = vunpack.c.l.b16 %v141
  %v520 = vunpack.c.h.b16 %v141
  %v521 = vunpack.c.l.b16 %v142
  %v522 = vunpack.c.h.b16 %v142
  %v523 = vunpack.c.l.b16 %v143
  %v524 = vunpack.c.h.b16 %v143
  %v525 = vunpack.c.l.b16 %v144
  %v526 = vunpack.c.h.b16 %v144
  %v527 = vunpack.c.l.b16 %v145
  %v528 = vunpack.c.h.b16 %v145
  %v529 = vunpack.c.l.b16 %v146
  %v530 = vunpack.c.h.b16 %v146
  %v531 = vunpack.c.l.b16 %v147
  %v532 = vunpack.c.h.b16 %v147
  %v533 = vunpack.c.l.b16 %v148
  %v534 = vunpack.c.h.b16 %v148
  %v535 = vunpack.c.l.b16 %v149
  %v536 = vunpack.c.h.b16 %v149
  %v537 = vunpack.c.l.b16 %v150
  %v538 = vunpack.c.h.b16 %v150
  %v539 = vunpack.c.l.b16 %v151
  %v540 = vunpack.c.h.b16 %v151
  %v541 = vunpack.c.l.b16 %v152
  %v542 = vunpack.c.h.b16 %v152
  %v543 = vunpack.c.l.b16 %v153
  %v544 = vunpack.c.h.b16 %v153
  %v545 = vunpack.c.l.b16 %v154
  %v546 = vunpack.c.h.b16 %v154
  %v547 = vunpack.c.l.b16 %v155
  %v548 = vunpack.c.h.b16 %v155
  %v549 = vunpack.c.l.b16 %v156
  %v550 = vunpack.c.h.b16 %v156
  %v551 = vunpack.c.l.b16 %v157
  %v552 = vunpack.c.h.b16 %v157
  %v553 = vunpack.c.l.b16 %v158
  %v554 = vunpack.c.h.b16 %v158
  %v555 = vunpack.c.l.b16 %v159
  %v556 = vunpack.c.h.b16 %v159
  %v557 = vunpack.c.l.b16 %v160
  %v558 = vunpack.c.h.b16 %v160
  %v559 = vunpack.c.l.b16 %v161
  %v560 = vunpack.c.h.b16 %v161
  %v561 = vunpack.c.l.b16 %v162
  %v562 = vunpack.c.h.b16 %v162
  %v563 = vunpack.c.l.b16 %v163
  %v564 = vunpack.c.h.b16 %v163
  %v565 = vunpack.c.l.b16 %v164
  %v566 = vunpack.c.h.b16 %v164
  %v567 = vunpack.c.l.b16 %v165
  %v568 = vunpack.c.h.b16 %v165
  %v569 = vunpack.c.l.b16 %v166
  %v570 = vunpack.c.h.b16 %v166
  %v571 = vpack.c.b16 %v317, %v315
  %v572 = vpack.c.b16 %v318, %v316
  %v573 = vpack.c.b16 %v321, %v319
  %v574 = vpack.c.b16 %v322, %v320
  %v575 = vpack.c.b16 %v325, %v323
  %v576 = vpack.c.b16 %v326, %v324
  %v577 = vpack.c.b16 %v329, %v327
  %v578 = vpack.c.b16 %v330, %v328
  %v579 = vpack.c.b16 %v333, %v331
  %v580 = vpack.c.b16 %v334, %v332
  %v581 = vpack.c.b16 %v337, %v335
  %v582 = vpack.c.b16 %v338, %v336
  %v583 = vpack.c.b16 %v341, %v339
  %v584 = vpack.c.b16 %v342, %v340
  %v585 = vpack.c.b16 %v345, %v343
  %v586 = vpack.c.b16 %v346, %v344
  %v587 = vpack.c.b16 %v349, %v347
  %v588 = vpack.c.b16 %v350, %v348
  %v589 = vpack.c.b16 %v353, %v351
  %v590 = vpack.c.b16 %v354, %v352
  %v591 = vpack.c.b16 %v357, %v355
  %v592 = vpack.c.b16 %v358, %v356
  %v593 = vpack.c.b16 %v361, %v359
  %v594 = vpack.c.b16 %v362, %v360
  %v595 = vpack.c.b16 %v365, %v363
  %v596 = vpack.c.b16 %v366, %v364
  %v597 = vpack.c.b16 %v369, %v367
  %v598 = vpack.c.b16 %v370, %v368
  %v599 = vpack.c.b16 %v373, %v371
  %v600 = vpack.c.b16 %v374, %v372
  %v601 = vpack.c.b16 %v377, %v375
  %v602 = vpack.c.b16 %v378, %v376
  %v603 = vpack.c.b16 %v381, %v379
  %v604 = vpack.c.b16 %v382, %v380
  %v605 = vpack.c.b16 %v385, %v383
  %v606 = vpack.c.b16 %v386, %v384
  %v607 = vpack.c.b16 %v389, %v387
  %v608 = vpack.c.b16 %v390, %v388
  %v609 = vpack.c.b16 %v393, %v391
  %v610 = vpack.c.b16 %v394, %v392
  %v611 = vpack.c.b16 %v397, %v395
  %v612 = vpack.c.b16 %v398, %v396
  %v613 = vpack.c.b16 %v401, %v399
  %v614 = vpack.c.b16 %v402, %v400
  %v615 = vpack.c.b16 %v405, %v403
  %v616 = vpack.c.b16 %v406, %v404
  %v617 = vpack.c.b16 %v409, %v407
  %v618 = vpack.c.b16 %v410, %v408
  %v619 = vpack.c.b16 %v413, %v411
  %v620 = vpack.c.b16 %v414, %v412
  %v621 = vpack.c.b16 %v417, %v415
  %v622 = vpack.c.b16 %v418, %v416
  %v623 = vpack.c.b16 %v421, %v419
  %v624 = vpack.c.b16 %v422, %v420
  %v625 = vpack.c.b16 %v425, %v423
  %v626 = vpack.c.b16 %v426, %v424
  %v627 = vpack.c.b16 %v429, %v427
  %v628 = vpack.c.b16 %v430, %v428
  %v629 = vpack.c.b16 %v433, %v431
  %v630 = vpack.c.b16 %v434, %v432
  %v631 = vpack.c.b16 %v437, %v435
  %v632 = vpack.c.b16 %v438, %v436
  %v633 = vpack.c.b16 %v441, %v439
  %v634 = vpack.c.b16 %v442, %v440
  %v635 = vpack.c.b16 %v445, %v443
  %v636 = vpack.c.b16 %v446, %v444
  %v637 = vpack.c.b16 %v449, %v447
  %v638 = vpack.c.b16 %v450, %v448
  %v639 = vpack.c.b16 %v453, %v451
  %v640 = vpack.c.b16 %v454, %v452
  %v641 = vpack.c.b16 %v457, %v455
  %v642 = vpack.c.b16 %v458, %v456
  %v643 = vpack.c.b16 %v461, %v459
  %v644 = vpack.c.b16 %v462, %v460
  %v645 = vpack.c.b16 %v465, %v463
  %v646 = vpack.c.b16 %v466, %v464
  %v647 = vpack.c.b16 %v469, %v467
  %v648 = vpack.c.b16 %v470, %v468
  %v649 = vpack.c.b16 %v473, %v471
  %v650 = vpack.c.b16 %v474, %v472
  %v651 = vpack.c.b16 %v477, %v475
  %v652 = vpack.c.b16 %v478, %v476
  %v653 = vpack.c.b16 %v481, %v479
  %v654 = vpack.c.b16 %v482, %v480
  %v655 = vpack.c.b16 %v485, %v483
  %v656 = vpack.c.b16 %v486, %v484
  %v657 = vpack.c.b16 %v489, %v487
  %v658 = vpack.c.b16 %v490, %v488
  %v659 = vpack.c.b16 %v493, %v491
  %v660 = vpack.c.b16 %v494, %v492
  %v661 = vpack.c.b16 %v497, %v495
  %v662 = vpack.c.b16 %v498, %v496
  %v663 = vpack.c.b16 %v501, %v499
  %v664 = vpack.c.b16 %v502, %v500
  %v665 = vpack.c.b16 %v505, %v503
  %v666 = vpack.c.b16 %v506, %v504
  %v667 = vpack.c.b16 %v509, %v507
  %v668 = vpack.c.b16 %v510, %v508
  %v669 = vpack.c.b16 %v513, %v511
  %v670 = vpack.c.b16 %v514, %v512
  %v671 = vpack.c.b16 %v517, %v515
  %v672 = vpack.c.b16 %v518, %v516
  %v673 = vpack.c.b16 %v521, %v519
  %v674 = vpack.c.b16 %v522, %v520
  %v675 = vpack.c.b16 %v525, %v523
  %v676 = vpack.c.b16 %v526, %v524
  %v677 = vpack.c.b16 %v529, %v527
  %v678 = vpack.c.b16 %v530, %v528
  %v679 = vpack.c.b16 %v533, %v531
  %v680 = vpack.c.b16 %v534, %v532
  %v681 = vpack.c.b16 %v537, %v535
  %v682 = vpack.c.b16 %v538, %v536
  %v683 = vpack.c.b16 %v541, %v539
  %v684 = vpack.c.b16 %v542, %v540
  %v685 = vpack.c.b16 %v545, %v543
  %v686 = vpack.c.b16 %v546, %v544
  %v687 = vpack.c.b16 %v549, %v547
  %v688 = vpack.c.b16 %v550, %v548
  %v689 = vpack.c.b16 %v553, %v551
  %v690 = vpack.c.b16 %v554, %v552
  %v691 = vpack.c.b16 %v557, %v555
  %v692 = vpack.c.b16 %v558, %v556
  %v693 = vpack.c.b16 %v561, %v559
  %v694 = vpack.c.b16 %v562, %v560
  %v695 = vpack.c.b16 %v565, %v563
  %v696 = vpack.c.b16 %v566, %v564
  %v697 = vpack.c.b16 %v569, %v567
  %v698 = vpack.c.b16 %v570, %v568
  %v783 = vunpack.c.l.b16 %v167
  %v784 = vunpack.c.l.b16 %v168
  %v785 = vunpack.c.l.b16 %v169
  %v786 = vunpack.c.l.b16 %v170
  %v787 = vunpack.c.l.b16 %v171
  %v788 = vunpack.c.l.b16 %v172
  %v789 = vunpack.c.l.b16 %v173
  %v790 = vunpack.c.l.b16 %v174
  %v791 = vunpack.c.l.b16 %v175
  %v792 = vunpack.c.l.b16 %v176
  %v793 = vunpack.c.l.b16 %v177
  %v794 = vunpack.c.l.b16 %v178
  %v795 = vunpack.c.l.b16 %v179
  %v796 = vunpack.c.l.b16 %v180
  %v797 = vunpack.c.l.b16 %v181
  %v798 = vunpack.c.l.b16 %v182
  %v799 = vunpack.c.l.b16 %v183
  %v800 = vunpack.c.l.b16 %v184
  %v801 = vunpack.c.l.b16 %v185
  %v802 = vunpack.c.l.b16 %v186
  %v803 = vpack.c.b16 %v784, %v783
  %v804 = vpack.c.b16 %v786, %v785
  %v805 = vpack.c.b16 %v788, %v787
  %v806 = vpack.c.b16 %v790, %v789
  %v807 = vpack.c.b16 %v792, %v791
  %v808 = vpack.c.b16 %v794, %v793
  %v809 = vpack.c.b16 %v796, %v795
  %v810 = vpack.c.b16 %v798, %v797
  %v811 = vpack.c.b16 %v800, %v799
  %v812 = vpack.c.b16 %v802, %v801
  %vm823 = vcmask 261120
  %v825 = vsel %vm823, %v572, 0
  %v828 = vsel %vm823, %v574, 0
  %v831 = vsel %vm823, %v576, 0
  %v834 = vsel %vm823, %v578, 0
  %v837 = vsel %vm823, %v580, 0
  %v840 = vsel %vm823, %v582, 0
  %v843 = vsel %vm823, %v584, 0
  %v846 = vsel %vm823, %v586, 0
  %v849 = vsel %vm823, %v588, 0
  %v852 = vsel %vm823, %v590, 0
  %v855 = vsel %vm823, %v592, 0
  %v858 = vsel %vm823, %v594, 0
  %v861 = vsel %vm823, %v596, 0
  %v864 = vsel %vm823, %v598, 0
  %v867 = vsel %vm823, %v600, 0
  %v870 = vsel %vm823, %v602, 0
  %v873 = vsel %vm823, %v604, 0
  %v876 = vsel %vm823, %v606, 0
  %v879 = vsel %vm823, %v608, 0
  %v882 = vsel %vm823, %v610, 0
  %v885 = vsel %vm823, %v612, 0
  %v888 = vsel %vm823, %v614, 0
  %v891 = vsel %vm823, %v616, 0
  %v894 = vsel %vm823, %v618, 0
  %v897 = vsel %vm823, %v620, 0
  %v900 = vsel %vm823, %v622, 0
  %v903 = vsel %vm823, %v624, 0
  %v906 = vsel %vm823, %v626, 0
  %v909 = vsel %vm823, %v628, 0
  %v912 = vsel %vm823, %v630, 0
  %v915 = vsel %vm823, %v632, 0
  %v918 = vsel %vm823, %v634, 0
  %v921 = vsel %vm823, %v636, 0
  %v924 = vsel %vm823, %v638, 0
  %v927 = vsel %vm823, %v640, 0
  %v930 = vsel %vm823, %v642, 0
  %v933 = vsel %vm823, %v644, 0
  %v936 = vsel %vm823, %v646, 0
  %v939 = vsel %vm823, %v648, 0
  %v942 = vsel %vm823, %v650, 0
  %v945 = vsel %vm823, %v652, 0
  %v948 = vsel %vm823, %v654, 0
  %v951 = vsel %vm823, %v656, 0
  %v954 = vsel %vm823, %v658, 0
  %v957 = vsel %vm823, %v660, 0
  %v960 = vsel %vm823, %v662, 0
  %v963 = vsel %vm823, %v664, 0
  %v966 = vsel %vm823, %v666, 0
  %v969 = vsel %vm823, %v668, 0
  %v972 = vsel %vm823, %v670, 0
  %v975 = vsel %vm823, %v672, 0
  %v978 = vsel %vm823, %v674, 0
  %v981 = vsel %vm823, %v676, 0
  %v984 = vsel %vm823, %v678, 0
  %v987 = vsel %vm823, %v680, 0
  %v990 = vsel %vm823, %v682, 0
  %v993 = vsel %vm823, %v684, 0
  %v996 = vsel %vm823, %v686, 0
  %v999 = vsel %vm823, %v688, 0
  %v1002 = vsel %vm823, %v690, 0
  %v1005 = vsel %vm823, %v692, 0
  %v1008 = vsel %vm823, %v694, 0
  %v1011 = vsel %vm823, %v696, 0
  %v1014 = vsel %vm823, %v698, 0
  %1016 = vmatpush.bf16.msra.mxu0 %v810
  %1017 = vmatpush.bf16.msra.mxu0 %v809
  %1018 = vmatpush.bf16.msra.mxu0 %v808
  %1019 = vmatpush.bf16.msra.mxu0 %v807
  %1020 = vmatpush.bf16.msra.mxu0 %v806
  %1021 = vmatpush.bf16.msra.mxu0 %v805
  %1022 = vmatpush.bf16.msra.mxu0 %v804
  %1023 = vmatpush.bf16.msra.mxu0 %v803
  %1024 = vmatmul.bf16.gmra.mxu0 %v571
  %v1025 = vpop.f32.mrf.mxu0
  %v1026 = vadd.f32 0.0, %v1025
  %v1027 = vpop.f32.mrf.mxu0
  %v1028 = vadd.f32 0.0, %v1027
  %1029 = vmatmul.bf16.gmra.mxu0 %v573
  %v1030 = vpop.f32.mrf.mxu0
  %v1031 = vadd.f32 0.0, %v1030
  %v1032 = vpop.f32.mrf.mxu0
  %v1033 = vadd.f32 0.0, %v1032
  %1034 = vmatmul.bf16.gmra.mxu0 %v575
  %v1035 = vpop.f32.mrf.mxu0
  %v1036 = vadd.f32 0.0, %v1035
  %v1037 = vpop.f32.mrf.mxu0
  %v1038 = vadd.f32 0.0, %v1037
  %1039 = vmatmul.bf16.gmra.mxu0 %v577
  %v1040 = vpop.f32.mrf.mxu0
  %v1041 = vadd.f32 0.0, %v1040
  %v1042 = vpop.f32.mrf.mxu0
  %v1043 = vadd.f32 0.0, %v1042
  %1044 = vmatmul.bf16.gmra.mxu0 %v579
  %v1045 = vpop.f32.mrf.mxu0
  %v1046 = vadd.f32 0.0, %v1045
  %v1047 = vpop.f32.mrf.mxu0
  %v1048 = vadd.f32 0.0, %v1047
  %1049 = vmatmul.bf16.gmra.mxu0 %v581
  %v1050 = vpop.f32.mrf.mxu0
  %v1051 = vadd.f32 0.0, %v1050
  %v1052 = vpop.f32.mrf.mxu0
  %v1053 = vadd.f32 0.0, %v1052
  %1054 = vmatmul.bf16.gmra.mxu0 %v583
  %v1055 = vpop.f32.mrf.mxu0
  %v1056 = vadd.f32 0.0, %v1055
  %v1057 = vpop.f32.mrf.mxu0
  %v1058 = vadd.f32 0.0, %v1057
  %1059 = vmatmul.bf16.gmra.mxu0 %v585
  %v1060 = vpop.f32.mrf.mxu0
  %v1061 = vadd.f32 0.0, %v1060
  %v1062 = vpop.f32.mrf.mxu0
  %v1063 = vadd.f32 0.0, %v1062
  %1064 = vmatmul.bf16.gmra.mxu0 %v587
  %v1065 = vpop.f32.mrf.mxu0
  %v1066 = vadd.f32 0.0, %v1065
  %v1067 = vpop.f32.mrf.mxu0
  %v1068 = vadd.f32 0.0, %v1067
  %1069 = vmatmul.bf16.gmra.mxu0 %v589
  %v1070 = vpop.f32.mrf.mxu0
  %v1071 = vadd.f32 0.0, %v1070
  %v1072 = vpop.f32.mrf.mxu0
  %v1073 = vadd.f32 0.0, %v1072
  %1074 = vmatmul.bf16.gmra.mxu0 %v591
  %v1075 = vpop.f32.mrf.mxu0
  %v1076 = vadd.f32 0.0, %v1075
  %v1077 = vpop.f32.mrf.mxu0
  %v1078 = vadd.f32 0.0, %v1077
  %1079 = vmatmul.bf16.gmra.mxu0 %v593
  %v1080 = vpop.f32.mrf.mxu0
  %v1081 = vadd.f32 0.0, %v1080
  %v1082 = vpop.f32.mrf.mxu0
  %v1083 = vadd.f32 0.0, %v1082
  %1084 = vmatmul.bf16.gmra.mxu0 %v595
  %v1085 = vpop.f32.mrf.mxu0
  %v1086 = vadd.f32 0.0, %v1085
  %v1087 = vpop.f32.mrf.mxu0
  %v1088 = vadd.f32 0.0, %v1087
  %1089 = vmatmul.bf16.gmra.mxu0 %v597
  %v1090 = vpop.f32.mrf.mxu0
  %v1091 = vadd.f32 0.0, %v1090
  %v1092 = vpop.f32.mrf.mxu0
  %v1093 = vadd.f32 0.0, %v1092
  %1094 = vmatmul.bf16.gmra.mxu0 %v599
  %v1095 = vpop.f32.mrf.mxu0
  %v1096 = vadd.f32 0.0, %v1095
  %v1097 = vpop.f32.mrf.mxu0
  %v1098 = vadd.f32 0.0, %v1097
  %1099 = vmatmul.bf16.gmra.mxu0 %v601
  %v1100 = vpop.f32.mrf.mxu0
  %v1101 = vadd.f32 0.0, %v1100
  %v1102 = vpop.f32.mrf.mxu0
  %v1103 = vadd.f32 0.0, %v1102
  %1104 = vmatmul.bf16.gmra.mxu0 %v603
  %v1105 = vpop.f32.mrf.mxu0
  %v1106 = vadd.f32 0.0, %v1105
  %v1107 = vpop.f32.mrf.mxu0
  %v1108 = vadd.f32 0.0, %v1107
  %1109 = vmatmul.bf16.gmra.mxu0 %v605
  %v1110 = vpop.f32.mrf.mxu0
  %v1111 = vadd.f32 0.0, %v1110
  %v1112 = vpop.f32.mrf.mxu0
  %v1113 = vadd.f32 0.0, %v1112
  %1114 = vmatmul.bf16.gmra.mxu0 %v607
  %v1115 = vpop.f32.mrf.mxu0
  %v1116 = vadd.f32 0.0, %v1115
  %v1117 = vpop.f32.mrf.mxu0
  %v1118 = vadd.f32 0.0, %v1117
  %1119 = vmatmul.bf16.gmra.mxu0 %v609
  %v1120 = vpop.f32.mrf.mxu0
  %v1121 = vadd.f32 0.0, %v1120
  %v1122 = vpop.f32.mrf.mxu0
  %v1123 = vadd.f32 0.0, %v1122
  %1124 = vmatmul.bf16.gmra.mxu0 %v611
  %v1125 = vpop.f32.mrf.mxu0
  %v1126 = vadd.f32 0.0, %v1125
  %v1127 = vpop.f32.mrf.mxu0
  %v1128 = vadd.f32 0.0, %v1127
  %1129 = vmatmul.bf16.gmra.mxu0 %v613
  %v1130 = vpop.f32.mrf.mxu0
  %v1131 = vadd.f32 0.0, %v1130
  %v1132 = vpop.f32.mrf.mxu0
  %v1133 = vadd.f32 0.0, %v1132
  %1134 = vmatmul.bf16.gmra.mxu0 %v615
  %v1135 = vpop.f32.mrf.mxu0
  %v1136 = vadd.f32 0.0, %v1135
  %v1137 = vpop.f32.mrf.mxu0
  %v1138 = vadd.f32 0.0, %v1137
  %1139 = vmatmul.bf16.gmra.mxu0 %v617
  %v1140 = vpop.f32.mrf.mxu0
  %v1141 = vadd.f32 0.0, %v1140
  %v1142 = vpop.f32.mrf.mxu0
  %v1143 = vadd.f32 0.0, %v1142
  %1144 = vmatmul.bf16.gmra.mxu0 %v619
  %v1145 = vpop.f32.mrf.mxu0
  %v1146 = vadd.f32 0.0, %v1145
  %v1147 = vpop.f32.mrf.mxu0
  %v1148 = vadd.f32 0.0, %v1147
  %1149 = vmatmul.bf16.gmra.mxu0 %v621
  %v1150 = vpop.f32.mrf.mxu0
  %v1151 = vadd.f32 0.0, %v1150
  %v1152 = vpop.f32.mrf.mxu0
  %v1153 = vadd.f32 0.0, %v1152
  %1154 = vmatmul.bf16.gmra.mxu0 %v623
  %v1155 = vpop.f32.mrf.mxu0
  %v1156 = vadd.f32 0.0, %v1155
  %v1157 = vpop.f32.mrf.mxu0
  %v1158 = vadd.f32 0.0, %v1157
  %1159 = vmatmul.bf16.gmra.mxu0 %v625
  %v1160 = vpop.f32.mrf.mxu0
  %v1161 = vadd.f32 0.0, %v1160
  %v1162 = vpop.f32.mrf.mxu0
  %v1163 = vadd.f32 0.0, %v1162
  %1164 = vmatmul.bf16.gmra.mxu0 %v627
  %v1165 = vpop.f32.mrf.mxu0
  %v1166 = vadd.f32 0.0, %v1165
  %v1167 = vpop.f32.mrf.mxu0
  %v1168 = vadd.f32 0.0, %v1167
  %1169 = vmatmul.bf16.gmra.mxu0 %v629
  %v1170 = vpop.f32.mrf.mxu0
  %v1171 = vadd.f32 0.0, %v1170
  %v1172 = vpop.f32.mrf.mxu0
  %v1173 = vadd.f32 0.0, %v1172
  %1174 = vmatmul.bf16.gmra.mxu0 %v631
  %v1175 = vpop.f32.mrf.mxu0
  %v1176 = vadd.f32 0.0, %v1175
  %v1177 = vpop.f32.mrf.mxu0
  %v1178 = vadd.f32 0.0, %v1177
  %1179 = vmatmul.bf16.gmra.mxu0 %v633
  %v1180 = vpop.f32.mrf.mxu0
  %v1181 = vadd.f32 0.0, %v1180
  %v1182 = vpop.f32.mrf.mxu0
  %v1183 = vadd.f32 0.0, %v1182
  %1184 = vmatmul.bf16.gmra.mxu0 %v635
  %v1185 = vpop.f32.mrf.mxu0
  %v1186 = vadd.f32 0.0, %v1185
  %v1187 = vpop.f32.mrf.mxu0
  %v1188 = vadd.f32 0.0, %v1187
  %1189 = vmatmul.bf16.gmra.mxu0 %v637
  %v1190 = vpop.f32.mrf.mxu0
  %v1191 = vadd.f32 0.0, %v1190
  %v1192 = vpop.f32.mrf.mxu0
  %v1193 = vadd.f32 0.0, %v1192
  %1194 = vmatmul.bf16.gmra.mxu0 %v639
  %v1195 = vpop.f32.mrf.mxu0
  %v1196 = vadd.f32 0.0, %v1195
  %v1197 = vpop.f32.mrf.mxu0
  %v1198 = vadd.f32 0.0, %v1197
  %1199 = vmatmul.bf16.gmra.mxu0 %v641
  %v1200 = vpop.f32.mrf.mxu0
  %v1201 = vadd.f32 0.0, %v1200
  %v1202 = vpop.f32.mrf.mxu0
  %v1203 = vadd.f32 0.0, %v1202
  %1204 = vmatmul.bf16.gmra.mxu0 %v643
  %v1205 = vpop.f32.mrf.mxu0
  %v1206 = vadd.f32 0.0, %v1205
  %v1207 = vpop.f32.mrf.mxu0
  %v1208 = vadd.f32 0.0, %v1207
  %1209 = vmatmul.bf16.gmra.mxu0 %v645
  %v1210 = vpop.f32.mrf.mxu0
  %v1211 = vadd.f32 0.0, %v1210
  %v1212 = vpop.f32.mrf.mxu0
  %v1213 = vadd.f32 0.0, %v1212
  %1214 = vmatmul.bf16.gmra.mxu0 %v647
  %v1215 = vpop.f32.mrf.mxu0
  %v1216 = vadd.f32 0.0, %v1215
  %v1217 = vpop.f32.mrf.mxu0
  %v1218 = vadd.f32 0.0, %v1217
  %1219 = vmatmul.bf16.gmra.mxu0 %v649
  %v1220 = vpop.f32.mrf.mxu0
  %v1221 = vadd.f32 0.0, %v1220
  %v1222 = vpop.f32.mrf.mxu0
  %v1223 = vadd.f32 0.0, %v1222
  %1224 = vmatmul.bf16.gmra.mxu0 %v651
  %v1225 = vpop.f32.mrf.mxu0
  %v1226 = vadd.f32 0.0, %v1225
  %v1227 = vpop.f32.mrf.mxu0
  %v1228 = vadd.f32 0.0, %v1227
  %1229 = vmatmul.bf16.gmra.mxu0 %v653
  %v1230 = vpop.f32.mrf.mxu0
  %v1231 = vadd.f32 0.0, %v1230
  %v1232 = vpop.f32.mrf.mxu0
  %v1233 = vadd.f32 0.0, %v1232
  %1234 = vmatmul.bf16.gmra.mxu0 %v655
  %v1235 = vpop.f32.mrf.mxu0
  %v1236 = vadd.f32 0.0, %v1235
  %v1237 = vpop.f32.mrf.mxu0
  %v1238 = vadd.f32 0.0, %v1237
  %1239 = vmatmul.bf16.gmra.mxu0 %v657
  %v1240 = vpop.f32.mrf.mxu0
  %v1241 = vadd.f32 0.0, %v1240
  %v1242 = vpop.f32.mrf.mxu0
  %v1243 = vadd.f32 0.0, %v1242
  %1244 = vmatmul.bf16.gmra.mxu0 %v659
  %v1245 = vpop.f32.mrf.mxu0
  %v1246 = vadd.f32 0.0, %v1245
  %v1247 = vpop.f32.mrf.mxu0
  %v1248 = vadd.f32 0.0, %v1247
  %1249 = vmatmul.bf16.gmra.mxu0 %v661
  %v1250 = vpop.f32.mrf.mxu0
  %v1251 = vadd.f32 0.0, %v1250
  %v1252 = vpop.f32.mrf.mxu0
  %v1253 = vadd.f32 0.0, %v1252
  %1254 = vmatmul.bf16.gmra.mxu0 %v663
  %v1255 = vpop.f32.mrf.mxu0
  %v1256 = vadd.f32 0.0, %v1255
  %v1257 = vpop.f32.mrf.mxu0
  %v1258 = vadd.f32 0.0, %v1257
  %1259 = vmatmul.bf16.gmra.mxu0 %v665
  %v1260 = vpop.f32.mrf.mxu0
  %v1261 = vadd.f32 0.0, %v1260
  %v1262 = vpop.f32.mrf.mxu0
  %v1263 = vadd.f32 0.0, %v1262
  %1264 = vmatmul.bf16.gmra.mxu0 %v667
  %v1265 = vpop.f32.mrf.mxu0
  %v1266 = vadd.f32 0.0, %v1265
  %v1267 = vpop.f32.mrf.mxu0
  %v1268 = vadd.f32 0.0, %v1267
  %1269 = vmatmul.bf16.gmra.mxu0 %v669
  %v1270 = vpop.f32.mrf.mxu0
  %v1271 = vadd.f32 0.0, %v1270
  %v1272 = vpop.f32.mrf.mxu0
  %v1273 = vadd.f32 0.0, %v1272
  %1274 = vmatmul.bf16.gmra.mxu0 %v671
  %v1275 = vpop.f32.mrf.mxu0
  %v1276 = vadd.f32 0.0, %v1275
  %v1277 = vpop.f32.mrf.mxu0
  %v1278 = vadd.f32 0.0, %v1277
  %1279 = vmatmul.bf16.gmra.mxu0 %v673
  %v1280 = vpop.f32.mrf.mxu0
  %v1281 = vadd.f32 0.0, %v1280
  %v1282 = vpop.f32.mrf.mxu0
  %v1283 = vadd.f32 0.0, %v1282
  %1284 = vmatmul.bf16.gmra.mxu0 %v675
  %v1285 = vpop.f32.mrf.mxu0
  %v1286 = vadd.f32 0.0, %v1285
  %v1287 = vpop.f32.mrf.mxu0
  %v1288 = vadd.f32 0.0, %v1287
  %1289 = vmatmul.bf16.gmra.mxu0 %v677
  %v1290 = vpop.f32.mrf.mxu0
  %v1291 = vadd.f32 0.0, %v1290
  %v1292 = vpop.f32.mrf.mxu0
  %v1293 = vadd.f32 0.0, %v1292
  %1294 = vmatmul.bf16.gmra.mxu0 %v679
  %v1295 = vpop.f32.mrf.mxu0
  %v1296 = vadd.f32 0.0, %v1295
  %v1297 = vpop.f32.mrf.mxu0
  %v1298 = vadd.f32 0.0, %v1297
  %1299 = vmatmul.bf16.gmra.mxu0 %v681
  %v1300 = vpop.f32.mrf.mxu0
  %v1301 = vadd.f32 0.0, %v1300
  %v1302 = vpop.f32.mrf.mxu0
  %v1303 = vadd.f32 0.0, %v1302
  %1304 = vmatmul.bf16.gmra.mxu0 %v683
  %v1305 = vpop.f32.mrf.mxu0
  %v1306 = vadd.f32 0.0, %v1305
  %v1307 = vpop.f32.mrf.mxu0
  %v1308 = vadd.f32 0.0, %v1307
  %1309 = vmatmul.bf16.gmra.mxu0 %v685
  %v1310 = vpop.f32.mrf.mxu0
  %v1311 = vadd.f32 0.0, %v1310
  %v1312 = vpop.f32.mrf.mxu0
  %v1313 = vadd.f32 0.0, %v1312
  %1314 = vmatmul.bf16.gmra.mxu0 %v687
  %v1315 = vpop.f32.mrf.mxu0
  %v1316 = vadd.f32 0.0, %v1315
  %v1317 = vpop.f32.mrf.mxu0
  %v1318 = vadd.f32 0.0, %v1317
  %1319 = vmatmul.bf16.gmra.mxu0 %v689
  %v1320 = vpop.f32.mrf.mxu0
  %v1321 = vadd.f32 0.0, %v1320
  %v1322 = vpop.f32.mrf.mxu0
  %v1323 = vadd.f32 0.0, %v1322
  %1324 = vmatmul.bf16.gmra.mxu0 %v691
  %v1325 = vpop.f32.mrf.mxu0
  %v1326 = vadd.f32 0.0, %v1325
  %v1327 = vpop.f32.mrf.mxu0
  %v1328 = vadd.f32 0.0, %v1327
  %1329 = vmatmul.bf16.gmra.mxu0 %v693
  %v1330 = vpop.f32.mrf.mxu0
  %v1331 = vadd.f32 0.0, %v1330
  %v1332 = vpop.f32.mrf.mxu0
  %v1333 = vadd.f32 0.0, %v1332
  %1334 = vmatmul.bf16.gmra.mxu0 %v695
  %v1335 = vpop.f32.mrf.mxu0
  %v1336 = vadd.f32 0.0, %v1335
  %v1337 = vpop.f32.mrf.mxu0
  %v1338 = vadd.f32 0.0, %v1337
  %1339 = vmatmul.bf16.gmra.mxu0 %v697
  %v1340 = vpop.f32.mrf.mxu0
  %v1341 = vadd.f32 0.0, %v1340
  %v1342 = vpop.f32.mrf.mxu0
  %v1343 = vadd.f32 0.0, %v1342
  %1344 = vdwg.mxu0
  %1345 = vmatpush.bf16.msra.mxu0 0
  %1346 = vmatpush.bf16.msra.mxu0 0
  %1347 = vmatpush.bf16.msra.mxu0 0
  %1348 = vmatpush.bf16.msra.mxu0 0
  %1349 = vmatpush.bf16.msra.mxu0 0
  %1350 = vmatpush.bf16.msra.mxu0 0
  %1351 = vmatpush.bf16.msra.mxu0 %v812
  %1352 = vmatpush.bf16.msra.mxu0 %v811
  %1353 = vmatmul.bf16.gmra.mxu0 %v825
  %v1354 = vpop.f32.mrf.mxu0
  %v1355 = vadd.f32 %v1026, %v1354
  %v1356 = vpop.f32.mrf.mxu0
  %v1357 = vadd.f32 %v1028, %v1356
  %1358 = vmatmul.bf16.gmra.mxu0 %v828
  %v1359 = vpop.f32.mrf.mxu0
  %v1360 = vadd.f32 %v1031, %v1359
  %v1361 = vpop.f32.mrf.mxu0
  %v1362 = vadd.f32 %v1033, %v1361
  %1363 = vmatmul.bf16.gmra.mxu0 %v831
  %v1364 = vpop.f32.mrf.mxu0
  %v1365 = vadd.f32 %v1036, %v1364
  %v1366 = vpop.f32.mrf.mxu0
  %v1367 = vadd.f32 %v1038, %v1366
  %1368 = vmatmul.bf16.gmra.mxu0 %v834
  %v1369 = vpop.f32.mrf.mxu0
  %v1370 = vadd.f32 %v1041, %v1369
  %v1371 = vpop.f32.mrf.mxu0
  %v1372 = vadd.f32 %v1043, %v1371
  %1373 = vmatmul.bf16.gmra.mxu0 %v837
  %v1374 = vpop.f32.mrf.mxu0
  %v1375 = vadd.f32 %v1046, %v1374
  %v1376 = vpop.f32.mrf.mxu0
  %v1377 = vadd.f32 %v1048, %v1376
  %1378 = vmatmul.bf16.gmra.mxu0 %v840
  %v1379 = vpop.f32.mrf.mxu0
  %v1380 = vadd.f32 %v1051, %v1379
  %v1381 = vpop.f32.mrf.mxu0
  %v1382 = vadd.f32 %v1053, %v1381
  %1383 = vmatmul.bf16.gmra.mxu0 %v843
  %v1384 = vpop.f32.mrf.mxu0
  %v1385 = vadd.f32 %v1056, %v1384
  %v1386 = vpop.f32.mrf.mxu0
  %v1387 = vadd.f32 %v1058, %v1386
  %1388 = vmatmul.bf16.gmra.mxu0 %v846
  %v1389 = vpop.f32.mrf.mxu0
  %v1390 = vadd.f32 %v1061, %v1389
  %v1391 = vpop.f32.mrf.mxu0
  %v1392 = vadd.f32 %v1063, %v1391
  %1393 = vmatmul.bf16.gmra.mxu0 %v849
  %v1394 = vpop.f32.mrf.mxu0
  %v1395 = vadd.f32 %v1066, %v1394
  %v1396 = vpop.f32.mrf.mxu0
  %v1397 = vadd.f32 %v1068, %v1396
  %1398 = vmatmul.bf16.gmra.mxu0 %v852
  %v1399 = vpop.f32.mrf.mxu0
  %v1400 = vadd.f32 %v1071, %v1399
  %v1401 = vpop.f32.mrf.mxu0
  %v1402 = vadd.f32 %v1073, %v1401
  %1403 = vmatmul.bf16.gmra.mxu0 %v855
  %v1404 = vpop.f32.mrf.mxu0
  %v1405 = vadd.f32 %v1076, %v1404
  %v1406 = vpop.f32.mrf.mxu0
  %v1407 = vadd.f32 %v1078, %v1406
  %1408 = vmatmul.bf16.gmra.mxu0 %v858
  %v1409 = vpop.f32.mrf.mxu0
  %v1410 = vadd.f32 %v1081, %v1409
  %v1411 = vpop.f32.mrf.mxu0
  %v1412 = vadd.f32 %v1083, %v1411
  %1413 = vmatmul.bf16.gmra.mxu0 %v861
  %v1414 = vpop.f32.mrf.mxu0
  %v1415 = vadd.f32 %v1086, %v1414
  %v1416 = vpop.f32.mrf.mxu0
  %v1417 = vadd.f32 %v1088, %v1416
  %1418 = vmatmul.bf16.gmra.mxu0 %v864
  %v1419 = vpop.f32.mrf.mxu0
  %v1420 = vadd.f32 %v1091, %v1419
  %v1421 = vpop.f32.mrf.mxu0
  %v1422 = vadd.f32 %v1093, %v1421
  %1423 = vmatmul.bf16.gmra.mxu0 %v867
  %v1424 = vpop.f32.mrf.mxu0
  %v1425 = vadd.f32 %v1096, %v1424
  %v1426 = vpop.f32.mrf.mxu0
  %v1427 = vadd.f32 %v1098, %v1426
  %1428 = vmatmul.bf16.gmra.mxu0 %v870
  %v1429 = vpop.f32.mrf.mxu0
  %v1430 = vadd.f32 %v1101, %v1429
  %v1431 = vpop.f32.mrf.mxu0
  %v1432 = vadd.f32 %v1103, %v1431
  %1433 = vmatmul.bf16.gmra.mxu0 %v873
  %v1434 = vpop.f32.mrf.mxu0
  %v1435 = vadd.f32 %v1106, %v1434
  %v1436 = vpop.f32.mrf.mxu0
  %v1437 = vadd.f32 %v1108, %v1436
  %1438 = vmatmul.bf16.gmra.mxu0 %v876
  %v1439 = vpop.f32.mrf.mxu0
  %v1440 = vadd.f32 %v1111, %v1439
  %v1441 = vpop.f32.mrf.mxu0
  %v1442 = vadd.f32 %v1113, %v1441
  %1443 = vmatmul.bf16.gmra.mxu0 %v879
  %v1444 = vpop.f32.mrf.mxu0
  %v1445 = vadd.f32 %v1116, %v1444
  %v1446 = vpop.f32.mrf.mxu0
  %v1447 = vadd.f32 %v1118, %v1446
  %1448 = vmatmul.bf16.gmra.mxu0 %v882
  %v1449 = vpop.f32.mrf.mxu0
  %v1450 = vadd.f32 %v1121, %v1449
  %v1451 = vpop.f32.mrf.mxu0
  %v1452 = vadd.f32 %v1123, %v1451
  %1453 = vmatmul.bf16.gmra.mxu0 %v885
  %v1454 = vpop.f32.mrf.mxu0
  %v1455 = vadd.f32 %v1126, %v1454
  %v1456 = vpop.f32.mrf.mxu0
  %v1457 = vadd.f32 %v1128, %v1456
  %1458 = vmatmul.bf16.gmra.mxu0 %v888
  %v1459 = vpop.f32.mrf.mxu0
  %v1460 = vadd.f32 %v1131, %v1459
  %v1461 = vpop.f32.mrf.mxu0
  %v1462 = vadd.f32 %v1133, %v1461
  %1463 = vmatmul.bf16.gmra.mxu0 %v891
  %v1464 = vpop.f32.mrf.mxu0
  %v1465 = vadd.f32 %v1136, %v1464
  %v1466 = vpop.f32.mrf.mxu0
  %v1467 = vadd.f32 %v1138, %v1466
  %1468 = vmatmul.bf16.gmra.mxu0 %v894
  %v1469 = vpop.f32.mrf.mxu0
  %v1470 = vadd.f32 %v1141, %v1469
  %v1471 = vpop.f32.mrf.mxu0
  %v1472 = vadd.f32 %v1143, %v1471
  %1473 = vmatmul.bf16.gmra.mxu0 %v897
  %v1474 = vpop.f32.mrf.mxu0
  %v1475 = vadd.f32 %v1146, %v1474
  %v1476 = vpop.f32.mrf.mxu0
  %v1477 = vadd.f32 %v1148, %v1476
  %1478 = vmatmul.bf16.gmra.mxu0 %v900
  %v1479 = vpop.f32.mrf.mxu0
  %v1480 = vadd.f32 %v1151, %v1479
  %v1481 = vpop.f32.mrf.mxu0
  %v1482 = vadd.f32 %v1153, %v1481
  %1483 = vmatmul.bf16.gmra.mxu0 %v903
  %v1484 = vpop.f32.mrf.mxu0
  %v1485 = vadd.f32 %v1156, %v1484
  %v1486 = vpop.f32.mrf.mxu0
  %v1487 = vadd.f32 %v1158, %v1486
  %1488 = vmatmul.bf16.gmra.mxu0 %v906
  %v1489 = vpop.f32.mrf.mxu0
  %v1490 = vadd.f32 %v1161, %v1489
  %v1491 = vpop.f32.mrf.mxu0
  %v1492 = vadd.f32 %v1163, %v1491
  %1493 = vmatmul.bf16.gmra.mxu0 %v909
  %v1494 = vpop.f32.mrf.mxu0
  %v1495 = vadd.f32 %v1166, %v1494
  %v1496 = vpop.f32.mrf.mxu0
  %v1497 = vadd.f32 %v1168, %v1496
  %1498 = vmatmul.bf16.gmra.mxu0 %v912
  %v1499 = vpop.f32.mrf.mxu0
  %v1500 = vadd.f32 %v1171, %v1499
  %v1501 = vpop.f32.mrf.mxu0
  %v1502 = vadd.f32 %v1173, %v1501
  %1503 = vmatmul.bf16.gmra.mxu0 %v915
  %v1504 = vpop.f32.mrf.mxu0
  %v1505 = vadd.f32 %v1176, %v1504
  %v1506 = vpop.f32.mrf.mxu0
  %v1507 = vadd.f32 %v1178, %v1506
  %1508 = vmatmul.bf16.gmra.mxu0 %v918
  %v1509 = vpop.f32.mrf.mxu0
  %v1510 = vadd.f32 %v1181, %v1509
  %v1511 = vpop.f32.mrf.mxu0
  %v1512 = vadd.f32 %v1183, %v1511
  %1513 = vmatmul.bf16.gmra.mxu0 %v921
  %v1514 = vpop.f32.mrf.mxu0
  %v1515 = vadd.f32 %v1186, %v1514
  %v1516 = vpop.f32.mrf.mxu0
  %v1517 = vadd.f32 %v1188, %v1516
  %1518 = vmatmul.bf16.gmra.mxu0 %v924
  %v1519 = vpop.f32.mrf.mxu0
  %v1520 = vadd.f32 %v1191, %v1519
  %v1521 = vpop.f32.mrf.mxu0
  %v1522 = vadd.f32 %v1193, %v1521
  %1523 = vmatmul.bf16.gmra.mxu0 %v927
  %v1524 = vpop.f32.mrf.mxu0
  %v1525 = vadd.f32 %v1196, %v1524
  %v1526 = vpop.f32.mrf.mxu0
  %v1527 = vadd.f32 %v1198, %v1526
  %1528 = vmatmul.bf16.gmra.mxu0 %v930
  %v1529 = vpop.f32.mrf.mxu0
  %v1530 = vadd.f32 %v1201, %v1529
  %v1531 = vpop.f32.mrf.mxu0
  %v1532 = vadd.f32 %v1203, %v1531
  %1533 = vmatmul.bf16.gmra.mxu0 %v933
  %v1534 = vpop.f32.mrf.mxu0
  %v1535 = vadd.f32 %v1206, %v1534
  %v1536 = vpop.f32.mrf.mxu0
  %v1537 = vadd.f32 %v1208, %v1536
  %1538 = vmatmul.bf16.gmra.mxu0 %v936
  %v1539 = vpop.f32.mrf.mxu0
  %v1540 = vadd.f32 %v1211, %v1539
  %v1541 = vpop.f32.mrf.mxu0
  %v1542 = vadd.f32 %v1213, %v1541
  %1543 = vmatmul.bf16.gmra.mxu0 %v939
  %v1544 = vpop.f32.mrf.mxu0
  %v1545 = vadd.f32 %v1216, %v1544
  %v1546 = vpop.f32.mrf.mxu0
  %v1547 = vadd.f32 %v1218, %v1546
  %1548 = vmatmul.bf16.gmra.mxu0 %v942
  %v1549 = vpop.f32.mrf.mxu0
  %v1550 = vadd.f32 %v1221, %v1549
  %v1551 = vpop.f32.mrf.mxu0
  %v1552 = vadd.f32 %v1223, %v1551
  %1553 = vmatmul.bf16.gmra.mxu0 %v945
  %v1554 = vpop.f32.mrf.mxu0
  %v1555 = vadd.f32 %v1226, %v1554
  %v1556 = vpop.f32.mrf.mxu0
  %v1557 = vadd.f32 %v1228, %v1556
  %1558 = vmatmul.bf16.gmra.mxu0 %v948
  %v1559 = vpop.f32.mrf.mxu0
  %v1560 = vadd.f32 %v1231, %v1559
  %v1561 = vpop.f32.mrf.mxu0
  %v1562 = vadd.f32 %v1233, %v1561
  %1563 = vmatmul.bf16.gmra.mxu0 %v951
  %v1564 = vpop.f32.mrf.mxu0
  %v1565 = vadd.f32 %v1236, %v1564
  %v1566 = vpop.f32.mrf.mxu0
  %v1567 = vadd.f32 %v1238, %v1566
  %1568 = vmatmul.bf16.gmra.mxu0 %v954
  %v1569 = vpop.f32.mrf.mxu0
  %v1570 = vadd.f32 %v1241, %v1569
  %v1571 = vpop.f32.mrf.mxu0
  %v1572 = vadd.f32 %v1243, %v1571
  %1573 = vmatmul.bf16.gmra.mxu0 %v957
  %v1574 = vpop.f32.mrf.mxu0
  %v1575 = vadd.f32 %v1246, %v1574
  %v1576 = vpop.f32.mrf.mxu0
  %v1577 = vadd.f32 %v1248, %v1576
  %1578 = vmatmul.bf16.gmra.mxu0 %v960
  %v1579 = vpop.f32.mrf.mxu0
  %v1580 = vadd.f32 %v1251, %v1579
  %v1581 = vpop.f32.mrf.mxu0
  %v1582 = vadd.f32 %v1253, %v1581
  %1583 = vmatmul.bf16.gmra.mxu0 %v963
  %v1584 = vpop.f32.mrf.mxu0
  %v1585 = vadd.f32 %v1256, %v1584
  %v1586 = vpop.f32.mrf.mxu0
  %v1587 = vadd.f32 %v1258, %v1586
  %1588 = vmatmul.bf16.gmra.mxu0 %v966
  %v1589 = vpop.f32.mrf.mxu0
  %v1590 = vadd.f32 %v1261, %v1589
  %v1591 = vpop.f32.mrf.mxu0
  %v1592 = vadd.f32 %v1263, %v1591
  %1593 = vmatmul.bf16.gmra.mxu0 %v969
  %v1594 = vpop.f32.mrf.mxu0
  %v1595 = vadd.f32 %v1266, %v1594
  %v1596 = vpop.f32.mrf.mxu0
  %v1597 = vadd.f32 %v1268, %v1596
  %1598 = vmatmul.bf16.gmra.mxu0 %v972
  %v1599 = vpop.f32.mrf.mxu0
  %v1600 = vadd.f32 %v1271, %v1599
  %v1601 = vpop.f32.mrf.mxu0
  %v1602 = vadd.f32 %v1273, %v1601
  %1603 = vmatmul.bf16.gmra.mxu0 %v975
  %v1604 = vpop.f32.mrf.mxu0
  %v1605 = vadd.f32 %v1276, %v1604
  %v1606 = vpop.f32.mrf.mxu0
  %v1607 = vadd.f32 %v1278, %v1606
  %1608 = vmatmul.bf16.gmra.mxu0 %v978
  %v1609 = vpop.f32.mrf.mxu0
  %v1610 = vadd.f32 %v1281, %v1609
  %v1611 = vpop.f32.mrf.mxu0
  %v1612 = vadd.f32 %v1283, %v1611
  %1613 = vmatmul.bf16.gmra.mxu0 %v981
  %v1614 = vpop.f32.mrf.mxu0
  %v1615 = vadd.f32 %v1286, %v1614
  %v1616 = vpop.f32.mrf.mxu0
  %v1617 = vadd.f32 %v1288, %v1616
  %1618 = vmatmul.bf16.gmra.mxu0 %v984
  %v1619 = vpop.f32.mrf.mxu0
  %v1620 = vadd.f32 %v1291, %v1619
  %v1621 = vpop.f32.mrf.mxu0
  %v1622 = vadd.f32 %v1293, %v1621
  %1623 = vmatmul.bf16.gmra.mxu0 %v987
  %v1624 = vpop.f32.mrf.mxu0
  %v1625 = vadd.f32 %v1296, %v1624
  %v1626 = vpop.f32.mrf.mxu0
  %v1627 = vadd.f32 %v1298, %v1626
  %1628 = vmatmul.bf16.gmra.mxu0 %v990
  %v1629 = vpop.f32.mrf.mxu0
  %v1630 = vadd.f32 %v1301, %v1629
  %v1631 = vpop.f32.mrf.mxu0
  %v1632 = vadd.f32 %v1303, %v1631
  %1633 = vmatmul.bf16.gmra.mxu0 %v993
  %v1634 = vpop.f32.mrf.mxu0
  %v1635 = vadd.f32 %v1306, %v1634
  %v1636 = vpop.f32.mrf.mxu0
  %v1637 = vadd.f32 %v1308, %v1636
  %1638 = vmatmul.bf16.gmra.mxu0 %v996
  %v1639 = vpop.f32.mrf.mxu0
  %v1640 = vadd.f32 %v1311, %v1639
  %v1641 = vpop.f32.mrf.mxu0
  %v1642 = vadd.f32 %v1313, %v1641
  %1643 = vmatmul.bf16.gmra.mxu0 %v999
  %v1644 = vpop.f32.mrf.mxu0
  %v1645 = vadd.f32 %v1316, %v1644
  %v1646 = vpop.f32.mrf.mxu0
  %v1647 = vadd.f32 %v1318, %v1646
  %1648 = vmatmul.bf16.gmra.mxu0 %v1002
  %v1649 = vpop.f32.mrf.mxu0
  %v1650 = vadd.f32 %v1321, %v1649
  %v1651 = vpop.f32.mrf.mxu0
  %v1652 = vadd.f32 %v1323, %v1651
  %1653 = vmatmul.bf16.gmra.mxu0 %v1005
  %v1654 = vpop.f32.mrf.mxu0
  %v1655 = vadd.f32 %v1326, %v1654
  %v1656 = vpop.f32.mrf.mxu0
  %v1657 = vadd.f32 %v1328, %v1656
  %1658 = vmatmul.bf16.gmra.mxu0 %v1008
  %v1659 = vpop.f32.mrf.mxu0
  %v1660 = vadd.f32 %v1331, %v1659
  %v1661 = vpop.f32.mrf.mxu0
  %v1662 = vadd.f32 %v1333, %v1661
  %1663 = vmatmul.bf16.gmra.mxu0 %v1011
  %v1664 = vpop.f32.mrf.mxu0
  %v1665 = vadd.f32 %v1336, %v1664
  %v1666 = vpop.f32.mrf.mxu0
  %v1667 = vadd.f32 %v1338, %v1666
  %1668 = vmatmul.bf16.gmra.mxu0 %v1014
  %v1669 = vpop.f32.mrf.mxu0
  %v1670 = vadd.f32 %v1341, %v1669
  %v1671 = vpop.f32.mrf.mxu0
  %v1672 = vadd.f32 %v1343, %v1671
  %1673 = vdwg.mxu0
  %vm1674 = vcmp.ge.f32.partialorder %v1355, 0.0
  %vm1675 = vcmp.ge.f32.partialorder %v1357, 0.0
  %vm1676 = vcmp.ge.f32.partialorder %v1360, 0.0
  %vm1677 = vcmp.ge.f32.partialorder %v1362, 0.0
  %vm1678 = vcmp.ge.f32.partialorder %v1365, 0.0
  %vm1679 = vcmp.ge.f32.partialorder %v1367, 0.0
  %vm1680 = vcmp.ge.f32.partialorder %v1370, 0.0
  %vm1681 = vcmp.ge.f32.partialorder %v1372, 0.0
  %vm1682 = vcmp.ge.f32.partialorder %v1375, 0.0
  %vm1683 = vcmp.ge.f32.partialorder %v1377, 0.0
  %vm1684 = vcmp.ge.f32.partialorder %v1380, 0.0
  %vm1685 = vcmp.ge.f32.partialorder %v1382, 0.0
  %vm1686 = vcmp.ge.f32.partialorder %v1385, 0.0
  %vm1687 = vcmp.ge.f32.partialorder %v1387, 0.0
  %vm1688 = vcmp.ge.f32.partialorder %v1390, 0.0
  %vm1689 = vcmp.ge.f32.partialorder %v1392, 0.0
  %vm1690 = vcmp.ge.f32.partialorder %v1395, 0.0
  %vm1691 = vcmp.ge.f32.partialorder %v1397, 0.0
  %vm1692 = vcmp.ge.f32.partialorder %v1400, 0.0
  %vm1693 = vcmp.ge.f32.partialorder %v1402, 0.0
  %vm1694 = vcmp.ge.f32.partialorder %v1405, 0.0
  %vm1695 = vcmp.ge.f32.partialorder %v1407, 0.0
  %vm1696 = vcmp.ge.f32.partialorder %v1410, 0.0
  %vm1697 = vcmp.ge.f32.partialorder %v1412, 0.0
  %vm1698 = vcmp.ge.f32.partialorder %v1415, 0.0
  %vm1699 = vcmp.ge.f32.partialorder %v1417, 0.0
  %vm1700 = vcmp.ge.f32.partialorder %v1420, 0.0
  %vm1701 = vcmp.ge.f32.partialorder %v1422, 0.0
  %vm1702 = vcmp.ge.f32.partialorder %v1425, 0.0
  %vm1703 = vcmp.ge.f32.partialorder %v1427, 0.0
  %vm1704 = vcmp.ge.f32.partialorder %v1430, 0.0
  %vm1705 = vcmp.ge.f32.partialorder %v1432, 0.0
  %vm1706 = vcmp.ge.f32.partialorder %v1435, 0.0
  %vm1707 = vcmp.ge.f32.partialorder %v1437, 0.0
  %vm1708 = vcmp.ge.f32.partialorder %v1440, 0.0
  %vm1709 = vcmp.ge.f32.partialorder %v1442, 0.0
  %vm1710 = vcmp.ge.f32.partialorder %v1445, 0.0
  %vm1711 = vcmp.ge.f32.partialorder %v1447, 0.0
  %vm1712 = vcmp.ge.f32.partialorder %v1450, 0.0
  %vm1713 = vcmp.ge.f32.partialorder %v1452, 0.0
  %vm1714 = vcmp.ge.f32.partialorder %v1455, 0.0
  %vm1715 = vcmp.ge.f32.partialorder %v1457, 0.0
  %vm1716 = vcmp.ge.f32.partialorder %v1460, 0.0
  %vm1717 = vcmp.ge.f32.partialorder %v1462, 0.0
  %vm1718 = vcmp.ge.f32.partialorder %v1465, 0.0
  %vm1719 = vcmp.ge.f32.partialorder %v1467, 0.0
  %vm1720 = vcmp.ge.f32.partialorder %v1470, 0.0
  %vm1721 = vcmp.ge.f32.partialorder %v1472, 0.0
  %vm1722 = vcmp.ge.f32.partialorder %v1475, 0.0
  %vm1723 = vcmp.ge.f32.partialorder %v1477, 0.0
  %vm1724 = vcmp.ge.f32.partialorder %v1480, 0.0
  %vm1725 = vcmp.ge.f32.partialorder %v1482, 0.0
  %vm1726 = vcmp.ge.f32.partialorder %v1485, 0.0
  %vm1727 = vcmp.ge.f32.partialorder %v1487, 0.0
  %vm1728 = vcmp.ge.f32.partialorder %v1490, 0.0
  %vm1729 = vcmp.ge.f32.partialorder %v1492, 0.0
  %vm1730 = vcmp.ge.f32.partialorder %v1495, 0.0
  %vm1731 = vcmp.ge.f32.partialorder %v1497, 0.0
  %vm1732 = vcmp.ge.f32.partialorder %v1500, 0.0
  %vm1733 = vcmp.ge.f32.partialorder %v1502, 0.0
  %vm1734 = vcmp.ge.f32.partialorder %v1505, 0.0
  %vm1735 = vcmp.ge.f32.partialorder %v1507, 0.0
  %vm1736 = vcmp.ge.f32.partialorder %v1510, 0.0
  %vm1737 = vcmp.ge.f32.partialorder %v1512, 0.0
  %vm1738 = vcmp.ge.f32.partialorder %v1515, 0.0
  %vm1739 = vcmp.ge.f32.partialorder %v1517, 0.0
  %vm1740 = vcmp.ge.f32.partialorder %v1520, 0.0
  %vm1741 = vcmp.ge.f32.partialorder %v1522, 0.0
  %vm1742 = vcmp.ge.f32.partialorder %v1525, 0.0
  %vm1743 = vcmp.ge.f32.partialorder %v1527, 0.0
  %vm1744 = vcmp.ge.f32.partialorder %v1530, 0.0
  %vm1745 = vcmp.ge.f32.partialorder %v1532, 0.0
  %vm1746 = vcmp.ge.f32.partialorder %v1535, 0.0
  %vm1747 = vcmp.ge.f32.partialorder %v1537, 0.0
  %vm1748 = vcmp.ge.f32.partialorder %v1540, 0.0
  %vm1749 = vcmp.ge.f32.partialorder %v1542, 0.0
  %vm1750 = vcmp.ge.f32.partialorder %v1545, 0.0
  %vm1751 = vcmp.ge.f32.partialorder %v1547, 0.0
  %vm1752 = vcmp.ge.f32.partialorder %v1550, 0.0
  %vm1753 = vcmp.ge.f32.partialorder %v1552, 0.0
  %vm1754 = vcmp.ge.f32.partialorder %v1555, 0.0
  %vm1755 = vcmp.ge.f32.partialorder %v1557, 0.0
  %vm1756 = vcmp.ge.f32.partialorder %v1560, 0.0
  %vm1757 = vcmp.ge.f32.partialorder %v1562, 0.0
  %vm1758 = vcmp.ge.f32.partialorder %v1565, 0.0
  %vm1759 = vcmp.ge.f32.partialorder %v1567, 0.0
  %vm1760 = vcmp.ge.f32.partialorder %v1570, 0.0
  %vm1761 = vcmp.ge.f32.partialorder %v1572, 0.0
  %vm1762 = vcmp.ge.f32.partialorder %v1575, 0.0
  %vm1763 = vcmp.ge.f32.partialorder %v1577, 0.0
  %vm1764 = vcmp.ge.f32.partialorder %v1580, 0.0
  %vm1765 = vcmp.ge.f32.partialorder %v1582, 0.0
  %vm1766 = vcmp.ge.f32.partialorder %v1585, 0.0
  %vm1767 = vcmp.ge.f32.partialorder %v1587, 0.0
  %vm1768 = vcmp.ge.f32.partialorder %v1590, 0.0
  %vm1769 = vcmp.ge.f32.partialorder %v1592, 0.0
  %vm1770 = vcmp.ge.f32.partialorder %v1595, 0.0
  %vm1771 = vcmp.ge.f32.partialorder %v1597, 0.0
  %vm1772 = vcmp.ge.f32.partialorder %v1600, 0.0
  %vm1773 = vcmp.ge.f32.partialorder %v1602, 0.0
  %vm1774 = vcmp.ge.f32.partialorder %v1605, 0.0
  %vm1775 = vcmp.ge.f32.partialorder %v1607, 0.0
  %vm1776 = vcmp.ge.f32.partialorder %v1610, 0.0
  %vm1777 = vcmp.ge.f32.partialorder %v1612, 0.0
  %vm1778 = vcmp.ge.f32.partialorder %v1615, 0.0
  %vm1779 = vcmp.ge.f32.partialorder %v1617, 0.0
  %vm1780 = vcmp.ge.f32.partialorder %v1620, 0.0
  %vm1781 = vcmp.ge.f32.partialorder %v1622, 0.0
  %vm1782 = vcmp.ge.f32.partialorder %v1625, 0.0
  %vm1783 = vcmp.ge.f32.partialorder %v1627, 0.0
  %vm1784 = vcmp.ge.f32.partialorder %v1630, 0.0
  %vm1785 = vcmp.ge.f32.partialorder %v1632, 0.0
  %vm1786 = vcmp.ge.f32.partialorder %v1635, 0.0
  %vm1787 = vcmp.ge.f32.partialorder %v1637, 0.0
  %vm1788 = vcmp.ge.f32.partialorder %v1640, 0.0
  %vm1789 = vcmp.ge.f32.partialorder %v1642, 0.0
  %vm1790 = vcmp.ge.f32.partialorder %v1645, 0.0
  %vm1791 = vcmp.ge.f32.partialorder %v1647, 0.0
  %vm1792 = vcmp.ge.f32.partialorder %v1650, 0.0
  %vm1793 = vcmp.ge.f32.partialorder %v1652, 0.0
  %vm1794 = vcmp.ge.f32.partialorder %v1655, 0.0
  %vm1795 = vcmp.ge.f32.partialorder %v1657, 0.0
  %vm1796 = vcmp.ge.f32.partialorder %v1660, 0.0
  %vm1797 = vcmp.ge.f32.partialorder %v1662, 0.0
  %vm1798 = vcmp.ge.f32.partialorder %v1665, 0.0
  %vm1799 = vcmp.ge.f32.partialorder %v1667, 0.0
  %vm1800 = vcmp.ge.f32.partialorder %v1670, 0.0
  %vm1801 = vcmp.ge.f32.partialorder %v1672, 0.0
  %v1802 = vmul.f32 %v1355, 0.2
  %v1803 = vmul.f32 %v1357, 0.2
  %v1804 = vmul.f32 %v1360, 0.2
  %v1805 = vmul.f32 %v1362, 0.2
  %v1806 = vmul.f32 %v1365, 0.2
  %v1807 = vmul.f32 %v1367, 0.2
  %v1808 = vmul.f32 %v1370, 0.2
  %v1809 = vmul.f32 %v1372, 0.2
  %v1810 = vmul.f32 %v1375, 0.2
  %v1811 = vmul.f32 %v1377, 0.2
  %v1812 = vmul.f32 %v1380, 0.2
  %v1813 = vmul.f32 %v1382, 0.2
  %v1814 = vmul.f32 %v1385, 0.2
  %v1815 = vmul.f32 %v1387, 0.2
  %v1816 = vmul.f32 %v1390, 0.2
  %v1817 = vmul.f32 %v1392, 0.2
  %v1818 = vmul.f32 %v1395, 0.2
  %v1819 = vmul.f32 %v1397, 0.2
  %v1820 = vmul.f32 %v1400, 0.2
  %v1821 = vmul.f32 %v1402, 0.2
  %v1822 = vmul.f32 %v1405, 0.2
  %v1823 = vmul.f32 %v1407, 0.2
  %v1824 = vmul.f32 %v1410, 0.2
  %v1825 = vmul.f32 %v1412, 0.2
  %v1826 = vmul.f32 %v1415, 0.2
  %v1827 = vmul.f32 %v1417, 0.2
  %v1828 = vmul.f32 %v1420, 0.2
  %v1829 = vmul.f32 %v1422, 0.2
  %v1830 = vmul.f32 %v1425, 0.2
  %v1831 = vmul.f32 %v1427, 0.2
  %v1832 = vmul.f32 %v1430, 0.2
  %v1833 = vmul.f32 %v1432, 0.2
  %v1834 = vmul.f32 %v1435, 0.2
  %v1835 = vmul.f32 %v1437, 0.2
  %v1836 = vmul.f32 %v1440, 0.2
  %v1837 = vmul.f32 %v1442, 0.2
  %v1838 = vmul.f32 %v1445, 0.2
  %v1839 = vmul.f32 %v1447, 0.2
  %v1840 = vmul.f32 %v1450, 0.2
  %v1841 = vmul.f32 %v1452, 0.2
  %v1842 = vmul.f32 %v1455, 0.2
  %v1843 = vmul.f32 %v1457, 0.2
  %v1844 = vmul.f32 %v1460, 0.2
  %v1845 = vmul.f32 %v1462, 0.2
  %v1846 = vmul.f32 %v1465, 0.2
  %v1847 = vmul.f32 %v1467, 0.2
  %v1848 = vmul.f32 %v1470, 0.2
  %v1849 = vmul.f32 %v1472, 0.2
  %v1850 = vmul.f32 %v1475, 0.2
  %v1851 = vmul.f32 %v1477, 0.2
  %v1852 = vmul.f32 %v1480, 0.2
  %v1853 = vmul.f32 %v1482, 0.2
  %v1854 = vmul.f32 %v1485, 0.2
  %v1855 = vmul.f32 %v1487, 0.2
  %v1856 = vmul.f32 %v1490, 0.2
  %v1857 = vmul.f32 %v1492, 0.2
  %v1858 = vmul.f32 %v1495, 0.2
  %v1859 = vmul.f32 %v1497, 0.2
  %v1860 = vmul.f32 %v1500, 0.2
  %v1861 = vmul.f32 %v1502, 0.2
  %v1862 = vmul.f32 %v1505, 0.2
  %v1863 = vmul.f32 %v1507, 0.2
  %v1864 = vmul.f32 %v1510, 0.2
  %v1865 = vmul.f32 %v1512, 0.2
  %v1866 = vmul.f32 %v1515, 0.2
  %v1867 = vmul.f32 %v1517, 0.2
  %v1868 = vmul.f32 %v1520, 0.2
  %v1869 = vmul.f32 %v1522, 0.2
  %v1870 = vmul.f32 %v1525, 0.2
  %v1871 = vmul.f32 %v1527, 0.2
  %v1872 = vmul.f32 %v1530, 0.2
  %v1873 = vmul.f32 %v1532, 0.2
  %v1874 = vmul.f32 %v1535, 0.2
  %v1875 = vmul.f32 %v1537, 0.2
  %v1876 = vmul.f32 %v1540, 0.2
  %v1877 = vmul.f32 %v1542, 0.2
  %v1878 = vmul.f32 %v1545, 0.2
  %v1879 = vmul.f32 %v1547, 0.2
  %v1880 = vmul.f32 %v1550, 0.2
  %v1881 = vmul.f32 %v1552, 0.2
  %v1882 = vmul.f32 %v1555, 0.2
  %v1883 = vmul.f32 %v1557, 0.2
  %v1884 = vmul.f32 %v1560, 0.2
  %v1885 = vmul.f32 %v1562, 0.2
  %v1886 = vmul.f32 %v1565, 0.2
  %v1887 = vmul.f32 %v1567, 0.2
  %v1888 = vmul.f32 %v1570, 0.2
  %v1889 = vmul.f32 %v1572, 0.2
  %v1890 = vmul.f32 %v1575, 0.2
  %v1891 = vmul.f32 %v1577, 0.2
  %v1892 = vmul.f32 %v1580, 0.2
  %v1893 = vmul.f32 %v1582, 0.2
  %v1894 = vmul.f32 %v1585, 0.2
  %v1895 = vmul.f32 %v1587, 0.2
  %v1896 = vmul.f32 %v1590, 0.2
  %v1897 = vmul.f32 %v1592, 0.2
  %v1898 = vmul.f32 %v1595, 0.2
  %v1899 = vmul.f32 %v1597, 0.2
  %v1900 = vmul.f32 %v1600, 0.2
  %v1901 = vmul.f32 %v1602, 0.2
  %v1902 = vmul.f32 %v1605, 0.2
  %v1903 = vmul.f32 %v1607, 0.2
  %v1904 = vmul.f32 %v1610, 0.2
  %v1905 = vmul.f32 %v1612, 0.2
  %v1906 = vmul.f32 %v1615, 0.2
  %v1907 = vmul.f32 %v1617, 0.2
  %v1908 = vmul.f32 %v1620, 0.2
  %v1909 = vmul.f32 %v1622, 0.2
  %v1910 = vmul.f32 %v1625, 0.2
  %v1911 = vmul.f32 %v1627, 0.2
  %v1912 = vmul.f32 %v1630, 0.2
  %v1913 = vmul.f32 %v1632, 0.2
  %v1914 = vmul.f32 %v1635, 0.2
  %v1915 = vmul.f32 %v1637, 0.2
  %v1916 = vmul.f32 %v1640, 0.2
  %v1917 = vmul.f32 %v1642, 0.2
  %v1918 = vmul.f32 %v1645, 0.2
  %v1919 = vmul.f32 %v1647, 0.2
  %v1920 = vmul.f32 %v1650, 0.2
  %v1921 = vmul.f32 %v1652, 0.2
  %v1922 = vmul.f32 %v1655, 0.2
  %v1923 = vmul.f32 %v1657, 0.2
  %v1924 = vmul.f32 %v1660, 0.2
  %v1925 = vmul.f32 %v1662, 0.2
  %v1926 = vmul.f32 %v1665, 0.2
  %v1927 = vmul.f32 %v1667, 0.2
  %v1928 = vmul.f32 %v1670, 0.2
  %v1929 = vmul.f32 %v1672, 0.2
  %v1930 = vsel %vm1674, %v1355, %v1802
  %v1931 = vsel %vm1675, %v1357, %v1803
  %v1932 = vsel %vm1676, %v1360, %v1804
  %v1933 = vsel %vm1677, %v1362, %v1805
  %v1934 = vsel %vm1678, %v1365, %v1806
  %v1935 = vsel %vm1679, %v1367, %v1807
  %v1936 = vsel %vm1680, %v1370, %v1808
  %v1937 = vsel %vm1681, %v1372, %v1809
  %v1938 = vsel %vm1682, %v1375, %v1810
  %v1939 = vsel %vm1683, %v1377, %v1811
  %v1940 = vsel %vm1684, %v1380, %v1812
  %v1941 = vsel %vm1685, %v1382, %v1813
  %v1942 = vsel %vm1686, %v1385, %v1814
  %v1943 = vsel %vm1687, %v1387, %v1815
  %v1944 = vsel %vm1688, %v1390, %v1816
  %v1945 = vsel %vm1689, %v1392, %v1817
  %v1946 = vsel %vm1690, %v1395, %v1818
  %v1947 = vsel %vm1691, %v1397, %v1819
  %v1948 = vsel %vm1692, %v1400, %v1820
  %v1949 = vsel %vm1693, %v1402, %v1821
  %v1950 = vsel %vm1694, %v1405, %v1822
  %v1951 = vsel %vm1695, %v1407, %v1823
  %v1952 = vsel %vm1696, %v1410, %v1824
  %v1953 = vsel %vm1697, %v1412, %v1825
  %v1954 = vsel %vm1698, %v1415, %v1826
  %v1955 = vsel %vm1699, %v1417, %v1827
  %v1956 = vsel %vm1700, %v1420, %v1828
  %v1957 = vsel %vm1701, %v1422, %v1829
  %v1958 = vsel %vm1702, %v1425, %v1830
  %v1959 = vsel %vm1703, %v1427, %v1831
  %v1960 = vsel %vm1704, %v1430, %v1832
  %v1961 = vsel %vm1705, %v1432, %v1833
  %v1962 = vsel %vm1706, %v1435, %v1834
  %v1963 = vsel %vm1707, %v1437, %v1835
  %v1964 = vsel %vm1708, %v1440, %v1836
  %v1965 = vsel %vm1709, %v1442, %v1837
  %v1966 = vsel %vm1710, %v1445, %v1838
  %v1967 = vsel %vm1711, %v1447, %v1839
  %v1968 = vsel %vm1712, %v1450, %v1840
  %v1969 = vsel %vm1713, %v1452, %v1841
  %v1970 = vsel %vm1714, %v1455, %v1842
  %v1971 = vsel %vm1715, %v1457, %v1843
  %v1972 = vsel %vm1716, %v1460, %v1844
  %v1973 = vsel %vm1717, %v1462, %v1845
  %v1974 = vsel %vm1718, %v1465, %v1846
  %v1975 = vsel %vm1719, %v1467, %v1847
  %v1976 = vsel %vm1720, %v1470, %v1848
  %v1977 = vsel %vm1721, %v1472, %v1849
  %v1978 = vsel %vm1722, %v1475, %v1850
  %v1979 = vsel %vm1723, %v1477, %v1851
  %v1980 = vsel %vm1724, %v1480, %v1852
  %v1981 = vsel %vm1725, %v1482, %v1853
  %v1982 = vsel %vm1726, %v1485, %v1854
  %v1983 = vsel %vm1727, %v1487, %v1855
  %v1984 = vsel %vm1728, %v1490, %v1856
  %v1985 = vsel %vm1729, %v1492, %v1857
  %v1986 = vsel %vm1730, %v1495, %v1858
  %v1987 = vsel %vm1731, %v1497, %v1859
  %v1988 = vsel %vm1732, %v1500, %v1860
  %v1989 = vsel %vm1733, %v1502, %v1861
  %v1990 = vsel %vm1734, %v1505, %v1862
  %v1991 = vsel %vm1735, %v1507, %v1863
  %v1992 = vsel %vm1736, %v1510, %v1864
  %v1993 = vsel %vm1737, %v1512, %v1865
  %v1994 = vsel %vm1738, %v1515, %v1866
  %v1995 = vsel %vm1739, %v1517, %v1867
  %v1996 = vsel %vm1740, %v1520, %v1868
  %v1997 = vsel %vm1741, %v1522, %v1869
  %v1998 = vsel %vm1742, %v1525, %v1870
  %v1999 = vsel %vm1743, %v1527, %v1871
  %v2000 = vsel %vm1744, %v1530, %v1872
  %v2001 = vsel %vm1745, %v1532, %v1873
  %v2002 = vsel %vm1746, %v1535, %v1874
  %v2003 = vsel %vm1747, %v1537, %v1875
  %v2004 = vsel %vm1748, %v1540, %v1876
  %v2005 = vsel %vm1749, %v1542, %v1877
  %v2006 = vsel %vm1750, %v1545, %v1878
  %v2007 = vsel %vm1751, %v1547, %v1879
  %v2008 = vsel %vm1752, %v1550, %v1880
  %v2009 = vsel %vm1753, %v1552, %v1881
  %v2010 = vsel %vm1754, %v1555, %v1882
  %v2011 = vsel %vm1755, %v1557, %v1883
  %v2012 = vsel %vm1756, %v1560, %v1884
  %v2013 = vsel %vm1757, %v1562, %v1885
  %v2014 = vsel %vm1758, %v1565, %v1886
  %v2015 = vsel %vm1759, %v1567, %v1887
  %v2016 = vsel %vm1760, %v1570, %v1888
  %v2017 = vsel %vm1761, %v1572, %v1889
  %v2018 = vsel %vm1762, %v1575, %v1890
  %v2019 = vsel %vm1763, %v1577, %v1891
  %v2020 = vsel %vm1764, %v1580, %v1892
  %v2021 = vsel %vm1765, %v1582, %v1893
  %v2022 = vsel %vm1766, %v1585, %v1894
  %v2023 = vsel %vm1767, %v1587, %v1895
  %v2024 = vsel %vm1768, %v1590, %v1896
  %v2025 = vsel %vm1769, %v1592, %v1897
  %v2026 = vsel %vm1770, %v1595, %v1898
  %v2027 = vsel %vm1771, %v1597, %v1899
  %v2028 = vsel %vm1772, %v1600, %v1900
  %v2029 = vsel %vm1773, %v1602, %v1901
  %v2030 = vsel %vm1774, %v1605, %v1902
  %v2031 = vsel %vm1775, %v1607, %v1903
  %v2032 = vsel %vm1776, %v1610, %v1904
  %v2033 = vsel %vm1777, %v1612, %v1905
  %v2034 = vsel %vm1778, %v1615, %v1906
  %v2035 = vsel %vm1779, %v1617, %v1907
  %v2036 = vsel %vm1780, %v1620, %v1908
  %v2037 = vsel %vm1781, %v1622, %v1909
  %v2038 = vsel %vm1782, %v1625, %v1910
  %v2039 = vsel %vm1783, %v1627, %v1911
  %v2040 = vsel %vm1784, %v1630, %v1912
  %v2041 = vsel %vm1785, %v1632, %v1913
  %v2042 = vsel %vm1786, %v1635, %v1914
  %v2043 = vsel %vm1787, %v1637, %v1915
  %v2044 = vsel %vm1788, %v1640, %v1916
  %v2045 = vsel %vm1789, %v1642, %v1917
  %v2046 = vsel %vm1790, %v1645, %v1918
  %v2047 = vsel %vm1791, %v1647, %v1919
  %v2048 = vsel %vm1792, %v1650, %v1920
  %v2049 = vsel %vm1793, %v1652, %v1921
  %v2050 = vsel %vm1794, %v1655, %v1922
  %v2051 = vsel %vm1795, %v1657, %v1923
  %v2052 = vsel %vm1796, %v1660, %v1924
  %v2053 = vsel %vm1797, %v1662, %v1925
  %v2054 = vsel %vm1798, %v1665, %v1926
  %v2055 = vsel %vm1799, %v1667, %v1927
  %v2056 = vsel %vm1800, %v1670, %v1928
  %v2057 = vsel %vm1801, %v1672, %v1929
  %v2058 = vpack.c.bf16 %v1930, %v1930
  %v2059 = vpack.c.bf16 %v1931, %v1931
  %v2060 = vpack.c.bf16 %v1932, %v1932
  %v2061 = vpack.c.bf16 %v1933, %v1933
  %v2062 = vpack.c.bf16 %v1934, %v1934
  %v2063 = vpack.c.bf16 %v1935, %v1935
  %v2064 = vpack.c.bf16 %v1936, %v1936
  %v2065 = vpack.c.bf16 %v1937, %v1937
  %v2066 = vpack.c.bf16 %v1938, %v1938
  %v2067 = vpack.c.bf16 %v1939, %v1939
  %v2068 = vpack.c.bf16 %v1940, %v1940
  %v2069 = vpack.c.bf16 %v1941, %v1941
  %v2070 = vpack.c.bf16 %v1942, %v1942
  %v2071 = vpack.c.bf16 %v1943, %v1943
  %v2072 = vpack.c.bf16 %v1944, %v1944
  %v2073 = vpack.c.bf16 %v1945, %v1945
  %v2074 = vpack.c.bf16 %v1946, %v1946
  %v2075 = vpack.c.bf16 %v1947, %v1947
  %v2076 = vpack.c.bf16 %v1948, %v1948
  %v2077 = vpack.c.bf16 %v1949, %v1949
  %v2078 = vpack.c.bf16 %v1950, %v1950
  %v2079 = vpack.c.bf16 %v1951, %v1951
  %v2080 = vpack.c.bf16 %v1952, %v1952
  %v2081 = vpack.c.bf16 %v1953, %v1953
  %v2082 = vpack.c.bf16 %v1954, %v1954
  %v2083 = vpack.c.bf16 %v1955, %v1955
  %v2084 = vpack.c.bf16 %v1956, %v1956
  %v2085 = vpack.c.bf16 %v1957, %v1957
  %v2086 = vpack.c.bf16 %v1958, %v1958
  %v2087 = vpack.c.bf16 %v1959, %v1959
  %v2088 = vpack.c.bf16 %v1960, %v1960
  %v2089 = vpack.c.bf16 %v1961, %v1961
  %v2090 = vpack.c.bf16 %v1962, %v1962
  %v2091 = vpack.c.bf16 %v1963, %v1963
  %v2092 = vpack.c.bf16 %v1964, %v1964
  %v2093 = vpack.c.bf16 %v1965, %v1965
  %v2094 = vpack.c.bf16 %v1966, %v1966
  %v2095 = vpack.c.bf16 %v1967, %v1967
  %v2096 = vpack.c.bf16 %v1968, %v1968
  %v2097 = vpack.c.bf16 %v1969, %v1969
  %v2098 = vpack.c.bf16 %v1970, %v1970
  %v2099 = vpack.c.bf16 %v1971, %v1971
  %v2100 = vpack.c.bf16 %v1972, %v1972
  %v2101 = vpack.c.bf16 %v1973, %v1973
  %v2102 = vpack.c.bf16 %v1974, %v1974
  %v2103 = vpack.c.bf16 %v1975, %v1975
  %v2104 = vpack.c.bf16 %v1976, %v1976
  %v2105 = vpack.c.bf16 %v1977, %v1977
  %v2106 = vpack.c.bf16 %v1978, %v1978
  %v2107 = vpack.c.bf16 %v1979, %v1979
  %v2108 = vpack.c.bf16 %v1980, %v1980
  %v2109 = vpack.c.bf16 %v1981, %v1981
  %v2110 = vpack.c.bf16 %v1982, %v1982
  %v2111 = vpack.c.bf16 %v1983, %v1983
  %v2112 = vpack.c.bf16 %v1984, %v1984
  %v2113 = vpack.c.bf16 %v1985, %v1985
  %v2114 = vpack.c.bf16 %v1986, %v1986
  %v2115 = vpack.c.bf16 %v1987, %v1987
  %v2116 = vpack.c.bf16 %v1988, %v1988
  %v2117 = vpack.c.bf16 %v1989, %v1989
  %v2118 = vpack.c.bf16 %v1990, %v1990
  %v2119 = vpack.c.bf16 %v1991, %v1991
  %v2120 = vpack.c.bf16 %v1992, %v1992
  %v2121 = vpack.c.bf16 %v1993, %v1993
  %v2122 = vpack.c.bf16 %v1994, %v1994
  %v2123 = vpack.c.bf16 %v1995, %v1995
  %v2124 = vpack.c.bf16 %v1996, %v1996
  %v2125 = vpack.c.bf16 %v1997, %v1997
  %v2126 = vpack.c.bf16 %v1998, %v1998
  %v2127 = vpack.c.bf16 %v1999, %v1999
  %v2128 = vpack.c.bf16 %v2000, %v2000
  %v2129 = vpack.c.bf16 %v2001, %v2001
  %v2130 = vpack.c.bf16 %v2002, %v2002
  %v2131 = vpack.c.bf16 %v2003, %v2003
  %v2132 = vpack.c.bf16 %v2004, %v2004
  %v2133 = vpack.c.bf16 %v2005, %v2005
  %v2134 = vpack.c.bf16 %v2006, %v2006
  %v2135 = vpack.c.bf16 %v2007, %v2007
  %v2136 = vpack.c.bf16 %v2008, %v2008
  %v2137 = vpack.c.bf16 %v2009, %v2009
  %v2138 = vpack.c.bf16 %v2010, %v2010
  %v2139 = vpack.c.bf16 %v2011, %v2011
  %v2140 = vpack.c.bf16 %v2012, %v2012
  %v2141 = vpack.c.bf16 %v2013, %v2013
  %v2142 = vpack.c.bf16 %v2014, %v2014
  %v2143 = vpack.c.bf16 %v2015, %v2015
  %v2144 = vpack.c.bf16 %v2016, %v2016
  %v2145 = vpack.c.bf16 %v2017, %v2017
  %v2146 = vpack.c.bf16 %v2018, %v2018
  %v2147 = vpack.c.bf16 %v2019, %v2019
  %v2148 = vpack.c.bf16 %v2020, %v2020
  %v2149 = vpack.c.bf16 %v2021, %v2021
  %v2150 = vpack.c.bf16 %v2022, %v2022
  %v2151 = vpack.c.bf16 %v2023, %v2023
  %v2152 = vpack.c.bf16 %v2024, %v2024
  %v2153 = vpack.c.bf16 %v2025, %v2025
  %v2154 = vpack.c.bf16 %v2026, %v2026
  %v2155 = vpack.c.bf16 %v2027, %v2027
  %v2156 = vpack.c.bf16 %v2028, %v2028
  %v2157 = vpack.c.bf16 %v2029, %v2029
  %v2158 = vpack.c.bf16 %v2030, %v2030
  %v2159 = vpack.c.bf16 %v2031, %v2031
  %v2160 = vpack.c.bf16 %v2032, %v2032
  %v2161 = vpack.c.bf16 %v2033, %v2033
  %v2162 = vpack.c.bf16 %v2034, %v2034
  %v2163 = vpack.c.bf16 %v2035, %v2035
  %v2164 = vpack.c.bf16 %v2036, %v2036
  %v2165 = vpack.c.bf16 %v2037, %v2037
  %v2166 = vpack.c.bf16 %v2038, %v2038
  %v2167 = vpack.c.bf16 %v2039, %v2039
  %v2168 = vpack.c.bf16 %v2040, %v2040
  %v2169 = vpack.c.bf16 %v2041, %v2041
  %v2170 = vpack.c.bf16 %v2042, %v2042
  %v2171 = vpack.c.bf16 %v2043, %v2043
  %v2172 = vpack.c.bf16 %v2044, %v2044
  %v2173 = vpack.c.bf16 %v2045, %v2045
  %v2174 = vpack.c.bf16 %v2046, %v2046
  %v2175 = vpack.c.bf16 %v2047, %v2047
  %v2176 = vpack.c.bf16 %v2048, %v2048
  %v2177 = vpack.c.bf16 %v2049, %v2049
  %v2178 = vpack.c.bf16 %v2050, %v2050
  %v2179 = vpack.c.bf16 %v2051, %v2051
  %v2180 = vpack.c.bf16 %v2052, %v2052
  %v2181 = vpack.c.bf16 %v2053, %v2053
  %v2182 = vpack.c.bf16 %v2054, %v2054
  %v2183 = vpack.c.bf16 %v2055, %v2055
  %v2184 = vpack.c.bf16 %v2056, %v2056
  %v2185 = vpack.c.bf16 %v2057, %v2057
  %2186 = vst [vmem:[#allocation2] sm:$0xf] %v2058
  %2187 = vst [vmem:[#allocation2 + $0x4] sm:$0xf] %v2059
  %2188 = vst [vmem:[#allocation2 + $0x8] sm:$0xf] %v2060
  %2189 = vst [vmem:[#allocation2 + $0xc] sm:$0xf] %v2061
  %2190 = vst [vmem:[#allocation2 + $0x10] sm:$0xf] %v2062
  %2191 = vst [vmem:[#allocation2 + $0x14] sm:$0xf] %v2063
  %2192 = vst [vmem:[#allocation2 + $0x18] sm:$0xf] %v2064
  %2193 = vst [vmem:[#allocation2 + $0x1c] sm:$0xf] %v2065
  %2194 = vst [vmem:[#allocation2 + $0x20] sm:$0xf] %v2066
  %2195 = vst [vmem:[#allocation2 + $0x24] sm:$0xf] %v2067
  %2196 = vst [vmem:[#allocation2 + $0x28] sm:$0xf] %v2068
  %2197 = vst [vmem:[#allocation2 + $0x2c] sm:$0xf] %v2069
  %2198 = vst [vmem:[#allocation2 + $0x30] sm:$0xf] %v2070
  %2199 = vst [vmem:[#allocation2 + $0x34] sm:$0xf] %v2071
  %2200 = vst [vmem:[#allocation2 + $0x38] sm:$0xf] %v2072
  %2201 = vst [vmem:[#allocation2 + $0x3c] sm:$0xf] %v2073
  %2202 = vst [vmem:[#allocation2 + $0x40] sm:$0xf] %v2074
  %2203 = vst [vmem:[#allocation2 + $0x44] sm:$0xf] %v2075
  %2204 = vst [vmem:[#allocation2 + $0x48] sm:$0xf] %v2076
  %2205 = vst [vmem:[#allocation2 + $0x4c] sm:$0xf] %v2077
  %2206 = vst [vmem:[#allocation2 + $0x50] sm:$0xf] %v2078
  %2207 = vst [vmem:[#allocation2 + $0x54] sm:$0xf] %v2079
  %2208 = vst [vmem:[#allocation2 + $0x58] sm:$0xf] %v2080
  %2209 = vst [vmem:[#allocation2 + $0x5c] sm:$0xf] %v2081
  %2210 = vst [vmem:[#allocation2 + $0x60] sm:$0xf] %v2082
  %2211 = vst [vmem:[#allocation2 + $0x64] sm:$0xf] %v2083
  %2212 = vst [vmem:[#allocation2 + $0x68] sm:$0xf] %v2084
  %2213 = vst [vmem:[#allocation2 + $0x6c] sm:$0xf] %v2085
  %2214 = vst [vmem:[#allocation2 + $0x70] sm:$0xf] %v2086
  %2215 = vst [vmem:[#allocation2 + $0x74] sm:$0xf] %v2087
  %2216 = vst [vmem:[#allocation2 + $0x78] sm:$0xf] %v2088
  %2217 = vst [vmem:[#allocation2 + $0x7c] sm:$0xf] %v2089
  %2218 = vst [vmem:[#allocation2 + $0x80] sm:$0xf] %v2090
  %2219 = vst [vmem:[#allocation2 + $0x84] sm:$0xf] %v2091
  %2220 = vst [vmem:[#allocation2 + $0x88] sm:$0xf] %v2092
  %2221 = vst [vmem:[#allocation2 + $0x8c] sm:$0xf] %v2093
  %2222 = vst [vmem:[#allocation2 + $0x90] sm:$0xf] %v2094
  %2223 = vst [vmem:[#allocation2 + $0x94] sm:$0xf] %v2095
  %2224 = vst [vmem:[#allocation2 + $0x98] sm:$0xf] %v2096
  %2225 = vst [vmem:[#allocation2 + $0x9c] sm:$0xf] %v2097
  %2226 = vst [vmem:[#allocation2 + $0xa0] sm:$0xf] %v2098
  %2227 = vst [vmem:[#allocation2 + $0xa4] sm:$0xf] %v2099
  %2228 = vst [vmem:[#allocation2 + $0xa8] sm:$0xf] %v2100
  %2229 = vst [vmem:[#allocation2 + $0xac] sm:$0xf] %v2101
  %2230 = vst [vmem:[#allocation2 + $0xb0] sm:$0xf] %v2102
  %2231 = vst [vmem:[#allocation2 + $0xb4] sm:$0xf] %v2103
  %2232 = vst [vmem:[#allocation2 + $0xb8] sm:$0xf] %v2104
  %2233 = vst [vmem:[#allocation2 + $0xbc] sm:$0xf] %v2105
  %2234 = vst [vmem:[#allocation2 + $0xc0] sm:$0xf] %v2106
  %2235 = vst [vmem:[#allocation2 + $0xc4] sm:$0xf] %v2107
  %2236 = vst [vmem:[#allocation2 + $0xc8] sm:$0xf] %v2108
  %2237 = vst [vmem:[#allocation2 + $0xcc] sm:$0xf] %v2109
  %2238 = vst [vmem:[#allocation2 + $0xd0] sm:$0xf] %v2110
  %2239 = vst [vmem:[#allocation2 + $0xd4] sm:$0xf] %v2111
  %2240 = vst [vmem:[#allocation2 + $0xd8] sm:$0xf] %v2112
  %2241 = vst [vmem:[#allocation2 + $0xdc] sm:$0xf] %v2113
  %2242 = vst [vmem:[#allocation2 + $0xe0] sm:$0xf] %v2114
  %2243 = vst [vmem:[#allocation2 + $0xe4] sm:$0xf] %v2115
  %2244 = vst [vmem:[#allocation2 + $0xe8] sm:$0xf] %v2116
  %2245 = vst [vmem:[#allocation2 + $0xec] sm:$0xf] %v2117
  %2246 = vst [vmem:[#allocation2 + $0xf0] sm:$0xf] %v2118
  %2247 = vst [vmem:[#allocation2 + $0xf4] sm:$0xf] %v2119
  %2248 = vst [vmem:[#allocation2 + $0xf8] sm:$0xf] %v2120
  %2249 = vst [vmem:[#allocation2 + $0xfc] sm:$0xf] %v2121
  %2250 = vst [vmem:[#allocation2 + $0x100] sm:$0xf] %v2122
  %2251 = vst [vmem:[#allocation2 + $0x104] sm:$0xf] %v2123
  %2252 = vst [vmem:[#allocation2 + $0x108] sm:$0xf] %v2124
  %2253 = vst [vmem:[#allocation2 + $0x10c] sm:$0xf] %v2125
  %2254 = vst [vmem:[#allocation2 + $0x110] sm:$0xf] %v2126
  %2255 = vst [vmem:[#allocation2 + $0x114] sm:$0xf] %v2127
  %2256 = vst [vmem:[#allocation2 + $0x118] sm:$0xf] %v2128
  %2257 = vst [vmem:[#allocation2 + $0x11c] sm:$0xf] %v2129
  %2258 = vst [vmem:[#allocation2 + $0x120] sm:$0xf] %v2130
  %2259 = vst [vmem:[#allocation2 + $0x124] sm:$0xf] %v2131
  %2260 = vst [vmem:[#allocation2 + $0x128] sm:$0xf] %v2132
  %2261 = vst [vmem:[#allocation2 + $0x12c] sm:$0xf] %v2133
  %2262 = vst [vmem:[#allocation2 + $0x130] sm:$0xf] %v2134
  %2263 = vst [vmem:[#allocation2 + $0x134] sm:$0xf] %v2135
  %2264 = vst [vmem:[#allocation2 + $0x138] sm:$0xf] %v2136
  %2265 = vst [vmem:[#allocation2 + $0x13c] sm:$0xf] %v2137
  %2266 = vst [vmem:[#allocation2 + $0x140] sm:$0xf] %v2138
  %2267 = vst [vmem:[#allocation2 + $0x144] sm:$0xf] %v2139
  %2268 = vst [vmem:[#allocation2 + $0x148] sm:$0xf] %v2140
  %2269 = vst [vmem:[#allocation2 + $0x14c] sm:$0xf] %v2141
  %2270 = vst [vmem:[#allocation2 + $0x150] sm:$0xf] %v2142
  %2271 = vst [vmem:[#allocation2 + $0x154] sm:$0xf] %v2143
  %2272 = vst [vmem:[#allocation2 + $0x158] sm:$0xf] %v2144
  %2273 = vst [vmem:[#allocation2 + $0x15c] sm:$0xf] %v2145
  %2274 = vst [vmem:[#allocation2 + $0x160] sm:$0xf] %v2146
  %2275 = vst [vmem:[#allocation2 + $0x164] sm:$0xf] %v2147
  %2276 = vst [vmem:[#allocation2 + $0x168] sm:$0xf] %v2148
  %2277 = vst [vmem:[#allocation2 + $0x16c] sm:$0xf] %v2149
  %2278 = vst [vmem:[#allocation2 + $0x170] sm:$0xf] %v2150
  %2279 = vst [vmem:[#allocation2 + $0x174] sm:$0xf] %v2151
  %2280 = vst [vmem:[#allocation2 + $0x178] sm:$0xf] %v2152
  %2281 = vst [vmem:[#allocation2 + $0x17c] sm:$0xf] %v2153
  %2282 = vst [vmem:[#allocation2 + $0x180] sm:$0xf] %v2154
  %2283 = vst [vmem:[#allocation2 + $0x184] sm:$0xf] %v2155
  %2284 = vst [vmem:[#allocation2 + $0x188] sm:$0xf] %v2156
  %2285 = vst [vmem:[#allocation2 + $0x18c] sm:$0xf] %v2157
  %2286 = vst [vmem:[#allocation2 + $0x190] sm:$0xf] %v2158
  %2287 = vst [vmem:[#allocation2 + $0x194] sm:$0xf] %v2159
  %2288 = vst [vmem:[#allocation2 + $0x198] sm:$0xf] %v2160
  %2289 = vst [vmem:[#allocation2 + $0x19c] sm:$0xf] %v2161
  %2290 = vst [vmem:[#allocation2 + $0x1a0] sm:$0xf] %v2162
  %2291 = vst [vmem:[#allocation2 + $0x1a4] sm:$0xf] %v2163
  %2292 = vst [vmem:[#allocation2 + $0x1a8] sm:$0xf] %v2164
  %2293 = vst [vmem:[#allocation2 + $0x1ac] sm:$0xf] %v2165
  %2294 = vst [vmem:[#allocation2 + $0x1b0] sm:$0xf] %v2166
  %2295 = vst [vmem:[#allocation2 + $0x1b4] sm:$0xf] %v2167
  %2296 = vst [vmem:[#allocation2 + $0x1b8] sm:$0xf] %v2168
  %2297 = vst [vmem:[#allocation2 + $0x1bc] sm:$0xf] %v2169
  %2298 = vst [vmem:[#allocation2 + $0x1c0] sm:$0xf] %v2170
  %2299 = vst [vmem:[#allocation2 + $0x1c4] sm:$0xf] %v2171
  %2300 = vst [vmem:[#allocation2 + $0x1c8] sm:$0xf] %v2172
  %2301 = vst [vmem:[#allocation2 + $0x1cc] sm:$0xf] %v2173
  %2302 = vst [vmem:[#allocation2 + $0x1d0] sm:$0xf] %v2174
  %2303 = vst [vmem:[#allocation2 + $0x1d4] sm:$0xf] %v2175
  %2304 = vst [vmem:[#allocation2 + $0x1d8] sm:$0xf] %v2176
  %2305 = vst [vmem:[#allocation2 + $0x1dc] sm:$0xf] %v2177
  %2306 = vst [vmem:[#allocation2 + $0x1e0] sm:$0xf] %v2178
  %2307 = vst [vmem:[#allocation2 + $0x1e4] sm:$0xf] %v2179
  %2308 = vst [vmem:[#allocation2 + $0x1e8] sm:$0xf] %v2180
  %2309 = vst [vmem:[#allocation2 + $0x1ec] sm:$0xf] %v2181
  %2310 = vst [vmem:[#allocation2 + $0x1f0] sm:$0xf] %v2182
  %2311 = vst [vmem:[#allocation2 + $0x1f4] sm:$0xf] %v2183
  %2312 = vst [vmem:[#allocation2 + $0x1f8] sm:$0xf] %v2184
  %2313 = vst [vmem:[#allocation2 + $0x1fc] sm:$0xf] %v2185
  %v2314 = vld [vmem:[#allocation2] sm:$0xf]
  %v2315 = vld [vmem:[#allocation2 + $0x4] sm:$0xf]
  %v2316 = vld [vmem:[#allocation2 + $0x8] sm:$0xf]
  %v2317 = vld [vmem:[#allocation2 + $0xc] sm:$0xf]
  %v2318 = vld [vmem:[#allocation2 + $0x10] sm:$0xf]
  %v2319 = vld [vmem:[#allocation2 + $0x14] sm:$0xf]
  %2320 = vst [vmem:[#allocation3] sm:$0xf] %v2314
  %2321 = vst [vmem:[#allocation3 + $0x20] sm:$0xf] %v2315
  %2322 = vst [vmem:[#allocation3 + $0x40] sm:$0xf] %v2316
  %2323 = vst [vmem:[#allocation3 + $0x60] sm:$0xf] %v2317
  %2324 = vst [vmem:[#allocation3 + $0x80] sm:$0xf] %v2318
  %2325 = vst [vmem:[#allocation3 + $0xa0] sm:$0xf] %v2319
  %v2326 = vld [vmem:[#allocation2 + $0x20] sm:$0xf]
  %v2327 = vld [vmem:[#allocation2 + $0x24] sm:$0xf]
  %v2328 = vld [vmem:[#allocation2 + $0x28] sm:$0xf]
  %v2329 = vld [vmem:[#allocation2 + $0x2c] sm:$0xf]
  %v2330 = vld [vmem:[#allocation2 + $0x30] sm:$0xf]
  %v2331 = vld [vmem:[#allocation2 + $0x34] sm:$0xf]
  %2332 = vst [vmem:[#allocation3 + $0x4] sm:$0xf] %v2326
  %2333 = vst [vmem:[#allocation3 + $0x24] sm:$0xf] %v2327
  %2334 = vst [vmem:[#allocation3 + $0x44] sm:$0xf] %v2328
  %2335 = vst [vmem:[#allocation3 + $0x64] sm:$0xf] %v2329
  %2336 = vst [vmem:[#allocation3 + $0x84] sm:$0xf] %v2330
  %2337 = vst [vmem:[#allocation3 + $0xa4] sm:$0xf] %v2331
  %v2338 = vld [vmem:[#allocation2 + $0x80] sm:$0xf]
  %v2339 = vld [vmem:[#allocation2 + $0x84] sm:$0xf]
  %v2340 = vld [vmem:[#allocation2 + $0x88] sm:$0xf]
  %v2341 = vld [vmem:[#allocation2 + $0x8c] sm:$0xf]
  %v2342 = vld [vmem:[#allocation2 + $0x90] sm:$0xf]
  %v2343 = vld [vmem:[#allocation2 + $0x94] sm:$0xf]
  %2344 = vst [vmem:[#allocation3 + $0x8] sm:$0xf] %v2338
  %2345 = vst [vmem:[#allocation3 + $0x28] sm:$0xf] %v2339
  %2346 = vst [vmem:[#allocation3 + $0x48] sm:$0xf] %v2340
  %2347 = vst [vmem:[#allocation3 + $0x68] sm:$0xf] %v2341
  %2348 = vst [vmem:[#allocation3 + $0x88] sm:$0xf] %v2342
  %2349 = vst [vmem:[#allocation3 + $0xa8] sm:$0xf] %v2343
  %v2350 = vld [vmem:[#allocation2 + $0xa0] sm:$0xf]
  %v2351 = vld [vmem:[#allocation2 + $0xa4] sm:$0xf]
  %v2352 = vld [vmem:[#allocation2 + $0xa8] sm:$0xf]
  %v2353 = vld [vmem:[#allocation2 + $0xac] sm:$0xf]
  %v2354 = vld [vmem:[#allocation2 + $0xb0] sm:$0xf]
  %v2355 = vld [vmem:[#allocation2 + $0xb4] sm:$0xf]
  %2356 = vst [vmem:[#allocation3 + $0xc] sm:$0xf] %v2350
  %2357 = vst [vmem:[#allocation3 + $0x2c] sm:$0xf] %v2351
  %2358 = vst [vmem:[#allocation3 + $0x4c] sm:$0xf] %v2352
  %2359 = vst [vmem:[#allocation3 + $0x6c] sm:$0xf] %v2353
  %2360 = vst [vmem:[#allocation3 + $0x8c] sm:$0xf] %v2354
  %2361 = vst [vmem:[#allocation3 + $0xac] sm:$0xf] %v2355
  %v2362 = vld [vmem:[#allocation2 + $0x100] sm:$0xf]
  %v2363 = vld [vmem:[#allocation2 + $0x104] sm:$0xf]
  %v2364 = vld [vmem:[#allocation2 + $0x108] sm:$0xf]
  %v2365 = vld [vmem:[#allocation2 + $0x10c] sm:$0xf]
  %v2366 = vld [vmem:[#allocation2 + $0x110] sm:$0xf]
  %v2367 = vld [vmem:[#allocation2 + $0x114] sm:$0xf]
  %2368 = vst [vmem:[#allocation3 + $0x10] sm:$0xf] %v2362
  %2369 = vst [vmem:[#allocation3 + $0x30] sm:$0xf] %v2363
  %2370 = vst [vmem:[#allocation3 + $0x50] sm:$0xf] %v2364
  %2371 = vst [vmem:[#allocation3 + $0x70] sm:$0xf] %v2365
  %2372 = vst [vmem:[#allocation3 + $0x90] sm:$0xf] %v2366
  %2373 = vst [vmem:[#allocation3 + $0xb0] sm:$0xf] %v2367
  %v2374 = vld [vmem:[#allocation2 + $0x120] sm:$0xf]
  %v2375 = vld [vmem:[#allocation2 + $0x124] sm:$0xf]
  %v2376 = vld [vmem:[#allocation2 + $0x128] sm:$0xf]
  %v2377 = vld [vmem:[#allocation2 + $0x12c] sm:$0xf]
  %v2378 = vld [vmem:[#allocation2 + $0x130] sm:$0xf]
  %v2379 = vld [vmem:[#allocation2 + $0x134] sm:$0xf]
  %2380 = vst [vmem:[#allocation3 + $0x14] sm:$0xf] %v2374
  %2381 = vst [vmem:[#allocation3 + $0x34] sm:$0xf] %v2375
  %2382 = vst [vmem:[#allocation3 + $0x54] sm:$0xf] %v2376
  %2383 = vst [vmem:[#allocation3 + $0x74] sm:$0xf] %v2377
  %2384 = vst [vmem:[#allocation3 + $0x94] sm:$0xf] %v2378
  %2385 = vst [vmem:[#allocation3 + $0xb4] sm:$0xf] %v2379
  %v2386 = vld [vmem:[#allocation2 + $0x180] sm:$0xf]
  %v2387 = vld [vmem:[#allocation2 + $0x184] sm:$0xf]
  %v2388 = vld [vmem:[#allocation2 + $0x188] sm:$0xf]
  %v2389 = vld [vmem:[#allocation2 + $0x18c] sm:$0xf]
  %v2390 = vld [vmem:[#allocation2 + $0x190] sm:$0xf]
  %v2391 = vld [vmem:[#allocation2 + $0x194] sm:$0xf]
  %2392 = vst [vmem:[#allocation3 + $0x18] sm:$0xf] %v2386
  %2393 = vst [vmem:[#allocation3 + $0x38] sm:$0xf] %v2387
  %2394 = vst [vmem:[#allocation3 + $0x58] sm:$0xf] %v2388
  %2395 = vst [vmem:[#allocation3 + $0x78] sm:$0xf] %v2389
  %2396 = vst [vmem:[#allocation3 + $0x98] sm:$0xf] %v2390
  %2397 = vst [vmem:[#allocation3 + $0xb8] sm:$0xf] %v2391
  %v2398 = vld [vmem:[#allocation2 + $0x1a0] sm:$0xf]
  %v2399 = vld [vmem:[#allocation2 + $0x1a4] sm:$0xf]
  %v2400 = vld [vmem:[#allocation2 + $0x1a8] sm:$0xf]
  %v2401 = vld [vmem:[#allocation2 + $0x1ac] sm:$0xf]
  %v2402 = vld [vmem:[#allocation2 + $0x1b0] sm:$0xf]
  %v2403 = vld [vmem:[#allocation2 + $0x1b4] sm:$0xf]
  %2404 = vst [vmem:[#allocation3 + $0x1c] sm:$0xf] %v2398
  %2405 = vst [vmem:[#allocation3 + $0x3c] sm:$0xf] %v2399
  %2406 = vst [vmem:[#allocation3 + $0x5c] sm:$0xf] %v2400
  %2407 = vst [vmem:[#allocation3 + $0x7c] sm:$0xf] %v2401
  %2408 = vst [vmem:[#allocation3 + $0x9c] sm:$0xf] %v2402
  %2409 = vst [vmem:[#allocation3 + $0xbc] sm:$0xf] %v2403
  %v2410 = vld [vmem:[#allocation2 + $0x40] sm:$0xf]
  %v2411 = vld [vmem:[#allocation2 + $0x44] sm:$0xf]
  %v2412 = vld [vmem:[#allocation2 + $0x48] sm:$0xf]
  %v2413 = vld [vmem:[#allocation2 + $0x4c] sm:$0xf]
  %v2414 = vld [vmem:[#allocation2 + $0x50] sm:$0xf]
  %v2415 = vld [vmem:[#allocation2 + $0x54] sm:$0xf]
  %2416 = vst [vmem:[#allocation3 + $0xc0] sm:$0xf] %v2410
  %2417 = vst [vmem:[#allocation3 + $0xe0] sm:$0xf] %v2411
  %2418 = vst [vmem:[#allocation3 + $0x100] sm:$0xf] %v2412
  %2419 = vst [vmem:[#allocation3 + $0x120] sm:$0xf] %v2413
  %2420 = vst [vmem:[#allocation3 + $0x140] sm:$0xf] %v2414
  %2421 = vst [vmem:[#allocation3 + $0x160] sm:$0xf] %v2415
  %v2422 = vld [vmem:[#allocation2 + $0x60] sm:$0xf]
  %v2423 = vld [vmem:[#allocation2 + $0x64] sm:$0xf]
  %v2424 = vld [vmem:[#allocation2 + $0x68] sm:$0xf]
  %v2425 = vld [vmem:[#allocation2 + $0x6c] sm:$0xf]
  %v2426 = vld [vmem:[#allocation2 + $0x70] sm:$0xf]
  %v2427 = vld [vmem:[#allocation2 + $0x74] sm:$0xf]
  %2428 = vst [vmem:[#allocation3 + $0xc4] sm:$0xf] %v2422
  %2429 = vst [vmem:[#allocation3 + $0xe4] sm:$0xf] %v2423
  %2430 = vst [vmem:[#allocation3 + $0x104] sm:$0xf] %v2424
  %2431 = vst [vmem:[#allocation3 + $0x124] sm:$0xf] %v2425
  %2432 = vst [vmem:[#allocation3 + $0x144] sm:$0xf] %v2426
  %2433 = vst [vmem:[#allocation3 + $0x164] sm:$0xf] %v2427
  %v2434 = vld [vmem:[#allocation2 + $0xc0] sm:$0xf]
  %v2435 = vld [vmem:[#allocation2 + $0xc4] sm:$0xf]
  %v2436 = vld [vmem:[#allocation2 + $0xc8] sm:$0xf]
  %v2437 = vld [vmem:[#allocation2 + $0xcc] sm:$0xf]
  %v2438 = vld [vmem:[#allocation2 + $0xd0] sm:$0xf]
  %v2439 = vld [vmem:[#allocation2 + $0xd4] sm:$0xf]
  %2440 = vst [vmem:[#allocation3 + $0xc8] sm:$0xf] %v2434
  %2441 = vst [vmem:[#allocation3 + $0xe8] sm:$0xf] %v2435
  %2442 = vst [vmem:[#allocation3 + $0x108] sm:$0xf] %v2436
  %2443 = vst [vmem:[#allocation3 + $0x128] sm:$0xf] %v2437
  %2444 = vst [vmem:[#allocation3 + $0x148] sm:$0xf] %v2438
  %2445 = vst [vmem:[#allocation3 + $0x168] sm:$0xf] %v2439
  %v2446 = vld [vmem:[#allocation2 + $0xe0] sm:$0xf]
  %v2447 = vld [vmem:[#allocation2 + $0xe4] sm:$0xf]
  %v2448 = vld [vmem:[#allocation2 + $0xe8] sm:$0xf]
  %v2449 = vld [vmem:[#allocation2 + $0xec] sm:$0xf]
  %v2450 = vld [vmem:[#allocation2 + $0xf0] sm:$0xf]
  %v2451 = vld [vmem:[#allocation2 + $0xf4] sm:$0xf]
  %2452 = vst [vmem:[#allocation3 + $0xcc] sm:$0xf] %v2446
  %2453 = vst [vmem:[#allocation3 + $0xec] sm:$0xf] %v2447
  %2454 = vst [vmem:[#allocation3 + $0x10c] sm:$0xf] %v2448
  %2455 = vst [vmem:[#allocation3 + $0x12c] sm:$0xf] %v2449
  %2456 = vst [vmem:[#allocation3 + $0x14c] sm:$0xf] %v2450
  %2457 = vst [vmem:[#allocation3 + $0x16c] sm:$0xf] %v2451
  %v2458 = vld [vmem:[#allocation2 + $0x140] sm:$0xf]
  %v2459 = vld [vmem:[#allocation2 + $0x144] sm:$0xf]
  %v2460 = vld [vmem:[#allocation2 + $0x148] sm:$0xf]
  %v2461 = vld [vmem:[#allocation2 + $0x14c] sm:$0xf]
  %v2462 = vld [vmem:[#allocation2 + $0x150] sm:$0xf]
  %v2463 = vld [vmem:[#allocation2 + $0x154] sm:$0xf]
  %2464 = vst [vmem:[#allocation3 + $0xd0] sm:$0xf] %v2458
  %2465 = vst [vmem:[#allocation3 + $0xf0] sm:$0xf] %v2459
  %2466 = vst [vmem:[#allocation3 + $0x110] sm:$0xf] %v2460
  %2467 = vst [vmem:[#allocation3 + $0x130] sm:$0xf] %v2461
  %2468 = vst [vmem:[#allocation3 + $0x150] sm:$0xf] %v2462
  %2469 = vst [vmem:[#allocation3 + $0x170] sm:$0xf] %v2463
  %v2470 = vld [vmem:[#allocation2 + $0x160] sm:$0xf]
  %v2471 = vld [vmem:[#allocation2 + $0x164] sm:$0xf]
  %v2472 = vld [vmem:[#allocation2 + $0x168] sm:$0xf]
  %v2473 = vld [vmem:[#allocation2 + $0x16c] sm:$0xf]
  %v2474 = vld [vmem:[#allocation2 + $0x170] sm:$0xf]
  %v2475 = vld [vmem:[#allocation2 + $0x174] sm:$0xf]
  %2476 = vst [vmem:[#allocation3 + $0xd4] sm:$0xf] %v2470
  %2477 = vst [vmem:[#allocation3 + $0xf4] sm:$0xf] %v2471
  %2478 = vst [vmem:[#allocation3 + $0x114] sm:$0xf] %v2472
  %2479 = vst [vmem:[#allocation3 + $0x134] sm:$0xf] %v2473
  %2480 = vst [vmem:[#allocation3 + $0x154] sm:$0xf] %v2474
  %2481 = vst [vmem:[#allocation3 + $0x174] sm:$0xf] %v2475
  %v2482 = vld [vmem:[#allocation2 + $0x1c0] sm:$0xf]
  %v2483 = vld [vmem:[#allocation2 + $0x1c4] sm:$0xf]
  %v2484 = vld [vmem:[#allocation2 + $0x1c8] sm:$0xf]
  %v2485 = vld [vmem:[#allocation2 + $0x1cc] sm:$0xf]
  %v2486 = vld [vmem:[#allocation2 + $0x1d0] sm:$0xf]
  %v2487 = vld [vmem:[#allocation2 + $0x1d4] sm:$0xf]
  %2488 = vst [vmem:[#allocation3 + $0xd8] sm:$0xf] %v2482
  %2489 = vst [vmem:[#allocation3 + $0xf8] sm:$0xf] %v2483
  %2490 = vst [vmem:[#allocation3 + $0x118] sm:$0xf] %v2484
  %2491 = vst [vmem:[#allocation3 + $0x138] sm:$0xf] %v2485
  %2492 = vst [vmem:[#allocation3 + $0x158] sm:$0xf] %v2486
  %2493 = vst [vmem:[#allocation3 + $0x178] sm:$0xf] %v2487
  %v2494 = vld [vmem:[#allocation2 + $0x1e0] sm:$0xf]
  %v2495 = vld [vmem:[#allocation2 + $0x1e4] sm:$0xf]
  %v2496 = vld [vmem:[#allocation2 + $0x1e8] sm:$0xf]
  %v2497 = vld [vmem:[#allocation2 + $0x1ec] sm:$0xf]
  %v2498 = vld [vmem:[#allocation2 + $0x1f0] sm:$0xf]
  %v2499 = vld [vmem:[#allocation2 + $0x1f4] sm:$0xf]
  %2500 = vst [vmem:[#allocation3 + $0xdc] sm:$0xf] %v2494
  %2501 = vst [vmem:[#allocation3 + $0xfc] sm:$0xf] %v2495
  %2502 = vst [vmem:[#allocation3 + $0x11c] sm:$0xf] %v2496
  %2503 = vst [vmem:[#allocation3 + $0x13c] sm:$0xf] %v2497
  %2504 = vst [vmem:[#allocation3 + $0x15c] sm:$0xf] %v2498
  %2505 = vst [vmem:[#allocation3 + $0x17c] sm:$0xf] %v2499
  %v2506 = vld [vmem:[#allocation2 + $0x100] sm:$0xf]
  %v2507 = vld [vmem:[#allocation2 + $0x104] sm:$0xf]
  %v2508 = vld [vmem:[#allocation2 + $0x108] sm:$0xf]
  %v2509 = vld [vmem:[#allocation2 + $0x10c] sm:$0xf]
  %v2510 = vld [vmem:[#allocation2 + $0x110] sm:$0xf]
  %v2511 = vld [vmem:[#allocation2 + $0x114] sm:$0xf]
  %2512 = vst [vmem:[#allocation3 + $0x180] sm:$0xf] %v2506
  %2513 = vst [vmem:[#allocation3 + $0x1a0] sm:$0xf] %v2507
  %2514 = vst [vmem:[#allocation3 + $0x1c0] sm:$0xf] %v2508
  %2515 = vst [vmem:[#allocation3 + $0x1e0] sm:$0xf] %v2509
  %2516 = vst [vmem:[#allocation3 + $0x200] sm:$0xf] %v2510
  %2517 = vst [vmem:[#allocation3 + $0x220] sm:$0xf] %v2511
  %v2518 = vld [vmem:[#allocation2 + $0x120] sm:$0xf]
  %v2519 = vld [vmem:[#allocation2 + $0x124] sm:$0xf]
  %v2520 = vld [vmem:[#allocation2 + $0x128] sm:$0xf]
  %v2521 = vld [vmem:[#allocation2 + $0x12c] sm:$0xf]
  %v2522 = vld [vmem:[#allocation2 + $0x130] sm:$0xf]
  %v2523 = vld [vmem:[#allocation2 + $0x134] sm:$0xf]
  %2524 = vst [vmem:[#allocation3 + $0x184] sm:$0xf] %v2518
  %2525 = vst [vmem:[#allocation3 + $0x1a4] sm:$0xf] %v2519
  %2526 = vst [vmem:[#allocation3 + $0x1c4] sm:$0xf] %v2520
  %2527 = vst [vmem:[#allocation3 + $0x1e4] sm:$0xf] %v2521
  %2528 = vst [vmem:[#allocation3 + $0x204] sm:$0xf] %v2522
  %2529 = vst [vmem:[#allocation3 + $0x224] sm:$0xf] %v2523
  %v2530 = vld [vmem:[#allocation2 + $0x180] sm:$0xf]
  %v2531 = vld [vmem:[#allocation2 + $0x184] sm:$0xf]
  %v2532 = vld [vmem:[#allocation2 + $0x188] sm:$0xf]
  %v2533 = vld [vmem:[#allocation2 + $0x18c] sm:$0xf]
  %v2534 = vld [vmem:[#allocation2 + $0x190] sm:$0xf]
  %v2535 = vld [vmem:[#allocation2 + $0x194] sm:$0xf]
  %2536 = vst [vmem:[#allocation3 + $0x188] sm:$0xf] %v2530
  %2537 = vst [vmem:[#allocation3 + $0x1a8] sm:$0xf] %v2531
  %2538 = vst [vmem:[#allocation3 + $0x1c8] sm:$0xf] %v2532
  %2539 = vst [vmem:[#allocation3 + $0x1e8] sm:$0xf] %v2533
  %2540 = vst [vmem:[#allocation3 + $0x208] sm:$0xf] %v2534
  %2541 = vst [vmem:[#allocation3 + $0x228] sm:$0xf] %v2535
  %v2542 = vld [vmem:[#allocation2 + $0x1a0] sm:$0xf]
  %v2543 = vld [vmem:[#allocation2 + $0x1a4] sm:$0xf]
  %v2544 = vld [vmem:[#allocation2 + $0x1a8] sm:$0xf]
  %v2545 = vld [vmem:[#allocation2 + $0x1ac] sm:$0xf]
  %v2546 = vld [vmem:[#allocation2 + $0x1b0] sm:$0xf]
  %v2547 = vld [vmem:[#allocation2 + $0x1b4] sm:$0xf]
  %2548 = vst [vmem:[#allocation3 + $0x18c] sm:$0xf] %v2542
  %2549 = vst [vmem:[#allocation3 + $0x1ac] sm:$0xf] %v2543
  %2550 = vst [vmem:[#allocation3 + $0x1cc] sm:$0xf] %v2544
  %2551 = vst [vmem:[#allocation3 + $0x1ec] sm:$0xf] %v2545
  %2552 = vst [vmem:[#allocation3 + $0x20c] sm:$0xf] %v2546
  %2553 = vst [vmem:[#allocation3 + $0x22c] sm:$0xf] %v2547
  %v2554 = vld [vmem:[#allocation2 + $0x4] sm:$0xf]
  %v2555 = vld [vmem:[#allocation2 + $0x8] sm:$0xf]
  %v2556 = vld [vmem:[#allocation2 + $0xc] sm:$0xf]
  %v2557 = vld [vmem:[#allocation2 + $0x10] sm:$0xf]
  %v2558 = vld [vmem:[#allocation2 + $0x14] sm:$0xf]
  %v2559 = vld [vmem:[#allocation2 + $0x18] sm:$0xf]
  %2560 = vst [vmem:[#allocation3 + $0x190] sm:$0xf] %v2554
  %2561 = vst [vmem:[#allocation3 + $0x1b0] sm:$0xf] %v2555
  %2562 = vst [vmem:[#allocation3 + $0x1d0] sm:$0xf] %v2556
  %2563 = vst [vmem:[#allocation3 + $0x1f0] sm:$0xf] %v2557
  %2564 = vst [vmem:[#allocation3 + $0x210] sm:$0xf] %v2558
  %2565 = vst [vmem:[#allocation3 + $0x230] sm:$0xf] %v2559
  %v2566 = vld [vmem:[#allocation2 + $0x24] sm:$0xf]
  %v2567 = vld [vmem:[#allocation2 + $0x28] sm:$0xf]
  %v2568 = vld [vmem:[#allocation2 + $0x2c] sm:$0xf]
  %v2569 = vld [vmem:[#allocation2 + $0x30] sm:$0xf]
  %v2570 = vld [vmem:[#allocation2 + $0x34] sm:$0xf]
  %v2571 = vld [vmem:[#allocation2 + $0x38] sm:$0xf]
  %2572 = vst [vmem:[#allocation3 + $0x194] sm:$0xf] %v2566
  %2573 = vst [vmem:[#allocation3 + $0x1b4] sm:$0xf] %v2567
  %2574 = vst [vmem:[#allocation3 + $0x1d4] sm:$0xf] %v2568
  %2575 = vst [vmem:[#allocation3 + $0x1f4] sm:$0xf] %v2569
  %2576 = vst [vmem:[#allocation3 + $0x214] sm:$0xf] %v2570
  %2577 = vst [vmem:[#allocation3 + $0x234] sm:$0xf] %v2571
  %v2578 = vld [vmem:[#allocation2 + $0x84] sm:$0xf]
  %v2579 = vld [vmem:[#allocation2 + $0x88] sm:$0xf]
  %v2580 = vld [vmem:[#allocation2 + $0x8c] sm:$0xf]
  %v2581 = vld [vmem:[#allocation2 + $0x90] sm:$0xf]
  %v2582 = vld [vmem:[#allocation2 + $0x94] sm:$0xf]
  %v2583 = vld [vmem:[#allocation2 + $0x98] sm:$0xf]
  %2584 = vst [vmem:[#allocation3 + $0x198] sm:$0xf] %v2578
  %2585 = vst [vmem:[#allocation3 + $0x1b8] sm:$0xf] %v2579
  %2586 = vst [vmem:[#allocation3 + $0x1d8] sm:$0xf] %v2580
  %2587 = vst [vmem:[#allocation3 + $0x1f8] sm:$0xf] %v2581
  %2588 = vst [vmem:[#allocation3 + $0x218] sm:$0xf] %v2582
  %2589 = vst [vmem:[#allocation3 + $0x238] sm:$0xf] %v2583
  %v2590 = vld [vmem:[#allocation2 + $0xa4] sm:$0xf]
  %v2591 = vld [vmem:[#allocation2 + $0xa8] sm:$0xf]
  %v2592 = vld [vmem:[#allocation2 + $0xac] sm:$0xf]
  %v2593 = vld [vmem:[#allocation2 + $0xb0] sm:$0xf]
  %v2594 = vld [vmem:[#allocation2 + $0xb4] sm:$0xf]
  %v2595 = vld [vmem:[#allocation2 + $0xb8] sm:$0xf]
  %2596 = vst [vmem:[#allocation3 + $0x19c] sm:$0xf] %v2590
  %2597 = vst [vmem:[#allocation3 + $0x1bc] sm:$0xf] %v2591
  %2598 = vst [vmem:[#allocation3 + $0x1dc] sm:$0xf] %v2592
  %2599 = vst [vmem:[#allocation3 + $0x1fc] sm:$0xf] %v2593
  %2600 = vst [vmem:[#allocation3 + $0x21c] sm:$0xf] %v2594
  %2601 = vst [vmem:[#allocation3 + $0x23c] sm:$0xf] %v2595
  %v2602 = vld [vmem:[#allocation2 + $0x140] sm:$0xf]
  %v2603 = vld [vmem:[#allocation2 + $0x144] sm:$0xf]
  %v2604 = vld [vmem:[#allocation2 + $0x148] sm:$0xf]
  %v2605 = vld [vmem:[#allocation2 + $0x14c] sm:$0xf]
  %v2606 = vld [vmem:[#allocation2 + $0x150] sm:$0xf]
  %v2607 = vld [vmem:[#allocation2 + $0x154] sm:$0xf]
  %2608 = vst [vmem:[#allocation3 + $0x240] sm:$0xf] %v2602
  %2609 = vst [vmem:[#allocation3 + $0x260] sm:$0xf] %v2603
  %2610 = vst [vmem:[#allocation3 + $0x280] sm:$0xf] %v2604
  %2611 = vst [vmem:[#allocation3 + $0x2a0] sm:$0xf] %v2605
  %2612 = vst [vmem:[#allocation3 + $0x2c0] sm:$0xf] %v2606
  %2613 = vst [vmem:[#allocation3 + $0x2e0] sm:$0xf] %v2607
  %v2614 = vld [vmem:[#allocation2 + $0x160] sm:$0xf]
  %v2615 = vld [vmem:[#allocation2 + $0x164] sm:$0xf]
  %v2616 = vld [vmem:[#allocation2 + $0x168] sm:$0xf]
  %v2617 = vld [vmem:[#allocation2 + $0x16c] sm:$0xf]
  %v2618 = vld [vmem:[#allocation2 + $0x170] sm:$0xf]
  %v2619 = vld [vmem:[#allocation2 + $0x174] sm:$0xf]
  %2620 = vst [vmem:[#allocation3 + $0x244] sm:$0xf] %v2614
  %2621 = vst [vmem:[#allocation3 + $0x264] sm:$0xf] %v2615
  %2622 = vst [vmem:[#allocation3 + $0x284] sm:$0xf] %v2616
  %2623 = vst [vmem:[#allocation3 + $0x2a4] sm:$0xf] %v2617
  %2624 = vst [vmem:[#allocation3 + $0x2c4] sm:$0xf] %v2618
  %2625 = vst [vmem:[#allocation3 + $0x2e4] sm:$0xf] %v2619
  %v2626 = vld [vmem:[#allocation2 + $0x1c0] sm:$0xf]
  %v2627 = vld [vmem:[#allocation2 + $0x1c4] sm:$0xf]
  %v2628 = vld [vmem:[#allocation2 + $0x1c8] sm:$0xf]
  %v2629 = vld [vmem:[#allocation2 + $0x1cc] sm:$0xf]
  %v2630 = vld [vmem:[#allocation2 + $0x1d0] sm:$0xf]
  %v2631 = vld [vmem:[#allocation2 + $0x1d4] sm:$0xf]
  %2632 = vst [vmem:[#allocation3 + $0x248] sm:$0xf] %v2626
  %2633 = vst [vmem:[#allocation3 + $0x268] sm:$0xf] %v2627
  %2634 = vst [vmem:[#allocation3 + $0x288] sm:$0xf] %v2628
  %2635 = vst [vmem:[#allocation3 + $0x2a8] sm:$0xf] %v2629
  %2636 = vst [vmem:[#allocation3 + $0x2c8] sm:$0xf] %v2630
  %2637 = vst [vmem:[#allocation3 + $0x2e8] sm:$0xf] %v2631
  %v2638 = vld [vmem:[#allocation2 + $0x1e0] sm:$0xf]
  %v2639 = vld [vmem:[#allocation2 + $0x1e4] sm:$0xf]
  %v2640 = vld [vmem:[#allocation2 + $0x1e8] sm:$0xf]
  %v2641 = vld [vmem:[#allocation2 + $0x1ec] sm:$0xf]
  %v2642 = vld [vmem:[#allocation2 + $0x1f0] sm:$0xf]
  %v2643 = vld [vmem:[#allocation2 + $0x1f4] sm:$0xf]
  %2644 = vst [vmem:[#allocation3 + $0x24c] sm:$0xf] %v2638
  %2645 = vst [vmem:[#allocation3 + $0x26c] sm:$0xf] %v2639
  %2646 = vst [vmem:[#allocation3 + $0x28c] sm:$0xf] %v2640
  %2647 = vst [vmem:[#allocation3 + $0x2ac] sm:$0xf] %v2641
  %2648 = vst [vmem:[#allocation3 + $0x2cc] sm:$0xf] %v2642
  %2649 = vst [vmem:[#allocation3 + $0x2ec] sm:$0xf] %v2643
  %v2650 = vld [vmem:[#allocation2 + $0x44] sm:$0xf]
  %v2651 = vld [vmem:[#allocation2 + $0x48] sm:$0xf]
  %v2652 = vld [vmem:[#allocation2 + $0x4c] sm:$0xf]
  %v2653 = vld [vmem:[#allocation2 + $0x50] sm:$0xf]
  %v2654 = vld [vmem:[#allocation2 + $0x54] sm:$0xf]
  %v2655 = vld [vmem:[#allocation2 + $0x58] sm:$0xf]
  %2656 = vst [vmem:[#allocation3 + $0x250] sm:$0xf] %v2650
  %2657 = vst [vmem:[#allocation3 + $0x270] sm:$0xf] %v2651
  %2658 = vst [vmem:[#allocation3 + $0x290] sm:$0xf] %v2652
  %2659 = vst [vmem:[#allocation3 + $0x2b0] sm:$0xf] %v2653
  %2660 = vst [vmem:[#allocation3 + $0x2d0] sm:$0xf] %v2654
  %2661 = vst [vmem:[#allocation3 + $0x2f0] sm:$0xf] %v2655
  %v2662 = vld [vmem:[#allocation2 + $0x64] sm:$0xf]
  %v2663 = vld [vmem:[#allocation2 + $0x68] sm:$0xf]
  %v2664 = vld [vmem:[#allocation2 + $0x6c] sm:$0xf]
  %v2665 = vld [vmem:[#allocation2 + $0x70] sm:$0xf]
  %v2666 = vld [vmem:[#allocation2 + $0x74] sm:$0xf]
  %v2667 = vld [vmem:[#allocation2 + $0x78] sm:$0xf]
  %2668 = vst [vmem:[#allocation3 + $0x254] sm:$0xf] %v2662
  %2669 = vst [vmem:[#allocation3 + $0x274] sm:$0xf] %v2663
  %2670 = vst [vmem:[#allocation3 + $0x294] sm:$0xf] %v2664
  %2671 = vst [vmem:[#allocation3 + $0x2b4] sm:$0xf] %v2665
  %2672 = vst [vmem:[#allocation3 + $0x2d4] sm:$0xf] %v2666
  %2673 = vst [vmem:[#allocation3 + $0x2f4] sm:$0xf] %v2667
  %v2674 = vld [vmem:[#allocation2 + $0xc4] sm:$0xf]
  %v2675 = vld [vmem:[#allocation2 + $0xc8] sm:$0xf]
  %v2676 = vld [vmem:[#allocation2 + $0xcc] sm:$0xf]
  %v2677 = vld [vmem:[#allocation2 + $0xd0] sm:$0xf]
  %v2678 = vld [vmem:[#allocation2 + $0xd4] sm:$0xf]
  %v2679 = vld [vmem:[#allocation2 + $0xd8] sm:$0xf]
  %2680 = vst [vmem:[#allocation3 + $0x258] sm:$0xf] %v2674
  %2681 = vst [vmem:[#allocation3 + $0x278] sm:$0xf] %v2675
  %2682 = vst [vmem:[#allocation3 + $0x298] sm:$0xf] %v2676
  %2683 = vst [vmem:[#allocation3 + $0x2b8] sm:$0xf] %v2677
  %2684 = vst [vmem:[#allocation3 + $0x2d8] sm:$0xf] %v2678
  %2685 = vst [vmem:[#allocation3 + $0x2f8] sm:$0xf] %v2679
  %v2686 = vld [vmem:[#allocation2 + $0xe4] sm:$0xf]
  %v2687 = vld [vmem:[#allocation2 + $0xe8] sm:$0xf]
  %v2688 = vld [vmem:[#allocation2 + $0xec] sm:$0xf]
  %v2689 = vld [vmem:[#allocation2 + $0xf0] sm:$0xf]
  %v2690 = vld [vmem:[#allocation2 + $0xf4] sm:$0xf]
  %v2691 = vld [vmem:[#allocation2 + $0xf8] sm:$0xf]
  %2692 = vst [vmem:[#allocation3 + $0x25c] sm:$0xf] %v2686
  %2693 = vst [vmem:[#allocation3 + $0x27c] sm:$0xf] %v2687
  %2694 = vst [vmem:[#allocation3 + $0x29c] sm:$0xf] %v2688
  %2695 = vst [vmem:[#allocation3 + $0x2bc] sm:$0xf] %v2689
  %2696 = vst [vmem:[#allocation3 + $0x2dc] sm:$0xf] %v2690
  %2697 = vst [vmem:[#allocation3 + $0x2fc] sm:$0xf] %v2691
  %v2698 = vld [vmem:[#allocation3] sm:$0xff]
  %v2699 = vld [vmem:[#allocation3 + $0x8] sm:$0xff]
  %v2700 = vld [vmem:[#allocation3 + $0x10] sm:$0xff]
  %v2701 = vld [vmem:[#allocation3 + $0x18] sm:$0xff]
  %v2702 = vld [vmem:[#allocation3 + $0x20] sm:$0xff]
  %v2703 = vld [vmem:[#allocation3 + $0x28] sm:$0xff]
  %v2704 = vld [vmem:[#allocation3 + $0x30] sm:$0xff]
  %v2705 = vld [vmem:[#allocation3 + $0x38] sm:$0xff]
  %v2706 = vld [vmem:[#allocation3 + $0x40] sm:$0xff]
  %v2707 = vld [vmem:[#allocation3 + $0x48] sm:$0xff]
  %v2708 = vld [vmem:[#allocation3 + $0x50] sm:$0xff]
  %v2709 = vld [vmem:[#allocation3 + $0x58] sm:$0xff]
  %v2710 = vld [vmem:[#allocation3 + $0x60] sm:$0xff]
  %v2711 = vld [vmem:[#allocation3 + $0x68] sm:$0xff]
  %v2712 = vld [vmem:[#allocation3 + $0x70] sm:$0xff]
  %v2713 = vld [vmem:[#allocation3 + $0x78] sm:$0xff]
  %v2714 = vld [vmem:[#allocation3 + $0x80] sm:$0xff]
  %v2715 = vld [vmem:[#allocation3 + $0x88] sm:$0xff]
  %v2716 = vld [vmem:[#allocation3 + $0x90] sm:$0xff]
  %v2717 = vld [vmem:[#allocation3 + $0x98] sm:$0xff]
  %v2718 = vld [vmem:[#allocation3 + $0xa0] sm:$0xff]
  %v2719 = vld [vmem:[#allocation3 + $0xa8] sm:$0xff]
  %v2720 = vld [vmem:[#allocation3 + $0xb0] sm:$0xff]
  %v2721 = vld [vmem:[#allocation3 + $0xb8] sm:$0xff]
  %v2722 = vld [vmem:[#allocation3 + $0xc0] sm:$0xff]
  %v2723 = vld [vmem:[#allocation3 + $0xc8] sm:$0xff]
  %v2724 = vld [vmem:[#allocation3 + $0xd0] sm:$0xff]
  %v2725 = vld [vmem:[#allocation3 + $0xd8] sm:$0xff]
  %v2726 = vld [vmem:[#allocation3 + $0xe0] sm:$0xff]
  %v2727 = vld [vmem:[#allocation3 + $0xe8] sm:$0xff]
  %v2728 = vld [vmem:[#allocation3 + $0xf0] sm:$0xff]
  %v2729 = vld [vmem:[#allocation3 + $0xf8] sm:$0xff]
  %v2730 = vld [vmem:[#allocation3 + $0x100] sm:$0xff]
  %v2731 = vld [vmem:[#allocation3 + $0x108] sm:$0xff]
  %v2732 = vld [vmem:[#allocation3 + $0x110] sm:$0xff]
  %v2733 = vld [vmem:[#allocation3 + $0x118] sm:$0xff]
  %v2734 = vld [vmem:[#allocation3 + $0x120] sm:$0xff]
  %v2735 = vld [vmem:[#allocation3 + $0x128] sm:$0xff]
  %v2736 = vld [vmem:[#allocation3 + $0x130] sm:$0xff]
  %v2737 = vld [vmem:[#allocation3 + $0x138] sm:$0xff]
  %v2738 = vld [vmem:[#allocation3 + $0x140] sm:$0xff]
  %v2739 = vld [vmem:[#allocation3 + $0x148] sm:$0xff]
  %v2740 = vld [vmem:[#allocation3 + $0x150] sm:$0xff]
  %v2741 = vld [vmem:[#allocation3 + $0x158] sm:$0xff]
  %v2742 = vld [vmem:[#allocation3 + $0x160] sm:$0xff]
  %v2743 = vld [vmem:[#allocation3 + $0x168] sm:$0xff]
  %v2744 = vld [vmem:[#allocation3 + $0x170] sm:$0xff]
  %v2745 = vld [vmem:[#allocation3 + $0x178] sm:$0xff]
  %v2746 = vld [vmem:[#allocation3 + $0x180] sm:$0xff]
  %v2747 = vld [vmem:[#allocation3 + $0x188] sm:$0xff]
  %v2748 = vld [vmem:[#allocation3 + $0x190] sm:$0xff]
  %v2749 = vld [vmem:[#allocation3 + $0x198] sm:$0xff]
  %v2750 = vld [vmem:[#allocation3 + $0x1a0] sm:$0xff]
  %v2751 = vld [vmem:[#allocation3 + $0x1a8] sm:$0xff]
  %v2752 = vld [vmem:[#allocation3 + $0x1b0] sm:$0xff]
  %v2753 = vld [vmem:[#allocation3 + $0x1b8] sm:$0xff]
  %v2754 = vld [vmem:[#allocation3 + $0x1c0] sm:$0xff]
  %v2755 = vld [vmem:[#allocation3 + $0x1c8] sm:$0xff]
  %v2756 = vld [vmem:[#allocation3 + $0x1d0] sm:$0xff]
  %v2757 = vld [vmem:[#allocation3 + $0x1d8] sm:$0xff]
  %v2758 = vld [vmem:[#allocation3 + $0x1e0] sm:$0xff]
  %v2759 = vld [vmem:[#allocation3 + $0x1e8] sm:$0xff]
  %v2760 = vld [vmem:[#allocation3 + $0x1f0] sm:$0xff]
  %v2761 = vld [vmem:[#allocation3 + $0x1f8] sm:$0xff]
  %v2762 = vld [vmem:[#allocation3 + $0x200] sm:$0xff]
  %v2763 = vld [vmem:[#allocation3 + $0x208] sm:$0xff]
  %v2764 = vld [vmem:[#allocation3 + $0x210] sm:$0xff]
  %v2765 = vld [vmem:[#allocation3 + $0x218] sm:$0xff]
  %v2766 = vld [vmem:[#allocation3 + $0x220] sm:$0xff]
  %v2767 = vld [vmem:[#allocation3 + $0x228] sm:$0xff]
  %v2768 = vld [vmem:[#allocation3 + $0x230] sm:$0xff]
  %v2769 = vld [vmem:[#allocation3 + $0x238] sm:$0xff]
  %v2770 = vld [vmem:[#allocation3 + $0x240] sm:$0xff]
  %v2771 = vld [vmem:[#allocation3 + $0x248] sm:$0xff]
  %v2772 = vld [vmem:[#allocation3 + $0x250] sm:$0xff]
  %v2773 = vld [vmem:[#allocation3 + $0x258] sm:$0xff]
  %v2774 = vld [vmem:[#allocation3 + $0x260] sm:$0xff]
  %v2775 = vld [vmem:[#allocation3 + $0x268] sm:$0xff]
  %v2776 = vld [vmem:[#allocation3 + $0x270] sm:$0xff]
  %v2777 = vld [vmem:[#allocation3 + $0x278] sm:$0xff]
  %v2778 = vld [vmem:[#allocation3 + $0x280] sm:$0xff]
  %v2779 = vld [vmem:[#allocation3 + $0x288] sm:$0xff]
  %v2780 = vld [vmem:[#allocation3 + $0x290] sm:$0xff]
  %v2781 = vld [vmem:[#allocation3 + $0x298] sm:$0xff]
  %v2782 = vld [vmem:[#allocation3 + $0x2a0] sm:$0xff]
  %v2783 = vld [vmem:[#allocation3 + $0x2a8] sm:$0xff]
  %v2784 = vld [vmem:[#allocation3 + $0x2b0] sm:$0xff]
  %v2785 = vld [vmem:[#allocation3 + $0x2b8] sm:$0xff]
  %v2786 = vld [vmem:[#allocation3 + $0x2c0] sm:$0xff]
  %v2787 = vld [vmem:[#allocation3 + $0x2c8] sm:$0xff]
  %v2788 = vld [vmem:[#allocation3 + $0x2d0] sm:$0xff]
  %v2789 = vld [vmem:[#allocation3 + $0x2d8] sm:$0xff]
  %v2790 = vld [vmem:[#allocation3 + $0x2e0] sm:$0xff]
  %v2791 = vld [vmem:[#allocation3 + $0x2e8] sm:$0xff]
  %v2792 = vld [vmem:[#allocation3 + $0x2f0] sm:$0xff]
  %v2793 = vld [vmem:[#allocation3 + $0x2f8] sm:$0xff]
  %v2794 = vld [vmem:[%s2] sm:$0xf]
  %v2795 = vld [vmem:[%s2 + $0x4] sm:$0xf]
  %v2796 = vld [vmem:[%s2 + $0x8] sm:$0xf]
  %v2797 = vld [vmem:[%s2 + $0xc] sm:$0xf]
  %v2798 = vld [vmem:[%s2 + $0x10] sm:$0xf]
  %v2799 = vld [vmem:[%s2 + $0x14] sm:$0xf]
  %v2800 = vld [vmem:[%s2 + $0x18] sm:$0xf]
  %v2801 = vld [vmem:[%s2 + $0x1c] sm:$0xf]
  %v2802 = vld [vmem:[%s2 + $0x20] sm:$0xf]
  %v2803 = vld [vmem:[%s2 + $0x24] sm:$0xf]
  %v2804 = vld [vmem:[%s2 + $0x28] sm:$0xf]
  %v2805 = vld [vmem:[%s2 + $0x2c] sm:$0xf]
  %v2806 = vld [vmem:[%s2 + $0x30] sm:$0xf]
  %v2807 = vld [vmem:[%s2 + $0x34] sm:$0xf]
  %v2808 = vld [vmem:[%s2 + $0x38] sm:$0xf]
  %v2809 = vld [vmem:[%s2 + $0x3c] sm:$0xf]
  %v2810 = vld [vmem:[%s2 + $0x40] sm:$0xf]
  %v2811 = vld [vmem:[%s2 + $0x44] sm:$0xf]
  %v2812 = vld [vmem:[%s2 + $0x48] sm:$0xf]
  %v2813 = vld [vmem:[%s2 + $0x4c] sm:$0xf]
  %v2814 = vld [vmem:[%s2 + $0x50] sm:$0xf]
  %v2815 = vld [vmem:[%s2 + $0x54] sm:$0xf]
  %v2816 = vld [vmem:[%s2 + $0x58] sm:$0xf]
  %v2817 = vld [vmem:[%s2 + $0x5c] sm:$0xf]
  %v2818 = vld [vmem:[%s2 + $0x60] sm:$0xf]
  %v2819 = vld [vmem:[%s2 + $0x64] sm:$0xf]
  %v2820 = vld [vmem:[%s2 + $0x68] sm:$0xf]
  %v2821 = vld [vmem:[%s2 + $0x6c] sm:$0xf]
  %v2822 = vld [vmem:[%s2 + $0x70] sm:$0xf]
  %v2823 = vld [vmem:[%s2 + $0x74] sm:$0xf]
  %v2824 = vld [vmem:[%s2 + $0x78] sm:$0xf]
  %v2825 = vld [vmem:[%s2 + $0x7c] sm:$0xf]
  %v2826 = vld [vmem:[%s2 + $0x80] sm:$0xf]
  %v2827 = vld [vmem:[%s2 + $0x84] sm:$0xf]
  %v2828 = vld [vmem:[%s2 + $0x88] sm:$0xf]
  %v2829 = vld [vmem:[%s2 + $0x8c] sm:$0xf]
  %v2830 = vld [vmem:[%s2 + $0x90] sm:$0xf]
  %v2831 = vld [vmem:[%s2 + $0x94] sm:$0xf]
  %v2832 = vld [vmem:[%s2 + $0x98] sm:$0xf]
  %v2833 = vld [vmem:[%s2 + $0x9c] sm:$0xf]
  %v2834 = vld [vmem:[%s2 + $0xa0] sm:$0xf]
  %v2835 = vld [vmem:[%s2 + $0xa4] sm:$0xf]
  %v2836 = vld [vmem:[%s2 + $0xa8] sm:$0xf]
  %v2837 = vld [vmem:[%s2 + $0xac] sm:$0xf]
  %v2838 = vld [vmem:[%s2 + $0xb0] sm:$0xf]
  %v2839 = vld [vmem:[%s2 + $0xb4] sm:$0xf]
  %v2840 = vld [vmem:[%s2 + $0xb8] sm:$0xf]
  %v2841 = vld [vmem:[%s2 + $0xbc] sm:$0xf]
  %v2842 = vld [vmem:[%s2 + $0xc0] sm:$0xf]
  %v2843 = vld [vmem:[%s2 + $0xc4] sm:$0xf]
  %v2844 = vld [vmem:[%s2 + $0xc8] sm:$0xf]
  %v2845 = vld [vmem:[%s2 + $0xcc] sm:$0xf]
  %v2846 = vld [vmem:[%s2 + $0xd0] sm:$0xf]
  %v2847 = vld [vmem:[%s2 + $0xd4] sm:$0xf]
  %v2848 = vld [vmem:[%s2 + $0xd8] sm:$0xf]
  %v2849 = vld [vmem:[%s2 + $0xdc] sm:$0xf]
  %v2850 = vld [vmem:[%s2 + $0xe0] sm:$0xf]
  %v2851 = vld [vmem:[%s2 + $0xe4] sm:$0xf]
  %v2852 = vld [vmem:[%s2 + $0xe8] sm:$0xf]
  %v2853 = vld [vmem:[%s2 + $0xec] sm:$0xf]
  %v2854 = vld [vmem:[%s2 + $0xf0] sm:$0xf]
  %v2855 = vld [vmem:[%s2 + $0xf4] sm:$0xf]
  %v2856 = vld [vmem:[%s2 + $0xf8] sm:$0xf]
  %v2857 = vld [vmem:[%s2 + $0xfc] sm:$0xf]
  %v2858 = vld [vmem:[%s2 + $0x100] sm:$0xf]
  %v2859 = vld [vmem:[%s2 + $0x104] sm:$0xf]
  %v2860 = vld [vmem:[%s2 + $0x108] sm:$0xf]
  %v2861 = vld [vmem:[%s2 + $0x10c] sm:$0xf]
  %v2862 = vld [vmem:[%s2 + $0x110] sm:$0xf]
  %v2863 = vld [vmem:[%s2 + $0x114] sm:$0xf]
  %v2864 = vld [vmem:[%s2 + $0x118] sm:$0xf]
  %v2865 = vld [vmem:[%s2 + $0x11c] sm:$0xf]
  %v2866 = vld [vmem:[%s2 + $0x120] sm:$0xf]
  %v2867 = vld [vmem:[%s2 + $0x124] sm:$0xf]
  %v2868 = vld [vmem:[%s2 + $0x128] sm:$0xf]
  %v2869 = vld [vmem:[%s2 + $0x12c] sm:$0xf]
  %v2870 = vld [vmem:[%s2 + $0x130] sm:$0xf]
  %v2871 = vld [vmem:[%s2 + $0x134] sm:$0xf]
  %v2872 = vld [vmem:[%s2 + $0x138] sm:$0xf]
  %v2873 = vld [vmem:[%s2 + $0x13c] sm:$0xf]
  %v2874 = vld [vmem:[%s2 + $0x140] sm:$0xf]
  %v2875 = vld [vmem:[%s2 + $0x144] sm:$0xf]
  %v2876 = vld [vmem:[%s2 + $0x148] sm:$0xf]
  %v2877 = vld [vmem:[%s2 + $0x14c] sm:$0xf]
  %v2878 = vld [vmem:[%s2 + $0x150] sm:$0xf]
  %v2879 = vld [vmem:[%s2 + $0x154] sm:$0xf]
  %v2880 = vld [vmem:[%s2 + $0x158] sm:$0xf]
  %v2881 = vld [vmem:[%s2 + $0x15c] sm:$0xf]
  %v2882 = vld [vmem:[%s2 + $0x160] sm:$0xf]
  %v2883 = vld [vmem:[%s2 + $0x164] sm:$0xf]
  %v2884 = vld [vmem:[%s2 + $0x168] sm:$0xf]
  %v2885 = vld [vmem:[%s2 + $0x16c] sm:$0xf]
  %v2886 = vld [vmem:[%s2 + $0x170] sm:$0xf]
  %v2887 = vld [vmem:[%s2 + $0x174] sm:$0xf]
  %v2888 = vld [vmem:[%s2 + $0x178] sm:$0xf]
  %v2889 = vld [vmem:[%s2 + $0x17c] sm:$0xf]
  %v2890 = vld [vmem:[%s2 + $0x180] sm:$0xf]
  %v2891 = vld [vmem:[%s2 + $0x184] sm:$0xf]
  %v2892 = vld [vmem:[%s2 + $0x188] sm:$0xf]
  %v2893 = vld [vmem:[%s2 + $0x18c] sm:$0xf]
  %v2894 = vld [vmem:[%s2 + $0x190] sm:$0xf]
  %v2895 = vld [vmem:[%s2 + $0x194] sm:$0xf]
  %v2896 = vld [vmem:[%s2 + $0x198] sm:$0xf]
  %v2897 = vld [vmem:[%s2 + $0x19c] sm:$0xf]
  %v2898 = vld [vmem:[%s2 + $0x1a0] sm:$0xf]
  %v2899 = vld [vmem:[%s2 + $0x1a4] sm:$0xf]
  %v2900 = vld [vmem:[%s2 + $0x1a8] sm:$0xf]
  %v2901 = vld [vmem:[%s2 + $0x1ac] sm:$0xf]
  %v2902 = vld [vmem:[%s2 + $0x1b0] sm:$0xf]
  %v2903 = vld [vmem:[%s2 + $0x1b4] sm:$0xf]
  %v2904 = vld [vmem:[%s2 + $0x1b8] sm:$0xf]
  %v2905 = vld [vmem:[%s2 + $0x1bc] sm:$0xf]
  %v2906 = vld [vmem:[%s2 + $0x1c0] sm:$0xf]
  %v2907 = vld [vmem:[%s2 + $0x1c4] sm:$0xf]
  %v2908 = vld [vmem:[%s2 + $0x1c8] sm:$0xf]
  %v2909 = vld [vmem:[%s2 + $0x1cc] sm:$0xf]
  %v2910 = vld [vmem:[%s2 + $0x1d0] sm:$0xf]
  %v2911 = vld [vmem:[%s2 + $0x1d4] sm:$0xf]
  %v2912 = vld [vmem:[%s2 + $0x1d8] sm:$0xf]
  %v2913 = vld [vmem:[%s2 + $0x1dc] sm:$0xf]
  %v2914 = vld [vmem:[%s2 + $0x1e0] sm:$0xf]
  %v2915 = vld [vmem:[%s2 + $0x1e4] sm:$0xf]
  %v2916 = vld [vmem:[%s2 + $0x1e8] sm:$0xf]
  %v2917 = vld [vmem:[%s2 + $0x1ec] sm:$0xf]
  %v2918 = vld [vmem:[%s2 + $0x1f0] sm:$0xf]
  %v2919 = vld [vmem:[%s2 + $0x1f4] sm:$0xf]
  %v2920 = vld [vmem:[%s2 + $0x1f8] sm:$0xf]
  %v2921 = vld [vmem:[%s2 + $0x1fc] sm:$0xf]
  %v3018 = vunpack.c.l.b16 %v2698
  %v3019 = vunpack.c.h.b16 %v2698
  %v3020 = vunpack.c.l.b16 %v2699
  %v3021 = vunpack.c.h.b16 %v2699
  %v3022 = vunpack.c.l.b16 %v2700
  %v3023 = vunpack.c.h.b16 %v2700
  %v3024 = vunpack.c.l.b16 %v2701
  %v3025 = vunpack.c.h.b16 %v2701
  %v3026 = vunpack.c.l.b16 %v2702
  %v3027 = vunpack.c.h.b16 %v2702
  %v3028 = vunpack.c.l.b16 %v2703
  %v3029 = vunpack.c.h.b16 %v2703
  %v3030 = vunpack.c.l.b16 %v2704
  %v3031 = vunpack.c.h.b16 %v2704
  %v3032 = vunpack.c.l.b16 %v2705
  %v3033 = vunpack.c.h.b16 %v2705
  %v3034 = vunpack.c.l.b16 %v2706
  %v3035 = vunpack.c.h.b16 %v2706
  %v3036 = vunpack.c.l.b16 %v2707
  %v3037 = vunpack.c.h.b16 %v2707
  %v3038 = vunpack.c.l.b16 %v2708
  %v3039 = vunpack.c.h.b16 %v2708
  %v3040 = vunpack.c.l.b16 %v2709
  %v3041 = vunpack.c.h.b16 %v2709
  %v3042 = vunpack.c.l.b16 %v2710
  %v3043 = vunpack.c.h.b16 %v2710
  %v3044 = vunpack.c.l.b16 %v2711
  %v3045 = vunpack.c.h.b16 %v2711
  %v3046 = vunpack.c.l.b16 %v2712
  %v3047 = vunpack.c.h.b16 %v2712
  %v3048 = vunpack.c.l.b16 %v2713
  %v3049 = vunpack.c.h.b16 %v2713
  %v3050 = vunpack.c.l.b16 %v2714
  %v3051 = vunpack.c.h.b16 %v2714
  %v3052 = vunpack.c.l.b16 %v2715
  %v3053 = vunpack.c.h.b16 %v2715
  %v3054 = vunpack.c.l.b16 %v2716
  %v3055 = vunpack.c.h.b16 %v2716
  %v3056 = vunpack.c.l.b16 %v2717
  %v3057 = vunpack.c.h.b16 %v2717
  %v3058 = vunpack.c.l.b16 %v2718
  %v3059 = vunpack.c.h.b16 %v2718
  %v3060 = vunpack.c.l.b16 %v2719
  %v3061 = vunpack.c.h.b16 %v2719
  %v3062 = vunpack.c.l.b16 %v2720
  %v3063 = vunpack.c.h.b16 %v2720
  %v3064 = vunpack.c.l.b16 %v2721
  %v3065 = vunpack.c.h.b16 %v2721
  %v3066 = vunpack.c.l.b16 %v2722
  %v3067 = vunpack.c.h.b16 %v2722
  %v3068 = vunpack.c.l.b16 %v2723
  %v3069 = vunpack.c.h.b16 %v2723
  %v3070 = vunpack.c.l.b16 %v2724
  %v3071 = vunpack.c.h.b16 %v2724
  %v3072 = vunpack.c.l.b16 %v2725
  %v3073 = vunpack.c.h.b16 %v2725
  %v3074 = vunpack.c.l.b16 %v2726
  %v3075 = vunpack.c.h.b16 %v2726
  %v3076 = vunpack.c.l.b16 %v2727
  %v3077 = vunpack.c.h.b16 %v2727
  %v3078 = vunpack.c.l.b16 %v2728
  %v3079 = vunpack.c.h.b16 %v2728
  %v3080 = vunpack.c.l.b16 %v2729
  %v3081 = vunpack.c.h.b16 %v2729
  %v3082 = vunpack.c.l.b16 %v2730
  %v3083 = vunpack.c.h.b16 %v2730
  %v3084 = vunpack.c.l.b16 %v2731
  %v3085 = vunpack.c.h.b16 %v2731
  %v3086 = vunpack.c.l.b16 %v2732
  %v3087 = vunpack.c.h.b16 %v2732
  %v3088 = vunpack.c.l.b16 %v2733
  %v3089 = vunpack.c.h.b16 %v2733
  %v3090 = vunpack.c.l.b16 %v2734
  %v3091 = vunpack.c.h.b16 %v2734
  %v3092 = vunpack.c.l.b16 %v2735
  %v3093 = vunpack.c.h.b16 %v2735
  %v3094 = vunpack.c.l.b16 %v2736
  %v3095 = vunpack.c.h.b16 %v2736
  %v3096 = vunpack.c.l.b16 %v2737
  %v3097 = vunpack.c.h.b16 %v2737
  %v3098 = vunpack.c.l.b16 %v2738
  %v3099 = vunpack.c.h.b16 %v2738
  %v3100 = vunpack.c.l.b16 %v2739
  %v3101 = vunpack.c.h.b16 %v2739
  %v3102 = vunpack.c.l.b16 %v2740
  %v3103 = vunpack.c.h.b16 %v2740
  %v3104 = vunpack.c.l.b16 %v2741
  %v3105 = vunpack.c.h.b16 %v2741
  %v3106 = vunpack.c.l.b16 %v2742
  %v3107 = vunpack.c.h.b16 %v2742
  %v3108 = vunpack.c.l.b16 %v2743
  %v3109 = vunpack.c.h.b16 %v2743
  %v3110 = vunpack.c.l.b16 %v2744
  %v3111 = vunpack.c.h.b16 %v2744
  %v3112 = vunpack.c.l.b16 %v2745
  %v3113 = vunpack.c.h.b16 %v2745
  %v3114 = vunpack.c.l.b16 %v2746
  %v3115 = vunpack.c.h.b16 %v2746
  %v3116 = vunpack.c.l.b16 %v2747
  %v3117 = vunpack.c.h.b16 %v2747
  %v3118 = vunpack.c.l.b16 %v2748
  %v3119 = vunpack.c.h.b16 %v2748
  %v3120 = vunpack.c.l.b16 %v2749
  %v3121 = vunpack.c.h.b16 %v2749
  %v3122 = vunpack.c.l.b16 %v2750
  %v3123 = vunpack.c.h.b16 %v2750
  %v3124 = vunpack.c.l.b16 %v2751
  %v3125 = vunpack.c.h.b16 %v2751
  %v3126 = vunpack.c.l.b16 %v2752
  %v3127 = vunpack.c.h.b16 %v2752
  %v3128 = vunpack.c.l.b16 %v2753
  %v3129 = vunpack.c.h.b16 %v2753
  %v3130 = vunpack.c.l.b16 %v2754
  %v3131 = vunpack.c.h.b16 %v2754
  %v3132 = vunpack.c.l.b16 %v2755
  %v3133 = vunpack.c.h.b16 %v2755
  %v3134 = vunpack.c.l.b16 %v2756
  %v3135 = vunpack.c.h.b16 %v2756
  %v3136 = vunpack.c.l.b16 %v2757
  %v3137 = vunpack.c.h.b16 %v2757
  %v3138 = vunpack.c.l.b16 %v2758
  %v3139 = vunpack.c.h.b16 %v2758
  %v3140 = vunpack.c.l.b16 %v2759
  %v3141 = vunpack.c.h.b16 %v2759
  %v3142 = vunpack.c.l.b16 %v2760
  %v3143 = vunpack.c.h.b16 %v2760
  %v3144 = vunpack.c.l.b16 %v2761
  %v3145 = vunpack.c.h.b16 %v2761
  %v3146 = vunpack.c.l.b16 %v2762
  %v3147 = vunpack.c.h.b16 %v2762
  %v3148 = vunpack.c.l.b16 %v2763
  %v3149 = vunpack.c.h.b16 %v2763
  %v3150 = vunpack.c.l.b16 %v2764
  %v3151 = vunpack.c.h.b16 %v2764
  %v3152 = vunpack.c.l.b16 %v2765
  %v3153 = vunpack.c.h.b16 %v2765
  %v3154 = vunpack.c.l.b16 %v2766
  %v3155 = vunpack.c.h.b16 %v2766
  %v3156 = vunpack.c.l.b16 %v2767
  %v3157 = vunpack.c.h.b16 %v2767
  %v3158 = vunpack.c.l.b16 %v2768
  %v3159 = vunpack.c.h.b16 %v2768
  %v3160 = vunpack.c.l.b16 %v2769
  %v3161 = vunpack.c.h.b16 %v2769
  %v3162 = vunpack.c.l.b16 %v2770
  %v3163 = vunpack.c.h.b16 %v2770
  %v3164 = vunpack.c.l.b16 %v2771
  %v3165 = vunpack.c.h.b16 %v2771
  %v3166 = vunpack.c.l.b16 %v2772
  %v3167 = vunpack.c.h.b16 %v2772
  %v3168 = vunpack.c.l.b16 %v2773
  %v3169 = vunpack.c.h.b16 %v2773
  %v3170 = vunpack.c.l.b16 %v2774
  %v3171 = vunpack.c.h.b16 %v2774
  %v3172 = vunpack.c.l.b16 %v2775
  %v3173 = vunpack.c.h.b16 %v2775
  %v3174 = vunpack.c.l.b16 %v2776
  %v3175 = vunpack.c.h.b16 %v2776
  %v3176 = vunpack.c.l.b16 %v2777
  %v3177 = vunpack.c.h.b16 %v2777
  %v3178 = vunpack.c.l.b16 %v2778
  %v3179 = vunpack.c.h.b16 %v2778
  %v3180 = vunpack.c.l.b16 %v2779
  %v3181 = vunpack.c.h.b16 %v2779
  %v3182 = vunpack.c.l.b16 %v2780
  %v3183 = vunpack.c.h.b16 %v2780
  %v3184 = vunpack.c.l.b16 %v2781
  %v3185 = vunpack.c.h.b16 %v2781
  %v3186 = vunpack.c.l.b16 %v2782
  %v3187 = vunpack.c.h.b16 %v2782
  %v3188 = vunpack.c.l.b16 %v2783
  %v3189 = vunpack.c.h.b16 %v2783
  %v3190 = vunpack.c.l.b16 %v2784
  %v3191 = vunpack.c.h.b16 %v2784
  %v3192 = vunpack.c.l.b16 %v2785
  %v3193 = vunpack.c.h.b16 %v2785
  %v3194 = vunpack.c.l.b16 %v2786
  %v3195 = vunpack.c.h.b16 %v2786
  %v3196 = vunpack.c.l.b16 %v2787
  %v3197 = vunpack.c.h.b16 %v2787
  %v3198 = vunpack.c.l.b16 %v2788
  %v3199 = vunpack.c.h.b16 %v2788
  %v3200 = vunpack.c.l.b16 %v2789
  %v3201 = vunpack.c.h.b16 %v2789
  %v3202 = vunpack.c.l.b16 %v2790
  %v3203 = vunpack.c.h.b16 %v2790
  %v3204 = vunpack.c.l.b16 %v2791
  %v3205 = vunpack.c.h.b16 %v2791
  %v3206 = vunpack.c.l.b16 %v2792
  %v3207 = vunpack.c.h.b16 %v2792
  %v3208 = vunpack.c.l.b16 %v2793
  %v3209 = vunpack.c.h.b16 %v2793
  %v3210 = vpack.c.b16 %v3026, %v3018
  %v3211 = vpack.c.b16 %v3027, %v3019
  %v3212 = vpack.c.b16 %v3028, %v3020
  %v3213 = vpack.c.b16 %v3029, %v3021
  %v3214 = vpack.c.b16 %v3030, %v3022
  %v3215 = vpack.c.b16 %v3031, %v3023
  %v3216 = vpack.c.b16 %v3032, %v3024
  %v3217 = vpack.c.b16 %v3033, %v3025
  %v3218 = vpack.c.b16 %v3042, %v3034
  %v3219 = vpack.c.b16 %v3043, %v3035
  %v3220 = vpack.c.b16 %v3044, %v3036
  %v3221 = vpack.c.b16 %v3045, %v3037
  %v3222 = vpack.c.b16 %v3046, %v3038
  %v3223 = vpack.c.b16 %v3047, %v3039
  %v3224 = vpack.c.b16 %v3048, %v3040
  %v3225 = vpack.c.b16 %v3049, %v3041
  %v3226 = vpack.c.b16 %v3058, %v3050
  %v3227 = vpack.c.b16 %v3059, %v3051
  %v3228 = vpack.c.b16 %v3060, %v3052
  %v3229 = vpack.c.b16 %v3061, %v3053
  %v3230 = vpack.c.b16 %v3062, %v3054
  %v3231 = vpack.c.b16 %v3063, %v3055
  %v3232 = vpack.c.b16 %v3064, %v3056
  %v3233 = vpack.c.b16 %v3065, %v3057
  %v3234 = vpack.c.b16 %v3074, %v3066
  %v3235 = vpack.c.b16 %v3075, %v3067
  %v3236 = vpack.c.b16 %v3076, %v3068
  %v3237 = vpack.c.b16 %v3077, %v3069
  %v3238 = vpack.c.b16 %v3078, %v3070
  %v3239 = vpack.c.b16 %v3079, %v3071
  %v3240 = vpack.c.b16 %v3080, %v3072
  %v3241 = vpack.c.b16 %v3081, %v3073
  %v3242 = vpack.c.b16 %v3090, %v3082
  %v3243 = vpack.c.b16 %v3091, %v3083
  %v3244 = vpack.c.b16 %v3092, %v3084
  %v3245 = vpack.c.b16 %v3093, %v3085
  %v3246 = vpack.c.b16 %v3094, %v3086
  %v3247 = vpack.c.b16 %v3095, %v3087
  %v3248 = vpack.c.b16 %v3096, %v3088
  %v3249 = vpack.c.b16 %v3097, %v3089
  %v3250 = vpack.c.b16 %v3106, %v3098
  %v3251 = vpack.c.b16 %v3107, %v3099
  %v3252 = vpack.c.b16 %v3108, %v3100
  %v3253 = vpack.c.b16 %v3109, %v3101
  %v3254 = vpack.c.b16 %v3110, %v3102
  %v3255 = vpack.c.b16 %v3111, %v3103
  %v3256 = vpack.c.b16 %v3112, %v3104
  %v3257 = vpack.c.b16 %v3113, %v3105
  %v3258 = vpack.c.b16 %v3122, %v3114
  %v3259 = vpack.c.b16 %v3123, %v3115
  %v3260 = vpack.c.b16 %v3124, %v3116
  %v3261 = vpack.c.b16 %v3125, %v3117
  %v3262 = vpack.c.b16 %v3126, %v3118
  %v3263 = vpack.c.b16 %v3127, %v3119
  %v3264 = vpack.c.b16 %v3128, %v3120
  %v3265 = vpack.c.b16 %v3129, %v3121
  %v3266 = vpack.c.b16 %v3138, %v3130
  %v3267 = vpack.c.b16 %v3139, %v3131
  %v3268 = vpack.c.b16 %v3140, %v3132
  %v3269 = vpack.c.b16 %v3141, %v3133
  %v3270 = vpack.c.b16 %v3142, %v3134
  %v3271 = vpack.c.b16 %v3143, %v3135
  %v3272 = vpack.c.b16 %v3144, %v3136
  %v3273 = vpack.c.b16 %v3145, %v3137
  %v3274 = vpack.c.b16 %v3154, %v3146
  %v3275 = vpack.c.b16 %v3155, %v3147
  %v3276 = vpack.c.b16 %v3156, %v3148
  %v3277 = vpack.c.b16 %v3157, %v3149
  %v3278 = vpack.c.b16 %v3158, %v3150
  %v3279 = vpack.c.b16 %v3159, %v3151
  %v3280 = vpack.c.b16 %v3160, %v3152
  %v3281 = vpack.c.b16 %v3161, %v3153
  %v3282 = vpack.c.b16 %v3170, %v3162
  %v3283 = vpack.c.b16 %v3171, %v3163
  %v3284 = vpack.c.b16 %v3172, %v3164
  %v3285 = vpack.c.b16 %v3173, %v3165
  %v3286 = vpack.c.b16 %v3174, %v3166
  %v3287 = vpack.c.b16 %v3175, %v3167
  %v3288 = vpack.c.b16 %v3176, %v3168
  %v3289 = vpack.c.b16 %v3177, %v3169
  %v3290 = vpack.c.b16 %v3186, %v3178
  %v3291 = vpack.c.b16 %v3187, %v3179
  %v3292 = vpack.c.b16 %v3188, %v3180
  %v3293 = vpack.c.b16 %v3189, %v3181
  %v3294 = vpack.c.b16 %v3190, %v3182
  %v3295 = vpack.c.b16 %v3191, %v3183
  %v3296 = vpack.c.b16 %v3192, %v3184
  %v3297 = vpack.c.b16 %v3193, %v3185
  %v3298 = vpack.c.b16 %v3202, %v3194
  %v3299 = vpack.c.b16 %v3203, %v3195
  %v3300 = vpack.c.b16 %v3204, %v3196
  %v3301 = vpack.c.b16 %v3205, %v3197
  %v3302 = vpack.c.b16 %v3206, %v3198
  %v3303 = vpack.c.b16 %v3207, %v3199
  %v3304 = vpack.c.b16 %v3208, %v3200
  %v3305 = vpack.c.b16 %v3209, %v3201
  %v3530 = vunpack.c.l.b16 %v2794
  %v3531 = vunpack.c.l.b16 %v2795
  %v3532 = vunpack.c.l.b16 %v2796
  %v3533 = vunpack.c.l.b16 %v2797
  %v3534 = vunpack.c.l.b16 %v2798
  %v3535 = vunpack.c.l.b16 %v2799
  %v3536 = vunpack.c.l.b16 %v2800
  %v3537 = vunpack.c.l.b16 %v2801
  %v3538 = vunpack.c.l.b16 %v2802
  %v3539 = vunpack.c.l.b16 %v2803
  %v3540 = vunpack.c.l.b16 %v2804
  %v3541 = vunpack.c.l.b16 %v2805
  %v3542 = vunpack.c.l.b16 %v2806
  %v3543 = vunpack.c.l.b16 %v2807
  %v3544 = vunpack.c.l.b16 %v2808
  %v3545 = vunpack.c.l.b16 %v2809
  %v3546 = vunpack.c.l.b16 %v2810
  %v3547 = vunpack.c.l.b16 %v2811
  %v3548 = vunpack.c.l.b16 %v2812
  %v3549 = vunpack.c.l.b16 %v2813
  %v3550 = vunpack.c.l.b16 %v2814
  %v3551 = vunpack.c.l.b16 %v2815
  %v3552 = vunpack.c.l.b16 %v2816
  %v3553 = vunpack.c.l.b16 %v2817
  %v3554 = vunpack.c.l.b16 %v2818
  %v3555 = vunpack.c.l.b16 %v2819
  %v3556 = vunpack.c.l.b16 %v2820
  %v3557 = vunpack.c.l.b16 %v2821
  %v3558 = vunpack.c.l.b16 %v2822
  %v3559 = vunpack.c.l.b16 %v2823
  %v3560 = vunpack.c.l.b16 %v2824
  %v3561 = vunpack.c.l.b16 %v2825
  %v3562 = vunpack.c.l.b16 %v2826
  %v3563 = vunpack.c.l.b16 %v2827
  %v3564 = vunpack.c.l.b16 %v2828
  %v3565 = vunpack.c.l.b16 %v2829
  %v3566 = vunpack.c.l.b16 %v2830
  %v3567 = vunpack.c.l.b16 %v2831
  %v3568 = vunpack.c.l.b16 %v2832
  %v3569 = vunpack.c.l.b16 %v2833
  %v3570 = vunpack.c.l.b16 %v2834
  %v3571 = vunpack.c.l.b16 %v2835
  %v3572 = vunpack.c.l.b16 %v2836
  %v3573 = vunpack.c.l.b16 %v2837
  %v3574 = vunpack.c.l.b16 %v2838
  %v3575 = vunpack.c.l.b16 %v2839
  %v3576 = vunpack.c.l.b16 %v2840
  %v3577 = vunpack.c.l.b16 %v2841
  %v3578 = vunpack.c.l.b16 %v2842
  %v3579 = vunpack.c.l.b16 %v2843
  %v3580 = vunpack.c.l.b16 %v2844
  %v3581 = vunpack.c.l.b16 %v2845
  %v3582 = vunpack.c.l.b16 %v2846
  %v3583 = vunpack.c.l.b16 %v2847
  %v3584 = vunpack.c.l.b16 %v2848
  %v3585 = vunpack.c.l.b16 %v2849
  %v3586 = vunpack.c.l.b16 %v2850
  %v3587 = vunpack.c.l.b16 %v2851
  %v3588 = vunpack.c.l.b16 %v2852
  %v3589 = vunpack.c.l.b16 %v2853
  %v3590 = vunpack.c.l.b16 %v2854
  %v3591 = vunpack.c.l.b16 %v2855
  %v3592 = vunpack.c.l.b16 %v2856
  %v3593 = vunpack.c.l.b16 %v2857
  %v3594 = vunpack.c.l.b16 %v2858
  %v3595 = vunpack.c.l.b16 %v2859
  %v3596 = vunpack.c.l.b16 %v2860
  %v3597 = vunpack.c.l.b16 %v2861
  %v3598 = vunpack.c.l.b16 %v2862
  %v3599 = vunpack.c.l.b16 %v2863
  %v3600 = vunpack.c.l.b16 %v2864
  %v3601 = vunpack.c.l.b16 %v2865
  %v3602 = vunpack.c.l.b16 %v2866
  %v3603 = vunpack.c.l.b16 %v2867
  %v3604 = vunpack.c.l.b16 %v2868
  %v3605 = vunpack.c.l.b16 %v2869
  %v3606 = vunpack.c.l.b16 %v2870
  %v3607 = vunpack.c.l.b16 %v2871
  %v3608 = vunpack.c.l.b16 %v2872
  %v3609 = vunpack.c.l.b16 %v2873
  %v3610 = vunpack.c.l.b16 %v2874
  %v3611 = vunpack.c.l.b16 %v2875
  %v3612 = vunpack.c.l.b16 %v2876
  %v3613 = vunpack.c.l.b16 %v2877
  %v3614 = vunpack.c.l.b16 %v2878
  %v3615 = vunpack.c.l.b16 %v2879
  %v3616 = vunpack.c.l.b16 %v2880
  %v3617 = vunpack.c.l.b16 %v2881
  %v3618 = vunpack.c.l.b16 %v2882
  %v3619 = vunpack.c.l.b16 %v2883
  %v3620 = vunpack.c.l.b16 %v2884
  %v3621 = vunpack.c.l.b16 %v2885
  %v3622 = vunpack.c.l.b16 %v2886
  %v3623 = vunpack.c.l.b16 %v2887
  %v3624 = vunpack.c.l.b16 %v2888
  %v3625 = vunpack.c.l.b16 %v2889
  %v3626 = vunpack.c.l.b16 %v2890
  %v3627 = vunpack.c.l.b16 %v2891
  %v3628 = vunpack.c.l.b16 %v2892
  %v3629 = vunpack.c.l.b16 %v2893
  %v3630 = vunpack.c.l.b16 %v2894
  %v3631 = vunpack.c.l.b16 %v2895
  %v3632 = vunpack.c.l.b16 %v2896
  %v3633 = vunpack.c.l.b16 %v2897
  %v3634 = vunpack.c.l.b16 %v2898
  %v3635 = vunpack.c.l.b16 %v2899
  %v3636 = vunpack.c.l.b16 %v2900
  %v3637 = vunpack.c.l.b16 %v2901
  %v3638 = vunpack.c.l.b16 %v2902
  %v3639 = vunpack.c.l.b16 %v2903
  %v3640 = vunpack.c.l.b16 %v2904
  %v3641 = vunpack.c.l.b16 %v2905
  %v3642 = vunpack.c.l.b16 %v2906
  %v3643 = vunpack.c.l.b16 %v2907
  %v3644 = vunpack.c.l.b16 %v2908
  %v3645 = vunpack.c.l.b16 %v2909
  %v3646 = vunpack.c.l.b16 %v2910
  %v3647 = vunpack.c.l.b16 %v2911
  %v3648 = vunpack.c.l.b16 %v2912
  %v3649 = vunpack.c.l.b16 %v2913
  %v3650 = vunpack.c.l.b16 %v2914
  %v3651 = vunpack.c.l.b16 %v2915
  %v3652 = vunpack.c.l.b16 %v2916
  %v3653 = vunpack.c.l.b16 %v2917
  %v3654 = vunpack.c.l.b16 %v2918
  %v3655 = vunpack.c.l.b16 %v2919
  %v3656 = vunpack.c.l.b16 %v2920
  %v3657 = vunpack.c.l.b16 %v2921
  %v3658 = vpack.c.b16 %v3531, %v3530
  %v3659 = vpack.c.b16 %v3533, %v3532
  %v3660 = vpack.c.b16 %v3535, %v3534
  %v3661 = vpack.c.b16 %v3537, %v3536
  %v3662 = vpack.c.b16 %v3539, %v3538
  %v3663 = vpack.c.b16 %v3541, %v3540
  %v3664 = vpack.c.b16 %v3543, %v3542
  %v3665 = vpack.c.b16 %v3545, %v3544
  %v3666 = vpack.c.b16 %v3547, %v3546
  %v3667 = vpack.c.b16 %v3549, %v3548
  %v3668 = vpack.c.b16 %v3551, %v3550
  %v3669 = vpack.c.b16 %v3553, %v3552
  %v3670 = vpack.c.b16 %v3555, %v3554
  %v3671 = vpack.c.b16 %v3557, %v3556
  %v3672 = vpack.c.b16 %v3559, %v3558
  %v3673 = vpack.c.b16 %v3561, %v3560
  %v3674 = vpack.c.b16 %v3563, %v3562
  %v3675 = vpack.c.b16 %v3565, %v3564
  %v3676 = vpack.c.b16 %v3567, %v3566
  %v3677 = vpack.c.b16 %v3569, %v3568
  %v3678 = vpack.c.b16 %v3571, %v3570
  %v3679 = vpack.c.b16 %v3573, %v3572
  %v3680 = vpack.c.b16 %v3575, %v3574
  %v3681 = vpack.c.b16 %v3577, %v3576
  %v3682 = vpack.c.b16 %v3579, %v3578
  %v3683 = vpack.c.b16 %v3581, %v3580
  %v3684 = vpack.c.b16 %v3583, %v3582
  %v3685 = vpack.c.b16 %v3585, %v3584
  %v3686 = vpack.c.b16 %v3587, %v3586
  %v3687 = vpack.c.b16 %v3589, %v3588
  %v3688 = vpack.c.b16 %v3591, %v3590
  %v3689 = vpack.c.b16 %v3593, %v3592
  %v3690 = vpack.c.b16 %v3595, %v3594
  %v3691 = vpack.c.b16 %v3597, %v3596
  %v3692 = vpack.c.b16 %v3599, %v3598
  %v3693 = vpack.c.b16 %v3601, %v3600
  %v3694 = vpack.c.b16 %v3603, %v3602
  %v3695 = vpack.c.b16 %v3605, %v3604
  %v3696 = vpack.c.b16 %v3607, %v3606
  %v3697 = vpack.c.b16 %v3609, %v3608
  %v3698 = vpack.c.b16 %v3611, %v3610
  %v3699 = vpack.c.b16 %v3613, %v3612
  %v3700 = vpack.c.b16 %v3615, %v3614
  %v3701 = vpack.c.b16 %v3617, %v3616
  %v3702 = vpack.c.b16 %v3619, %v3618
  %v3703 = vpack.c.b16 %v3621, %v3620
  %v3704 = vpack.c.b16 %v3623, %v3622
  %v3705 = vpack.c.b16 %v3625, %v3624
  %v3706 = vpack.c.b16 %v3627, %v3626
  %v3707 = vpack.c.b16 %v3629, %v3628
  %v3708 = vpack.c.b16 %v3631, %v3630
  %v3709 = vpack.c.b16 %v3633, %v3632
  %v3710 = vpack.c.b16 %v3635, %v3634
  %v3711 = vpack.c.b16 %v3637, %v3636
  %v3712 = vpack.c.b16 %v3639, %v3638
  %v3713 = vpack.c.b16 %v3641, %v3640
  %v3714 = vpack.c.b16 %v3643, %v3642
  %v3715 = vpack.c.b16 %v3645, %v3644
  %v3716 = vpack.c.b16 %v3647, %v3646
  %v3717 = vpack.c.b16 %v3649, %v3648
  %v3718 = vpack.c.b16 %v3651, %v3650
  %v3719 = vpack.c.b16 %v3653, %v3652
  %v3720 = vpack.c.b16 %v3655, %v3654
  %v3721 = vpack.c.b16 %v3657, %v3656
  %3786 = vmatpush.bf16.msra.mxu0 %v3665
  %3787 = vmatpush.bf16.msra.mxu0 %v3664
  %3788 = vmatpush.bf16.msra.mxu0 %v3663
  %3789 = vmatpush.bf16.msra.mxu0 %v3662
  %3790 = vmatpush.bf16.msra.mxu0 %v3661
  %3791 = vmatpush.bf16.msra.mxu0 %v3660
  %3792 = vmatpush.bf16.msra.mxu0 %v3659
  %3793 = vmatpush.bf16.msra.mxu0 %v3658
  %3794 = vmatmul.bf16.gmra.mxu0 %v3210
  %v3795 = vpop.f32.mrf.mxu0
  %v3796 = vadd.f32 0.0, %v3795
  %v3797 = vpop.f32.mrf.mxu0
  %v3798 = vadd.f32 0.0, %v3797
  %3799 = vmatmul.bf16.gmra.mxu0 %v3218
  %v3800 = vpop.f32.mrf.mxu0
  %v3801 = vadd.f32 0.0, %v3800
  %v3802 = vpop.f32.mrf.mxu0
  %v3803 = vadd.f32 0.0, %v3802
  %3804 = vmatmul.bf16.gmra.mxu0 %v3226
  %v3805 = vpop.f32.mrf.mxu0
  %v3806 = vadd.f32 0.0, %v3805
  %v3807 = vpop.f32.mrf.mxu0
  %v3808 = vadd.f32 0.0, %v3807
  %3809 = vmatmul.bf16.gmra.mxu0 %v3234
  %v3810 = vpop.f32.mrf.mxu0
  %v3811 = vadd.f32 0.0, %v3810
  %v3812 = vpop.f32.mrf.mxu0
  %v3813 = vadd.f32 0.0, %v3812
  %3814 = vmatmul.bf16.gmra.mxu0 %v3242
  %v3815 = vpop.f32.mrf.mxu0
  %v3816 = vadd.f32 0.0, %v3815
  %v3817 = vpop.f32.mrf.mxu0
  %v3818 = vadd.f32 0.0, %v3817
  %3819 = vmatmul.bf16.gmra.mxu0 %v3250
  %v3820 = vpop.f32.mrf.mxu0
  %v3821 = vadd.f32 0.0, %v3820
  %v3822 = vpop.f32.mrf.mxu0
  %v3823 = vadd.f32 0.0, %v3822
  %3824 = vmatmul.bf16.gmra.mxu0 %v3258
  %v3825 = vpop.f32.mrf.mxu0
  %v3826 = vadd.f32 0.0, %v3825
  %v3827 = vpop.f32.mrf.mxu0
  %v3828 = vadd.f32 0.0, %v3827
  %3829 = vmatmul.bf16.gmra.mxu0 %v3266
  %v3830 = vpop.f32.mrf.mxu0
  %v3831 = vadd.f32 0.0, %v3830
  %v3832 = vpop.f32.mrf.mxu0
  %v3833 = vadd.f32 0.0, %v3832
  %3834 = vmatmul.bf16.gmra.mxu0 %v3274
  %v3835 = vpop.f32.mrf.mxu0
  %v3836 = vadd.f32 0.0, %v3835
  %v3837 = vpop.f32.mrf.mxu0
  %v3838 = vadd.f32 0.0, %v3837
  %3839 = vmatmul.bf16.gmra.mxu0 %v3282
  %v3840 = vpop.f32.mrf.mxu0
  %v3841 = vadd.f32 0.0, %v3840
  %v3842 = vpop.f32.mrf.mxu0
  %v3843 = vadd.f32 0.0, %v3842
  %3844 = vmatmul.bf16.gmra.mxu0 %v3290
  %v3845 = vpop.f32.mrf.mxu0
  %v3846 = vadd.f32 0.0, %v3845
  %v3847 = vpop.f32.mrf.mxu0
  %v3848 = vadd.f32 0.0, %v3847
  %3849 = vmatmul.bf16.gmra.mxu0 %v3298
  %v3850 = vpop.f32.mrf.mxu0
  %v3851 = vadd.f32 0.0, %v3850
  %v3852 = vpop.f32.mrf.mxu0
  %v3853 = vadd.f32 0.0, %v3852
  %3854 = vdwg.mxu0
  %3855 = vmatpush.bf16.msra.mxu0 %v3673
  %3856 = vmatpush.bf16.msra.mxu0 %v3672
  %3857 = vmatpush.bf16.msra.mxu0 %v3671
  %3858 = vmatpush.bf16.msra.mxu0 %v3670
  %3859 = vmatpush.bf16.msra.mxu0 %v3669
  %3860 = vmatpush.bf16.msra.mxu0 %v3668
  %3861 = vmatpush.bf16.msra.mxu0 %v3667
  %3862 = vmatpush.bf16.msra.mxu0 %v3666
  %3863 = vmatmul.bf16.gmra.mxu0 %v3211
  %v3864 = vpop.f32.mrf.mxu0
  %v3865 = vadd.f32 %v3796, %v3864
  %v3866 = vpop.f32.mrf.mxu0
  %v3867 = vadd.f32 %v3798, %v3866
  %3868 = vmatmul.bf16.gmra.mxu0 %v3219
  %v3869 = vpop.f32.mrf.mxu0
  %v3870 = vadd.f32 %v3801, %v3869
  %v3871 = vpop.f32.mrf.mxu0
  %v3872 = vadd.f32 %v3803, %v3871
  %3873 = vmatmul.bf16.gmra.mxu0 %v3227
  %v3874 = vpop.f32.mrf.mxu0
  %v3875 = vadd.f32 %v3806, %v3874
  %v3876 = vpop.f32.mrf.mxu0
  %v3877 = vadd.f32 %v3808, %v3876
  %3878 = vmatmul.bf16.gmra.mxu0 %v3235
  %v3879 = vpop.f32.mrf.mxu0
  %v3880 = vadd.f32 %v3811, %v3879
  %v3881 = vpop.f32.mrf.mxu0
  %v3882 = vadd.f32 %v3813, %v3881
  %3883 = vmatmul.bf16.gmra.mxu0 %v3243
  %v3884 = vpop.f32.mrf.mxu0
  %v3885 = vadd.f32 %v3816, %v3884
  %v3886 = vpop.f32.mrf.mxu0
  %v3887 = vadd.f32 %v3818, %v3886
  %3888 = vmatmul.bf16.gmra.mxu0 %v3251
  %v3889 = vpop.f32.mrf.mxu0
  %v3890 = vadd.f32 %v3821, %v3889
  %v3891 = vpop.f32.mrf.mxu0
  %v3892 = vadd.f32 %v3823, %v3891
  %3893 = vmatmul.bf16.gmra.mxu0 %v3259
  %v3894 = vpop.f32.mrf.mxu0
  %v3895 = vadd.f32 %v3826, %v3894
  %v3896 = vpop.f32.mrf.mxu0
  %v3897 = vadd.f32 %v3828, %v3896
  %3898 = vmatmul.bf16.gmra.mxu0 %v3267
  %v3899 = vpop.f32.mrf.mxu0
  %v3900 = vadd.f32 %v3831, %v3899
  %v3901 = vpop.f32.mrf.mxu0
  %v3902 = vadd.f32 %v3833, %v3901
  %3903 = vmatmul.bf16.gmra.mxu0 %v3275
  %v3904 = vpop.f32.mrf.mxu0
  %v3905 = vadd.f32 %v3836, %v3904
  %v3906 = vpop.f32.mrf.mxu0
  %v3907 = vadd.f32 %v3838, %v3906
  %3908 = vmatmul.bf16.gmra.mxu0 %v3283
  %v3909 = vpop.f32.mrf.mxu0
  %v3910 = vadd.f32 %v3841, %v3909
  %v3911 = vpop.f32.mrf.mxu0
  %v3912 = vadd.f32 %v3843, %v3911
  %3913 = vmatmul.bf16.gmra.mxu0 %v3291
  %v3914 = vpop.f32.mrf.mxu0
  %v3915 = vadd.f32 %v3846, %v3914
  %v3916 = vpop.f32.mrf.mxu0
  %v3917 = vadd.f32 %v3848, %v3916
  %3918 = vmatmul.bf16.gmra.mxu0 %v3299
  %v3919 = vpop.f32.mrf.mxu0
  %v3920 = vadd.f32 %v3851, %v3919
  %v3921 = vpop.f32.mrf.mxu0
  %v3922 = vadd.f32 %v3853, %v3921
  %3923 = vdwg.mxu0
  %3924 = vmatpush.bf16.msra.mxu0 %v3681
  %3925 = vmatpush.bf16.msra.mxu0 %v3680
  %3926 = vmatpush.bf16.msra.mxu0 %v3679
  %3927 = vmatpush.bf16.msra.mxu0 %v3678
  %3928 = vmatpush.bf16.msra.mxu0 %v3677
  %3929 = vmatpush.bf16.msra.mxu0 %v3676
  %3930 = vmatpush.bf16.msra.mxu0 %v3675
  %3931 = vmatpush.bf16.msra.mxu0 %v3674
  %3932 = vmatmul.bf16.gmra.mxu0 %v3212
  %v3933 = vpop.f32.mrf.mxu0
  %v3934 = vadd.f32 %v3865, %v3933
  %v3935 = vpop.f32.mrf.mxu0
  %v3936 = vadd.f32 %v3867, %v3935
  %3937 = vmatmul.bf16.gmra.mxu0 %v3220
  %v3938 = vpop.f32.mrf.mxu0
  %v3939 = vadd.f32 %v3870, %v3938
  %v3940 = vpop.f32.mrf.mxu0
  %v3941 = vadd.f32 %v3872, %v3940
  %3942 = vmatmul.bf16.gmra.mxu0 %v3228
  %v3943 = vpop.f32.mrf.mxu0
  %v3944 = vadd.f32 %v3875, %v3943
  %v3945 = vpop.f32.mrf.mxu0
  %v3946 = vadd.f32 %v3877, %v3945
  %3947 = vmatmul.bf16.gmra.mxu0 %v3236
  %v3948 = vpop.f32.mrf.mxu0
  %v3949 = vadd.f32 %v3880, %v3948
  %v3950 = vpop.f32.mrf.mxu0
  %v3951 = vadd.f32 %v3882, %v3950
  %3952 = vmatmul.bf16.gmra.mxu0 %v3244
  %v3953 = vpop.f32.mrf.mxu0
  %v3954 = vadd.f32 %v3885, %v3953
  %v3955 = vpop.f32.mrf.mxu0
  %v3956 = vadd.f32 %v3887, %v3955
  %3957 = vmatmul.bf16.gmra.mxu0 %v3252
  %v3958 = vpop.f32.mrf.mxu0
  %v3959 = vadd.f32 %v3890, %v3958
  %v3960 = vpop.f32.mrf.mxu0
  %v3961 = vadd.f32 %v3892, %v3960
  %3962 = vmatmul.bf16.gmra.mxu0 %v3260
  %v3963 = vpop.f32.mrf.mxu0
  %v3964 = vadd.f32 %v3895, %v3963
  %v3965 = vpop.f32.mrf.mxu0
  %v3966 = vadd.f32 %v3897, %v3965
  %3967 = vmatmul.bf16.gmra.mxu0 %v3268
  %v3968 = vpop.f32.mrf.mxu0
  %v3969 = vadd.f32 %v3900, %v3968
  %v3970 = vpop.f32.mrf.mxu0
  %v3971 = vadd.f32 %v3902, %v3970
  %3972 = vmatmul.bf16.gmra.mxu0 %v3276
  %v3973 = vpop.f32.mrf.mxu0
  %v3974 = vadd.f32 %v3905, %v3973
  %v3975 = vpop.f32.mrf.mxu0
  %v3976 = vadd.f32 %v3907, %v3975
  %3977 = vmatmul.bf16.gmra.mxu0 %v3284
  %v3978 = vpop.f32.mrf.mxu0
  %v3979 = vadd.f32 %v3910, %v3978
  %v3980 = vpop.f32.mrf.mxu0
  %v3981 = vadd.f32 %v3912, %v3980
  %3982 = vmatmul.bf16.gmra.mxu0 %v3292
  %v3983 = vpop.f32.mrf.mxu0
  %v3984 = vadd.f32 %v3915, %v3983
  %v3985 = vpop.f32.mrf.mxu0
  %v3986 = vadd.f32 %v3917, %v3985
  %3987 = vmatmul.bf16.gmra.mxu0 %v3300
  %v3988 = vpop.f32.mrf.mxu0
  %v3989 = vadd.f32 %v3920, %v3988
  %v3990 = vpop.f32.mrf.mxu0
  %v3991 = vadd.f32 %v3922, %v3990
  %3992 = vdwg.mxu0
  %3993 = vmatpush.bf16.msra.mxu0 %v3689
  %3994 = vmatpush.bf16.msra.mxu0 %v3688
  %3995 = vmatpush.bf16.msra.mxu0 %v3687
  %3996 = vmatpush.bf16.msra.mxu0 %v3686
  %3997 = vmatpush.bf16.msra.mxu0 %v3685
  %3998 = vmatpush.bf16.msra.mxu0 %v3684
  %3999 = vmatpush.bf16.msra.mxu0 %v3683
  %4000 = vmatpush.bf16.msra.mxu0 %v3682
  %4001 = vmatmul.bf16.gmra.mxu0 %v3213
  %v4002 = vpop.f32.mrf.mxu0
  %v4003 = vadd.f32 %v3934, %v4002
  %v4004 = vpop.f32.mrf.mxu0
  %v4005 = vadd.f32 %v3936, %v4004
  %4006 = vmatmul.bf16.gmra.mxu0 %v3221
  %v4007 = vpop.f32.mrf.mxu0
  %v4008 = vadd.f32 %v3939, %v4007
  %v4009 = vpop.f32.mrf.mxu0
  %v4010 = vadd.f32 %v3941, %v4009
  %4011 = vmatmul.bf16.gmra.mxu0 %v3229
  %v4012 = vpop.f32.mrf.mxu0
  %v4013 = vadd.f32 %v3944, %v4012
  %v4014 = vpop.f32.mrf.mxu0
  %v4015 = vadd.f32 %v3946, %v4014
  %4016 = vmatmul.bf16.gmra.mxu0 %v3237
  %v4017 = vpop.f32.mrf.mxu0
  %v4018 = vadd.f32 %v3949, %v4017
  %v4019 = vpop.f32.mrf.mxu0
  %v4020 = vadd.f32 %v3951, %v4019
  %4021 = vmatmul.bf16.gmra.mxu0 %v3245
  %v4022 = vpop.f32.mrf.mxu0
  %v4023 = vadd.f32 %v3954, %v4022
  %v4024 = vpop.f32.mrf.mxu0
  %v4025 = vadd.f32 %v3956, %v4024
  %4026 = vmatmul.bf16.gmra.mxu0 %v3253
  %v4027 = vpop.f32.mrf.mxu0
  %v4028 = vadd.f32 %v3959, %v4027
  %v4029 = vpop.f32.mrf.mxu0
  %v4030 = vadd.f32 %v3961, %v4029
  %4031 = vmatmul.bf16.gmra.mxu0 %v3261
  %v4032 = vpop.f32.mrf.mxu0
  %v4033 = vadd.f32 %v3964, %v4032
  %v4034 = vpop.f32.mrf.mxu0
  %v4035 = vadd.f32 %v3966, %v4034
  %4036 = vmatmul.bf16.gmra.mxu0 %v3269
  %v4037 = vpop.f32.mrf.mxu0
  %v4038 = vadd.f32 %v3969, %v4037
  %v4039 = vpop.f32.mrf.mxu0
  %v4040 = vadd.f32 %v3971, %v4039
  %4041 = vmatmul.bf16.gmra.mxu0 %v3277
  %v4042 = vpop.f32.mrf.mxu0
  %v4043 = vadd.f32 %v3974, %v4042
  %v4044 = vpop.f32.mrf.mxu0
  %v4045 = vadd.f32 %v3976, %v4044
  %4046 = vmatmul.bf16.gmra.mxu0 %v3285
  %v4047 = vpop.f32.mrf.mxu0
  %v4048 = vadd.f32 %v3979, %v4047
  %v4049 = vpop.f32.mrf.mxu0
  %v4050 = vadd.f32 %v3981, %v4049
  %4051 = vmatmul.bf16.gmra.mxu0 %v3293
  %v4052 = vpop.f32.mrf.mxu0
  %v4053 = vadd.f32 %v3984, %v4052
  %v4054 = vpop.f32.mrf.mxu0
  %v4055 = vadd.f32 %v3986, %v4054
  %4056 = vmatmul.bf16.gmra.mxu0 %v3301
  %v4057 = vpop.f32.mrf.mxu0
  %v4058 = vadd.f32 %v3989, %v4057
  %v4059 = vpop.f32.mrf.mxu0
  %v4060 = vadd.f32 %v3991, %v4059
  %4061 = vdwg.mxu0
  %4062 = vmatpush.bf16.msra.mxu0 %v3697
  %4063 = vmatpush.bf16.msra.mxu0 %v3696
  %4064 = vmatpush.bf16.msra.mxu0 %v3695
  %4065 = vmatpush.bf16.msra.mxu0 %v3694
  %4066 = vmatpush.bf16.msra.mxu0 %v3693
  %4067 = vmatpush.bf16.msra.mxu0 %v3692
  %4068 = vmatpush.bf16.msra.mxu0 %v3691
  %4069 = vmatpush.bf16.msra.mxu0 %v3690
  %4070 = vmatmul.bf16.gmra.mxu0 %v3214
  %v4071 = vpop.f32.mrf.mxu0
  %v4072 = vadd.f32 %v4003, %v4071
  %v4073 = vpop.f32.mrf.mxu0
  %v4074 = vadd.f32 %v4005, %v4073
  %4075 = vmatmul.bf16.gmra.mxu0 %v3222
  %v4076 = vpop.f32.mrf.mxu0
  %v4077 = vadd.f32 %v4008, %v4076
  %v4078 = vpop.f32.mrf.mxu0
  %v4079 = vadd.f32 %v4010, %v4078
  %4080 = vmatmul.bf16.gmra.mxu0 %v3230
  %v4081 = vpop.f32.mrf.mxu0
  %v4082 = vadd.f32 %v4013, %v4081
  %v4083 = vpop.f32.mrf.mxu0
  %v4084 = vadd.f32 %v4015, %v4083
  %4085 = vmatmul.bf16.gmra.mxu0 %v3238
  %v4086 = vpop.f32.mrf.mxu0
  %v4087 = vadd.f32 %v4018, %v4086
  %v4088 = vpop.f32.mrf.mxu0
  %v4089 = vadd.f32 %v4020, %v4088
  %4090 = vmatmul.bf16.gmra.mxu0 %v3246
  %v4091 = vpop.f32.mrf.mxu0
  %v4092 = vadd.f32 %v4023, %v4091
  %v4093 = vpop.f32.mrf.mxu0
  %v4094 = vadd.f32 %v4025, %v4093
  %4095 = vmatmul.bf16.gmra.mxu0 %v3254
  %v4096 = vpop.f32.mrf.mxu0
  %v4097 = vadd.f32 %v4028, %v4096
  %v4098 = vpop.f32.mrf.mxu0
  %v4099 = vadd.f32 %v4030, %v4098
  %4100 = vmatmul.bf16.gmra.mxu0 %v3262
  %v4101 = vpop.f32.mrf.mxu0
  %v4102 = vadd.f32 %v4033, %v4101
  %v4103 = vpop.f32.mrf.mxu0
  %v4104 = vadd.f32 %v4035, %v4103
  %4105 = vmatmul.bf16.gmra.mxu0 %v3270
  %v4106 = vpop.f32.mrf.mxu0
  %v4107 = vadd.f32 %v4038, %v4106
  %v4108 = vpop.f32.mrf.mxu0
  %v4109 = vadd.f32 %v4040, %v4108
  %4110 = vmatmul.bf16.gmra.mxu0 %v3278
  %v4111 = vpop.f32.mrf.mxu0
  %v4112 = vadd.f32 %v4043, %v4111
  %v4113 = vpop.f32.mrf.mxu0
  %v4114 = vadd.f32 %v4045, %v4113
  %4115 = vmatmul.bf16.gmra.mxu0 %v3286
  %v4116 = vpop.f32.mrf.mxu0
  %v4117 = vadd.f32 %v4048, %v4116
  %v4118 = vpop.f32.mrf.mxu0
  %v4119 = vadd.f32 %v4050, %v4118
  %4120 = vmatmul.bf16.gmra.mxu0 %v3294
  %v4121 = vpop.f32.mrf.mxu0
  %v4122 = vadd.f32 %v4053, %v4121
  %v4123 = vpop.f32.mrf.mxu0
  %v4124 = vadd.f32 %v4055, %v4123
  %4125 = vmatmul.bf16.gmra.mxu0 %v3302
  %v4126 = vpop.f32.mrf.mxu0
  %v4127 = vadd.f32 %v4058, %v4126
  %v4128 = vpop.f32.mrf.mxu0
  %v4129 = vadd.f32 %v4060, %v4128
  %4130 = vdwg.mxu0
  %4131 = vmatpush.bf16.msra.mxu0 %v3705
  %4132 = vmatpush.bf16.msra.mxu0 %v3704
  %4133 = vmatpush.bf16.msra.mxu0 %v3703
  %4134 = vmatpush.bf16.msra.mxu0 %v3702
  %4135 = vmatpush.bf16.msra.mxu0 %v3701
  %4136 = vmatpush.bf16.msra.mxu0 %v3700
  %4137 = vmatpush.bf16.msra.mxu0 %v3699
  %4138 = vmatpush.bf16.msra.mxu0 %v3698
  %4139 = vmatmul.bf16.gmra.mxu0 %v3215
  %v4140 = vpop.f32.mrf.mxu0
  %v4141 = vadd.f32 %v4072, %v4140
  %v4142 = vpop.f32.mrf.mxu0
  %v4143 = vadd.f32 %v4074, %v4142
  %4144 = vmatmul.bf16.gmra.mxu0 %v3223
  %v4145 = vpop.f32.mrf.mxu0
  %v4146 = vadd.f32 %v4077, %v4145
  %v4147 = vpop.f32.mrf.mxu0
  %v4148 = vadd.f32 %v4079, %v4147
  %4149 = vmatmul.bf16.gmra.mxu0 %v3231
  %v4150 = vpop.f32.mrf.mxu0
  %v4151 = vadd.f32 %v4082, %v4150
  %v4152 = vpop.f32.mrf.mxu0
  %v4153 = vadd.f32 %v4084, %v4152
  %4154 = vmatmul.bf16.gmra.mxu0 %v3239
  %v4155 = vpop.f32.mrf.mxu0
  %v4156 = vadd.f32 %v4087, %v4155
  %v4157 = vpop.f32.mrf.mxu0
  %v4158 = vadd.f32 %v4089, %v4157
  %4159 = vmatmul.bf16.gmra.mxu0 %v3247
  %v4160 = vpop.f32.mrf.mxu0
  %v4161 = vadd.f32 %v4092, %v4160
  %v4162 = vpop.f32.mrf.mxu0
  %v4163 = vadd.f32 %v4094, %v4162
  %4164 = vmatmul.bf16.gmra.mxu0 %v3255
  %v4165 = vpop.f32.mrf.mxu0
  %v4166 = vadd.f32 %v4097, %v4165
  %v4167 = vpop.f32.mrf.mxu0
  %v4168 = vadd.f32 %v4099, %v4167
  %4169 = vmatmul.bf16.gmra.mxu0 %v3263
  %v4170 = vpop.f32.mrf.mxu0
  %v4171 = vadd.f32 %v4102, %v4170
  %v4172 = vpop.f32.mrf.mxu0
  %v4173 = vadd.f32 %v4104, %v4172
  %4174 = vmatmul.bf16.gmra.mxu0 %v3271
  %v4175 = vpop.f32.mrf.mxu0
  %v4176 = vadd.f32 %v4107, %v4175
  %v4177 = vpop.f32.mrf.mxu0
  %v4178 = vadd.f32 %v4109, %v4177
  %4179 = vmatmul.bf16.gmra.mxu0 %v3279
  %v4180 = vpop.f32.mrf.mxu0
  %v4181 = vadd.f32 %v4112, %v4180
  %v4182 = vpop.f32.mrf.mxu0
  %v4183 = vadd.f32 %v4114, %v4182
  %4184 = vmatmul.bf16.gmra.mxu0 %v3287
  %v4185 = vpop.f32.mrf.mxu0
  %v4186 = vadd.f32 %v4117, %v4185
  %v4187 = vpop.f32.mrf.mxu0
  %v4188 = vadd.f32 %v4119, %v4187
  %4189 = vmatmul.bf16.gmra.mxu0 %v3295
  %v4190 = vpop.f32.mrf.mxu0
  %v4191 = vadd.f32 %v4122, %v4190
  %v4192 = vpop.f32.mrf.mxu0
  %v4193 = vadd.f32 %v4124, %v4192
  %4194 = vmatmul.bf16.gmra.mxu0 %v3303
  %v4195 = vpop.f32.mrf.mxu0
  %v4196 = vadd.f32 %v4127, %v4195
  %v4197 = vpop.f32.mrf.mxu0
  %v4198 = vadd.f32 %v4129, %v4197
  %4199 = vdwg.mxu0
  %4200 = vmatpush.bf16.msra.mxu0 %v3713
  %4201 = vmatpush.bf16.msra.mxu0 %v3712
  %4202 = vmatpush.bf16.msra.mxu0 %v3711
  %4203 = vmatpush.bf16.msra.mxu0 %v3710
  %4204 = vmatpush.bf16.msra.mxu0 %v3709
  %4205 = vmatpush.bf16.msra.mxu0 %v3708
  %4206 = vmatpush.bf16.msra.mxu0 %v3707
  %4207 = vmatpush.bf16.msra.mxu0 %v3706
  %4208 = vmatmul.bf16.gmra.mxu0 %v3216
  %v4209 = vpop.f32.mrf.mxu0
  %v4210 = vadd.f32 %v4141, %v4209
  %v4211 = vpop.f32.mrf.mxu0
  %v4212 = vadd.f32 %v4143, %v4211
  %4213 = vmatmul.bf16.gmra.mxu0 %v3224
  %v4214 = vpop.f32.mrf.mxu0
  %v4215 = vadd.f32 %v4146, %v4214
  %v4216 = vpop.f32.mrf.mxu0
  %v4217 = vadd.f32 %v4148, %v4216
  %4218 = vmatmul.bf16.gmra.mxu0 %v3232
  %v4219 = vpop.f32.mrf.mxu0
  %v4220 = vadd.f32 %v4151, %v4219
  %v4221 = vpop.f32.mrf.mxu0
  %v4222 = vadd.f32 %v4153, %v4221
  %4223 = vmatmul.bf16.gmra.mxu0 %v3240
  %v4224 = vpop.f32.mrf.mxu0
  %v4225 = vadd.f32 %v4156, %v4224
  %v4226 = vpop.f32.mrf.mxu0
  %v4227 = vadd.f32 %v4158, %v4226
  %4228 = vmatmul.bf16.gmra.mxu0 %v3248
  %v4229 = vpop.f32.mrf.mxu0
  %v4230 = vadd.f32 %v4161, %v4229
  %v4231 = vpop.f32.mrf.mxu0
  %v4232 = vadd.f32 %v4163, %v4231
  %4233 = vmatmul.bf16.gmra.mxu0 %v3256
  %v4234 = vpop.f32.mrf.mxu0
  %v4235 = vadd.f32 %v4166, %v4234
  %v4236 = vpop.f32.mrf.mxu0
  %v4237 = vadd.f32 %v4168, %v4236
  %4238 = vmatmul.bf16.gmra.mxu0 %v3264
  %v4239 = vpop.f32.mrf.mxu0
  %v4240 = vadd.f32 %v4171, %v4239
  %v4241 = vpop.f32.mrf.mxu0
  %v4242 = vadd.f32 %v4173, %v4241
  %4243 = vmatmul.bf16.gmra.mxu0 %v3272
  %v4244 = vpop.f32.mrf.mxu0
  %v4245 = vadd.f32 %v4176, %v4244
  %v4246 = vpop.f32.mrf.mxu0
  %v4247 = vadd.f32 %v4178, %v4246
  %4248 = vmatmul.bf16.gmra.mxu0 %v3280
  %v4249 = vpop.f32.mrf.mxu0
  %v4250 = vadd.f32 %v4181, %v4249
  %v4251 = vpop.f32.mrf.mxu0
  %v4252 = vadd.f32 %v4183, %v4251
  %4253 = vmatmul.bf16.gmra.mxu0 %v3288
  %v4254 = vpop.f32.mrf.mxu0
  %v4255 = vadd.f32 %v4186, %v4254
  %v4256 = vpop.f32.mrf.mxu0
  %v4257 = vadd.f32 %v4188, %v4256
  %4258 = vmatmul.bf16.gmra.mxu0 %v3296
  %v4259 = vpop.f32.mrf.mxu0
  %v4260 = vadd.f32 %v4191, %v4259
  %v4261 = vpop.f32.mrf.mxu0
  %v4262 = vadd.f32 %v4193, %v4261
  %4263 = vmatmul.bf16.gmra.mxu0 %v3304
  %v4264 = vpop.f32.mrf.mxu0
  %v4265 = vadd.f32 %v4196, %v4264
  %v4266 = vpop.f32.mrf.mxu0
  %v4267 = vadd.f32 %v4198, %v4266
  %4268 = vdwg.mxu0
  %4269 = vmatpush.bf16.msra.mxu0 %v3721
  %4270 = vmatpush.bf16.msra.mxu0 %v3720
  %4271 = vmatpush.bf16.msra.mxu0 %v3719
  %4272 = vmatpush.bf16.msra.mxu0 %v3718
  %4273 = vmatpush.bf16.msra.mxu0 %v3717
  %4274 = vmatpush.bf16.msra.mxu0 %v3716
  %4275 = vmatpush.bf16.msra.mxu0 %v3715
  %4276 = vmatpush.bf16.msra.mxu0 %v3714
  %4277 = vmatmul.bf16.gmra.mxu0 %v3217
  %v4278 = vpop.f32.mrf.mxu0
  %v4279 = vadd.f32 %v4210, %v4278
  %v4280 = vpop.f32.mrf.mxu0
  %v4281 = vadd.f32 %v4212, %v4280
  %4282 = vmatmul.bf16.gmra.mxu0 %v3225
  %v4283 = vpop.f32.mrf.mxu0
  %v4284 = vadd.f32 %v4215, %v4283
  %v4285 = vpop.f32.mrf.mxu0
  %v4286 = vadd.f32 %v4217, %v4285
  %4287 = vmatmul.bf16.gmra.mxu0 %v3233
  %v4288 = vpop.f32.mrf.mxu0
  %v4289 = vadd.f32 %v4220, %v4288
  %v4290 = vpop.f32.mrf.mxu0
  %v4291 = vadd.f32 %v4222, %v4290
  %4292 = vmatmul.bf16.gmra.mxu0 %v3241
  %v4293 = vpop.f32.mrf.mxu0
  %v4294 = vadd.f32 %v4225, %v4293
  %v4295 = vpop.f32.mrf.mxu0
  %v4296 = vadd.f32 %v4227, %v4295
  %4297 = vmatmul.bf16.gmra.mxu0 %v3249
  %v4298 = vpop.f32.mrf.mxu0
  %v4299 = vadd.f32 %v4230, %v4298
  %v4300 = vpop.f32.mrf.mxu0
  %v4301 = vadd.f32 %v4232, %v4300
  %4302 = vmatmul.bf16.gmra.mxu0 %v3257
  %v4303 = vpop.f32.mrf.mxu0
  %v4304 = vadd.f32 %v4235, %v4303
  %v4305 = vpop.f32.mrf.mxu0
  %v4306 = vadd.f32 %v4237, %v4305
  %4307 = vmatmul.bf16.gmra.mxu0 %v3265
  %v4308 = vpop.f32.mrf.mxu0
  %v4309 = vadd.f32 %v4240, %v4308
  %v4310 = vpop.f32.mrf.mxu0
  %v4311 = vadd.f32 %v4242, %v4310
  %4312 = vmatmul.bf16.gmra.mxu0 %v3273
  %v4313 = vpop.f32.mrf.mxu0
  %v4314 = vadd.f32 %v4245, %v4313
  %v4315 = vpop.f32.mrf.mxu0
  %v4316 = vadd.f32 %v4247, %v4315
  %4317 = vmatmul.bf16.gmra.mxu0 %v3281
  %v4318 = vpop.f32.mrf.mxu0
  %v4319 = vadd.f32 %v4250, %v4318
  %v4320 = vpop.f32.mrf.mxu0
  %v4321 = vadd.f32 %v4252, %v4320
  %4322 = vmatmul.bf16.gmra.mxu0 %v3289
  %v4323 = vpop.f32.mrf.mxu0
  %v4324 = vadd.f32 %v4255, %v4323
  %v4325 = vpop.f32.mrf.mxu0
  %v4326 = vadd.f32 %v4257, %v4325
  %4327 = vmatmul.bf16.gmra.mxu0 %v3297
  %v4328 = vpop.f32.mrf.mxu0
  %v4329 = vadd.f32 %v4260, %v4328
  %v4330 = vpop.f32.mrf.mxu0
  %v4331 = vadd.f32 %v4262, %v4330
  %4332 = vmatmul.bf16.gmra.mxu0 %v3305
  %v4333 = vpop.f32.mrf.mxu0
  %v4334 = vadd.f32 %v4265, %v4333
  %v4335 = vpop.f32.mrf.mxu0
  %v4336 = vadd.f32 %v4267, %v4335
  %4337 = vdwg.mxu0
  %v4338 = vld [vmem:[%s5] sm:$0xff]
  %v4339 = vld [vmem:[%s5 + $0x8] sm:$0xff]
  %v4340 = vld [vmem:[%s5 + $0x10] sm:$0xff]
  %v4341 = vld [vmem:[%s5 + $0x18] sm:$0xff]
  %v4342 = vld [vmem:[%s5 + $0x20] sm:$0xff]
  %v4343 = vld [vmem:[%s5 + $0x28] sm:$0xff]
  %v4344 = vld [vmem:[%s5 + $0x30] sm:$0xff]
  %v4345 = vld [vmem:[%s5 + $0x38] sm:$0xff]
  %v4346 = vld [vmem:[%s5 + $0x40] sm:$0xff]
  %v4347 = vld [vmem:[%s5 + $0x48] sm:$0xff]
  %v4348 = vld [vmem:[%s5 + $0x50] sm:$0xff]
  %v4349 = vld [vmem:[%s5 + $0x58] sm:$0xff]
  %v4350 = vld [vmem:[%s5 + $0x60] sm:$0xff]
  %v4351 = vld [vmem:[%s5 + $0x68] sm:$0xff]
  %v4352 = vld [vmem:[%s5 + $0x70] sm:$0xff]
  %v4353 = vld [vmem:[%s5 + $0x78] sm:$0xff]
  %v4354 = vld [vmem:[%s5 + $0x80] sm:$0xff]
  %v4355 = vld [vmem:[%s5 + $0x88] sm:$0xff]
  %v4356 = vld [vmem:[%s5 + $0x90] sm:$0xff]
  %v4357 = vld [vmem:[%s5 + $0x98] sm:$0xff]
  %v4358 = vld [vmem:[%s5 + $0xa0] sm:$0xff]
  %v4359 = vld [vmem:[%s5 + $0xa8] sm:$0xff]
  %v4360 = vld [vmem:[%s5 + $0xb0] sm:$0xff]
  %v4361 = vld [vmem:[%s5 + $0xb8] sm:$0xff]
  %4363 = vset.pattern.permute.xlu0 0
  %4364 = vperm.xlu0 %4363, %v4338
  %v4365 = vpop.permute.xlu0 %4364
  %4368 = vset.pattern.permute.xlu0 0
  %4369 = vperm.xlu0 %4368, %v4339
  %v4370 = vpop.permute.xlu0 %4369
  %4373 = vset.pattern.permute.xlu0 0
  %4374 = vperm.xlu0 %4373, %v4340
  %v4375 = vpop.permute.xlu0 %4374
  %4378 = vset.pattern.permute.xlu0 0
  %4379 = vperm.xlu0 %4378, %v4341
  %v4380 = vpop.permute.xlu0 %4379
  %4383 = vset.pattern.permute.xlu0 0
  %4384 = vperm.xlu0 %4383, %v4342
  %v4385 = vpop.permute.xlu0 %4384
  %4388 = vset.pattern.permute.xlu0 0
  %4389 = vperm.xlu0 %4388, %v4343
  %v4390 = vpop.permute.xlu0 %4389
  %4393 = vset.pattern.permute.xlu0 0
  %4394 = vperm.xlu0 %4393, %v4344
  %v4395 = vpop.permute.xlu0 %4394
  %4398 = vset.pattern.permute.xlu0 0
  %4399 = vperm.xlu0 %4398, %v4345
  %v4400 = vpop.permute.xlu0 %4399
  %4403 = vset.pattern.permute.xlu0 0
  %4404 = vperm.xlu0 %4403, %v4346
  %v4405 = vpop.permute.xlu0 %4404
  %4408 = vset.pattern.permute.xlu0 0
  %4409 = vperm.xlu0 %4408, %v4347
  %v4410 = vpop.permute.xlu0 %4409
  %4413 = vset.pattern.permute.xlu0 0
  %4414 = vperm.xlu0 %4413, %v4348
  %v4415 = vpop.permute.xlu0 %4414
  %4418 = vset.pattern.permute.xlu0 0
  %4419 = vperm.xlu0 %4418, %v4349
  %v4420 = vpop.permute.xlu0 %4419
  %4423 = vset.pattern.permute.xlu0 0
  %4424 = vperm.xlu0 %4423, %v4350
  %v4425 = vpop.permute.xlu0 %4424
  %4428 = vset.pattern.permute.xlu0 0
  %4429 = vperm.xlu0 %4428, %v4351
  %v4430 = vpop.permute.xlu0 %4429
  %4433 = vset.pattern.permute.xlu0 0
  %4434 = vperm.xlu0 %4433, %v4352
  %v4435 = vpop.permute.xlu0 %4434
  %4438 = vset.pattern.permute.xlu0 0
  %4439 = vperm.xlu0 %4438, %v4353
  %v4440 = vpop.permute.xlu0 %4439
  %4443 = vset.pattern.permute.xlu0 0
  %4444 = vperm.xlu0 %4443, %v4354
  %v4445 = vpop.permute.xlu0 %4444
  %4448 = vset.pattern.permute.xlu0 0
  %4449 = vperm.xlu0 %4448, %v4355
  %v4450 = vpop.permute.xlu0 %4449
  %4453 = vset.pattern.permute.xlu0 0
  %4454 = vperm.xlu0 %4453, %v4356
  %v4455 = vpop.permute.xlu0 %4454
  %4458 = vset.pattern.permute.xlu0 0
  %4459 = vperm.xlu0 %4458, %v4357
  %v4460 = vpop.permute.xlu0 %4459
  %4463 = vset.pattern.permute.xlu0 0
  %4464 = vperm.xlu0 %4463, %v4358
  %v4465 = vpop.permute.xlu0 %4464
  %4468 = vset.pattern.permute.xlu0 0
  %4469 = vperm.xlu0 %4468, %v4359
  %v4470 = vpop.permute.xlu0 %4469
  %4473 = vset.pattern.permute.xlu0 0
  %4474 = vperm.xlu0 %4473, %v4360
  %v4475 = vpop.permute.xlu0 %4474
  %4478 = vset.pattern.permute.xlu0 0
  %4479 = vperm.xlu0 %4478, %v4361
  %v4480 = vpop.permute.xlu0 %4479
  %v4482 = vmul.f32 %v4279, %v4365
  %v4483 = vmul.f32 %v4281, %v4370
  %v4484 = vmul.f32 %v4284, %v4375
  %v4485 = vmul.f32 %v4286, %v4380
  %v4486 = vmul.f32 %v4289, %v4385
  %v4487 = vmul.f32 %v4291, %v4390
  %v4488 = vmul.f32 %v4294, %v4395
  %v4489 = vmul.f32 %v4296, %v4400
  %v4490 = vmul.f32 %v4299, %v4405
  %v4491 = vmul.f32 %v4301, %v4410
  %v4492 = vmul.f32 %v4304, %v4415
  %v4493 = vmul.f32 %v4306, %v4420
  %v4494 = vmul.f32 %v4309, %v4425
  %v4495 = vmul.f32 %v4311, %v4430
  %v4496 = vmul.f32 %v4314, %v4435
  %v4497 = vmul.f32 %v4316, %v4440
  %v4498 = vmul.f32 %v4319, %v4445
  %v4499 = vmul.f32 %v4321, %v4450
  %v4500 = vmul.f32 %v4324, %v4455
  %v4501 = vmul.f32 %v4326, %v4460
  %v4502 = vmul.f32 %v4329, %v4465
  %v4503 = vmul.f32 %v4331, %v4470
  %v4504 = vmul.f32 %v4334, %v4475
  %v4505 = vmul.f32 %v4336, %v4480
  %v4506 = vadd.f32 %v4482, %v4483
  %v4507 = vadd.f32 %v4506, %v4484
  %v4508 = vadd.f32 %v4507, %v4485
  %v4509 = vadd.f32 %v4508, %v4486
  %v4510 = vadd.f32 %v4509, %v4487
  %v4511 = vadd.f32 %v4510, %v4488
  %v4512 = vadd.f32 %v4511, %v4489
  %v4513 = vadd.f32 %v4512, %v4490
  %v4514 = vadd.f32 %v4513, %v4491
  %v4515 = vadd.f32 %v4514, %v4492
  %v4516 = vadd.f32 %v4515, %v4493
  %v4517 = vadd.f32 %v4516, %v4494
  %v4518 = vadd.f32 %v4517, %v4495
  %v4519 = vadd.f32 %v4518, %v4496
  %v4520 = vadd.f32 %v4519, %v4497
  %v4521 = vadd.f32 %v4520, %v4498
  %v4522 = vadd.f32 %v4521, %v4499
  %v4523 = vadd.f32 %v4522, %v4500
  %v4524 = vadd.f32 %v4523, %v4501
  %v4525 = vadd.f32 %v4524, %v4502
  %v4526 = vadd.f32 %v4525, %v4503
  %v4527 = vadd.f32 %v4526, %v4504
  %v4528 = vadd.f32 %v4527, %v4505
  %v4529 = vrot.slane %v4528, 4
  %v4530 = vadd.f32 %v4528, %v4529
  %v4531 = vrot.slane %v4530, 2
  %v4532 = vadd.f32 %v4530, %v4531
  %v4533 = vrot.slane %v4532, 1
  %v4534 = vadd.f32 %v4532, %v4533
  %v4535 = vrcp.pop 98.0
  %v4536 = vmul.f32 98.0, %v4535
  %v4537 = vsub.f32 1.0, %v4536
  %v4538 = vmul.f32 %v4535, %v4537
  %v4539 = vadd.f32 %v4535, %v4538
  %vm4540 = vweird.f32 %v4535
  %v4541 = vsel %vm4540, %v4535, %v4539
  %v4542 = vmul.f32 %v4534, %v4541
  %v4543 = vmul.f32 %v4482, %v4279
  %v4544 = vmul.f32 %v4483, %v4281
  %v4545 = vmul.f32 %v4484, %v4284
  %v4546 = vmul.f32 %v4485, %v4286
  %v4547 = vmul.f32 %v4486, %v4289
  %v4548 = vmul.f32 %v4487, %v4291
  %v4549 = vmul.f32 %v4488, %v4294
  %v4550 = vmul.f32 %v4489, %v4296
  %v4551 = vmul.f32 %v4490, %v4299
  %v4552 = vmul.f32 %v4491, %v4301
  %v4553 = vmul.f32 %v4492, %v4304
  %v4554 = vmul.f32 %v4493, %v4306
  %v4555 = vmul.f32 %v4494, %v4309
  %v4556 = vmul.f32 %v4495, %v4311
  %v4557 = vmul.f32 %v4496, %v4314
  %v4558 = vmul.f32 %v4497, %v4316
  %v4559 = vmul.f32 %v4498, %v4319
  %v4560 = vmul.f32 %v4499, %v4321
  %v4561 = vmul.f32 %v4500, %v4324
  %v4562 = vmul.f32 %v4501, %v4326
  %v4563 = vmul.f32 %v4502, %v4329
  %v4564 = vmul.f32 %v4503, %v4331
  %v4565 = vmul.f32 %v4504, %v4334
  %v4566 = vmul.f32 %v4505, %v4336
  %v4567 = vadd.f32 %v4543, %v4544
  %v4568 = vadd.f32 %v4567, %v4545
  %v4569 = vadd.f32 %v4568, %v4546
  %v4570 = vadd.f32 %v4569, %v4547
  %v4571 = vadd.f32 %v4570, %v4548
  %v4572 = vadd.f32 %v4571, %v4549
  %v4573 = vadd.f32 %v4572, %v4550
  %v4574 = vadd.f32 %v4573, %v4551
  %v4575 = vadd.f32 %v4574, %v4552
  %v4576 = vadd.f32 %v4575, %v4553
  %v4577 = vadd.f32 %v4576, %v4554
  %v4578 = vadd.f32 %v4577, %v4555
  %v4579 = vadd.f32 %v4578, %v4556
  %v4580 = vadd.f32 %v4579, %v4557
  %v4581 = vadd.f32 %v4580, %v4558
  %v4582 = vadd.f32 %v4581, %v4559
  %v4583 = vadd.f32 %v4582, %v4560
  %v4584 = vadd.f32 %v4583, %v4561
  %v4585 = vadd.f32 %v4584, %v4562
  %v4586 = vadd.f32 %v4585, %v4563
  %v4587 = vadd.f32 %v4586, %v4564
  %v4588 = vadd.f32 %v4587, %v4565
  %v4589 = vadd.f32 %v4588, %v4566
  %v4590 = vrot.slane %v4589, 4
  %v4591 = vadd.f32 %v4589, %v4590
  %v4592 = vrot.slane %v4591, 2
  %v4593 = vadd.f32 %v4591, %v4592
  %v4594 = vrot.slane %v4593, 1
  %v4595 = vadd.f32 %v4593, %v4594
  %v4596 = vmul.f32 %v4595, %v4541
  %v4597 = vmul.f32 %v4542, %v4542
  %v4598 = vsub.f32 %v4596, %v4597
  %v4599 = vmax.f32 %v4598, 0.0
  %v4600 = vadd.f32 %v4599, 1e-05
  %v4601 = vrsqrt.pop %v4600
  %v4602 = vmul.f32 %v4601, %v4600
  %v4603 = vmul.f32 %v4602, %v4601
  %v4604 = vmul.f32 0.5, %v4603
  %v4605 = vsub.f32 1.5, %v4604
  %v4606 = vmul.f32 %v4601, %v4605
  %vm4607 = vweird.f32 %v4600
  %vm4608 = vweird.f32 %v4601
  %vm4609 = vmor %vm4607, %vm4608
  %v4610 = vsel %vm4609, %v4601, %v4606
  %v4611 = vld [vmem:[%s7] sm:$0x1]
  %v4612 = vmul.f32 %v4610, %v4611
  %v4613 = vsub.f32 %v4279, %v4542
  %v4614 = vsub.f32 %v4281, %v4542
  %v4615 = vsub.f32 %v4284, %v4542
  %v4616 = vsub.f32 %v4286, %v4542
  %v4617 = vsub.f32 %v4289, %v4542
  %v4618 = vsub.f32 %v4291, %v4542
  %v4619 = vsub.f32 %v4294, %v4542
  %v4620 = vsub.f32 %v4296, %v4542
  %v4621 = vsub.f32 %v4299, %v4542
  %v4622 = vsub.f32 %v4301, %v4542
  %v4623 = vsub.f32 %v4304, %v4542
  %v4624 = vsub.f32 %v4306, %v4542
  %v4625 = vsub.f32 %v4309, %v4542
  %v4626 = vsub.f32 %v4311, %v4542
  %v4627 = vsub.f32 %v4314, %v4542
  %v4628 = vsub.f32 %v4316, %v4542
  %v4629 = vsub.f32 %v4319, %v4542
  %v4630 = vsub.f32 %v4321, %v4542
  %v4631 = vsub.f32 %v4324, %v4542
  %v4632 = vsub.f32 %v4326, %v4542
  %v4633 = vsub.f32 %v4329, %v4542
  %v4634 = vsub.f32 %v4331, %v4542
  %v4635 = vsub.f32 %v4334, %v4542
  %v4636 = vsub.f32 %v4336, %v4542
  %v4637 = vperm.slane %v4612, 0
  %v4638 = vmul.f32 %v4613, %v4637
  %v4639 = vmul.f32 %v4614, %v4637
  %v4640 = vmul.f32 %v4615, %v4637
  %v4641 = vmul.f32 %v4616, %v4637
  %v4642 = vmul.f32 %v4617, %v4637
  %v4643 = vmul.f32 %v4618, %v4637
  %v4644 = vmul.f32 %v4619, %v4637
  %v4645 = vmul.f32 %v4620, %v4637
  %v4646 = vmul.f32 %v4621, %v4637
  %v4647 = vmul.f32 %v4622, %v4637
  %v4648 = vmul.f32 %v4623, %v4637
  %v4649 = vmul.f32 %v4624, %v4637
  %v4650 = vmul.f32 %v4625, %v4637
  %v4651 = vmul.f32 %v4626, %v4637
  %v4652 = vmul.f32 %v4627, %v4637
  %v4653 = vmul.f32 %v4628, %v4637
  %v4654 = vmul.f32 %v4629, %v4637
  %v4655 = vmul.f32 %v4630, %v4637
  %v4656 = vmul.f32 %v4631, %v4637
  %v4657 = vmul.f32 %v4632, %v4637
  %v4658 = vmul.f32 %v4633, %v4637
  %v4659 = vmul.f32 %v4634, %v4637
  %v4660 = vmul.f32 %v4635, %v4637
  %v4661 = vmul.f32 %v4636, %v4637
  %v4662 = vld [vmem:[%s8] sm:$0x1]
  %v4664 = vperm.slane %v4662, 0
  %v4666 = vadd.f32 %v4638, %v4664
  %v4667 = vadd.f32 %v4639, %v4664
  %v4668 = vadd.f32 %v4640, %v4664
  %v4669 = vadd.f32 %v4641, %v4664
  %v4670 = vadd.f32 %v4642, %v4664
  %v4671 = vadd.f32 %v4643, %v4664
  %v4672 = vadd.f32 %v4644, %v4664
  %v4673 = vadd.f32 %v4645, %v4664
  %v4674 = vadd.f32 %v4646, %v4664
  %v4675 = vadd.f32 %v4647, %v4664
  %v4676 = vadd.f32 %v4648, %v4664
  %v4677 = vadd.f32 %v4649, %v4664
  %v4678 = vadd.f32 %v4650, %v4664
  %v4679 = vadd.f32 %v4651, %v4664
  %v4680 = vadd.f32 %v4652, %v4664
  %v4681 = vadd.f32 %v4653, %v4664
  %v4682 = vadd.f32 %v4654, %v4664
  %v4683 = vadd.f32 %v4655, %v4664
  %v4684 = vadd.f32 %v4656, %v4664
  %v4685 = vadd.f32 %v4657, %v4664
  %v4686 = vadd.f32 %v4658, %v4664
  %v4687 = vadd.f32 %v4659, %v4664
  %v4688 = vadd.f32 %v4660, %v4664
  %v4689 = vadd.f32 %v4661, %v4664
  %vm4690 = vcmp.ge.f32.partialorder %v4666, 0.0
  %vm4691 = vcmp.ge.f32.partialorder %v4667, 0.0
  %vm4692 = vcmp.ge.f32.partialorder %v4668, 0.0
  %vm4693 = vcmp.ge.f32.partialorder %v4669, 0.0
  %vm4694 = vcmp.ge.f32.partialorder %v4670, 0.0
  %vm4695 = vcmp.ge.f32.partialorder %v4671, 0.0
  %vm4696 = vcmp.ge.f32.partialorder %v4672, 0.0
  %vm4697 = vcmp.ge.f32.partialorder %v4673, 0.0
  %vm4698 = vcmp.ge.f32.partialorder %v4674, 0.0
  %vm4699 = vcmp.ge.f32.partialorder %v4675, 0.0
  %vm4700 = vcmp.ge.f32.partialorder %v4676, 0.0
  %vm4701 = vcmp.ge.f32.partialorder %v4677, 0.0
  %vm4702 = vcmp.ge.f32.partialorder %v4678, 0.0
  %vm4703 = vcmp.ge.f32.partialorder %v4679, 0.0
  %vm4704 = vcmp.ge.f32.partialorder %v4680, 0.0
  %vm4705 = vcmp.ge.f32.partialorder %v4681, 0.0
  %vm4706 = vcmp.ge.f32.partialorder %v4682, 0.0
  %vm4707 = vcmp.ge.f32.partialorder %v4683, 0.0
  %vm4708 = vcmp.ge.f32.partialorder %v4684, 0.0
  %vm4709 = vcmp.ge.f32.partialorder %v4685, 0.0
  %vm4710 = vcmp.ge.f32.partialorder %v4686, 0.0
  %vm4711 = vcmp.ge.f32.partialorder %v4687, 0.0
  %vm4712 = vcmp.ge.f32.partialorder %v4688, 0.0
  %vm4713 = vcmp.ge.f32.partialorder %v4689, 0.0
  %v4714 = vmul.f32 %v4666, 0.2
  %v4715 = vmul.f32 %v4667, 0.2
  %v4716 = vmul.f32 %v4668, 0.2
  %v4717 = vmul.f32 %v4669, 0.2
  %v4718 = vmul.f32 %v4670, 0.2
  %v4719 = vmul.f32 %v4671, 0.2
  %v4720 = vmul.f32 %v4672, 0.2
  %v4721 = vmul.f32 %v4673, 0.2
  %v4722 = vmul.f32 %v4674, 0.2
  %v4723 = vmul.f32 %v4675, 0.2
  %v4724 = vmul.f32 %v4676, 0.2
  %v4725 = vmul.f32 %v4677, 0.2
  %v4726 = vmul.f32 %v4678, 0.2
  %v4727 = vmul.f32 %v4679, 0.2
  %v4728 = vmul.f32 %v4680, 0.2
  %v4729 = vmul.f32 %v4681, 0.2
  %v4730 = vmul.f32 %v4682, 0.2
  %v4731 = vmul.f32 %v4683, 0.2
  %v4732 = vmul.f32 %v4684, 0.2
  %v4733 = vmul.f32 %v4685, 0.2
  %v4734 = vmul.f32 %v4686, 0.2
  %v4735 = vmul.f32 %v4687, 0.2
  %v4736 = vmul.f32 %v4688, 0.2
  %v4737 = vmul.f32 %v4689, 0.2
  %v4738 = vsel %vm4690, %v4666, %v4714
  %v4739 = vsel %vm4691, %v4667, %v4715
  %v4740 = vsel %vm4692, %v4668, %v4716
  %v4741 = vsel %vm4693, %v4669, %v4717
  %v4742 = vsel %vm4694, %v4670, %v4718
  %v4743 = vsel %vm4695, %v4671, %v4719
  %v4744 = vsel %vm4696, %v4672, %v4720
  %v4745 = vsel %vm4697, %v4673, %v4721
  %v4746 = vsel %vm4698, %v4674, %v4722
  %v4747 = vsel %vm4699, %v4675, %v4723
  %v4748 = vsel %vm4700, %v4676, %v4724
  %v4749 = vsel %vm4701, %v4677, %v4725
  %v4750 = vsel %vm4702, %v4678, %v4726
  %v4751 = vsel %vm4703, %v4679, %v4727
  %v4752 = vsel %vm4704, %v4680, %v4728
  %v4753 = vsel %vm4705, %v4681, %v4729
  %v4754 = vsel %vm4706, %v4682, %v4730
  %v4755 = vsel %vm4707, %v4683, %v4731
  %v4756 = vsel %vm4708, %v4684, %v4732
  %v4757 = vsel %vm4709, %v4685, %v4733
  %v4758 = vsel %vm4710, %v4686, %v4734
  %v4759 = vsel %vm4711, %v4687, %v4735
  %v4760 = vsel %vm4712, %v4688, %v4736
  %v4761 = vsel %vm4713, %v4689, %v4737
  %v4762 = vpack.c.bf16 %v4738, %v4738
  %v4763 = vpack.c.bf16 %v4739, %v4739
  %v4764 = vpack.c.bf16 %v4740, %v4740
  %v4765 = vpack.c.bf16 %v4741, %v4741
  %v4766 = vpack.c.bf16 %v4742, %v4742
  %v4767 = vpack.c.bf16 %v4743, %v4743
  %v4768 = vpack.c.bf16 %v4744, %v4744
  %v4769 = vpack.c.bf16 %v4745, %v4745
  %v4770 = vpack.c.bf16 %v4746, %v4746
  %v4771 = vpack.c.bf16 %v4747, %v4747
  %v4772 = vpack.c.bf16 %v4748, %v4748
  %v4773 = vpack.c.bf16 %v4749, %v4749
  %v4774 = vpack.c.bf16 %v4750, %v4750
  %v4775 = vpack.c.bf16 %v4751, %v4751
  %v4776 = vpack.c.bf16 %v4752, %v4752
  %v4777 = vpack.c.bf16 %v4753, %v4753
  %v4778 = vpack.c.bf16 %v4754, %v4754
  %v4779 = vpack.c.bf16 %v4755, %v4755
  %v4780 = vpack.c.bf16 %v4756, %v4756
  %v4781 = vpack.c.bf16 %v4757, %v4757
  %v4782 = vpack.c.bf16 %v4758, %v4758
  %v4783 = vpack.c.bf16 %v4759, %v4759
  %v4784 = vpack.c.bf16 %v4760, %v4760
  %v4785 = vpack.c.bf16 %v4761, %v4761
  %4786 = vst [vmem:[#allocation4] sm:$0xf] %v4762
  %4787 = vst [vmem:[#allocation4 + $0x4] sm:$0xf] %v4763
  %4788 = vst [vmem:[#allocation4 + $0x8] sm:$0xf] %v4764
  %4789 = vst [vmem:[#allocation4 + $0xc] sm:$0xf] %v4765
  %4790 = vst [vmem:[#allocation4 + $0x10] sm:$0xf] %v4766
  %4791 = vst [vmem:[#allocation4 + $0x14] sm:$0xf] %v4767
  %4792 = vst [vmem:[#allocation4 + $0x18] sm:$0xf] %v4768
  %4793 = vst [vmem:[#allocation4 + $0x1c] sm:$0xf] %v4769
  %4794 = vst [vmem:[#allocation4 + $0x20] sm:$0xf] %v4770
  %4795 = vst [vmem:[#allocation4 + $0x24] sm:$0xf] %v4771
  %4796 = vst [vmem:[#allocation4 + $0x28] sm:$0xf] %v4772
  %4797 = vst [vmem:[#allocation4 + $0x2c] sm:$0xf] %v4773
  %4798 = vst [vmem:[#allocation4 + $0x30] sm:$0xf] %v4774
  %4799 = vst [vmem:[#allocation4 + $0x34] sm:$0xf] %v4775
  %4800 = vst [vmem:[#allocation4 + $0x38] sm:$0xf] %v4776
  %4801 = vst [vmem:[#allocation4 + $0x3c] sm:$0xf] %v4777
  %4802 = vst [vmem:[#allocation4 + $0x40] sm:$0xf] %v4778
  %4803 = vst [vmem:[#allocation4 + $0x44] sm:$0xf] %v4779
  %4804 = vst [vmem:[#allocation4 + $0x48] sm:$0xf] %v4780
  %4805 = vst [vmem:[#allocation4 + $0x4c] sm:$0xf] %v4781
  %4806 = vst [vmem:[#allocation4 + $0x50] sm:$0xf] %v4782
  %4807 = vst [vmem:[#allocation4 + $0x54] sm:$0xf] %v4783
  %4808 = vst [vmem:[#allocation4 + $0x58] sm:$0xf] %v4784
  %4809 = vst [vmem:[#allocation4 + $0x5c] sm:$0xf] %v4785
  %v4810 = vld [vmem:[#allocation4] sm:$0xf]
  %v4811 = vld [vmem:[#allocation4 + $0x4] sm:$0xf]
  %v4812 = vld [vmem:[#allocation4 + $0x8] sm:$0xf]
  %v4813 = vld [vmem:[#allocation4 + $0x18] sm:$0xf]
  %v4814 = vld [vmem:[#allocation4 + $0x1c] sm:$0xf]
  %v4815 = vld [vmem:[#allocation4 + $0x20] sm:$0xf]
  %v4816 = vld [vmem:[#allocation4] sm:$0xe]
  %v4817 = vld [vmem:[#allocation4 + $0xc] sm:$0x1]
  %v4818 = vld [vmem:[#allocation4 + $0x30] sm:$0xf]
  %v4819 = vld [vmem:[#allocation4 + $0x34] sm:$0xf]
  %v4820 = vld [vmem:[#allocation4 + $0x38] sm:$0xf]
  %v4821 = vld [vmem:[#allocation4 + $0x48] sm:$0xf]
  %v4822 = vld [vmem:[#allocation4 + $0x4c] sm:$0xf]
  %v4823 = vld [vmem:[#allocation4 + $0x50] sm:$0xf]
  %v4824 = vld [vmem:[#allocation4 + $0x30] sm:$0xe]
  %v4825 = vld [vmem:[#allocation4 + $0x3c] sm:$0x1]
  %v4826 = vld [vmem:[#allocation4 + $0xc] sm:$0xf]
  %v4827 = vld [vmem:[#allocation4 + $0x24] sm:$0xf]
  %v4828 = vld [vmem:[#allocation4 + $0x4] sm:$0xe]
  %v4829 = vld [vmem:[#allocation4 + $0x10] sm:$0x1]
  %v4833 = vunpack.c.l.b16 %v4810
  %v4834 = vunpack.c.l.b16 %v4811
  %v4835 = vunpack.c.l.b16 %v4812
  %v4836 = vpack.c.b16 %v4834, %v4833
  %v4837 = vpack.c.b16 %v4835, %v4835
  %v4843 = vunpack.c.l.b16 %v4813
  %v4844 = vunpack.c.l.b16 %v4814
  %v4845 = vunpack.c.l.b16 %v4815
  %v4846 = vpack.c.b16 %v4844, %v4843
  %v4847 = vpack.c.b16 %v4845, %v4845
  %v4852 = vunpack.c.l.b16 %v4816
  %v4853 = vunpack.c.l.b16 %v4817
  %v4854 = vpack.c.b16 %v4834, %v4852
  %v4855 = vpack.c.b16 %v4853, %v4835
  %vm4856 = vcmask 1046528
  %v4857 = vrot.slane %v4854, 1
  %v4858 = vrot.slane %v4855, 1
  %v4859 = vsel %vm4856, %v4857, %v4858
  %v4865 = vunpack.c.l.b16 %v4818
  %v4866 = vunpack.c.l.b16 %v4819
  %v4867 = vunpack.c.l.b16 %v4820
  %v4868 = vpack.c.b16 %v4866, %v4865
  %v4869 = vpack.c.b16 %v4867, %v4867
  %v4875 = vunpack.c.l.b16 %v4821
  %v4876 = vunpack.c.l.b16 %v4822
  %v4877 = vunpack.c.l.b16 %v4823
  %v4878 = vpack.c.b16 %v4876, %v4875
  %v4879 = vpack.c.b16 %v4877, %v4877
  %v4884 = vunpack.c.l.b16 %v4824
  %v4885 = vunpack.c.l.b16 %v4825
  %v4886 = vpack.c.b16 %v4866, %v4884
  %v4887 = vpack.c.b16 %v4885, %v4867
  %v4888 = vrot.slane %v4886, 1
  %v4889 = vrot.slane %v4887, 1
  %v4890 = vsel %vm4856, %v4888, %v4889
  %v4894 = vunpack.c.l.b16 %v4826
  %v4895 = vpack.c.b16 %v4835, %v4834
  %v4896 = vpack.c.b16 %v4894, %v4894
  %v4900 = vunpack.c.l.b16 %v4827
  %v4901 = vpack.c.b16 %v4845, %v4844
  %v4902 = vpack.c.b16 %v4900, %v4900
  %v4907 = vunpack.c.l.b16 %v4828
  %v4908 = vunpack.c.l.b16 %v4829
  %v4909 = vpack.c.b16 %v4835, %v4907
  %v4910 = vpack.c.b16 %v4908, %v4894
  %v4911 = vrot.slane %v4909, 1
  %v4912 = vrot.slane %v4910, 1
  %v4913 = vsel %vm4856, %v4911, %v4912
  %v4916 = vld [vmem:[%s3] sm:$0xff]
  %v4917 = vld [vmem:[%s3 + $0x8] sm:$0xff]
  %v4918 = vld [vmem:[%s3 + $0x10] sm:$0xff]
  %v4919 = vld [vmem:[%s3 + $0x18] sm:$0xff]
  %v4920 = vld [vmem:[%s3 + $0x20] sm:$0xff]
  %v4921 = vld [vmem:[%s3 + $0x28] sm:$0xff]
  %v4922 = vld [vmem:[%s3 + $0x30] sm:$0xff]
  %v4923 = vld [vmem:[%s3 + $0x38] sm:$0xff]
  %v4924 = vld [vmem:[%s3 + $0x40] sm:$0xff]
  %v4925 = vld [vmem:[%s3 + $0x48] sm:$0xff]
  %v4926 = vld [vmem:[%s3 + $0x50] sm:$0xff]
  %v4927 = vld [vmem:[%s3 + $0x58] sm:$0xff]
  %v4928 = vld [vmem:[%s3 + $0x60] sm:$0xff]
  %v4929 = vld [vmem:[%s3 + $0x68] sm:$0xff]
  %v4930 = vld [vmem:[%s3 + $0x70] sm:$0xff]
  %v4931 = vld [vmem:[%s3 + $0x78] sm:$0xff]
  %v4932 = vld [vmem:[%s3 + $0x80] sm:$0xff]
  %v4933 = vld [vmem:[%s3 + $0x88] sm:$0xff]
  %v4934 = vld [vmem:[%s3 + $0x90] sm:$0xff]
  %v4935 = vld [vmem:[%s3 + $0x98] sm:$0xff]
  %v4936 = vld [vmem:[%s3 + $0xa0] sm:$0xff]
  %v4937 = vld [vmem:[%s3 + $0xa8] sm:$0xff]
  %v4938 = vld [vmem:[%s3 + $0xb0] sm:$0xff]
  %v4939 = vld [vmem:[%s3 + $0xb8] sm:$0xff]
  %v4940 = vld [vmem:[%s3 + $0xc0] sm:$0xff]
  %v4941 = vld [vmem:[%s3 + $0xc8] sm:$0xff]
  %v4942 = vld [vmem:[%s3 + $0xd0] sm:$0xff]
  %v4943 = vld [vmem:[%s3 + $0xd8] sm:$0xff]
  %v4944 = vld [vmem:[%s3 + $0xe0] sm:$0xff]
  %v4945 = vld [vmem:[%s3 + $0xe8] sm:$0xff]
  %v4946 = vld [vmem:[%s3 + $0xf0] sm:$0xff]
  %v4947 = vld [vmem:[%s3 + $0xf8] sm:$0xff]
  %v4948 = vld [vmem:[%s3 + $0x100] sm:$0xff]
  %v4949 = vld [vmem:[%s3 + $0x108] sm:$0xff]
  %v4950 = vld [vmem:[%s3 + $0x110] sm:$0xff]
  %v4951 = vld [vmem:[%s3 + $0x118] sm:$0xff]
  %v4952 = vld [vmem:[%s3 + $0x120] sm:$0xff]
  %v4953 = vld [vmem:[%s3 + $0x128] sm:$0xff]
  %v4954 = vld [vmem:[%s3 + $0x130] sm:$0xff]
  %v4955 = vld [vmem:[%s3 + $0x138] sm:$0xff]
  %v4956 = vld [vmem:[%s3 + $0x140] sm:$0xff]
  %v4957 = vld [vmem:[%s3 + $0x148] sm:$0xff]
  %v4958 = vld [vmem:[%s3 + $0x150] sm:$0xff]
  %v4959 = vld [vmem:[%s3 + $0x158] sm:$0xff]
  %v4960 = vld [vmem:[%s3 + $0x160] sm:$0xff]
  %v4961 = vld [vmem:[%s3 + $0x168] sm:$0xff]
  %v4962 = vld [vmem:[%s3 + $0x170] sm:$0xff]
  %v4963 = vld [vmem:[%s3 + $0x178] sm:$0xff]
  %v4964 = vld [vmem:[%s3 + $0x180] sm:$0xff]
  %v4965 = vld [vmem:[%s3 + $0x188] sm:$0xff]
  %v4966 = vld [vmem:[%s3 + $0x190] sm:$0xff]
  %v4967 = vld [vmem:[%s3 + $0x198] sm:$0xff]
  %v4968 = vld [vmem:[%s3 + $0x1a0] sm:$0xff]
  %v4969 = vld [vmem:[%s3 + $0x1a8] sm:$0xff]
  %v4970 = vld [vmem:[%s3 + $0x1b0] sm:$0xff]
  %v4971 = vld [vmem:[%s3 + $0x1b8] sm:$0xff]
  %v4972 = vld [vmem:[%s3 + $0x1c0] sm:$0xff]
  %v4973 = vld [vmem:[%s3 + $0x1c8] sm:$0xff]
  %v4974 = vld [vmem:[%s3 + $0x1d0] sm:$0xff]
  %v4975 = vld [vmem:[%s3 + $0x1d8] sm:$0xff]
  %v4976 = vld [vmem:[%s3 + $0x1e0] sm:$0xff]
  %v4977 = vld [vmem:[%s3 + $0x1e8] sm:$0xff]
  %v4978 = vld [vmem:[%s3 + $0x1f0] sm:$0xff]
  %v4979 = vld [vmem:[%s3 + $0x1f8] sm:$0xff]
  %v4980 = vld [vmem:[%s3 + $0x200] sm:$0xff]
  %v4981 = vld [vmem:[%s3 + $0x208] sm:$0xff]
  %v4982 = vld [vmem:[%s3 + $0x210] sm:$0xff]
  %v4983 = vld [vmem:[%s3 + $0x218] sm:$0xff]
  %v4984 = vld [vmem:[%s3 + $0x220] sm:$0xff]
  %v4985 = vld [vmem:[%s3 + $0x228] sm:$0xff]
  %v4986 = vld [vmem:[%s3 + $0x230] sm:$0xff]
  %v4987 = vld [vmem:[%s3 + $0x238] sm:$0xff]
  %v4988 = vld [vmem:[%s3 + $0x240] sm:$0xff]
  %v4989 = vld [vmem:[%s3 + $0x248] sm:$0xff]
  %v4990 = vld [vmem:[%s3 + $0x250] sm:$0xff]
  %v4991 = vld [vmem:[%s3 + $0x258] sm:$0xff]
  %v4992 = vld [vmem:[%s3 + $0x260] sm:$0xff]
  %v4993 = vld [vmem:[%s3 + $0x268] sm:$0xff]
  %v4994 = vld [vmem:[%s3 + $0x270] sm:$0xff]
  %v4995 = vld [vmem:[%s3 + $0x278] sm:$0xff]
  %v4996 = vld [vmem:[%s3 + $0x280] sm:$0xff]
  %v4997 = vld [vmem:[%s3 + $0x288] sm:$0xff]
  %v4998 = vld [vmem:[%s3 + $0x290] sm:$0xff]
  %v4999 = vld [vmem:[%s3 + $0x298] sm:$0xff]
  %v5000 = vld [vmem:[%s3 + $0x2a0] sm:$0xff]
  %v5001 = vld [vmem:[%s3 + $0x2a8] sm:$0xff]
  %v5002 = vld [vmem:[%s3 + $0x2b0] sm:$0xff]
  %v5003 = vld [vmem:[%s3 + $0x2b8] sm:$0xff]
  %v5004 = vld [vmem:[%s3 + $0x2c0] sm:$0xff]
  %v5005 = vld [vmem:[%s3 + $0x2c8] sm:$0xff]
  %v5006 = vld [vmem:[%s3 + $0x2d0] sm:$0xff]
  %v5007 = vld [vmem:[%s3 + $0x2d8] sm:$0xff]
  %v5008 = vld [vmem:[%s3 + $0x2e0] sm:$0xff]
  %v5009 = vld [vmem:[%s3 + $0x2e8] sm:$0xff]
  %v5010 = vld [vmem:[%s3 + $0x2f0] sm:$0xff]
  %v5011 = vld [vmem:[%s3 + $0x2f8] sm:$0xff]
  %v5012 = vld [vmem:[%s3 + $0x300] sm:$0xff]
  %v5013 = vld [vmem:[%s3 + $0x308] sm:$0xff]
  %v5014 = vld [vmem:[%s3 + $0x310] sm:$0xff]
  %v5015 = vld [vmem:[%s3 + $0x318] sm:$0xff]
  %v5016 = vld [vmem:[%s3 + $0x320] sm:$0xff]
  %v5017 = vld [vmem:[%s3 + $0x328] sm:$0xff]
  %v5018 = vld [vmem:[%s3 + $0x330] sm:$0xff]
  %v5019 = vld [vmem:[%s3 + $0x338] sm:$0xff]
  %v5020 = vld [vmem:[%s3 + $0x340] sm:$0xff]
  %v5021 = vld [vmem:[%s3 + $0x348] sm:$0xff]
  %v5022 = vld [vmem:[%s3 + $0x350] sm:$0xff]
  %v5023 = vld [vmem:[%s3 + $0x358] sm:$0xff]
  %v5024 = vld [vmem:[%s3 + $0x360] sm:$0xff]
  %v5025 = vld [vmem:[%s3 + $0x368] sm:$0xff]
  %v5026 = vld [vmem:[%s3 + $0x370] sm:$0xff]
  %v5027 = vld [vmem:[%s3 + $0x378] sm:$0xff]
  %v5028 = vld [vmem:[%s3 + $0x380] sm:$0xff]
  %v5029 = vld [vmem:[%s3 + $0x388] sm:$0xff]
  %v5030 = vld [vmem:[%s3 + $0x390] sm:$0xff]
  %v5031 = vld [vmem:[%s3 + $0x398] sm:$0xff]
  %v5032 = vld [vmem:[%s3 + $0x3a0] sm:$0xff]
  %v5033 = vld [vmem:[%s3 + $0x3a8] sm:$0xff]
  %v5034 = vld [vmem:[%s3 + $0x3b0] sm:$0xff]
  %v5035 = vld [vmem:[%s3 + $0x3b8] sm:$0xff]
  %v5036 = vld [vmem:[%s3 + $0x3c0] sm:$0xff]
  %v5037 = vld [vmem:[%s3 + $0x3c8] sm:$0xff]
  %v5038 = vld [vmem:[%s3 + $0x3d0] sm:$0xff]
  %v5039 = vld [vmem:[%s3 + $0x3d8] sm:$0xff]
  %v5040 = vld [vmem:[%s3 + $0x3e0] sm:$0xff]
  %v5041 = vld [vmem:[%s3 + $0x3e8] sm:$0xff]
  %v5042 = vld [vmem:[%s3 + $0x3f0] sm:$0xff]
  %v5043 = vld [vmem:[%s3 + $0x3f8] sm:$0xff]
  %v5044 = vld [vmem:[%s3 + $0x400] sm:$0xff]
  %v5045 = vld [vmem:[%s3 + $0x408] sm:$0xff]
  %v5046 = vld [vmem:[%s3 + $0x410] sm:$0xff]
  %v5047 = vld [vmem:[%s3 + $0x418] sm:$0xff]
  %v5048 = vld [vmem:[%s3 + $0x420] sm:$0xff]
  %v5049 = vld [vmem:[%s3 + $0x428] sm:$0xff]
  %v5050 = vld [vmem:[%s3 + $0x430] sm:$0xff]
  %v5051 = vld [vmem:[%s3 + $0x438] sm:$0xff]
  %v5052 = vld [vmem:[%s3 + $0x440] sm:$0xff]
  %v5053 = vld [vmem:[%s3 + $0x448] sm:$0xff]
  %v5054 = vld [vmem:[%s3 + $0x450] sm:$0xff]
  %v5055 = vld [vmem:[%s3 + $0x458] sm:$0xff]
  %v5056 = vld [vmem:[%s3 + $0x460] sm:$0xff]
  %v5057 = vld [vmem:[%s3 + $0x468] sm:$0xff]
  %v5058 = vld [vmem:[%s3 + $0x470] sm:$0xff]
  %v5059 = vld [vmem:[%s3 + $0x478] sm:$0xff]
  %v5204 = vunpack.c.l.b16 %v4916
  %v5205 = vunpack.c.h.b16 %v4916
  %v5206 = vunpack.c.l.b16 %v4917
  %v5207 = vunpack.c.h.b16 %v4917
  %v5208 = vunpack.c.l.b16 %v4918
  %v5209 = vunpack.c.h.b16 %v4918
  %v5210 = vunpack.c.l.b16 %v4919
  %v5211 = vunpack.c.h.b16 %v4919
  %v5212 = vunpack.c.l.b16 %v4920
  %v5213 = vunpack.c.h.b16 %v4920
  %v5214 = vunpack.c.l.b16 %v4921
  %v5215 = vunpack.c.h.b16 %v4921
  %v5216 = vunpack.c.l.b16 %v4922
  %v5217 = vunpack.c.h.b16 %v4922
  %v5218 = vunpack.c.l.b16 %v4923
  %v5219 = vunpack.c.h.b16 %v4923
  %v5220 = vunpack.c.l.b16 %v4924
  %v5221 = vunpack.c.h.b16 %v4924
  %v5222 = vunpack.c.l.b16 %v4925
  %v5223 = vunpack.c.h.b16 %v4925
  %v5224 = vunpack.c.l.b16 %v4926
  %v5225 = vunpack.c.h.b16 %v4926
  %v5226 = vunpack.c.l.b16 %v4927
  %v5227 = vunpack.c.h.b16 %v4927
  %v5228 = vunpack.c.l.b16 %v4928
  %v5229 = vunpack.c.h.b16 %v4928
  %v5230 = vunpack.c.l.b16 %v4929
  %v5231 = vunpack.c.h.b16 %v4929
  %v5232 = vunpack.c.l.b16 %v4930
  %v5233 = vunpack.c.h.b16 %v4930
  %v5234 = vunpack.c.l.b16 %v4931
  %v5235 = vunpack.c.h.b16 %v4931
  %v5236 = vunpack.c.l.b16 %v4932
  %v5237 = vunpack.c.h.b16 %v4932
  %v5238 = vunpack.c.l.b16 %v4933
  %v5239 = vunpack.c.h.b16 %v4933
  %v5240 = vunpack.c.l.b16 %v4934
  %v5241 = vunpack.c.h.b16 %v4934
  %v5242 = vunpack.c.l.b16 %v4935
  %v5243 = vunpack.c.h.b16 %v4935
  %v5244 = vunpack.c.l.b16 %v4936
  %v5245 = vunpack.c.h.b16 %v4936
  %v5246 = vunpack.c.l.b16 %v4937
  %v5247 = vunpack.c.h.b16 %v4937
  %v5248 = vunpack.c.l.b16 %v4938
  %v5249 = vunpack.c.h.b16 %v4938
  %v5250 = vunpack.c.l.b16 %v4939
  %v5251 = vunpack.c.h.b16 %v4939
  %v5252 = vunpack.c.l.b16 %v4940
  %v5253 = vunpack.c.h.b16 %v4940
  %v5254 = vunpack.c.l.b16 %v4941
  %v5255 = vunpack.c.h.b16 %v4941
  %v5256 = vunpack.c.l.b16 %v4942
  %v5257 = vunpack.c.h.b16 %v4942
  %v5258 = vunpack.c.l.b16 %v4943
  %v5259 = vunpack.c.h.b16 %v4943
  %v5260 = vunpack.c.l.b16 %v4944
  %v5261 = vunpack.c.h.b16 %v4944
  %v5262 = vunpack.c.l.b16 %v4945
  %v5263 = vunpack.c.h.b16 %v4945
  %v5264 = vunpack.c.l.b16 %v4946
  %v5265 = vunpack.c.h.b16 %v4946
  %v5266 = vunpack.c.l.b16 %v4947
  %v5267 = vunpack.c.h.b16 %v4947
  %v5268 = vunpack.c.l.b16 %v4948
  %v5269 = vunpack.c.h.b16 %v4948
  %v5270 = vunpack.c.l.b16 %v4949
  %v5271 = vunpack.c.h.b16 %v4949
  %v5272 = vunpack.c.l.b16 %v4950
  %v5273 = vunpack.c.h.b16 %v4950
  %v5274 = vunpack.c.l.b16 %v4951
  %v5275 = vunpack.c.h.b16 %v4951
  %v5276 = vunpack.c.l.b16 %v4952
  %v5277 = vunpack.c.h.b16 %v4952
  %v5278 = vunpack.c.l.b16 %v4953
  %v5279 = vunpack.c.h.b16 %v4953
  %v5280 = vunpack.c.l.b16 %v4954
  %v5281 = vunpack.c.h.b16 %v4954
  %v5282 = vunpack.c.l.b16 %v4955
  %v5283 = vunpack.c.h.b16 %v4955
  %v5284 = vunpack.c.l.b16 %v4956
  %v5285 = vunpack.c.h.b16 %v4956
  %v5286 = vunpack.c.l.b16 %v4957
  %v5287 = vunpack.c.h.b16 %v4957
  %v5288 = vunpack.c.l.b16 %v4958
  %v5289 = vunpack.c.h.b16 %v4958
  %v5290 = vunpack.c.l.b16 %v4959
  %v5291 = vunpack.c.h.b16 %v4959
  %v5292 = vunpack.c.l.b16 %v4960
  %v5293 = vunpack.c.h.b16 %v4960
  %v5294 = vunpack.c.l.b16 %v4961
  %v5295 = vunpack.c.h.b16 %v4961
  %v5296 = vunpack.c.l.b16 %v4962
  %v5297 = vunpack.c.h.b16 %v4962
  %v5298 = vunpack.c.l.b16 %v4963
  %v5299 = vunpack.c.h.b16 %v4963
  %v5300 = vunpack.c.l.b16 %v4964
  %v5301 = vunpack.c.h.b16 %v4964
  %v5302 = vunpack.c.l.b16 %v4965
  %v5303 = vunpack.c.h.b16 %v4965
  %v5304 = vunpack.c.l.b16 %v4966
  %v5305 = vunpack.c.h.b16 %v4966
  %v5306 = vunpack.c.l.b16 %v4967
  %v5307 = vunpack.c.h.b16 %v4967
  %v5308 = vunpack.c.l.b16 %v4968
  %v5309 = vunpack.c.h.b16 %v4968
  %v5310 = vunpack.c.l.b16 %v4969
  %v5311 = vunpack.c.h.b16 %v4969
  %v5312 = vunpack.c.l.b16 %v4970
  %v5313 = vunpack.c.h.b16 %v4970
  %v5314 = vunpack.c.l.b16 %v4971
  %v5315 = vunpack.c.h.b16 %v4971
  %v5316 = vunpack.c.l.b16 %v4972
  %v5317 = vunpack.c.h.b16 %v4972
  %v5318 = vunpack.c.l.b16 %v4973
  %v5319 = vunpack.c.h.b16 %v4973
  %v5320 = vunpack.c.l.b16 %v4974
  %v5321 = vunpack.c.h.b16 %v4974
  %v5322 = vunpack.c.l.b16 %v4975
  %v5323 = vunpack.c.h.b16 %v4975
  %v5324 = vunpack.c.l.b16 %v4976
  %v5325 = vunpack.c.h.b16 %v4976
  %v5326 = vunpack.c.l.b16 %v4977
  %v5327 = vunpack.c.h.b16 %v4977
  %v5328 = vunpack.c.l.b16 %v4978
  %v5329 = vunpack.c.h.b16 %v4978
  %v5330 = vunpack.c.l.b16 %v4979
  %v5331 = vunpack.c.h.b16 %v4979
  %v5332 = vunpack.c.l.b16 %v4980
  %v5333 = vunpack.c.h.b16 %v4980
  %v5334 = vunpack.c.l.b16 %v4981
  %v5335 = vunpack.c.h.b16 %v4981
  %v5336 = vunpack.c.l.b16 %v4982
  %v5337 = vunpack.c.h.b16 %v4982
  %v5338 = vunpack.c.l.b16 %v4983
  %v5339 = vunpack.c.h.b16 %v4983
  %v5340 = vunpack.c.l.b16 %v4984
  %v5341 = vunpack.c.h.b16 %v4984
  %v5342 = vunpack.c.l.b16 %v4985
  %v5343 = vunpack.c.h.b16 %v4985
  %v5344 = vunpack.c.l.b16 %v4986
  %v5345 = vunpack.c.h.b16 %v4986
  %v5346 = vunpack.c.l.b16 %v4987
  %v5347 = vunpack.c.h.b16 %v4987
  %v5348 = vunpack.c.l.b16 %v4988
  %v5349 = vunpack.c.h.b16 %v4988
  %v5350 = vunpack.c.l.b16 %v4989
  %v5351 = vunpack.c.h.b16 %v4989
  %v5352 = vunpack.c.l.b16 %v4990
  %v5353 = vunpack.c.h.b16 %v4990
  %v5354 = vunpack.c.l.b16 %v4991
  %v5355 = vunpack.c.h.b16 %v4991
  %v5356 = vunpack.c.l.b16 %v4992
  %v5357 = vunpack.c.h.b16 %v4992
  %v5358 = vunpack.c.l.b16 %v4993
  %v5359 = vunpack.c.h.b16 %v4993
  %v5360 = vunpack.c.l.b16 %v4994
  %v5361 = vunpack.c.h.b16 %v4994
  %v5362 = vunpack.c.l.b16 %v4995
  %v5363 = vunpack.c.h.b16 %v4995
  %v5364 = vunpack.c.l.b16 %v4996
  %v5365 = vunpack.c.h.b16 %v4996
  %v5366 = vunpack.c.l.b16 %v4997
  %v5367 = vunpack.c.h.b16 %v4997
  %v5368 = vunpack.c.l.b16 %v4998
  %v5369 = vunpack.c.h.b16 %v4998
  %v5370 = vunpack.c.l.b16 %v4999
  %v5371 = vunpack.c.h.b16 %v4999
  %v5372 = vunpack.c.l.b16 %v5000
  %v5373 = vunpack.c.h.b16 %v5000
  %v5374 = vunpack.c.l.b16 %v5001
  %v5375 = vunpack.c.h.b16 %v5001
  %v5376 = vunpack.c.l.b16 %v5002
  %v5377 = vunpack.c.h.b16 %v5002
  %v5378 = vunpack.c.l.b16 %v5003
  %v5379 = vunpack.c.h.b16 %v5003
  %v5380 = vunpack.c.l.b16 %v5004
  %v5381 = vunpack.c.h.b16 %v5004
  %v5382 = vunpack.c.l.b16 %v5005
  %v5383 = vunpack.c.h.b16 %v5005
  %v5384 = vunpack.c.l.b16 %v5006
  %v5385 = vunpack.c.h.b16 %v5006
  %v5386 = vunpack.c.l.b16 %v5007
  %v5387 = vunpack.c.h.b16 %v5007
  %v5388 = vunpack.c.l.b16 %v5008
  %v5389 = vunpack.c.h.b16 %v5008
  %v5390 = vunpack.c.l.b16 %v5009
  %v5391 = vunpack.c.h.b16 %v5009
  %v5392 = vunpack.c.l.b16 %v5010
  %v5393 = vunpack.c.h.b16 %v5010
  %v5394 = vunpack.c.l.b16 %v5011
  %v5395 = vunpack.c.h.b16 %v5011
  %v5396 = vunpack.c.l.b16 %v5012
  %v5397 = vunpack.c.h.b16 %v5012
  %v5398 = vunpack.c.l.b16 %v5013
  %v5399 = vunpack.c.h.b16 %v5013
  %v5400 = vunpack.c.l.b16 %v5014
  %v5401 = vunpack.c.h.b16 %v5014
  %v5402 = vunpack.c.l.b16 %v5015
  %v5403 = vunpack.c.h.b16 %v5015
  %v5404 = vunpack.c.l.b16 %v5016
  %v5405 = vunpack.c.h.b16 %v5016
  %v5406 = vunpack.c.l.b16 %v5017
  %v5407 = vunpack.c.h.b16 %v5017
  %v5408 = vunpack.c.l.b16 %v5018
  %v5409 = vunpack.c.h.b16 %v5018
  %v5410 = vunpack.c.l.b16 %v5019
  %v5411 = vunpack.c.h.b16 %v5019
  %v5412 = vunpack.c.l.b16 %v5020
  %v5413 = vunpack.c.h.b16 %v5020
  %v5414 = vunpack.c.l.b16 %v5021
  %v5415 = vunpack.c.h.b16 %v5021
  %v5416 = vunpack.c.l.b16 %v5022
  %v5417 = vunpack.c.h.b16 %v5022
  %v5418 = vunpack.c.l.b16 %v5023
  %v5419 = vunpack.c.h.b16 %v5023
  %v5420 = vunpack.c.l.b16 %v5024
  %v5421 = vunpack.c.h.b16 %v5024
  %v5422 = vunpack.c.l.b16 %v5025
  %v5423 = vunpack.c.h.b16 %v5025
  %v5424 = vunpack.c.l.b16 %v5026
  %v5425 = vunpack.c.h.b16 %v5026
  %v5426 = vunpack.c.l.b16 %v5027
  %v5427 = vunpack.c.h.b16 %v5027
  %v5428 = vunpack.c.l.b16 %v5028
  %v5429 = vunpack.c.h.b16 %v5028
  %v5430 = vunpack.c.l.b16 %v5029
  %v5431 = vunpack.c.h.b16 %v5029
  %v5432 = vunpack.c.l.b16 %v5030
  %v5433 = vunpack.c.h.b16 %v5030
  %v5434 = vunpack.c.l.b16 %v5031
  %v5435 = vunpack.c.h.b16 %v5031
  %v5436 = vunpack.c.l.b16 %v5032
  %v5437 = vunpack.c.h.b16 %v5032
  %v5438 = vunpack.c.l.b16 %v5033
  %v5439 = vunpack.c.h.b16 %v5033
  %v5440 = vunpack.c.l.b16 %v5034
  %v5441 = vunpack.c.h.b16 %v5034
  %v5442 = vunpack.c.l.b16 %v5035
  %v5443 = vunpack.c.h.b16 %v5035
  %v5444 = vunpack.c.l.b16 %v5036
  %v5445 = vunpack.c.h.b16 %v5036
  %v5446 = vunpack.c.l.b16 %v5037
  %v5447 = vunpack.c.h.b16 %v5037
  %v5448 = vunpack.c.l.b16 %v5038
  %v5449 = vunpack.c.h.b16 %v5038
  %v5450 = vunpack.c.l.b16 %v5039
  %v5451 = vunpack.c.h.b16 %v5039
  %v5452 = vunpack.c.l.b16 %v5040
  %v5453 = vunpack.c.h.b16 %v5040
  %v5454 = vunpack.c.l.b16 %v5041
  %v5455 = vunpack.c.h.b16 %v5041
  %v5456 = vunpack.c.l.b16 %v5042
  %v5457 = vunpack.c.h.b16 %v5042
  %v5458 = vunpack.c.l.b16 %v5043
  %v5459 = vunpack.c.h.b16 %v5043
  %v5460 = vunpack.c.l.b16 %v5044
  %v5461 = vunpack.c.h.b16 %v5044
  %v5462 = vunpack.c.l.b16 %v5045
  %v5463 = vunpack.c.h.b16 %v5045
  %v5464 = vunpack.c.l.b16 %v5046
  %v5465 = vunpack.c.h.b16 %v5046
  %v5466 = vunpack.c.l.b16 %v5047
  %v5467 = vunpack.c.h.b16 %v5047
  %v5468 = vunpack.c.l.b16 %v5048
  %v5469 = vunpack.c.h.b16 %v5048
  %v5470 = vunpack.c.l.b16 %v5049
  %v5471 = vunpack.c.h.b16 %v5049
  %v5472 = vunpack.c.l.b16 %v5050
  %v5473 = vunpack.c.h.b16 %v5050
  %v5474 = vunpack.c.l.b16 %v5051
  %v5475 = vunpack.c.h.b16 %v5051
  %v5476 = vunpack.c.l.b16 %v5052
  %v5477 = vunpack.c.h.b16 %v5052
  %v5478 = vunpack.c.l.b16 %v5053
  %v5479 = vunpack.c.h.b16 %v5053
  %v5480 = vunpack.c.l.b16 %v5054
  %v5481 = vunpack.c.h.b16 %v5054
  %v5482 = vunpack.c.l.b16 %v5055
  %v5483 = vunpack.c.h.b16 %v5055
  %v5484 = vunpack.c.l.b16 %v5056
  %v5485 = vunpack.c.h.b16 %v5056
  %v5486 = vunpack.c.l.b16 %v5057
  %v5487 = vunpack.c.h.b16 %v5057
  %v5488 = vunpack.c.l.b16 %v5058
  %v5489 = vunpack.c.h.b16 %v5058
  %v5490 = vunpack.c.l.b16 %v5059
  %v5491 = vunpack.c.h.b16 %v5059
  %v5492 = vpack.c.b16 %v5206, %v5204
  %v5493 = vpack.c.b16 %v5207, %v5205
  %v5494 = vpack.c.b16 %v5210, %v5208
  %v5495 = vpack.c.b16 %v5211, %v5209
  %v5496 = vpack.c.b16 %v5214, %v5212
  %v5497 = vpack.c.b16 %v5215, %v5213
  %v5498 = vpack.c.b16 %v5218, %v5216
  %v5499 = vpack.c.b16 %v5219, %v5217
  %v5500 = vpack.c.b16 %v5222, %v5220
  %v5501 = vpack.c.b16 %v5223, %v5221
  %v5502 = vpack.c.b16 %v5226, %v5224
  %v5503 = vpack.c.b16 %v5227, %v5225
  %v5504 = vpack.c.b16 %v5230, %v5228
  %v5505 = vpack.c.b16 %v5231, %v5229
  %v5506 = vpack.c.b16 %v5234, %v5232
  %v5507 = vpack.c.b16 %v5235, %v5233
  %v5508 = vpack.c.b16 %v5238, %v5236
  %v5509 = vpack.c.b16 %v5239, %v5237
  %v5510 = vpack.c.b16 %v5242, %v5240
  %v5511 = vpack.c.b16 %v5243, %v5241
  %v5512 = vpack.c.b16 %v5246, %v5244
  %v5513 = vpack.c.b16 %v5247, %v5245
  %v5514 = vpack.c.b16 %v5250, %v5248
  %v5515 = vpack.c.b16 %v5251, %v5249
  %v5516 = vpack.c.b16 %v5254, %v5252
  %v5517 = vpack.c.b16 %v5255, %v5253
  %v5518 = vpack.c.b16 %v5258, %v5256
  %v5519 = vpack.c.b16 %v5259, %v5257
  %v5520 = vpack.c.b16 %v5262, %v5260
  %v5521 = vpack.c.b16 %v5263, %v5261
  %v5522 = vpack.c.b16 %v5266, %v5264
  %v5523 = vpack.c.b16 %v5267, %v5265
  %v5524 = vpack.c.b16 %v5270, %v5268
  %v5525 = vpack.c.b16 %v5271, %v5269
  %v5526 = vpack.c.b16 %v5274, %v5272
  %v5527 = vpack.c.b16 %v5275, %v5273
  %v5528 = vpack.c.b16 %v5278, %v5276
  %v5529 = vpack.c.b16 %v5279, %v5277
  %v5530 = vpack.c.b16 %v5282, %v5280
  %v5531 = vpack.c.b16 %v5283, %v5281
  %v5532 = vpack.c.b16 %v5286, %v5284
  %v5533 = vpack.c.b16 %v5287, %v5285
  %v5534 = vpack.c.b16 %v5290, %v5288
  %v5535 = vpack.c.b16 %v5291, %v5289
  %v5536 = vpack.c.b16 %v5294, %v5292
  %v5537 = vpack.c.b16 %v5295, %v5293
  %v5538 = vpack.c.b16 %v5298, %v5296
  %v5539 = vpack.c.b16 %v5299, %v5297
  %v5540 = vpack.c.b16 %v5302, %v5300
  %v5541 = vpack.c.b16 %v5303, %v5301
  %v5542 = vpack.c.b16 %v5306, %v5304
  %v5543 = vpack.c.b16 %v5307, %v5305
  %v5544 = vpack.c.b16 %v5310, %v5308
  %v5545 = vpack.c.b16 %v5311, %v5309
  %v5546 = vpack.c.b16 %v5314, %v5312
  %v5547 = vpack.c.b16 %v5315, %v5313
  %v5548 = vpack.c.b16 %v5318, %v5316
  %v5549 = vpack.c.b16 %v5319, %v5317
  %v5550 = vpack.c.b16 %v5322, %v5320
  %v5551 = vpack.c.b16 %v5323, %v5321
  %v5552 = vpack.c.b16 %v5326, %v5324
  %v5553 = vpack.c.b16 %v5327, %v5325
  %v5554 = vpack.c.b16 %v5330, %v5328
  %v5555 = vpack.c.b16 %v5331, %v5329
  %v5556 = vpack.c.b16 %v5334, %v5332
  %v5557 = vpack.c.b16 %v5335, %v5333
  %v5558 = vpack.c.b16 %v5338, %v5336
  %v5559 = vpack.c.b16 %v5339, %v5337
  %v5560 = vpack.c.b16 %v5342, %v5340
  %v5561 = vpack.c.b16 %v5343, %v5341
  %v5562 = vpack.c.b16 %v5346, %v5344
  %v5563 = vpack.c.b16 %v5347, %v5345
  %v5564 = vpack.c.b16 %v5350, %v5348
  %v5565 = vpack.c.b16 %v5351, %v5349
  %v5566 = vpack.c.b16 %v5354, %v5352
  %v5567 = vpack.c.b16 %v5355, %v5353
  %v5568 = vpack.c.b16 %v5358, %v5356
  %v5569 = vpack.c.b16 %v5359, %v5357
  %v5570 = vpack.c.b16 %v5362, %v5360
  %v5571 = vpack.c.b16 %v5363, %v5361
  %v5572 = vpack.c.b16 %v5366, %v5364
  %v5573 = vpack.c.b16 %v5367, %v5365
  %v5574 = vpack.c.b16 %v5370, %v5368
  %v5575 = vpack.c.b16 %v5371, %v5369
  %v5576 = vpack.c.b16 %v5374, %v5372
  %v5577 = vpack.c.b16 %v5375, %v5373
  %v5578 = vpack.c.b16 %v5378, %v5376
  %v5579 = vpack.c.b16 %v5379, %v5377
  %v5580 = vpack.c.b16 %v5382, %v5380
  %v5581 = vpack.c.b16 %v5383, %v5381
  %v5582 = vpack.c.b16 %v5386, %v5384
  %v5583 = vpack.c.b16 %v5387, %v5385
  %v5584 = vpack.c.b16 %v5390, %v5388
  %v5585 = vpack.c.b16 %v5391, %v5389
  %v5586 = vpack.c.b16 %v5394, %v5392
  %v5587 = vpack.c.b16 %v5395, %v5393
  %v5588 = vpack.c.b16 %v5398, %v5396
  %v5589 = vpack.c.b16 %v5399, %v5397
  %v5590 = vpack.c.b16 %v5402, %v5400
  %v5591 = vpack.c.b16 %v5403, %v5401
  %v5592 = vpack.c.b16 %v5406, %v5404
  %v5593 = vpack.c.b16 %v5407, %v5405
  %v5594 = vpack.c.b16 %v5410, %v5408
  %v5595 = vpack.c.b16 %v5411, %v5409
  %v5596 = vpack.c.b16 %v5414, %v5412
  %v5597 = vpack.c.b16 %v5415, %v5413
  %v5598 = vpack.c.b16 %v5418, %v5416
  %v5599 = vpack.c.b16 %v5419, %v5417
  %v5600 = vpack.c.b16 %v5422, %v5420
  %v5601 = vpack.c.b16 %v5423, %v5421
  %v5602 = vpack.c.b16 %v5426, %v5424
  %v5603 = vpack.c.b16 %v5427, %v5425
  %v5604 = vpack.c.b16 %v5430, %v5428
  %v5605 = vpack.c.b16 %v5431, %v5429
  %v5606 = vpack.c.b16 %v5434, %v5432
  %v5607 = vpack.c.b16 %v5435, %v5433
  %v5608 = vpack.c.b16 %v5438, %v5436
  %v5609 = vpack.c.b16 %v5439, %v5437
  %v5610 = vpack.c.b16 %v5442, %v5440
  %v5611 = vpack.c.b16 %v5443, %v5441
  %v5612 = vpack.c.b16 %v5446, %v5444
  %v5613 = vpack.c.b16 %v5447, %v5445
  %v5614 = vpack.c.b16 %v5450, %v5448
  %v5615 = vpack.c.b16 %v5451, %v5449
  %v5616 = vpack.c.b16 %v5454, %v5452
  %v5617 = vpack.c.b16 %v5455, %v5453
  %v5618 = vpack.c.b16 %v5458, %v5456
  %v5619 = vpack.c.b16 %v5459, %v5457
  %v5620 = vpack.c.b16 %v5462, %v5460
  %v5621 = vpack.c.b16 %v5463, %v5461
  %v5622 = vpack.c.b16 %v5466, %v5464
  %v5623 = vpack.c.b16 %v5467, %v5465
  %v5624 = vpack.c.b16 %v5470, %v5468
  %v5625 = vpack.c.b16 %v5471, %v5469
  %v5626 = vpack.c.b16 %v5474, %v5472
  %v5627 = vpack.c.b16 %v5475, %v5473
  %v5628 = vpack.c.b16 %v5478, %v5476
  %v5629 = vpack.c.b16 %v5479, %v5477
  %v5630 = vpack.c.b16 %v5482, %v5480
  %v5631 = vpack.c.b16 %v5483, %v5481
  %v5632 = vpack.c.b16 %v5486, %v5484
  %v5633 = vpack.c.b16 %v5487, %v5485
  %v5634 = vpack.c.b16 %v5490, %v5488
  %v5635 = vpack.c.b16 %v5491, %v5489
  %5780 = vmatpush.bf16.msra.mxu0 %v5506
  %5781 = vmatpush.bf16.msra.mxu0 %v5504
  %5782 = vmatpush.bf16.msra.mxu0 %v5502
  %5783 = vmatpush.bf16.msra.mxu0 %v5500
  %5784 = vmatpush.bf16.msra.mxu0 %v5498
  %5785 = vmatpush.bf16.msra.mxu0 %v5496
  %5786 = vmatpush.bf16.msra.mxu0 %v5494
  %5787 = vmatpush.bf16.msra.mxu0 %v5492
  %5788 = vmatmul.bf16.gmra.mxu0 %v4836
  %v5789 = vpop.f32.mrf.mxu0
  %v5790 = vadd.f32 0.0, %v5789
  %v5791 = vpop.f32.mrf.mxu0
  %v5792 = vadd.f32 0.0, %v5791
  %5793 = vmatmul.bf16.gmra.mxu0 %v4837
  %v5794 = vpop.f32.mrf.mxu0
  %v5795 = vadd.f32 0.0, %v5794
  %v5796 = vpop.f32.mrf.mxu0
  %5797 = vdwg.mxu0
  %5798 = vmatpush.bf16.msra.mxu0 %v5522
  %5799 = vmatpush.bf16.msra.mxu0 %v5520
  %5800 = vmatpush.bf16.msra.mxu0 %v5518
  %5801 = vmatpush.bf16.msra.mxu0 %v5516
  %5802 = vmatpush.bf16.msra.mxu0 %v5514
  %5803 = vmatpush.bf16.msra.mxu0 %v5512
  %5804 = vmatpush.bf16.msra.mxu0 %v5510
  %5805 = vmatpush.bf16.msra.mxu0 %v5508
  %5806 = vmatmul.bf16.gmra.mxu0 %v4846
  %v5807 = vpop.f32.mrf.mxu0
  %v5808 = vadd.f32 %v5790, %v5807
  %v5809 = vpop.f32.mrf.mxu0
  %v5810 = vadd.f32 %v5792, %v5809
  %5811 = vmatmul.bf16.gmra.mxu0 %v4847
  %v5812 = vpop.f32.mrf.mxu0
  %v5813 = vadd.f32 %v5795, %v5812
  %v5814 = vpop.f32.mrf.mxu0
  %5815 = vdwg.mxu0
  %5816 = vmatpush.bf16.msra.mxu0 %v5538
  %5817 = vmatpush.bf16.msra.mxu0 %v5536
  %5818 = vmatpush.bf16.msra.mxu0 %v5534
  %5819 = vmatpush.bf16.msra.mxu0 %v5532
  %5820 = vmatpush.bf16.msra.mxu0 %v5530
  %5821 = vmatpush.bf16.msra.mxu0 %v5528
  %5822 = vmatpush.bf16.msra.mxu0 %v5526
  %5823 = vmatpush.bf16.msra.mxu0 %v5524
  %5824 = vmatmul.bf16.gmra.mxu0 %v4859
  %v5825 = vpop.f32.mrf.mxu0
  %v5826 = vadd.f32 %v5808, %v5825
  %v5827 = vpop.f32.mrf.mxu0
  %v5828 = vadd.f32 %v5810, %v5827
  %5829 = vmatmul.bf16.gmra.mxu0 %v4858
  %v5830 = vpop.f32.mrf.mxu0
  %v5831 = vadd.f32 %v5813, %v5830
  %v5832 = vpop.f32.mrf.mxu0
  %5833 = vdwg.mxu0
  %5834 = vmatpush.bf16.msra.mxu0 %v5554
  %5835 = vmatpush.bf16.msra.mxu0 %v5552
  %5836 = vmatpush.bf16.msra.mxu0 %v5550
  %5837 = vmatpush.bf16.msra.mxu0 %v5548
  %5838 = vmatpush.bf16.msra.mxu0 %v5546
  %5839 = vmatpush.bf16.msra.mxu0 %v5544
  %5840 = vmatpush.bf16.msra.mxu0 %v5542
  %5841 = vmatpush.bf16.msra.mxu0 %v5540
  %5842 = vmatmul.bf16.gmra.mxu0 %v4868
  %v5843 = vpop.f32.mrf.mxu0
  %v5844 = vadd.f32 %v5826, %v5843
  %v5845 = vpop.f32.mrf.mxu0
  %v5846 = vadd.f32 %v5828, %v5845
  %5847 = vmatmul.bf16.gmra.mxu0 %v4869
  %v5848 = vpop.f32.mrf.mxu0
  %v5849 = vadd.f32 %v5831, %v5848
  %v5850 = vpop.f32.mrf.mxu0
  %5851 = vdwg.mxu0
  %5852 = vmatpush.bf16.msra.mxu0 %v5570
  %5853 = vmatpush.bf16.msra.mxu0 %v5568
  %5854 = vmatpush.bf16.msra.mxu0 %v5566
  %5855 = vmatpush.bf16.msra.mxu0 %v5564
  %5856 = vmatpush.bf16.msra.mxu0 %v5562
  %5857 = vmatpush.bf16.msra.mxu0 %v5560
  %5858 = vmatpush.bf16.msra.mxu0 %v5558
  %5859 = vmatpush.bf16.msra.mxu0 %v5556
  %5860 = vmatmul.bf16.gmra.mxu0 %v4878
  %v5861 = vpop.f32.mrf.mxu0
  %v5862 = vadd.f32 %v5844, %v5861
  %v5863 = vpop.f32.mrf.mxu0
  %v5864 = vadd.f32 %v5846, %v5863
  %5865 = vmatmul.bf16.gmra.mxu0 %v4879
  %v5866 = vpop.f32.mrf.mxu0
  %v5867 = vadd.f32 %v5849, %v5866
  %v5868 = vpop.f32.mrf.mxu0
  %5869 = vdwg.mxu0
  %5870 = vmatpush.bf16.msra.mxu0 %v5586
  %5871 = vmatpush.bf16.msra.mxu0 %v5584
  %5872 = vmatpush.bf16.msra.mxu0 %v5582
  %5873 = vmatpush.bf16.msra.mxu0 %v5580
  %5874 = vmatpush.bf16.msra.mxu0 %v5578
  %5875 = vmatpush.bf16.msra.mxu0 %v5576
  %5876 = vmatpush.bf16.msra.mxu0 %v5574
  %5877 = vmatpush.bf16.msra.mxu0 %v5572
  %5878 = vmatmul.bf16.gmra.mxu0 %v4890
  %v5879 = vpop.f32.mrf.mxu0
  %v5880 = vadd.f32 %v5862, %v5879
  %v5881 = vpop.f32.mrf.mxu0
  %v5882 = vadd.f32 %v5864, %v5881
  %5883 = vmatmul.bf16.gmra.mxu0 %v4889
  %v5884 = vpop.f32.mrf.mxu0
  %v5885 = vadd.f32 %v5867, %v5884
  %v5886 = vpop.f32.mrf.mxu0
  %5887 = vdwg.mxu0
  %5888 = vmatpush.bf16.msra.mxu0 %v5602
  %5889 = vmatpush.bf16.msra.mxu0 %v5600
  %5890 = vmatpush.bf16.msra.mxu0 %v5598
  %5891 = vmatpush.bf16.msra.mxu0 %v5596
  %5892 = vmatpush.bf16.msra.mxu0 %v5594
  %5893 = vmatpush.bf16.msra.mxu0 %v5592
  %5894 = vmatpush.bf16.msra.mxu0 %v5590
  %5895 = vmatpush.bf16.msra.mxu0 %v5588
  %5896 = vmatmul.bf16.gmra.mxu0 %v4895
  %v5897 = vpop.f32.mrf.mxu0
  %v5898 = vadd.f32 %v5880, %v5897
  %v5899 = vpop.f32.mrf.mxu0
  %v5900 = vadd.f32 %v5882, %v5899
  %5901 = vmatmul.bf16.gmra.mxu0 %v4896
  %v5902 = vpop.f32.mrf.mxu0
  %v5903 = vadd.f32 %v5885, %v5902
  %v5904 = vpop.f32.mrf.mxu0
  %5905 = vdwg.mxu0
  %5906 = vmatpush.bf16.msra.mxu0 %v5618
  %5907 = vmatpush.bf16.msra.mxu0 %v5616
  %5908 = vmatpush.bf16.msra.mxu0 %v5614
  %5909 = vmatpush.bf16.msra.mxu0 %v5612
  %5910 = vmatpush.bf16.msra.mxu0 %v5610
  %5911 = vmatpush.bf16.msra.mxu0 %v5608
  %5912 = vmatpush.bf16.msra.mxu0 %v5606
  %5913 = vmatpush.bf16.msra.mxu0 %v5604
  %5914 = vmatmul.bf16.gmra.mxu0 %v4901
  %v5915 = vpop.f32.mrf.mxu0
  %v5916 = vadd.f32 %v5898, %v5915
  %v5917 = vpop.f32.mrf.mxu0
  %v5918 = vadd.f32 %v5900, %v5917
  %5919 = vmatmul.bf16.gmra.mxu0 %v4902
  %v5920 = vpop.f32.mrf.mxu0
  %v5921 = vadd.f32 %v5903, %v5920
  %v5922 = vpop.f32.mrf.mxu0
  %5923 = vdwg.mxu0
  %5924 = vmatpush.bf16.msra.mxu0 %v5634
  %5925 = vmatpush.bf16.msra.mxu0 %v5632
  %5926 = vmatpush.bf16.msra.mxu0 %v5630
  %5927 = vmatpush.bf16.msra.mxu0 %v5628
  %5928 = vmatpush.bf16.msra.mxu0 %v5626
  %5929 = vmatpush.bf16.msra.mxu0 %v5624
  %5930 = vmatpush.bf16.msra.mxu0 %v5622
  %5931 = vmatpush.bf16.msra.mxu0 %v5620
  %5932 = vmatmul.bf16.gmra.mxu0 %v4913
  %v5933 = vpop.f32.mrf.mxu0
  %v5934 = vadd.f32 %v5916, %v5933
  %v5935 = vpop.f32.mrf.mxu0
  %v5936 = vadd.f32 %v5918, %v5935
  %5937 = vmatmul.bf16.gmra.mxu0 %v4912
  %v5938 = vpop.f32.mrf.mxu0
  %v5939 = vadd.f32 %v5921, %v5938
  %v5940 = vpop.f32.mrf.mxu0
  %5941 = vdwg.mxu0
  %5942 = vmatpush.bf16.msra.mxu0 %v5507
  %5943 = vmatpush.bf16.msra.mxu0 %v5505
  %5944 = vmatpush.bf16.msra.mxu0 %v5503
  %5945 = vmatpush.bf16.msra.mxu0 %v5501
  %5946 = vmatpush.bf16.msra.mxu0 %v5499
  %5947 = vmatpush.bf16.msra.mxu0 %v5497
  %5948 = vmatpush.bf16.msra.mxu0 %v5495
  %5949 = vmatpush.bf16.msra.mxu0 %v5493
  %5950 = vmatmul.bf16.gmra.mxu0 %v4836
  %v5951 = vpop.f32.mrf.mxu0
  %v5952 = vadd.f32 0.0, %v5951
  %v5953 = vpop.f32.mrf.mxu0
  %v5954 = vadd.f32 0.0, %v5953
  %5955 = vmatmul.bf16.gmra.mxu0 %v4837
  %v5956 = vpop.f32.mrf.mxu0
  %v5957 = vadd.f32 0.0, %v5956
  %v5958 = vpop.f32.mrf.mxu0
  %5959 = vdwg.mxu0
  %5960 = vmatpush.bf16.msra.mxu0 %v5523
  %5961 = vmatpush.bf16.msra.mxu0 %v5521
  %5962 = vmatpush.bf16.msra.mxu0 %v5519
  %5963 = vmatpush.bf16.msra.mxu0 %v5517
  %5964 = vmatpush.bf16.msra.mxu0 %v5515
  %5965 = vmatpush.bf16.msra.mxu0 %v5513
  %5966 = vmatpush.bf16.msra.mxu0 %v5511
  %5967 = vmatpush.bf16.msra.mxu0 %v5509
  %5968 = vmatmul.bf16.gmra.mxu0 %v4846
  %v5969 = vpop.f32.mrf.mxu0
  %v5970 = vadd.f32 %v5952, %v5969
  %v5971 = vpop.f32.mrf.mxu0
  %v5972 = vadd.f32 %v5954, %v5971
  %5973 = vmatmul.bf16.gmra.mxu0 %v4847
  %v5974 = vpop.f32.mrf.mxu0
  %v5975 = vadd.f32 %v5957, %v5974
  %v5976 = vpop.f32.mrf.mxu0
  %5977 = vdwg.mxu0
  %5978 = vmatpush.bf16.msra.mxu0 %v5539
  %5979 = vmatpush.bf16.msra.mxu0 %v5537
  %5980 = vmatpush.bf16.msra.mxu0 %v5535
  %5981 = vmatpush.bf16.msra.mxu0 %v5533
  %5982 = vmatpush.bf16.msra.mxu0 %v5531
  %5983 = vmatpush.bf16.msra.mxu0 %v5529
  %5984 = vmatpush.bf16.msra.mxu0 %v5527
  %5985 = vmatpush.bf16.msra.mxu0 %v5525
  %5986 = vmatmul.bf16.gmra.mxu0 %v4859
  %v5987 = vpop.f32.mrf.mxu0
  %v5988 = vadd.f32 %v5970, %v5987
  %v5989 = vpop.f32.mrf.mxu0
  %v5990 = vadd.f32 %v5972, %v5989
  %5991 = vmatmul.bf16.gmra.mxu0 %v4858
  %v5992 = vpop.f32.mrf.mxu0
  %v5993 = vadd.f32 %v5975, %v5992
  %v5994 = vpop.f32.mrf.mxu0
  %5995 = vdwg.mxu0
  %5996 = vmatpush.bf16.msra.mxu0 %v5555
  %5997 = vmatpush.bf16.msra.mxu0 %v5553
  %5998 = vmatpush.bf16.msra.mxu0 %v5551
  %5999 = vmatpush.bf16.msra.mxu0 %v5549
  %6000 = vmatpush.bf16.msra.mxu0 %v5547
  %6001 = vmatpush.bf16.msra.mxu0 %v5545
  %6002 = vmatpush.bf16.msra.mxu0 %v5543
  %6003 = vmatpush.bf16.msra.mxu0 %v5541
  %6004 = vmatmul.bf16.gmra.mxu0 %v4868
  %v6005 = vpop.f32.mrf.mxu0
  %v6006 = vadd.f32 %v5988, %v6005
  %v6007 = vpop.f32.mrf.mxu0
  %v6008 = vadd.f32 %v5990, %v6007
  %6009 = vmatmul.bf16.gmra.mxu0 %v4869
  %v6010 = vpop.f32.mrf.mxu0
  %v6011 = vadd.f32 %v5993, %v6010
  %v6012 = vpop.f32.mrf.mxu0
  %6013 = vdwg.mxu0
  %6014 = vmatpush.bf16.msra.mxu0 %v5571
  %6015 = vmatpush.bf16.msra.mxu0 %v5569
  %6016 = vmatpush.bf16.msra.mxu0 %v5567
  %6017 = vmatpush.bf16.msra.mxu0 %v5565
  %6018 = vmatpush.bf16.msra.mxu0 %v5563
  %6019 = vmatpush.bf16.msra.mxu0 %v5561
  %6020 = vmatpush.bf16.msra.mxu0 %v5559
  %6021 = vmatpush.bf16.msra.mxu0 %v5557
  %6022 = vmatmul.bf16.gmra.mxu0 %v4878
  %v6023 = vpop.f32.mrf.mxu0
  %v6024 = vadd.f32 %v6006, %v6023
  %v6025 = vpop.f32.mrf.mxu0
  %v6026 = vadd.f32 %v6008, %v6025
  %6027 = vmatmul.bf16.gmra.mxu0 %v4879
  %v6028 = vpop.f32.mrf.mxu0
  %v6029 = vadd.f32 %v6011, %v6028
  %v6030 = vpop.f32.mrf.mxu0
  %6031 = vdwg.mxu0
  %6032 = vmatpush.bf16.msra.mxu0 %v5587
  %6033 = vmatpush.bf16.msra.mxu0 %v5585
  %6034 = vmatpush.bf16.msra.mxu0 %v5583
  %6035 = vmatpush.bf16.msra.mxu0 %v5581
  %6036 = vmatpush.bf16.msra.mxu0 %v5579
  %6037 = vmatpush.bf16.msra.mxu0 %v5577
  %6038 = vmatpush.bf16.msra.mxu0 %v5575
  %6039 = vmatpush.bf16.msra.mxu0 %v5573
  %6040 = vmatmul.bf16.gmra.mxu0 %v4890
  %v6041 = vpop.f32.mrf.mxu0
  %v6042 = vadd.f32 %v6024, %v6041
  %v6043 = vpop.f32.mrf.mxu0
  %v6044 = vadd.f32 %v6026, %v6043
  %6045 = vmatmul.bf16.gmra.mxu0 %v4889
  %v6046 = vpop.f32.mrf.mxu0
  %v6047 = vadd.f32 %v6029, %v6046
  %v6048 = vpop.f32.mrf.mxu0
  %6049 = vdwg.mxu0
  %6050 = vmatpush.bf16.msra.mxu0 %v5603
  %6051 = vmatpush.bf16.msra.mxu0 %v5601
  %6052 = vmatpush.bf16.msra.mxu0 %v5599
  %6053 = vmatpush.bf16.msra.mxu0 %v5597
  %6054 = vmatpush.bf16.msra.mxu0 %v5595
  %6055 = vmatpush.bf16.msra.mxu0 %v5593
  %6056 = vmatpush.bf16.msra.mxu0 %v5591
  %6057 = vmatpush.bf16.msra.mxu0 %v5589
  %6058 = vmatmul.bf16.gmra.mxu0 %v4895
  %v6059 = vpop.f32.mrf.mxu0
  %v6060 = vadd.f32 %v6042, %v6059
  %v6061 = vpop.f32.mrf.mxu0
  %v6062 = vadd.f32 %v6044, %v6061
  %6063 = vmatmul.bf16.gmra.mxu0 %v4896
  %v6064 = vpop.f32.mrf.mxu0
  %v6065 = vadd.f32 %v6047, %v6064
  %v6066 = vpop.f32.mrf.mxu0
  %6067 = vdwg.mxu0
  %6068 = vmatpush.bf16.msra.mxu0 %v5619
  %6069 = vmatpush.bf16.msra.mxu0 %v5617
  %6070 = vmatpush.bf16.msra.mxu0 %v5615
  %6071 = vmatpush.bf16.msra.mxu0 %v5613
  %6072 = vmatpush.bf16.msra.mxu0 %v5611
  %6073 = vmatpush.bf16.msra.mxu0 %v5609
  %6074 = vmatpush.bf16.msra.mxu0 %v5607
  %6075 = vmatpush.bf16.msra.mxu0 %v5605
  %6076 = vmatmul.bf16.gmra.mxu0 %v4901
  %v6077 = vpop.f32.mrf.mxu0
  %v6078 = vadd.f32 %v6060, %v6077
  %v6079 = vpop.f32.mrf.mxu0
  %v6080 = vadd.f32 %v6062, %v6079
  %6081 = vmatmul.bf16.gmra.mxu0 %v4902
  %v6082 = vpop.f32.mrf.mxu0
  %v6083 = vadd.f32 %v6065, %v6082
  %v6084 = vpop.f32.mrf.mxu0
  %6085 = vdwg.mxu0
  %6086 = vmatpush.bf16.msra.mxu0 %v5635
  %6087 = vmatpush.bf16.msra.mxu0 %v5633
  %6088 = vmatpush.bf16.msra.mxu0 %v5631
  %6089 = vmatpush.bf16.msra.mxu0 %v5629
  %6090 = vmatpush.bf16.msra.mxu0 %v5627
  %6091 = vmatpush.bf16.msra.mxu0 %v5625
  %6092 = vmatpush.bf16.msra.mxu0 %v5623
  %6093 = vmatpush.bf16.msra.mxu0 %v5621
  %6094 = vmatmul.bf16.gmra.mxu0 %v4913
  %v6095 = vpop.f32.mrf.mxu0
  %v6096 = vadd.f32 %v6078, %v6095
  %v6097 = vpop.f32.mrf.mxu0
  %v6098 = vadd.f32 %v6080, %v6097
  %6099 = vmatmul.bf16.gmra.mxu0 %v4912
  %v6100 = vpop.f32.mrf.mxu0
  %v6101 = vadd.f32 %v6083, %v6100
  %v6102 = vpop.f32.mrf.mxu0
  %6103 = vdwg.mxu0
  %v6104 = vld [vmem:[%s6] sm:$0xff]
  %v6105 = vld [vmem:[%s6 + $0x8] sm:$0xff]
  %v6106 = vld [vmem:[%s6 + $0x10] sm:$0xff]
  %6108 = vset.pattern.permute.xlu0 0
  %6109 = vperm.xlu0 %6108, %v6104
  %v6110 = vpop.permute.xlu0 %6109
  %6113 = vset.pattern.permute.xlu0 0
  %6114 = vperm.xlu0 %6113, %v6105
  %v6115 = vpop.permute.xlu0 %6114
  %6118 = vset.pattern.permute.xlu0 0
  %6119 = vperm.xlu0 %6118, %v6106
  %v6120 = vpop.permute.xlu0 %6119
  %v6122 = vmul.f32 %v5934, %v6110
  %v6123 = vmul.f32 %v6096, %v6110
  %v6124 = vmul.f32 %v5936, %v6115
  %v6125 = vmul.f32 %v6098, %v6115
  %v6126 = vmul.f32 %v5939, %v6120
  %v6127 = vmul.f32 %v6101, %v6120
  %v6128 = vadd.f32 %v6122, %v6124
  %v6129 = vadd.f32 %v6128, %v6126
  %v6130 = vrot.slane %v6129, 4
  %v6131 = vadd.f32 %v6129, %v6130
  %v6132 = vrot.slane %v6131, 2
  %v6133 = vadd.f32 %v6131, %v6132
  %v6134 = vrot.slane %v6133, 1
  %v6135 = vadd.f32 %v6133, %v6134
  %v6136 = vadd.f32 %v6123, %v6125
  %v6137 = vadd.f32 %v6136, %v6127
  %v6138 = vrot.slane %v6137, 4
  %v6139 = vadd.f32 %v6137, %v6138
  %v6140 = vrot.slane %v6139, 2
  %v6141 = vadd.f32 %v6139, %v6140
  %v6142 = vrot.slane %v6141, 1
  %v6143 = vadd.f32 %v6141, %v6142
  %v6144 = vrcp.pop 18.0
  %v6145 = vmul.f32 18.0, %v6144
  %v6146 = vsub.f32 1.0, %v6145
  %v6147 = vmul.f32 %v6144, %v6146
  %v6148 = vadd.f32 %v6144, %v6147
  %vm6149 = vweird.f32 %v6144
  %v6150 = vsel %vm6149, %v6144, %v6148
  %v6151 = vmul.f32 %v6135, %v6150
  %v6152 = vmul.f32 %v6143, %v6150
  %v6153 = vmul.f32 %v6122, %v5934
  %v6154 = vmul.f32 %v6123, %v6096
  %v6155 = vmul.f32 %v6124, %v5936
  %v6156 = vmul.f32 %v6125, %v6098
  %v6157 = vmul.f32 %v6126, %v5939
  %v6158 = vmul.f32 %v6127, %v6101
  %v6159 = vadd.f32 %v6153, %v6155
  %v6160 = vadd.f32 %v6159, %v6157
  %v6161 = vrot.slane %v6160, 4
  %v6162 = vadd.f32 %v6160, %v6161
  %v6163 = vrot.slane %v6162, 2
  %v6164 = vadd.f32 %v6162, %v6163
  %v6165 = vrot.slane %v6164, 1
  %v6166 = vadd.f32 %v6164, %v6165
  %v6167 = vadd.f32 %v6154, %v6156
  %v6168 = vadd.f32 %v6167, %v6158
  %v6169 = vrot.slane %v6168, 4
  %v6170 = vadd.f32 %v6168, %v6169
  %v6171 = vrot.slane %v6170, 2
  %v6172 = vadd.f32 %v6170, %v6171
  %v6173 = vrot.slane %v6172, 1
  %v6174 = vadd.f32 %v6172, %v6173
  %v6175 = vmul.f32 %v6166, %v6150
  %v6176 = vmul.f32 %v6174, %v6150
  %v6177 = vmul.f32 %v6151, %v6151
  %v6178 = vmul.f32 %v6152, %v6152
  %v6179 = vsub.f32 %v6175, %v6177
  %v6180 = vsub.f32 %v6176, %v6178
  %v6181 = vmax.f32 %v6179, 0.0
  %v6182 = vmax.f32 %v6180, 0.0
  %v6183 = vadd.f32 %v6181, 1e-05
  %v6184 = vadd.f32 %v6182, 1e-05
  %v6185 = vrsqrt.pop %v6183
  %v6186 = vmul.f32 %v6185, %v6183
  %v6187 = vmul.f32 %v6186, %v6185
  %v6188 = vmul.f32 0.5, %v6187
  %v6189 = vsub.f32 1.5, %v6188
  %v6190 = vmul.f32 %v6185, %v6189
  %vm6191 = vweird.f32 %v6183
  %vm6192 = vweird.f32 %v6185
  %vm6193 = vmor %vm6191, %vm6192
  %v6194 = vsel %vm6193, %v6185, %v6190
  %v6195 = vrsqrt.pop %v6184
  %v6196 = vmul.f32 %v6195, %v6184
  %v6197 = vmul.f32 %v6196, %v6195
  %v6198 = vmul.f32 0.5, %v6197
  %v6199 = vsub.f32 1.5, %v6198
  %v6200 = vmul.f32 %v6195, %v6199
  %vm6201 = vweird.f32 %v6184
  %vm6202 = vweird.f32 %v6195
  %vm6203 = vmor %vm6201, %vm6202
  %v6204 = vsel %vm6203, %v6195, %v6200
  %v6205 = vld [vmem:[%s9] sm:$0x3]
  %v6207 = vperm.slane %v6205, 0
  %v6208 = vperm.slane %v6205, 1
  %v6211 = vmul.f32 %v6194, %v6207
  %v6212 = vmul.f32 %v6204, %v6208
  %v6213 = vsub.f32 %v5934, %v6151
  %v6214 = vsub.f32 %v6096, %v6152
  %v6215 = vsub.f32 %v5936, %v6151
  %v6216 = vsub.f32 %v6098, %v6152
  %v6217 = vsub.f32 %v5939, %v6151
  %v6218 = vsub.f32 %v6101, %v6152
  %v6219 = vperm.slane %v6211, 0
  %v6220 = vperm.slane %v6212, 0
  %v6221 = vmul.f32 %v6213, %v6219
  %v6222 = vmul.f32 %v6214, %v6220
  %v6223 = vmul.f32 %v6215, %v6219
  %v6224 = vmul.f32 %v6216, %v6220
  %v6225 = vmul.f32 %v6217, %v6219
  %v6226 = vmul.f32 %v6218, %v6220
  %v6227 = vld [vmem:[%s10] sm:$0x3]
  %v6229 = vperm.slane %v6227, 0
  %v6230 = vperm.slane %v6227, 1
  %v6233 = vadd.f32 %v6221, %v6229
  %v6234 = vadd.f32 %v6222, %v6230
  %v6235 = vadd.f32 %v6223, %v6229
  %v6236 = vadd.f32 %v6224, %v6230
  %v6237 = vadd.f32 %v6225, %v6229
  %v6238 = vadd.f32 %v6226, %v6230
  %vm6239 = vcmp.ge.f32.partialorder %v6233, 0.0
  %vm6240 = vcmp.ge.f32.partialorder %v6234, 0.0
  %vm6241 = vcmp.ge.f32.partialorder %v6235, 0.0
  %vm6242 = vcmp.ge.f32.partialorder %v6236, 0.0
  %vm6243 = vcmp.ge.f32.partialorder %v6237, 0.0
  %vm6244 = vcmp.ge.f32.partialorder %v6238, 0.0
  %v6245 = vmul.f32 %v6233, 0.2
  %v6246 = vmul.f32 %v6234, 0.2
  %v6247 = vmul.f32 %v6235, 0.2
  %v6248 = vmul.f32 %v6236, 0.2
  %v6249 = vmul.f32 %v6237, 0.2
  %v6250 = vmul.f32 %v6238, 0.2
  %v6251 = vsel %vm6239, %v6233, %v6245
  %v6252 = vsel %vm6240, %v6234, %v6246
  %v6253 = vsel %vm6241, %v6235, %v6247
  %v6254 = vsel %vm6242, %v6236, %v6248
  %v6255 = vsel %vm6243, %v6237, %v6249
  %v6256 = vsel %vm6244, %v6238, %v6250
  %6257 = vst [vmem:[#allocation5] sm:$0xff] %v6251
  %6258 = vst [vmem:[#allocation5 + $0x8] sm:$0xff] %v6252
  %6259 = vst [vmem:[#allocation5 + $0x10] sm:$0xff] %v6253
  %6260 = vst [vmem:[#allocation5 + $0x18] sm:$0xff] %v6254
  %6261 = vst [vmem:[#allocation5 + $0x20] sm:$0xff] %v6255
  %6262 = vst [vmem:[#allocation5 + $0x28] sm:$0xff] %v6256
  %v6263 = vld [vmem:[#allocation5] sm:$0x3]
  %v6264 = vld [vmem:[#allocation5 + $0x8] sm:$0x3]
  %v6265 = vld [vmem:[%s4] ss:$8 sm:$0x3]
  %v6267 = vperm.slane %v6265, 0
  %v6268 = vperm.slane %v6265, 1
  %v6271 = vmul.f32 %v6263, %v6267
  %v6272 = vmul.f32 %v6264, %v6268
  %v6273 = vadd.f32 %v6271, 0.0
  %v6274 = vadd.f32 %v6272, 0.0
  %v6275 = vld [vmem:[#allocation5] sm:$0xc]
  %v6276 = vld [vmem:[#allocation5 + $0x8] sm:$0xc]
  %s6277 = scalar_lea.vmem %s4, 1
  %v6278 = vld [vmem:[%s6277] ss:$8 sm:$0x3]
  %v6280 = vperm.slane %v6278, 0
  %v6281 = vperm.slane %v6278, 1
  %v6284 = vmul.f32 %v6275, %v6280
  %v6285 = vmul.f32 %v6276, %v6281
  %v6288 = vrot.slane %v6284, 2
  %v6289 = vrot.slane %v6285, 2
  %v6292 = vadd.f32 %v6273, %v6288
  %v6293 = vadd.f32 %v6274, %v6289
  %v6294 = vld [vmem:[#allocation5] sm:$0x30]
  %v6295 = vld [vmem:[#allocation5 + $0x8] sm:$0x30]
  %s6296 = scalar_lea.vmem %s4, 2
  %v6297 = vld [vmem:[%s6296] ss:$8 sm:$0x3]
  %v6299 = vperm.slane %v6297, 0
  %v6300 = vperm.slane %v6297, 1
  %v6303 = vmul.f32 %v6294, %v6299
  %v6304 = vmul.f32 %v6295, %v6300
  %v6307 = vrot.slane %v6303, 4
  %v6308 = vrot.slane %v6304, 4
  %v6311 = vadd.f32 %v6292, %v6307
  %v6312 = vadd.f32 %v6293, %v6308
  %v6313 = vld [vmem:[#allocation5] sm:$0xc0]
  %v6314 = vld [vmem:[#allocation5 + $0x8] sm:$0xc0]
  %s6315 = scalar_lea.vmem %s4, 3
  %v6316 = vld [vmem:[%s6315] ss:$8 sm:$0x3]
  %v6318 = vperm.slane %v6316, 0
  %v6319 = vperm.slane %v6316, 1
  %v6322 = vmul.f32 %v6313, %v6318
  %v6323 = vmul.f32 %v6314, %v6319
  %v6326 = vrot.slane %v6322, 6
  %v6327 = vrot.slane %v6323, 6
  %v6330 = vadd.f32 %v6311, %v6326
  %v6331 = vadd.f32 %v6312, %v6327
  %v6332 = vld [vmem:[#allocation5 + $0x10] sm:$0x3]
  %v6333 = vld [vmem:[#allocation5 + $0x18] sm:$0x3]
  %s6334 = scalar_lea.vmem %s4, 4
  %v6335 = vld [vmem:[%s6334] ss:$8 sm:$0x3]
  %v6337 = vperm.slane %v6335, 0
  %v6338 = vperm.slane %v6335, 1
  %v6341 = vmul.f32 %v6332, %v6337
  %v6342 = vmul.f32 %v6333, %v6338
  %v6343 = vadd.f32 %v6330, %v6341
  %v6344 = vadd.f32 %v6331, %v6342
  %v6345 = vld [vmem:[#allocation5 + $0x10] sm:$0xc]
  %v6346 = vld [vmem:[#allocation5 + $0x18] sm:$0xc]
  %s6347 = scalar_lea.vmem %s4, 5
  %v6348 = vld [vmem:[%s6347] ss:$8 sm:$0x3]
  %v6350 = vperm.slane %v6348, 0
  %v6351 = vperm.slane %v6348, 1
  %v6354 = vmul.f32 %v6345, %v6350
  %v6355 = vmul.f32 %v6346, %v6351
  %v6358 = vrot.slane %v6354, 2
  %v6359 = vrot.slane %v6355, 2
  %v6362 = vadd.f32 %v6343, %v6358
  %v6363 = vadd.f32 %v6344, %v6359
  %v6364 = vld [vmem:[#allocation5 + $0x10] sm:$0x30]
  %v6365 = vld [vmem:[#allocation5 + $0x18] sm:$0x30]
  %s6366 = scalar_lea.vmem %s4, 6
  %v6367 = vld [vmem:[%s6366] ss:$8 sm:$0x3]
  %v6369 = vperm.slane %v6367, 0
  %v6370 = vperm.slane %v6367, 1
  %v6373 = vmul.f32 %v6364, %v6369
  %v6374 = vmul.f32 %v6365, %v6370
  %v6377 = vrot.slane %v6373, 4
  %v6378 = vrot.slane %v6374, 4
  %v6381 = vadd.f32 %v6362, %v6377
  %v6382 = vadd.f32 %v6363, %v6378
  %v6383 = vld [vmem:[#allocation5 + $0x10] sm:$0xc0]
  %v6384 = vld [vmem:[#allocation5 + $0x18] sm:$0xc0]
  %s6385 = scalar_lea.vmem %s4, 7
  %v6386 = vld [vmem:[%s6385] ss:$8 sm:$0x3]
  %v6388 = vperm.slane %v6386, 0
  %v6389 = vperm.slane %v6386, 1
  %v6392 = vmul.f32 %v6383, %v6388
  %v6393 = vmul.f32 %v6384, %v6389
  %v6396 = vrot.slane %v6392, 6
  %v6397 = vrot.slane %v6393, 6
  %v6400 = vadd.f32 %v6381, %v6396
  %v6401 = vadd.f32 %v6382, %v6397
  %v6402 = vld [vmem:[#allocation5 + $0x20] sm:$0x3]
  %v6403 = vld [vmem:[#allocation5 + $0x28] sm:$0x3]
  %s6404 = scalar_lea.vmem %s4, 16
  %v6405 = vld [vmem:[%s6404] ss:$8 sm:$0x3]
  %v6407 = vperm.slane %v6405, 0
  %v6408 = vperm.slane %v6405, 1
  %v6411 = vmul.f32 %v6402, %v6407
  %v6412 = vmul.f32 %v6403, %v6408
  %v6413 = vadd.f32 %v6400, %v6411
  %v6414 = vadd.f32 %v6401, %v6412
  %v6415 = vld [vmem:[#allocation5 + $0x20] sm:$0xc]
  %v6416 = vld [vmem:[#allocation5 + $0x28] sm:$0xc]
  %s6417 = scalar_lea.vmem %s4, 17
  %v6418 = vld [vmem:[%s6417] ss:$8 sm:$0x3]
  %v6420 = vperm.slane %v6418, 0
  %v6421 = vperm.slane %v6418, 1
  %v6424 = vmul.f32 %v6415, %v6420
  %v6425 = vmul.f32 %v6416, %v6421
  %v6428 = vrot.slane %v6424, 2
  %v6429 = vrot.slane %v6425, 2
  %v6432 = vadd.f32 %v6413, %v6428
  %v6433 = vadd.f32 %v6414, %v6429
  %v6434 = vld [vmem:[#allocation5 + $0x20] sm:$0x30]
  %v6435 = vld [vmem:[#allocation5 + $0x28] sm:$0x30]
  %s6436 = scalar_lea.vmem %s4, 18
  %v6437 = vld [vmem:[%s6436] ss:$8 sm:$0x3]
  %v6439 = vperm.slane %v6437, 0
  %v6440 = vperm.slane %v6437, 1
  %v6443 = vmul.f32 %v6434, %v6439
  %v6444 = vmul.f32 %v6435, %v6440
  %v6447 = vrot.slane %v6443, 4
  %v6448 = vrot.slane %v6444, 4
  %v6451 = vadd.f32 %v6432, %v6447
  %v6452 = vadd.f32 %v6433, %v6448
  %v6453 = vld [vmem:[#allocation5 + $0x20] sm:$0xc0]
  %v6454 = vld [vmem:[#allocation5 + $0x28] sm:$0xc0]
  %s6455 = scalar_lea.vmem %s4, 19
  %v6456 = vld [vmem:[%s6455] ss:$8 sm:$0x3]
  %v6458 = vperm.slane %v6456, 0
  %v6459 = vperm.slane %v6456, 1
  %v6462 = vmul.f32 %v6453, %v6458
  %v6463 = vmul.f32 %v6454, %v6459
  %v6466 = vrot.slane %v6462, 6
  %v6467 = vrot.slane %v6463, 6
  %v6470 = vadd.f32 %v6451, %v6466
  %v6471 = vadd.f32 %v6452, %v6467
  %vm6472 = vcmask 1041408
  %v6473 = vsel %vm6472, %v6470, 0.0
  %v6474 = vsel %vm6472, %v6471, 0.0
  %v6475 = vadd.f32 %v6473, %v6474
  %6476 = vadd.xlane.f32.xlu0 %v6475
  %v6477 = vpop.xlane.xlu0 %6476
  %v6478 = vxor.u32 %v6477, 2147483648
  %v6479 = vmul.f32 %v6478, 1.442695
  %v6480 = vpow.pop %v6479
  %v6481 = vadd.f32 %v6480, 1.0
  %v6482 = vrcp.pop %v6481
  %v6483 = vmul.f32 %v6481, %v6482
  %v6484 = vsub.f32 1.0, %v6483
  %v6485 = vmul.f32 %v6482, %v6484
  %v6486 = vadd.f32 %v6482, %v6485
  %vm6487 = vweird.f32 %v6481
  %vm6488 = vweird.f32 %v6482
  %vm6489 = vmor %vm6487, %vm6488
  %v6490 = vsel %vm6489, %v6482, %v6486
  %v6491 = vand.u32 2147483647, %v6481
  %vm6492 = vcmp.eq.f32.partialorder %v6491, 8.507059e+37
  %v6493 = vand.u32 %v6481, 2147483648
  %v6494 = vor.u32 1.1754944e-38, %v6493
  %v6495 = vsel %vm6492, %v6494, %v6490
  %v6496 = vmul.f32 1.0, %v6495
  %vm6497 = vcmask 1024
  %6498 = vst.msk [vmem:[%s11] sm:$0x3] %vm6497, %v6496
  // Predicated region
  $region46: #{discriminator_forward.1} parent=0 // pred_check
    _
  $region47: #{discriminator_forward.1} parent=0 // pred_check_branch
    %6500 = sbr.rel (0) target = $region49
  $region48: #{discriminator_forward.1} parent=0 // pred_region
    _
  $region49: #{discriminator_forward.1} parent=0 // pred_fallthru
    _
  // Predicated region
  $region50: #{discriminator_forward.1} parent=0 // pred_check
    _
  $region51: #{discriminator_forward.1} parent=0 // pred_check_branch
    %6502 = sbr.rel (0) target = $region53
  $region52: #{discriminator_forward.1} parent=0 // pred_region
    _
  $region53: #{discriminator_forward.1} parent=0 // pred_fallthru
    _

</llo_original>
